<compile_context>
chip_gen: v5e
topology: v5e:2x2
jax: 0.10.0
libtpu: 0.0.40
codegen_flags: <defaults>
</compile_context>

<pallas_src>
import jax
import jax.numpy as jnp
from jax.experimental import pallas as pl
from jax.experimental.pallas import tpu as pltpu


def _round_up(x, m):
    return (x + m - 1) // m * m


def _make_kernel(d_pad, compute_dtype):
    def kernel(x_ref, wab_ref, bab_ref, wc_ref, bc_ref, out_ref):
        # Cast to bf16 in-kernel (no extra HBM pass); MXU matmul, f32 accum.
        x = x_ref[...]
        if x.dtype != compute_dtype:
            x = x.astype(compute_dtype)

        # Single fused matmul: [bn, Lp] @ [Lp, 2*Dp] -> f32.
        ab = jnp.dot(x, wab_ref[...], preferred_element_type=jnp.float32)
        ab = ab + bab_ref[...]                        # f32 bias broadcast

        # Static, lane-aligned split (d_pad is a multiple of 128).
        a = jnp.tanh(ab[:, :d_pad])                   # EUP
        # sigmoid(z) == 0.5 * (tanh(0.5 * z) + 1): one EUP op, VALU stays free.
        b = 0.5 * (jnp.tanh(0.5 * ab[:, d_pad:]) + 1.0)
        gated = a * b                                 # VPU, [bn, Dp] f32

        # Final projection on the (otherwise idle) MXU against the 128-lane
        # zero-padded Wc -> lane-dense [bn, 128] output, f32 for fidelity.
        out = jnp.dot(gated, wc_ref[...], preferred_element_type=jnp.float32)
        out_ref[...] = (out + bc_ref[...]).astype(out_ref.dtype)

    return kernel


def attn_net_gated_forward(x, wa, ba, wb, bb, wc, bc, *,
                           block_n=512, use_bf16=True,
                           vmem_limit_bytes=32 * 1024 * 1024,
                           interpret=False):
    """Fused gated-attention forward.

    x: [N, L]; wa/wb: [L, D] (pre-transposed vs. torch); ba/bb: [D];
    wc: [D, n_classes]; bc: [n_classes].
    Returns (A [N, n_classes] float32, x) like the PyTorch module.
    """
    N, L = x.shape
    D = wa.shape[1]
    n_classes = wc.shape[1]

    # ---- shape prep: lane-align L/D, 128-pad the class dim -----------------
    Lp = _round_up(L, 128)
    Dp = _round_up(D, 128)
    NCp = _round_up(n_classes, 128)          # lane-dense output width

    block_n = max(8, min(_round_up(block_n, 8), _round_up(N, 8)))
    Np = _round_up(N, block_n)

    # x streams straight from HBM in its native dtype; pad ONLY if ragged
    # (L=1024 default is already 128-aligned, so usually this is a no-op).
    xp = x
    if (Np, Lp) != (N, L):
        xp = jnp.pad(x, ((0, Np - N), (0, Lp - L)))

    compute_dtype = jnp.bfloat16 if use_bf16 else xp.dtype

    # Fuse Wa|Wb into one [Lp, 2*Dp] weight; one matmul shares the x LHS.
    wab = jnp.concatenate(
        [jnp.pad(wa, ((0, Lp - L), (0, Dp - D))),
         jnp.pad(wb, ((0, Lp - L), (0, Dp - D)))], axis=1).astype(compute_dtype)
    bab = jnp.concatenate(
        [jnp.pad(ba, (0, Dp - D)),
         jnp.pad(bb, (0, Dp - D))]).reshape(1, 2 * Dp).astype(jnp.float32)

    # Wc / bc zero-padded to 128 output lanes; kept f32 (tiny matmul).
    wc_k = jnp.pad(wc, ((0, Dp - D), (0, NCp - n_classes))).astype(jnp.float32)
    bc_k = jnp.pad(bc, (0, NCp - n_classes)).reshape(1, NCp).astype(jnp.float32)

    grid = (Np // block_n,)
    kernel = _make_kernel(Dp, compute_dtype)

    A_full = pl.pallas_call(
        kernel,
        out_shape=jax.ShapeDtypeStruct((Np, NCp), jnp.float32),
        grid_spec=pltpu.PrefetchScalarGridSpec(
            num_scalar_prefetch=0,
            grid=grid,
            in_specs=[
                pl.BlockSpec((block_n, Lp), lambda i: (i, 0)),   # x (streamed)
                pl.BlockSpec((Lp, 2 * Dp), lambda i: (0, 0)),    # fused Wa|Wb
                pl.BlockSpec((1, 2 * Dp), lambda i: (0, 0)),     # fused ba|bb
                pl.BlockSpec((Dp, NCp), lambda i: (0, 0)),       # Wc (128-pad)
                pl.BlockSpec((1, NCp), lambda i: (0, 0)),        # bc (128-pad)
            ],
            out_specs=pl.BlockSpec((block_n, NCp), lambda i: (i, 0)),
        ),
        compiler_params=pltpu.CompilerParams(
            dimension_semantics=("parallel",),
            vmem_limit_bytes=vmem_limit_bytes,
        ),
        interpret=interpret,
    )(xp, wab, bab, wc_k, bc_k)

    A = A_full[:N, :n_classes]
    return A, x


def _init_linear(key, in_f, out_f, dtype=jnp.float32):
    # PyTorch-style uniform init, stored as [in_f, out_f] (transposed vs torch).
    kw, kb = jax.random.split(key)
    bound = 1.0 / jnp.sqrt(in_f)
    w = jax.random.uniform(kw, (in_f, out_f), dtype, -bound, bound)
    b = jax.random.uniform(kb, (out_f,), dtype, -bound, bound)
    return w, b


if __name__ == "__main__":
    # Module defaults: L=1024, D=256, n_classes=1.  N=2048 with block_n=512
    # gives a 4-step "parallel" grid (>= 2 steps per TensorCore on v7x).
    N, L, D, n_classes = 2048, 1024, 256, 1

    key = jax.random.PRNGKey(0)
    kx, ka, kb, kc = jax.random.split(key, 4)

    x = jax.random.normal(kx, (N, L), jnp.float32)
    wa, ba = _init_linear(ka, L, D)
    wb, bb = _init_linear(kb, L, D)
    wc, bc = _init_linear(kc, D, n_classes)

    A, x_out = attn_net_gated_forward(x, wa, ba, wb, bb, wc, bc, block_n=512)
    jax.block_until_ready((A, x_out))

    # Reference: same math with the same bf16 matmul-input cast as the kernel.
    xb = x.astype(jnp.bfloat16)
    a_ref = jnp.tanh(jnp.dot(xb, wa.astype(jnp.bfloat16),
                             preferred_element_type=jnp.float32) + ba)
    b_ref = jax.nn.sigmoid(jnp.dot(xb, wb.astype(jnp.bfloat16),
                                   preferred_element_type=jnp.float32) + bb)
    A_ref = (a_ref * b_ref) @ wc + bc

    assert A.shape == (N, n_classes)
    assert x_out.shape == (N, L)
    max_err = float(jnp.max(jnp.abs(A - A_ref)))
    assert jnp.allclose(A, A_ref, atol=2e-3, rtol=2e-3), max_err
    assert jnp.array_equal(x_out, x)

    print("KERNEL_OK")
</pallas_src>

<mosaic_0001>
module attributes {stable_mosaic.version = 11 : i64} {
  func.func @kernel(%arg0: i32, %arg1: memref<512x1024xf32, #tpu.memory_space<vmem>>, %arg2: memref<1024x512xbf16, #tpu.memory_space<vmem>>, %arg3: memref<1x512xf32, #tpu.memory_space<vmem>>, %arg4: memref<256x128xf32, #tpu.memory_space<vmem>>, %arg5: memref<1x128xf32, #tpu.memory_space<vmem>>, %arg6: memref<512x128xf32, #tpu.memory_space<vmem>>) attributes {dimension_semantics = [#tpu.dimension_semantics<parallel>], iteration_bounds = array<i64: 4>, scalar_prefetch = 0 : i64, scratch_operands = 0 : i64, tpu.core_type = #tpu.core_type<tc>, window_params = [{transform_indices = @transform_0, window_bounds = array<i64: 512, 1024>}, {pipeline_mode = #tpu.pipeline_mode<synchronous>, transform_indices = @transform_1, window_bounds = array<i64: 1024, 512>}, {pipeline_mode = #tpu.pipeline_mode<synchronous>, transform_indices = @transform_2, window_bounds = array<i64: 1, 512>}, {pipeline_mode = #tpu.pipeline_mode<synchronous>, transform_indices = @transform_3, window_bounds = array<i64: 256, 128>}, {pipeline_mode = #tpu.pipeline_mode<synchronous>, transform_indices = @transform_4, window_bounds = array<i64: 1, 128>}, {transform_indices = @transform_5, window_bounds = array<i64: 512, 128>}]} {
    %c0 = arith.constant 0 : index
    %c0_0 = arith.constant 0 : index
    %0 = vector.load %arg1[%c0, %c0_0] : memref<512x1024xf32, #tpu.memory_space<vmem>>, vector<512x1024xf32>
    %1 = arith.truncf %0 : vector<512x1024xf32> to vector<512x1024xbf16>
    %c0_1 = arith.constant 0 : index
    %c0_2 = arith.constant 0 : index
    %2 = vector.load %arg2[%c0_1, %c0_2] : memref<1024x512xbf16, #tpu.memory_space<vmem>>, vector<1024x512xbf16>
    %cst = arith.constant dense<0.000000e+00> : vector<512x512xf32>
    %3 = tpu.matmul %1, %2, %cst {dimension_numbers = #tpu.dot_dimension_numbers<[1], [0], [0], [1], [0, 0, 1, 1], [], []>} : vector<512x1024xbf16>, vector<1024x512xbf16>, vector<512x512xf32> -> vector<512x512xf32>
    %c0_3 = arith.constant 0 : index
    %c0_4 = arith.constant 0 : index
    %4 = vector.load %arg3[%c0_3, %c0_4] : memref<1x512xf32, #tpu.memory_space<vmem>>, vector<1x512xf32>
    %5 = vector.broadcast %4 : vector<1x512xf32> to vector<512x512xf32>
    %6 = arith.addf %3, %5 : vector<512x512xf32>
    %7 = vector.extract_strided_slice %6 {offsets = [0, 0], sizes = [512, 256], strides = [1, 1]} : vector<512x512xf32> to vector<512x256xf32>
    %8 = math.tanh %7 : vector<512x256xf32>
    %9 = vector.extract_strided_slice %6 {offsets = [0, 256], sizes = [512, 256], strides = [1, 1]} : vector<512x512xf32> to vector<512x256xf32>
    %cst_5 = arith.constant 5.000000e-01 : f32
    %10 = vector.broadcast %cst_5 : f32 to vector<512x256xf32>
    %11 = arith.mulf %10, %9 : vector<512x256xf32>
    %12 = math.tanh %11 : vector<512x256xf32>
    %cst_6 = arith.constant 1.000000e+00 : f32
    %13 = vector.broadcast %cst_6 : f32 to vector<512x256xf32>
    %14 = arith.addf %12, %13 : vector<512x256xf32>
    %cst_7 = arith.constant 5.000000e-01 : f32
    %15 = vector.broadcast %cst_7 : f32 to vector<512x256xf32>
    %16 = arith.mulf %15, %14 : vector<512x256xf32>
    %17 = arith.mulf %8, %16 : vector<512x256xf32>
    %c0_8 = arith.constant 0 : index
    %c0_9 = arith.constant 0 : index
    %18 = vector.load %arg4[%c0_8, %c0_9] : memref<256x128xf32, #tpu.memory_space<vmem>>, vector<256x128xf32>
    %cst_10 = arith.constant dense<0.000000e+00> : vector<512x128xf32>
    %19 = tpu.matmul %17, %18, %cst_10 {dimension_numbers = #tpu.dot_dimension_numbers<[1], [0], [0], [1], [0, 0, 1, 1], [], []>} : vector<512x256xf32>, vector<256x128xf32>, vector<512x128xf32> -> vector<512x128xf32>
    %c0_11 = arith.constant 0 : index
    %c0_12 = arith.constant 0 : index
    %20 = vector.load %arg5[%c0_11, %c0_12] : memref<1x128xf32, #tpu.memory_space<vmem>>, vector<1x128xf32>
    %21 = vector.broadcast %20 : vector<1x128xf32> to vector<512x128xf32>
    %22 = arith.addf %19, %21 : vector<512x128xf32>
    %c0_13 = arith.constant 0 : index
    %c0_14 = arith.constant 0 : index
    %23 = vector.load %arg6[%c0_13, %c0_14] : memref<512x128xf32, #tpu.memory_space<vmem>>, vector<512x128xf32>
    tpu.vector_store %arg6[%c0_13, %c0_14], %22 {strides = array<i32>} : memref<512x128xf32, #tpu.memory_space<vmem>>, vector<512x128xf32>,
    return
  }
  func.func @transform_0(%arg0: i32) -> (i32, i32) {
    %c0_i32 = arith.constant 0 : i32
    %c0_i32_0 = arith.constant 0 : i32
    return %arg0, %c0_i32 : i32, i32
  }
  func.func @transform_1(%arg0: i32) -> (i32, i32) {
    %c0_i32 = arith.constant 0 : i32
    %c0_i32_0 = arith.constant 0 : i32
    %c0_i32_1 = arith.constant 0 : i32
    return %c0_i32, %c0_i32_0 : i32, i32
  }
  func.func @transform_2(%arg0: i32) -> (i32, i32) {
    %c0_i32 = arith.constant 0 : i32
    %c0_i32_0 = arith.constant 0 : i32
    %c0_i32_1 = arith.constant 0 : i32
    return %c0_i32, %c0_i32_0 : i32, i32
  }
  func.func @transform_3(%arg0: i32) -> (i32, i32) {
    %c0_i32 = arith.constant 0 : i32
    %c0_i32_0 = arith.constant 0 : i32
    %c0_i32_1 = arith.constant 0 : i32
    return %c0_i32, %c0_i32_0 : i32, i32
  }
  func.func @transform_4(%arg0: i32) -> (i32, i32) {
    %c0_i32 = arith.constant 0 : i32
    %c0_i32_0 = arith.constant 0 : i32
    %c0_i32_1 = arith.constant 0 : i32
    return %c0_i32, %c0_i32_0 : i32, i32
  }
  func.func @transform_5(%arg0: i32) -> (i32, i32) {
    %c0_i32 = arith.constant 0 : i32
    %c0_i32_0 = arith.constant 0 : i32
    return %arg0, %c0_i32 : i32, i32
  }
}

</mosaic_0001>

<llo_original>
// kernel: tpu_custom_call.1
$region0: #{tpu_custom_call.1}
  #allocation0 [shape = 'u32[]', space=smem, size = 0x4, offset = 0x4, fixed_abs, tag = 'smem constant byte address 0x4 - core index']
  #allocation1 [shape = 'u32[72,128]{1,0:T(1,128)}', space=vmem, size = 0x9000, scoped, tag = 'internal scratch']
  %s0 = inlined_call_operand.hbm [shape: f32[2048,1024], index: 0, kind: input, shape index: {}]
  %s1 = inlined_call_operand.hbm [shape: bf16[1024,512], index: 1, kind: input, shape index: {}]
  %s2 = inlined_call_operand.hbm [shape: f32[1,512], index: 2, kind: input, shape index: {}]
  %s3 = inlined_call_operand.hbm [shape: f32[256,128], index: 3, kind: input, shape index: {}]
  %s4 = inlined_call_operand.hbm [shape: f32[1,128], index: 4, kind: input, shape index: {}]
  %s5 = inlined_call_operand.hbm [shape: f32[2048,128], index: 5, kind: output, shape index: {}]
  %s6 = sld [smem:[#allocation0]]
  $region73: #{tpu_custom_call.1} parent=0
    _
  %s8 = ssub.s32 1, %s6
  %s9 = scalar_select 0, %s8, %s6
  $region1: #{tpu_custom_call.1} parent=0
    #allocation2 [shape = 'u8[4194304]{0}', space=vmem, size = 0x400000, scoped, tag = 'input window, operand 0']
    #allocation3 [shape = 's32[2]{0}', space=sflag, size = 0x8, scoped, tag = 'scoped memory for tpu_custom_call.1']
    #allocation4 [shape = 's32[2]{0}', space=sflag, size = 0x8, scoped, tag = 'scoped memory for tpu_custom_call.1']
    #allocation5 [shape = 'u8[1048576]{0}', space=vmem, size = 0x100000, scoped, tag = 'input window, operand 1, single buffered']
    #allocation6 [shape = 's32[1]{0}', space=sflag, size = 0x4, scoped, tag = 'scoped memory for tpu_custom_call.1']
    #allocation7 [shape = 'u8[2048]{0}', space=vmem, size = 0x800, scoped, tag = 'input window, operand 2, single buffered']
    #allocation8 [shape = 'u8[131072]{0}', space=vmem, size = 0x20000, scoped, tag = 'input window, operand 3, single buffered']
    #allocation9 [shape = 's32[1]{0}', space=sflag, size = 0x4, scoped, tag = 'scoped memory for tpu_custom_call.1']
    #allocation10 [shape = 'u8[512]{0}', space=vmem, size = 0x400, scoped, tag = 'input window, operand 4, single buffered']
    #allocation11 [shape = 'u8[524288]{0}', space=vmem, size = 0x80000, scoped, tag = 'output window, operand 0']
    %10 = vsyncpa [#allocation3], 0
    %s11 = scalar_lea.sflag [#allocation3], 1
    %12 = vsyncpa %s11, 0
    %13 = vsyncpa [#allocation6], 0
    %14 = vsyncpa [#allocation9], 0
    %15 = vsyncpa [#allocation4], 0
    %s16 = scalar_lea.sflag [#allocation4], 1
    %17 = vsyncpa %s16, 0
    loop: start=0, step=1, limit=6
    $region2: #{tpu_custom_call.1} parent=1 // loop_pre_header
      _
    $region3: #{tpu_custom_call.1} parent=1 // loop_header
      %s19 = sphi 0, %s23
      %p20 = scmp.ge.s32.totalorder %s19, 6
      %s29 = sphi 0, %s31
      %s32 = sphi 0, %s29
      %s33 = sphi 0, %s32
      %s49 = sphi 0, %s33
      %s53 = sphi 0, %s53
      %s55 = sphi 0, %s53
      %s56 = sphi 0, %s55
      %s70 = sphi 0, %s56
      %s74 = sphi 0, %s74
      %s76 = sphi 0, %s74
      %s77 = sphi 0, %s76
      %s91 = sphi 0, %s77
      %s95 = sphi 0, %s95
      %s97 = sphi 0, %s95
      %s98 = sphi 0, %s97
      %s112 = sphi 0, %s98
      %s116 = sphi 0, %s116
      %s118 = sphi 0, %s116
      %s119 = sphi 0, %s118
      %s133 = sphi 0, %s119
      %s139 = sphi 0, %s141
      %s142 = sphi 0, %s139
      %s143 = sphi 0, %s142
      %s159 = sphi 0, %s143
    $region4: #{tpu_custom_call.1} parent=1 // loop_header_branch
      %22 = sbr.rel (%p20) target = $region8
    $region5: #{tpu_custom_call.1} parent=1 // loop_body
      %s24 = ssub.s32 %s19, 1
      %s25 = ssub.s32 %s19, 2
      %s26 = sadd.s32 %s19, 1
      %s27 = ssub.s32 %s19, %s26
      %p28 = scmp.eq.s32.totalorder %s27, 0
      %s30 = sadd.s32 %s29, 1
      %s31 = scalar_select %p28, %s29, %s30
      %p34 = pneg %p28
      %p35 = scmp.eq.s32.totalorder %s19, 3
      %p36 = por %p34, %p35
      %p37 = scmp.ne.s32.totalorder %s29, %s32
      %p38 = scmp.eq.s32.totalorder %s19, 0
      %p39 = por %p37, %p38
      %p40 = scmp.ne.s32.totalorder %s29, %s32
      %p41 = scmp.eq.s32.totalorder %s24, 3
      %p42 = por %p40, %p41
      %p43 = scmp.ne.s32.totalorder %s32, %s33
      %p44 = scmp.eq.s32.totalorder %s24, 0
      %p45 = por %p43, %p44
      %p46 = scmp.ne.s32.totalorder %s32, %s33
      %p47 = scmp.eq.s32.totalorder %s25, 3
      %p48 = por %p46, %p47
      %p50 = scmp.ne.s32.totalorder %s33, %s49
      %p51 = scmp.eq.s32.totalorder %s25, 0
      %p52 = por %p50, %p51
      %s54 = sadd.s32 %s53, 1
      %p57 = scmp.eq.s32.totalorder %s19, 3
      %p58 = scmp.ne.s32.totalorder %s53, %s55
      %p59 = scmp.eq.s32.totalorder %s19, 0
      %p60 = por %p58, %p59
      %p61 = scmp.ne.s32.totalorder %s53, %s55
      %p62 = scmp.eq.s32.totalorder %s24, 3
      %p63 = por %p61, %p62
      %p64 = scmp.ne.s32.totalorder %s55, %s56
      %p65 = scmp.eq.s32.totalorder %s24, 0
      %p66 = por %p64, %p65
      %p67 = scmp.ne.s32.totalorder %s55, %s56
      %p68 = scmp.eq.s32.totalorder %s25, 3
      %p69 = por %p67, %p68
      %p71 = scmp.ne.s32.totalorder %s56, %s70
      %p72 = scmp.eq.s32.totalorder %s25, 0
      %p73 = por %p71, %p72
      %s75 = sadd.s32 %s74, 1
      %p78 = scmp.eq.s32.totalorder %s19, 3
      %p79 = scmp.ne.s32.totalorder %s74, %s76
      %p80 = scmp.eq.s32.totalorder %s19, 0
      %p81 = por %p79, %p80
      %p82 = scmp.ne.s32.totalorder %s74, %s76
      %p83 = scmp.eq.s32.totalorder %s24, 3
      %p84 = por %p82, %p83
      %p85 = scmp.ne.s32.totalorder %s76, %s77
      %p86 = scmp.eq.s32.totalorder %s24, 0
      %p87 = por %p85, %p86
      %p88 = scmp.ne.s32.totalorder %s76, %s77
      %p89 = scmp.eq.s32.totalorder %s25, 3
      %p90 = por %p88, %p89
      %p92 = scmp.ne.s32.totalorder %s77, %s91
      %p93 = scmp.eq.s32.totalorder %s25, 0
      %p94 = por %p92, %p93
      %s96 = sadd.s32 %s95, 1
      %p99 = scmp.eq.s32.totalorder %s19, 3
      %p100 = scmp.ne.s32.totalorder %s95, %s97
      %p101 = scmp.eq.s32.totalorder %s19, 0
      %p102 = por %p100, %p101
      %p103 = scmp.ne.s32.totalorder %s95, %s97
      %p104 = scmp.eq.s32.totalorder %s24, 3
      %p105 = por %p103, %p104
      %p106 = scmp.ne.s32.totalorder %s97, %s98
      %p107 = scmp.eq.s32.totalorder %s24, 0
      %p108 = por %p106, %p107
      %p109 = scmp.ne.s32.totalorder %s97, %s98
      %p110 = scmp.eq.s32.totalorder %s25, 3
      %p111 = por %p109, %p110
      %p113 = scmp.ne.s32.totalorder %s98, %s112
      %p114 = scmp.eq.s32.totalorder %s25, 0
      %p115 = por %p113, %p114
      %s117 = sadd.s32 %s116, 1
      %p120 = scmp.eq.s32.totalorder %s19, 3
      %p121 = scmp.ne.s32.totalorder %s116, %s118
      %p122 = scmp.eq.s32.totalorder %s19, 0
      %p123 = por %p121, %p122
      %p124 = scmp.ne.s32.totalorder %s116, %s118
      %p125 = scmp.eq.s32.totalorder %s24, 3
      %p126 = por %p124, %p125
      %p127 = scmp.ne.s32.totalorder %s118, %s119
      %p128 = scmp.eq.s32.totalorder %s24, 0
      %p129 = por %p127, %p128
      %p130 = scmp.ne.s32.totalorder %s118, %s119
      %p131 = scmp.eq.s32.totalorder %s25, 3
      %p132 = por %p130, %p131
      %p134 = scmp.ne.s32.totalorder %s119, %s133
      %p135 = scmp.eq.s32.totalorder %s25, 0
      %p136 = por %p134, %p135
      %s137 = ssub.s32 %s19, %s26
      %p138 = scmp.eq.s32.totalorder %s137, 0
      %s140 = sadd.s32 %s139, 1
      %s141 = scalar_select %p138, %s139, %s140
      %p144 = pneg %p138
      %p145 = scmp.eq.s32.totalorder %s19, 3
      %p146 = por %p144, %p145
      %p147 = scmp.ne.s32.totalorder %s139, %s142
      %p148 = scmp.eq.s32.totalorder %s19, 0
      %p149 = por %p147, %p148
      %p150 = scmp.ne.s32.totalorder %s139, %s142
      %p151 = scmp.eq.s32.totalorder %s24, 3
      %p152 = por %p150, %p151
      %p153 = scmp.ne.s32.totalorder %s142, %s143
      %p154 = scmp.eq.s32.totalorder %s24, 0
      %p155 = por %p153, %p154
      %p156 = scmp.ne.s32.totalorder %s142, %s143
      %p157 = scmp.eq.s32.totalorder %s25, 3
      %p158 = por %p156, %p157
      %p160 = scmp.ne.s32.totalorder %s143, %s159
      %p161 = scmp.eq.s32.totalorder %s25, 0
      %p162 = por %p160, %p161
      %p163 = scmp.le.s32.totalorder 1, %s19
      %p164 = scmp.lt.s32.totalorder %s19, 5
      %p165 = pnand %p163, %p164
      %p166 = pneg %p165
      // Predicated region
      $region9: #{tpu_custom_call.1} parent=5 // pred_check
        _
      $region10: #{tpu_custom_call.1} parent=5 // pred_check_branch
        %168 = sbr.rel (%p165) target = $region12
      $region11: #{tpu_custom_call.1} parent=5 // pred_region
        %s169 = ssub.s32 %s19, 1
        // Predicated region
        $region13: #{tpu_custom_call.1} parent=11 // pred_check
          %p170 = pneg %p66
        $region14: #{tpu_custom_call.1} parent=11 // pred_check_branch
          %172 = sbr.rel (%p170) target = $region16
        $region15: #{tpu_custom_call.1} parent=11 // pred_region
          %174 = vsyncadd [#allocation6], 0
          %s175 = sshll.u32 %s1, 4
          %s176 = int_to_ptr.hbm [resolvable:$true] %s175
          %s177 = sshll.u32 [#allocation5], 4
          %s178 = int_to_ptr.vmem [resolvable:$true] %s177
          %183 = dma.hbm_to_vmem [thread:$0]  %s176, 32768, %s178, [#allocation6], 256, 256, 16
        $region16: #{tpu_custom_call.1} parent=11 // pred_fallthru
          _
        // Predicated region
        $region17: #{tpu_custom_call.1} parent=11 // pred_check
          %p184 = pneg %p87
        $region18: #{tpu_custom_call.1} parent=11 // pred_check_branch
          %186 = sbr.rel (%p184) target = $region20
        $region19: #{tpu_custom_call.1} parent=11 // pred_region
          %188 = vsyncadd [#allocation6], 0
          %s190 = sshll.u32 %s2, 4
          %s191 = int_to_ptr.hbm [resolvable:$true] %s190
          %s192 = sshll.u32 [#allocation7], 4
          %s193 = int_to_ptr.vmem [resolvable:$true] %s192
          %195 = dma.hbm_to_vmem [thread:$0]  %s191, 64, %s193, [#allocation6]
        $region20: #{tpu_custom_call.1} parent=11 // pred_fallthru
          _
        // Predicated region
        $region21: #{tpu_custom_call.1} parent=11 // pred_check
          %p196 = pneg %p108
        $region22: #{tpu_custom_call.1} parent=11 // pred_check_branch
          %198 = sbr.rel (%p196) target = $region24
        $region23: #{tpu_custom_call.1} parent=11 // pred_region
          %200 = vsyncadd [#allocation9], 0
          %s201 = sshll.u32 %s3, 4
          %s202 = int_to_ptr.hbm [resolvable:$true] %s201
          %s203 = sshll.u32 [#allocation8], 4
          %s204 = int_to_ptr.vmem [resolvable:$true] %s203
          %209 = dma.hbm_to_vmem [thread:$0]  %s202, 4096, %s204, [#allocation9], 128, 128, 8
        $region24: #{tpu_custom_call.1} parent=11 // pred_fallthru
          _
        // Predicated region
        $region25: #{tpu_custom_call.1} parent=11 // pred_check
          %p210 = pneg %p129
        $region26: #{tpu_custom_call.1} parent=11 // pred_check_branch
          %212 = sbr.rel (%p210) target = $region28
        $region27: #{tpu_custom_call.1} parent=11 // pred_region
          %214 = vsyncadd [#allocation9], 0
          %s216 = sshll.u32 %s4, 4
          %s217 = int_to_ptr.hbm [resolvable:$true] %s216
          %s218 = sshll.u32 [#allocation10], 4
          %s219 = int_to_ptr.vmem [resolvable:$true] %s218
          %221 = dma.hbm_to_vmem [thread:$0]  %s217, 16, %s219, [#allocation9]
        $region28: #{tpu_custom_call.1} parent=11 // pred_fallthru
          _
      $region12: #{tpu_custom_call.1} parent=5 // pred_fallthru
        _
      %p222 = scmp.lt.s32.totalorder %s19, 4
      // Predicated region
      $region29: #{tpu_custom_call.1} parent=5 // pred_check
        %p223 = pneg %p222
      $region30: #{tpu_custom_call.1} parent=5 // pred_check_branch
        %225 = sbr.rel (%p223) target = $region32
      $region31: #{tpu_custom_call.1} parent=5 // pred_region
        // Predicated region
        $region33: #{tpu_custom_call.1} parent=31 // pred_check
          %p226 = pneg %p39
        $region34: #{tpu_custom_call.1} parent=31 // pred_check_branch
          %228 = sbr.rel (%p226) target = $region36
        $region35: #{tpu_custom_call.1} parent=31 // pred_region
          %s229 = sand.u32 %s29, 1
          %s230 = scalar_lea.sflag [#allocation3], %s229
          %s231 = sand.u32 %s29, 1
          %s232 = smul.addr %s231, 4096
          %s233 = scalar_lea.vmem [#allocation2], %s232
          %s234 = smul.u32 64, %s19
          %236 = vsyncadd %s230, 0
          %s237 = smul.addr %s234, 8
          %s238 = smul.addr %s237, 8
          %s239 = scalar_lea.hbm %s0, %s238
          %s240 = sshll.u32 %s239, 4
          %s241 = int_to_ptr.hbm [resolvable:$true] %s240
          %s242 = sshll.u32 %s233, 4
          %s243 = int_to_ptr.vmem [resolvable:$true] %s242
          %248 = dma.hbm_to_vmem [thread:$0]  %s241, 65536, %s243, %s230, 1024, 1024, 64
        $region36: #{tpu_custom_call.1} parent=31 // pred_fallthru
          _
      $region32: #{tpu_custom_call.1} parent=5 // pred_fallthru
        _
      %p249 = scmp.le.s32.totalorder 1, %s19
      %p250 = scmp.lt.s32.totalorder %s19, 5
      %p251 = pnand %p249, %p250
      %p252 = pneg %p251
      // Predicated region
      $region37: #{tpu_custom_call.1} parent=5 // pred_check
        _
      $region38: #{tpu_custom_call.1} parent=5 // pred_check_branch
        %254 = sbr.rel (%p251) target = $region40
      $region39: #{tpu_custom_call.1} parent=5 // pred_region
        %s255 = ssub.s32 %s19, 1
        %s256 = sand.u32 %s32, 1
        %s257 = scalar_lea.sflag [#allocation3], %s256
        %s258 = sand.u32 %s32, 1
        %s259 = smul.addr %s258, 4096
        %s260 = scalar_lea.vmem [#allocation2], %s259
        // Predicated region
        $region41: #{tpu_custom_call.1} parent=39 // pred_check
          %p261 = pneg %p45
        $region42: #{tpu_custom_call.1} parent=39 // pred_check_branch
          %263 = sbr.rel (%p261) target = $region44
        $region43: #{tpu_custom_call.1} parent=39 // pred_region
          %265 = dma.done %s257, 65536
        $region44: #{tpu_custom_call.1} parent=39 // pred_fallthru
          _
        // Predicated region
        $region45: #{tpu_custom_call.1} parent=39 // pred_check
          %p266 = pneg %p66
        $region46: #{tpu_custom_call.1} parent=39 // pred_check_branch
          %268 = sbr.rel (%p266) target = $region48
        $region47: #{tpu_custom_call.1} parent=39 // pred_region
          %270 = dma.done [#allocation6], 32768
        $region48: #{tpu_custom_call.1} parent=39 // pred_fallthru
          _
        // Predicated region
        $region49: #{tpu_custom_call.1} parent=39 // pred_check
          %p271 = pneg %p87
        $region50: #{tpu_custom_call.1} parent=39 // pred_check_branch
          %273 = sbr.rel (%p271) target = $region52
        $region51: #{tpu_custom_call.1} parent=39 // pred_region
          %275 = dma.done [#allocation6], 64
        $region52: #{tpu_custom_call.1} parent=39 // pred_fallthru
          _
        // Predicated region
        $region53: #{tpu_custom_call.1} parent=39 // pred_check
          %p276 = pneg %p108
        $region54: #{tpu_custom_call.1} parent=39 // pred_check_branch
          %278 = sbr.rel (%p276) target = $region56
        $region55: #{tpu_custom_call.1} parent=39 // pred_region
          %280 = dma.done [#allocation9], 4096
        $region56: #{tpu_custom_call.1} parent=39 // pred_fallthru
          _
        // Predicated region
        $region57: #{tpu_custom_call.1} parent=39 // pred_check
          %p281 = pneg %p129
        $region58: #{tpu_custom_call.1} parent=39 // pred_check_branch
          %283 = sbr.rel (%p281) target = $region60
        $region59: #{tpu_custom_call.1} parent=39 // pred_region
          %285 = dma.done [#allocation9], 16
        $region60: #{tpu_custom_call.1} parent=39 // pred_fallthru
          _
        %s286 = sand.u32 %s32, 1
        %s287 = scalar_lea.sflag [#allocation3], %s286
        %s288 = sand.u32 %s32, 1
        %s289 = smul.addr %s288, 4096
        %s290 = scalar_lea.vmem [#allocation2], %s289
        %p291 = pneg %p45
        %p292 = pneg %p42
        %p293 = pneg %p66
        %p294 = pneg %p63
        %p295 = pneg %p87
        %p296 = pneg %p84
        %p297 = pneg %p108
        %p298 = pneg %p105
        %p299 = pneg %p129
        %p300 = pneg %p126
        %p301 = pneg %p155
        %p302 = pneg %p152
        %s303 = sand.u32 %s142, 1
        %s304 = scalar_lea.sflag [#allocation4], %s303
        %s305 = sand.u32 %s142, 1
        %s306 = smul.addr %s305, 512
        %s307 = scalar_lea.vmem [#allocation11], %s306
        %s308 = smul.u32 64, %s24
        %s309 = smul.u32 64, %s24
        %v310 = vld [vmem:[%s260] sm:$0xff]
        %v311 = vld [vmem:[%s260 + $0x8] sm:$0xff]
        %v312 = vld [vmem:[%s260 + $0x10] sm:$0xff]
        %v313 = vld [vmem:[%s260 + $0x18] sm:$0xff]
        %v314 = vld [vmem:[%s260 + $0x20] sm:$0xff]
        %v315 = vld [vmem:[%s260 + $0x28] sm:$0xff]
        %v316 = vld [vmem:[%s260 + $0x30] sm:$0xff]
        %v317 = vld [vmem:[%s260 + $0x38] sm:$0xff]
        %v318 = vld [vmem:[%s260 + $0x40] sm:$0xff]
        %v319 = vld [vmem:[%s260 + $0x48] sm:$0xff]
        %v320 = vld [vmem:[%s260 + $0x50] sm:$0xff]
        %v321 = vld [vmem:[%s260 + $0x58] sm:$0xff]
        %v322 = vld [vmem:[%s260 + $0x60] sm:$0xff]
        %v323 = vld [vmem:[%s260 + $0x68] sm:$0xff]
        %v324 = vld [vmem:[%s260 + $0x70] sm:$0xff]
        %v325 = vld [vmem:[%s260 + $0x78] sm:$0xff]
        %v326 = vld [vmem:[%s260 + $0x80] sm:$0xff]
        %v327 = vld [vmem:[%s260 + $0x88] sm:$0xff]
        %v328 = vld [vmem:[%s260 + $0x90] sm:$0xff]
        %v329 = vld [vmem:[%s260 + $0x98] sm:$0xff]
        %v330 = vld [vmem:[%s260 + $0xa0] sm:$0xff]
        %v331 = vld [vmem:[%s260 + $0xa8] sm:$0xff]
        %v332 = vld [vmem:[%s260 + $0xb0] sm:$0xff]
        %v333 = vld [vmem:[%s260 + $0xb8] sm:$0xff]
        %v334 = vld [vmem:[%s260 + $0xc0] sm:$0xff]
        %v335 = vld [vmem:[%s260 + $0xc8] sm:$0xff]
        %v336 = vld [vmem:[%s260 + $0xd0] sm:$0xff]
        %v337 = vld [vmem:[%s260 + $0xd8] sm:$0xff]
        %v338 = vld [vmem:[%s260 + $0xe0] sm:$0xff]
        %v339 = vld [vmem:[%s260 + $0xe8] sm:$0xff]
        %v340 = vld [vmem:[%s260 + $0xf0] sm:$0xff]
        %v341 = vld [vmem:[%s260 + $0xf8] sm:$0xff]
        %v342 = vld [vmem:[%s260 + $0x100] sm:$0xff]
        %v343 = vld [vmem:[%s260 + $0x108] sm:$0xff]
        %v344 = vld [vmem:[%s260 + $0x110] sm:$0xff]
        %v345 = vld [vmem:[%s260 + $0x118] sm:$0xff]
        %v346 = vld [vmem:[%s260 + $0x120] sm:$0xff]
        %v347 = vld [vmem:[%s260 + $0x128] sm:$0xff]
        %v348 = vld [vmem:[%s260 + $0x130] sm:$0xff]
        %v349 = vld [vmem:[%s260 + $0x138] sm:$0xff]
        %v350 = vld [vmem:[%s260 + $0x140] sm:$0xff]
        %v351 = vld [vmem:[%s260 + $0x148] sm:$0xff]
        %v352 = vld [vmem:[%s260 + $0x150] sm:$0xff]
        %v353 = vld [vmem:[%s260 + $0x158] sm:$0xff]
        %v354 = vld [vmem:[%s260 + $0x160] sm:$0xff]
        %v355 = vld [vmem:[%s260 + $0x168] sm:$0xff]
        %v356 = vld [vmem:[%s260 + $0x170] sm:$0xff]
        %v357 = vld [vmem:[%s260 + $0x178] sm:$0xff]
        %v358 = vld [vmem:[%s260 + $0x180] sm:$0xff]
        %v359 = vld [vmem:[%s260 + $0x188] sm:$0xff]
        %v360 = vld [vmem:[%s260 + $0x190] sm:$0xff]
        %v361 = vld [vmem:[%s260 + $0x198] sm:$0xff]
        %v362 = vld [vmem:[%s260 + $0x1a0] sm:$0xff]
        %v363 = vld [vmem:[%s260 + $0x1a8] sm:$0xff]
        %v364 = vld [vmem:[%s260 + $0x1b0] sm:$0xff]
        %v365 = vld [vmem:[%s260 + $0x1b8] sm:$0xff]
        %v366 = vld [vmem:[%s260 + $0x1c0] sm:$0xff]
        %v367 = vld [vmem:[%s260 + $0x1c8] sm:$0xff]
        %v368 = vld [vmem:[%s260 + $0x1d0] sm:$0xff]
        %v369 = vld [vmem:[%s260 + $0x1d8] sm:$0xff]
        %v370 = vld [vmem:[%s260 + $0x1e0] sm:$0xff]
        %v371 = vld [vmem:[%s260 + $0x1e8] sm:$0xff]
        %v372 = vld [vmem:[%s260 + $0x1f0] sm:$0xff]
        %v373 = vld [vmem:[%s260 + $0x1f8] sm:$0xff]
        %v374 = vld [vmem:[%s260 + $0x200] sm:$0xff]
        %v375 = vld [vmem:[%s260 + $0x208] sm:$0xff]
        %v376 = vld [vmem:[%s260 + $0x210] sm:$0xff]
        %v377 = vld [vmem:[%s260 + $0x218] sm:$0xff]
        %v378 = vld [vmem:[%s260 + $0x220] sm:$0xff]
        %v379 = vld [vmem:[%s260 + $0x228] sm:$0xff]
        %v380 = vld [vmem:[%s260 + $0x230] sm:$0xff]
        %v381 = vld [vmem:[%s260 + $0x238] sm:$0xff]
        %v382 = vld [vmem:[%s260 + $0x240] sm:$0xff]
        %v383 = vld [vmem:[%s260 + $0x248] sm:$0xff]
        %v384 = vld [vmem:[%s260 + $0x250] sm:$0xff]
        %v385 = vld [vmem:[%s260 + $0x258] sm:$0xff]
        %v386 = vld [vmem:[%s260 + $0x260] sm:$0xff]
        %v387 = vld [vmem:[%s260 + $0x268] sm:$0xff]
        %v388 = vld [vmem:[%s260 + $0x270] sm:$0xff]
        %v389 = vld [vmem:[%s260 + $0x278] sm:$0xff]
        %v390 = vld [vmem:[%s260 + $0x280] sm:$0xff]
        %v391 = vld [vmem:[%s260 + $0x288] sm:$0xff]
        %v392 = vld [vmem:[%s260 + $0x290] sm:$0xff]
        %v393 = vld [vmem:[%s260 + $0x298] sm:$0xff]
        %v394 = vld [vmem:[%s260 + $0x2a0] sm:$0xff]
        %v395 = vld [vmem:[%s260 + $0x2a8] sm:$0xff]
        %v396 = vld [vmem:[%s260 + $0x2b0] sm:$0xff]
        %v397 = vld [vmem:[%s260 + $0x2b8] sm:$0xff]
        %v398 = vld [vmem:[%s260 + $0x2c0] sm:$0xff]
        %v399 = vld [vmem:[%s260 + $0x2c8] sm:$0xff]
        %v400 = vld [vmem:[%s260 + $0x2d0] sm:$0xff]
        %v401 = vld [vmem:[%s260 + $0x2d8] sm:$0xff]
        %v402 = vld [vmem:[%s260 + $0x2e0] sm:$0xff]
        %v403 = vld [vmem:[%s260 + $0x2e8] sm:$0xff]
        %v404 = vld [vmem:[%s260 + $0x2f0] sm:$0xff]
        %v405 = vld [vmem:[%s260 + $0x2f8] sm:$0xff]
        %v406 = vld [vmem:[%s260 + $0x300] sm:$0xff]
        %v407 = vld [vmem:[%s260 + $0x308] sm:$0xff]
        %v408 = vld [vmem:[%s260 + $0x310] sm:$0xff]
        %v409 = vld [vmem:[%s260 + $0x318] sm:$0xff]
        %v410 = vld [vmem:[%s260 + $0x320] sm:$0xff]
        %v411 = vld [vmem:[%s260 + $0x328] sm:$0xff]
        %v412 = vld [vmem:[%s260 + $0x330] sm:$0xff]
        %v413 = vld [vmem:[%s260 + $0x338] sm:$0xff]
        %v414 = vld [vmem:[%s260 + $0x340] sm:$0xff]
        %v415 = vld [vmem:[%s260 + $0x348] sm:$0xff]
        %v416 = vld [vmem:[%s260 + $0x350] sm:$0xff]
        %v417 = vld [vmem:[%s260 + $0x358] sm:$0xff]
        %v418 = vld [vmem:[%s260 + $0x360] sm:$0xff]
        %v419 = vld [vmem:[%s260 + $0x368] sm:$0xff]
        %v420 = vld [vmem:[%s260 + $0x370] sm:$0xff]
        %v421 = vld [vmem:[%s260 + $0x378] sm:$0xff]
        %v422 = vld [vmem:[%s260 + $0x380] sm:$0xff]
        %v423 = vld [vmem:[%s260 + $0x388] sm:$0xff]
        %v424 = vld [vmem:[%s260 + $0x390] sm:$0xff]
        %v425 = vld [vmem:[%s260 + $0x398] sm:$0xff]
        %v426 = vld [vmem:[%s260 + $0x3a0] sm:$0xff]
        %v427 = vld [vmem:[%s260 + $0x3a8] sm:$0xff]
        %v428 = vld [vmem:[%s260 + $0x3b0] sm:$0xff]
        %v429 = vld [vmem:[%s260 + $0x3b8] sm:$0xff]
        %v430 = vld [vmem:[%s260 + $0x3c0] sm:$0xff]
        %v431 = vld [vmem:[%s260 + $0x3c8] sm:$0xff]
        %v432 = vld [vmem:[%s260 + $0x3d0] sm:$0xff]
        %v433 = vld [vmem:[%s260 + $0x3d8] sm:$0xff]
        %v434 = vld [vmem:[%s260 + $0x3e0] sm:$0xff]
        %v435 = vld [vmem:[%s260 + $0x3e8] sm:$0xff]
        %v436 = vld [vmem:[%s260 + $0x3f0] sm:$0xff]
        %v437 = vld [vmem:[%s260 + $0x3f8] sm:$0xff]
        %v438 = vld [vmem:[%s260 + $0x400] sm:$0xff]
        %v439 = vld [vmem:[%s260 + $0x408] sm:$0xff]
        %v440 = vld [vmem:[%s260 + $0x410] sm:$0xff]
        %v441 = vld [vmem:[%s260 + $0x418] sm:$0xff]
        %v442 = vld [vmem:[%s260 + $0x420] sm:$0xff]
        %v443 = vld [vmem:[%s260 + $0x428] sm:$0xff]
        %v444 = vld [vmem:[%s260 + $0x430] sm:$0xff]
        %v445 = vld [vmem:[%s260 + $0x438] sm:$0xff]
        %v446 = vld [vmem:[%s260 + $0x440] sm:$0xff]
        %v447 = vld [vmem:[%s260 + $0x448] sm:$0xff]
        %v448 = vld [vmem:[%s260 + $0x450] sm:$0xff]
        %v449 = vld [vmem:[%s260 + $0x458] sm:$0xff]
        %v450 = vld [vmem:[%s260 + $0x460] sm:$0xff]
        %v451 = vld [vmem:[%s260 + $0x468] sm:$0xff]
        %v452 = vld [vmem:[%s260 + $0x470] sm:$0xff]
        %v453 = vld [vmem:[%s260 + $0x478] sm:$0xff]
        %v454 = vld [vmem:[%s260 + $0x480] sm:$0xff]
        %v455 = vld [vmem:[%s260 + $0x488] sm:$0xff]
        %v456 = vld [vmem:[%s260 + $0x490] sm:$0xff]
        %v457 = vld [vmem:[%s260 + $0x498] sm:$0xff]
        %v458 = vld [vmem:[%s260 + $0x4a0] sm:$0xff]
        %v459 = vld [vmem:[%s260 + $0x4a8] sm:$0xff]
        %v460 = vld [vmem:[%s260 + $0x4b0] sm:$0xff]
        %v461 = vld [vmem:[%s260 + $0x4b8] sm:$0xff]
        %v462 = vld [vmem:[%s260 + $0x4c0] sm:$0xff]
        %v463 = vld [vmem:[%s260 + $0x4c8] sm:$0xff]
        %v464 = vld [vmem:[%s260 + $0x4d0] sm:$0xff]
        %v465 = vld [vmem:[%s260 + $0x4d8] sm:$0xff]
        %v466 = vld [vmem:[%s260 + $0x4e0] sm:$0xff]
        %v467 = vld [vmem:[%s260 + $0x4e8] sm:$0xff]
        %v468 = vld [vmem:[%s260 + $0x4f0] sm:$0xff]
        %v469 = vld [vmem:[%s260 + $0x4f8] sm:$0xff]
        %v470 = vld [vmem:[%s260 + $0x500] sm:$0xff]
        %v471 = vld [vmem:[%s260 + $0x508] sm:$0xff]
        %v472 = vld [vmem:[%s260 + $0x510] sm:$0xff]
        %v473 = vld [vmem:[%s260 + $0x518] sm:$0xff]
        %v474 = vld [vmem:[%s260 + $0x520] sm:$0xff]
        %v475 = vld [vmem:[%s260 + $0x528] sm:$0xff]
        %v476 = vld [vmem:[%s260 + $0x530] sm:$0xff]
        %v477 = vld [vmem:[%s260 + $0x538] sm:$0xff]
        %v478 = vld [vmem:[%s260 + $0x540] sm:$0xff]
        %v479 = vld [vmem:[%s260 + $0x548] sm:$0xff]
        %v480 = vld [vmem:[%s260 + $0x550] sm:$0xff]
        %v481 = vld [vmem:[%s260 + $0x558] sm:$0xff]
        %v482 = vld [vmem:[%s260 + $0x560] sm:$0xff]
        %v483 = vld [vmem:[%s260 + $0x568] sm:$0xff]
        %v484 = vld [vmem:[%s260 + $0x570] sm:$0xff]
        %v485 = vld [vmem:[%s260 + $0x578] sm:$0xff]
        %v486 = vld [vmem:[%s260 + $0x580] sm:$0xff]
        %v487 = vld [vmem:[%s260 + $0x588] sm:$0xff]
        %v488 = vld [vmem:[%s260 + $0x590] sm:$0xff]
        %v489 = vld [vmem:[%s260 + $0x598] sm:$0xff]
        %v490 = vld [vmem:[%s260 + $0x5a0] sm:$0xff]
        %v491 = vld [vmem:[%s260 + $0x5a8] sm:$0xff]
        %v492 = vld [vmem:[%s260 + $0x5b0] sm:$0xff]
        %v493 = vld [vmem:[%s260 + $0x5b8] sm:$0xff]
        %v494 = vld [vmem:[%s260 + $0x5c0] sm:$0xff]
        %v495 = vld [vmem:[%s260 + $0x5c8] sm:$0xff]
        %v496 = vld [vmem:[%s260 + $0x5d0] sm:$0xff]
        %v497 = vld [vmem:[%s260 + $0x5d8] sm:$0xff]
        %v498 = vld [vmem:[%s260 + $0x5e0] sm:$0xff]
        %v499 = vld [vmem:[%s260 + $0x5e8] sm:$0xff]
        %v500 = vld [vmem:[%s260 + $0x5f0] sm:$0xff]
        %v501 = vld [vmem:[%s260 + $0x5f8] sm:$0xff]
        %v502 = vld [vmem:[%s260 + $0x600] sm:$0xff]
        %v503 = vld [vmem:[%s260 + $0x608] sm:$0xff]
        %v504 = vld [vmem:[%s260 + $0x610] sm:$0xff]
        %v505 = vld [vmem:[%s260 + $0x618] sm:$0xff]
        %v506 = vld [vmem:[%s260 + $0x620] sm:$0xff]
        %v507 = vld [vmem:[%s260 + $0x628] sm:$0xff]
        %v508 = vld [vmem:[%s260 + $0x630] sm:$0xff]
        %v509 = vld [vmem:[%s260 + $0x638] sm:$0xff]
        %v510 = vld [vmem:[%s260 + $0x640] sm:$0xff]
        %v511 = vld [vmem:[%s260 + $0x648] sm:$0xff]
        %v512 = vld [vmem:[%s260 + $0x650] sm:$0xff]
        %v513 = vld [vmem:[%s260 + $0x658] sm:$0xff]
        %v514 = vld [vmem:[%s260 + $0x660] sm:$0xff]
        %v515 = vld [vmem:[%s260 + $0x668] sm:$0xff]
        %v516 = vld [vmem:[%s260 + $0x670] sm:$0xff]
        %v517 = vld [vmem:[%s260 + $0x678] sm:$0xff]
        %v518 = vld [vmem:[%s260 + $0x680] sm:$0xff]
        %v519 = vld [vmem:[%s260 + $0x688] sm:$0xff]
        %v520 = vld [vmem:[%s260 + $0x690] sm:$0xff]
        %v521 = vld [vmem:[%s260 + $0x698] sm:$0xff]
        %v522 = vld [vmem:[%s260 + $0x6a0] sm:$0xff]
        %v523 = vld [vmem:[%s260 + $0x6a8] sm:$0xff]
        %v524 = vld [vmem:[%s260 + $0x6b0] sm:$0xff]
        %v525 = vld [vmem:[%s260 + $0x6b8] sm:$0xff]
        %v526 = vld [vmem:[%s260 + $0x6c0] sm:$0xff]
        %v527 = vld [vmem:[%s260 + $0x6c8] sm:$0xff]
        %v528 = vld [vmem:[%s260 + $0x6d0] sm:$0xff]
        %v529 = vld [vmem:[%s260 + $0x6d8] sm:$0xff]
        %v530 = vld [vmem:[%s260 + $0x6e0] sm:$0xff]
        %v531 = vld [vmem:[%s260 + $0x6e8] sm:$0xff]
        %v532 = vld [vmem:[%s260 + $0x6f0] sm:$0xff]
        %v533 = vld [vmem:[%s260 + $0x6f8] sm:$0xff]
        %v534 = vld [vmem:[%s260 + $0x700] sm:$0xff]
        %v535 = vld [vmem:[%s260 + $0x708] sm:$0xff]
        %v536 = vld [vmem:[%s260 + $0x710] sm:$0xff]
        %v537 = vld [vmem:[%s260 + $0x718] sm:$0xff]
        %v538 = vld [vmem:[%s260 + $0x720] sm:$0xff]
        %v539 = vld [vmem:[%s260 + $0x728] sm:$0xff]
        %v540 = vld [vmem:[%s260 + $0x730] sm:$0xff]
        %v541 = vld [vmem:[%s260 + $0x738] sm:$0xff]
        %v542 = vld [vmem:[%s260 + $0x740] sm:$0xff]
        %v543 = vld [vmem:[%s260 + $0x748] sm:$0xff]
        %v544 = vld [vmem:[%s260 + $0x750] sm:$0xff]
        %v545 = vld [vmem:[%s260 + $0x758] sm:$0xff]
        %v546 = vld [vmem:[%s260 + $0x760] sm:$0xff]
        %v547 = vld [vmem:[%s260 + $0x768] sm:$0xff]
        %v548 = vld [vmem:[%s260 + $0x770] sm:$0xff]
        %v549 = vld [vmem:[%s260 + $0x778] sm:$0xff]
        %v550 = vld [vmem:[%s260 + $0x780] sm:$0xff]
        %v551 = vld [vmem:[%s260 + $0x788] sm:$0xff]
        %v552 = vld [vmem:[%s260 + $0x790] sm:$0xff]
        %v553 = vld [vmem:[%s260 + $0x798] sm:$0xff]
        %v554 = vld [vmem:[%s260 + $0x7a0] sm:$0xff]
        %v555 = vld [vmem:[%s260 + $0x7a8] sm:$0xff]
        %v556 = vld [vmem:[%s260 + $0x7b0] sm:$0xff]
        %v557 = vld [vmem:[%s260 + $0x7b8] sm:$0xff]
        %v558 = vld [vmem:[%s260 + $0x7c0] sm:$0xff]
        %v559 = vld [vmem:[%s260 + $0x7c8] sm:$0xff]
        %v560 = vld [vmem:[%s260 + $0x7d0] sm:$0xff]
        %v561 = vld [vmem:[%s260 + $0x7d8] sm:$0xff]
        %v562 = vld [vmem:[%s260 + $0x7e0] sm:$0xff]
        %v563 = vld [vmem:[%s260 + $0x7e8] sm:$0xff]
        %v564 = vld [vmem:[%s260 + $0x7f0] sm:$0xff]
        %v565 = vld [vmem:[%s260 + $0x7f8] sm:$0xff]
        %v566 = vld [vmem:[%s260 + $0x800] sm:$0xff]
        %v567 = vld [vmem:[%s260 + $0x808] sm:$0xff]
        %v568 = vld [vmem:[%s260 + $0x810] sm:$0xff]
        %v569 = vld [vmem:[%s260 + $0x818] sm:$0xff]
        %v570 = vld [vmem:[%s260 + $0x820] sm:$0xff]
        %v571 = vld [vmem:[%s260 + $0x828] sm:$0xff]
        %v572 = vld [vmem:[%s260 + $0x830] sm:$0xff]
        %v573 = vld [vmem:[%s260 + $0x838] sm:$0xff]
        %v574 = vld [vmem:[%s260 + $0x840] sm:$0xff]
        %v575 = vld [vmem:[%s260 + $0x848] sm:$0xff]
        %v576 = vld [vmem:[%s260 + $0x850] sm:$0xff]
        %v577 = vld [vmem:[%s260 + $0x858] sm:$0xff]
        %v578 = vld [vmem:[%s260 + $0x860] sm:$0xff]
        %v579 = vld [vmem:[%s260 + $0x868] sm:$0xff]
        %v580 = vld [vmem:[%s260 + $0x870] sm:$0xff]
        %v581 = vld [vmem:[%s260 + $0x878] sm:$0xff]
        %v582 = vld [vmem:[%s260 + $0x880] sm:$0xff]
        %v583 = vld [vmem:[%s260 + $0x888] sm:$0xff]
        %v584 = vld [vmem:[%s260 + $0x890] sm:$0xff]
        %v585 = vld [vmem:[%s260 + $0x898] sm:$0xff]
        %v586 = vld [vmem:[%s260 + $0x8a0] sm:$0xff]
        %v587 = vld [vmem:[%s260 + $0x8a8] sm:$0xff]
        %v588 = vld [vmem:[%s260 + $0x8b0] sm:$0xff]
        %v589 = vld [vmem:[%s260 + $0x8b8] sm:$0xff]
        %v590 = vld [vmem:[%s260 + $0x8c0] sm:$0xff]
        %v591 = vld [vmem:[%s260 + $0x8c8] sm:$0xff]
        %v592 = vld [vmem:[%s260 + $0x8d0] sm:$0xff]
        %v593 = vld [vmem:[%s260 + $0x8d8] sm:$0xff]
        %v594 = vld [vmem:[%s260 + $0x8e0] sm:$0xff]
        %v595 = vld [vmem:[%s260 + $0x8e8] sm:$0xff]
        %v596 = vld [vmem:[%s260 + $0x8f0] sm:$0xff]
        %v597 = vld [vmem:[%s260 + $0x8f8] sm:$0xff]
        %v598 = vld [vmem:[%s260 + $0x900] sm:$0xff]
        %v599 = vld [vmem:[%s260 + $0x908] sm:$0xff]
        %v600 = vld [vmem:[%s260 + $0x910] sm:$0xff]
        %v601 = vld [vmem:[%s260 + $0x918] sm:$0xff]
        %v602 = vld [vmem:[%s260 + $0x920] sm:$0xff]
        %v603 = vld [vmem:[%s260 + $0x928] sm:$0xff]
        %v604 = vld [vmem:[%s260 + $0x930] sm:$0xff]
        %v605 = vld [vmem:[%s260 + $0x938] sm:$0xff]
        %v606 = vld [vmem:[%s260 + $0x940] sm:$0xff]
        %v607 = vld [vmem:[%s260 + $0x948] sm:$0xff]
        %v608 = vld [vmem:[%s260 + $0x950] sm:$0xff]
        %v609 = vld [vmem:[%s260 + $0x958] sm:$0xff]
        %v610 = vld [vmem:[%s260 + $0x960] sm:$0xff]
        %v611 = vld [vmem:[%s260 + $0x968] sm:$0xff]
        %v612 = vld [vmem:[%s260 + $0x970] sm:$0xff]
        %v613 = vld [vmem:[%s260 + $0x978] sm:$0xff]
        %v614 = vld [vmem:[%s260 + $0x980] sm:$0xff]
        %v615 = vld [vmem:[%s260 + $0x988] sm:$0xff]
        %v616 = vld [vmem:[%s260 + $0x990] sm:$0xff]
        %v617 = vld [vmem:[%s260 + $0x998] sm:$0xff]
        %v618 = vld [vmem:[%s260 + $0x9a0] sm:$0xff]
        %v619 = vld [vmem:[%s260 + $0x9a8] sm:$0xff]
        %v620 = vld [vmem:[%s260 + $0x9b0] sm:$0xff]
        %v621 = vld [vmem:[%s260 + $0x9b8] sm:$0xff]
        %v622 = vld [vmem:[%s260 + $0x9c0] sm:$0xff]
        %v623 = vld [vmem:[%s260 + $0x9c8] sm:$0xff]
        %v624 = vld [vmem:[%s260 + $0x9d0] sm:$0xff]
        %v625 = vld [vmem:[%s260 + $0x9d8] sm:$0xff]
        %v626 = vld [vmem:[%s260 + $0x9e0] sm:$0xff]
        %v627 = vld [vmem:[%s260 + $0x9e8] sm:$0xff]
        %v628 = vld [vmem:[%s260 + $0x9f0] sm:$0xff]
        %v629 = vld [vmem:[%s260 + $0x9f8] sm:$0xff]
        %v630 = vld [vmem:[%s260 + $0xa00] sm:$0xff]
        %v631 = vld [vmem:[%s260 + $0xa08] sm:$0xff]
        %v632 = vld [vmem:[%s260 + $0xa10] sm:$0xff]
        %v633 = vld [vmem:[%s260 + $0xa18] sm:$0xff]
        %v634 = vld [vmem:[%s260 + $0xa20] sm:$0xff]
        %v635 = vld [vmem:[%s260 + $0xa28] sm:$0xff]
        %v636 = vld [vmem:[%s260 + $0xa30] sm:$0xff]
        %v637 = vld [vmem:[%s260 + $0xa38] sm:$0xff]
        %v638 = vld [vmem:[%s260 + $0xa40] sm:$0xff]
        %v639 = vld [vmem:[%s260 + $0xa48] sm:$0xff]
        %v640 = vld [vmem:[%s260 + $0xa50] sm:$0xff]
        %v641 = vld [vmem:[%s260 + $0xa58] sm:$0xff]
        %v642 = vld [vmem:[%s260 + $0xa60] sm:$0xff]
        %v643 = vld [vmem:[%s260 + $0xa68] sm:$0xff]
        %v644 = vld [vmem:[%s260 + $0xa70] sm:$0xff]
        %v645 = vld [vmem:[%s260 + $0xa78] sm:$0xff]
        %v646 = vld [vmem:[%s260 + $0xa80] sm:$0xff]
        %v647 = vld [vmem:[%s260 + $0xa88] sm:$0xff]
        %v648 = vld [vmem:[%s260 + $0xa90] sm:$0xff]
        %v649 = vld [vmem:[%s260 + $0xa98] sm:$0xff]
        %v650 = vld [vmem:[%s260 + $0xaa0] sm:$0xff]
        %v651 = vld [vmem:[%s260 + $0xaa8] sm:$0xff]
        %v652 = vld [vmem:[%s260 + $0xab0] sm:$0xff]
        %v653 = vld [vmem:[%s260 + $0xab8] sm:$0xff]
        %v654 = vld [vmem:[%s260 + $0xac0] sm:$0xff]
        %v655 = vld [vmem:[%s260 + $0xac8] sm:$0xff]
        %v656 = vld [vmem:[%s260 + $0xad0] sm:$0xff]
        %v657 = vld [vmem:[%s260 + $0xad8] sm:$0xff]
        %v658 = vld [vmem:[%s260 + $0xae0] sm:$0xff]
        %v659 = vld [vmem:[%s260 + $0xae8] sm:$0xff]
        %v660 = vld [vmem:[%s260 + $0xaf0] sm:$0xff]
        %v661 = vld [vmem:[%s260 + $0xaf8] sm:$0xff]
        %v662 = vld [vmem:[%s260 + $0xb00] sm:$0xff]
        %v663 = vld [vmem:[%s260 + $0xb08] sm:$0xff]
        %v664 = vld [vmem:[%s260 + $0xb10] sm:$0xff]
        %v665 = vld [vmem:[%s260 + $0xb18] sm:$0xff]
        %v666 = vld [vmem:[%s260 + $0xb20] sm:$0xff]
        %v667 = vld [vmem:[%s260 + $0xb28] sm:$0xff]
        %v668 = vld [vmem:[%s260 + $0xb30] sm:$0xff]
        %v669 = vld [vmem:[%s260 + $0xb38] sm:$0xff]
        %v670 = vld [vmem:[%s260 + $0xb40] sm:$0xff]
        %v671 = vld [vmem:[%s260 + $0xb48] sm:$0xff]
        %v672 = vld [vmem:[%s260 + $0xb50] sm:$0xff]
        %v673 = vld [vmem:[%s260 + $0xb58] sm:$0xff]
        %v674 = vld [vmem:[%s260 + $0xb60] sm:$0xff]
        %v675 = vld [vmem:[%s260 + $0xb68] sm:$0xff]
        %v676 = vld [vmem:[%s260 + $0xb70] sm:$0xff]
        %v677 = vld [vmem:[%s260 + $0xb78] sm:$0xff]
        %v678 = vld [vmem:[%s260 + $0xb80] sm:$0xff]
        %v679 = vld [vmem:[%s260 + $0xb88] sm:$0xff]
        %v680 = vld [vmem:[%s260 + $0xb90] sm:$0xff]
        %v681 = vld [vmem:[%s260 + $0xb98] sm:$0xff]
        %v682 = vld [vmem:[%s260 + $0xba0] sm:$0xff]
        %v683 = vld [vmem:[%s260 + $0xba8] sm:$0xff]
        %v684 = vld [vmem:[%s260 + $0xbb0] sm:$0xff]
        %v685 = vld [vmem:[%s260 + $0xbb8] sm:$0xff]
        %v686 = vld [vmem:[%s260 + $0xbc0] sm:$0xff]
        %v687 = vld [vmem:[%s260 + $0xbc8] sm:$0xff]
        %v688 = vld [vmem:[%s260 + $0xbd0] sm:$0xff]
        %v689 = vld [vmem:[%s260 + $0xbd8] sm:$0xff]
        %v690 = vld [vmem:[%s260 + $0xbe0] sm:$0xff]
        %v691 = vld [vmem:[%s260 + $0xbe8] sm:$0xff]
        %v692 = vld [vmem:[%s260 + $0xbf0] sm:$0xff]
        %v693 = vld [vmem:[%s260 + $0xbf8] sm:$0xff]
        %v694 = vld [vmem:[%s260 + $0xc00] sm:$0xff]
        %v695 = vld [vmem:[%s260 + $0xc08] sm:$0xff]
        %v696 = vld [vmem:[%s260 + $0xc10] sm:$0xff]
        %v697 = vld [vmem:[%s260 + $0xc18] sm:$0xff]
        %v698 = vld [vmem:[%s260 + $0xc20] sm:$0xff]
        %v699 = vld [vmem:[%s260 + $0xc28] sm:$0xff]
        %v700 = vld [vmem:[%s260 + $0xc30] sm:$0xff]
        %v701 = vld [vmem:[%s260 + $0xc38] sm:$0xff]
        %v702 = vld [vmem:[%s260 + $0xc40] sm:$0xff]
        %v703 = vld [vmem:[%s260 + $0xc48] sm:$0xff]
        %v704 = vld [vmem:[%s260 + $0xc50] sm:$0xff]
        %v705 = vld [vmem:[%s260 + $0xc58] sm:$0xff]
        %v706 = vld [vmem:[%s260 + $0xc60] sm:$0xff]
        %v707 = vld [vmem:[%s260 + $0xc68] sm:$0xff]
        %v708 = vld [vmem:[%s260 + $0xc70] sm:$0xff]
        %v709 = vld [vmem:[%s260 + $0xc78] sm:$0xff]
        %v710 = vld [vmem:[%s260 + $0xc80] sm:$0xff]
        %v711 = vld [vmem:[%s260 + $0xc88] sm:$0xff]
        %v712 = vld [vmem:[%s260 + $0xc90] sm:$0xff]
        %v713 = vld [vmem:[%s260 + $0xc98] sm:$0xff]
        %v714 = vld [vmem:[%s260 + $0xca0] sm:$0xff]
        %v715 = vld [vmem:[%s260 + $0xca8] sm:$0xff]
        %v716 = vld [vmem:[%s260 + $0xcb0] sm:$0xff]
        %v717 = vld [vmem:[%s260 + $0xcb8] sm:$0xff]
        %v718 = vld [vmem:[%s260 + $0xcc0] sm:$0xff]
        %v719 = vld [vmem:[%s260 + $0xcc8] sm:$0xff]
        %v720 = vld [vmem:[%s260 + $0xcd0] sm:$0xff]
        %v721 = vld [vmem:[%s260 + $0xcd8] sm:$0xff]
        %v722 = vld [vmem:[%s260 + $0xce0] sm:$0xff]
        %v723 = vld [vmem:[%s260 + $0xce8] sm:$0xff]
        %v724 = vld [vmem:[%s260 + $0xcf0] sm:$0xff]
        %v725 = vld [vmem:[%s260 + $0xcf8] sm:$0xff]
        %v726 = vld [vmem:[%s260 + $0xd00] sm:$0xff]
        %v727 = vld [vmem:[%s260 + $0xd08] sm:$0xff]
        %v728 = vld [vmem:[%s260 + $0xd10] sm:$0xff]
        %v729 = vld [vmem:[%s260 + $0xd18] sm:$0xff]
        %v730 = vld [vmem:[%s260 + $0xd20] sm:$0xff]
        %v731 = vld [vmem:[%s260 + $0xd28] sm:$0xff]
        %v732 = vld [vmem:[%s260 + $0xd30] sm:$0xff]
        %v733 = vld [vmem:[%s260 + $0xd38] sm:$0xff]
        %v734 = vld [vmem:[%s260 + $0xd40] sm:$0xff]
        %v735 = vld [vmem:[%s260 + $0xd48] sm:$0xff]
        %v736 = vld [vmem:[%s260 + $0xd50] sm:$0xff]
        %v737 = vld [vmem:[%s260 + $0xd58] sm:$0xff]
        %v738 = vld [vmem:[%s260 + $0xd60] sm:$0xff]
        %v739 = vld [vmem:[%s260 + $0xd68] sm:$0xff]
        %v740 = vld [vmem:[%s260 + $0xd70] sm:$0xff]
        %v741 = vld [vmem:[%s260 + $0xd78] sm:$0xff]
        %v742 = vld [vmem:[%s260 + $0xd80] sm:$0xff]
        %v743 = vld [vmem:[%s260 + $0xd88] sm:$0xff]
        %v744 = vld [vmem:[%s260 + $0xd90] sm:$0xff]
        %v745 = vld [vmem:[%s260 + $0xd98] sm:$0xff]
        %v746 = vld [vmem:[%s260 + $0xda0] sm:$0xff]
        %v747 = vld [vmem:[%s260 + $0xda8] sm:$0xff]
        %v748 = vld [vmem:[%s260 + $0xdb0] sm:$0xff]
        %v749 = vld [vmem:[%s260 + $0xdb8] sm:$0xff]
        %v750 = vld [vmem:[%s260 + $0xdc0] sm:$0xff]
        %v751 = vld [vmem:[%s260 + $0xdc8] sm:$0xff]
        %v752 = vld [vmem:[%s260 + $0xdd0] sm:$0xff]
        %v753 = vld [vmem:[%s260 + $0xdd8] sm:$0xff]
        %v754 = vld [vmem:[%s260 + $0xde0] sm:$0xff]
        %v755 = vld [vmem:[%s260 + $0xde8] sm:$0xff]
        %v756 = vld [vmem:[%s260 + $0xdf0] sm:$0xff]
        %v757 = vld [vmem:[%s260 + $0xdf8] sm:$0xff]
        %v758 = vld [vmem:[%s260 + $0xe00] sm:$0xff]
        %v759 = vld [vmem:[%s260 + $0xe08] sm:$0xff]
        %v760 = vld [vmem:[%s260 + $0xe10] sm:$0xff]
        %v761 = vld [vmem:[%s260 + $0xe18] sm:$0xff]
        %v762 = vld [vmem:[%s260 + $0xe20] sm:$0xff]
        %v763 = vld [vmem:[%s260 + $0xe28] sm:$0xff]
        %v764 = vld [vmem:[%s260 + $0xe30] sm:$0xff]
        %v765 = vld [vmem:[%s260 + $0xe38] sm:$0xff]
        %v766 = vld [vmem:[%s260 + $0xe40] sm:$0xff]
        %v767 = vld [vmem:[%s260 + $0xe48] sm:$0xff]
        %v768 = vld [vmem:[%s260 + $0xe50] sm:$0xff]
        %v769 = vld [vmem:[%s260 + $0xe58] sm:$0xff]
        %v770 = vld [vmem:[%s260 + $0xe60] sm:$0xff]
        %v771 = vld [vmem:[%s260 + $0xe68] sm:$0xff]
        %v772 = vld [vmem:[%s260 + $0xe70] sm:$0xff]
        %v773 = vld [vmem:[%s260 + $0xe78] sm:$0xff]
        %v774 = vld [vmem:[%s260 + $0xe80] sm:$0xff]
        %v775 = vld [vmem:[%s260 + $0xe88] sm:$0xff]
        %v776 = vld [vmem:[%s260 + $0xe90] sm:$0xff]
        %v777 = vld [vmem:[%s260 + $0xe98] sm:$0xff]
        %v778 = vld [vmem:[%s260 + $0xea0] sm:$0xff]
        %v779 = vld [vmem:[%s260 + $0xea8] sm:$0xff]
        %v780 = vld [vmem:[%s260 + $0xeb0] sm:$0xff]
        %v781 = vld [vmem:[%s260 + $0xeb8] sm:$0xff]
        %v782 = vld [vmem:[%s260 + $0xec0] sm:$0xff]
        %v783 = vld [vmem:[%s260 + $0xec8] sm:$0xff]
        %v784 = vld [vmem:[%s260 + $0xed0] sm:$0xff]
        %v785 = vld [vmem:[%s260 + $0xed8] sm:$0xff]
        %v786 = vld [vmem:[%s260 + $0xee0] sm:$0xff]
        %v787 = vld [vmem:[%s260 + $0xee8] sm:$0xff]
        %v788 = vld [vmem:[%s260 + $0xef0] sm:$0xff]
        %v789 = vld [vmem:[%s260 + $0xef8] sm:$0xff]
        %v790 = vld [vmem:[%s260 + $0xf00] sm:$0xff]
        %v791 = vld [vmem:[%s260 + $0xf08] sm:$0xff]
        %v792 = vld [vmem:[%s260 + $0xf10] sm:$0xff]
        %v793 = vld [vmem:[%s260 + $0xf18] sm:$0xff]
        %v794 = vld [vmem:[%s260 + $0xf20] sm:$0xff]
        %v795 = vld [vmem:[%s260 + $0xf28] sm:$0xff]
        %v796 = vld [vmem:[%s260 + $0xf30] sm:$0xff]
        %v797 = vld [vmem:[%s260 + $0xf38] sm:$0xff]
        %v798 = vld [vmem:[%s260 + $0xf40] sm:$0xff]
        %v799 = vld [vmem:[%s260 + $0xf48] sm:$0xff]
        %v800 = vld [vmem:[%s260 + $0xf50] sm:$0xff]
        %v801 = vld [vmem:[%s260 + $0xf58] sm:$0xff]
        %v802 = vld [vmem:[%s260 + $0xf60] sm:$0xff]
        %v803 = vld [vmem:[%s260 + $0xf68] sm:$0xff]
        %v804 = vld [vmem:[%s260 + $0xf70] sm:$0xff]
        %v805 = vld [vmem:[%s260 + $0xf78] sm:$0xff]
        %v806 = vld [vmem:[%s260 + $0xf80] sm:$0xff]
        %v807 = vld [vmem:[%s260 + $0xf88] sm:$0xff]
        %v808 = vld [vmem:[%s260 + $0xf90] sm:$0xff]
        %v809 = vld [vmem:[%s260 + $0xf98] sm:$0xff]
        %v810 = vld [vmem:[%s260 + $0xfa0] sm:$0xff]
        %v811 = vld [vmem:[%s260 + $0xfa8] sm:$0xff]
        %v812 = vld [vmem:[%s260 + $0xfb0] sm:$0xff]
        %v813 = vld [vmem:[%s260 + $0xfb8] sm:$0xff]
        %v814 = vld [vmem:[%s260 + $0xfc0] sm:$0xff]
        %v815 = vld [vmem:[%s260 + $0xfc8] sm:$0xff]
        %v816 = vld [vmem:[%s260 + $0xfd0] sm:$0xff]
        %v817 = vld [vmem:[%s260 + $0xfd8] sm:$0xff]
        %v818 = vld [vmem:[%s260 + $0xfe0] sm:$0xff]
        %v819 = vld [vmem:[%s260 + $0xfe8] sm:$0xff]
        %v820 = vld [vmem:[%s260 + $0xff0] sm:$0xff]
        %v821 = vld [vmem:[%s260 + $0xff8] sm:$0xff]
        %v822 = vpack.c.bf16 %v318, %v310
        %v823 = vpack.c.bf16 %v319, %v311
        %v824 = vpack.c.bf16 %v320, %v312
        %v825 = vpack.c.bf16 %v321, %v313
        %v826 = vpack.c.bf16 %v322, %v314
        %v827 = vpack.c.bf16 %v323, %v315
        %v828 = vpack.c.bf16 %v324, %v316
        %v829 = vpack.c.bf16 %v325, %v317
        %v830 = vpack.c.bf16 %v334, %v326
        %v831 = vpack.c.bf16 %v335, %v327
        %v832 = vpack.c.bf16 %v336, %v328
        %v833 = vpack.c.bf16 %v337, %v329
        %v834 = vpack.c.bf16 %v338, %v330
        %v835 = vpack.c.bf16 %v339, %v331
        %v836 = vpack.c.bf16 %v340, %v332
        %v837 = vpack.c.bf16 %v341, %v333
        %v838 = vpack.c.bf16 %v350, %v342
        %v839 = vpack.c.bf16 %v351, %v343
        %v840 = vpack.c.bf16 %v352, %v344
        %v841 = vpack.c.bf16 %v353, %v345
        %v842 = vpack.c.bf16 %v354, %v346
        %v843 = vpack.c.bf16 %v355, %v347
        %v844 = vpack.c.bf16 %v356, %v348
        %v845 = vpack.c.bf16 %v357, %v349
        %v846 = vpack.c.bf16 %v366, %v358
        %v847 = vpack.c.bf16 %v367, %v359
        %v848 = vpack.c.bf16 %v368, %v360
        %v849 = vpack.c.bf16 %v369, %v361
        %v850 = vpack.c.bf16 %v370, %v362
        %v851 = vpack.c.bf16 %v371, %v363
        %v852 = vpack.c.bf16 %v372, %v364
        %v853 = vpack.c.bf16 %v373, %v365
        %v854 = vpack.c.bf16 %v382, %v374
        %v855 = vpack.c.bf16 %v383, %v375
        %v856 = vpack.c.bf16 %v384, %v376
        %v857 = vpack.c.bf16 %v385, %v377
        %v858 = vpack.c.bf16 %v386, %v378
        %v859 = vpack.c.bf16 %v387, %v379
        %v860 = vpack.c.bf16 %v388, %v380
        %v861 = vpack.c.bf16 %v389, %v381
        %v862 = vpack.c.bf16 %v398, %v390
        %v863 = vpack.c.bf16 %v399, %v391
        %v864 = vpack.c.bf16 %v400, %v392
        %v865 = vpack.c.bf16 %v401, %v393
        %v866 = vpack.c.bf16 %v402, %v394
        %v867 = vpack.c.bf16 %v403, %v395
        %v868 = vpack.c.bf16 %v404, %v396
        %v869 = vpack.c.bf16 %v405, %v397
        %v870 = vpack.c.bf16 %v414, %v406
        %v871 = vpack.c.bf16 %v415, %v407
        %v872 = vpack.c.bf16 %v416, %v408
        %v873 = vpack.c.bf16 %v417, %v409
        %v874 = vpack.c.bf16 %v418, %v410
        %v875 = vpack.c.bf16 %v419, %v411
        %v876 = vpack.c.bf16 %v420, %v412
        %v877 = vpack.c.bf16 %v421, %v413
        %v878 = vpack.c.bf16 %v430, %v422
        %v879 = vpack.c.bf16 %v431, %v423
        %v880 = vpack.c.bf16 %v432, %v424
        %v881 = vpack.c.bf16 %v433, %v425
        %v882 = vpack.c.bf16 %v434, %v426
        %v883 = vpack.c.bf16 %v435, %v427
        %v884 = vpack.c.bf16 %v436, %v428
        %v885 = vpack.c.bf16 %v437, %v429
        %v886 = vpack.c.bf16 %v446, %v438
        %v887 = vpack.c.bf16 %v447, %v439
        %v888 = vpack.c.bf16 %v448, %v440
        %v889 = vpack.c.bf16 %v449, %v441
        %v890 = vpack.c.bf16 %v450, %v442
        %v891 = vpack.c.bf16 %v451, %v443
        %v892 = vpack.c.bf16 %v452, %v444
        %v893 = vpack.c.bf16 %v453, %v445
        %v894 = vpack.c.bf16 %v462, %v454
        %v895 = vpack.c.bf16 %v463, %v455
        %v896 = vpack.c.bf16 %v464, %v456
        %v897 = vpack.c.bf16 %v465, %v457
        %v898 = vpack.c.bf16 %v466, %v458
        %v899 = vpack.c.bf16 %v467, %v459
        %v900 = vpack.c.bf16 %v468, %v460
        %v901 = vpack.c.bf16 %v469, %v461
        %v902 = vpack.c.bf16 %v478, %v470
        %v903 = vpack.c.bf16 %v479, %v471
        %v904 = vpack.c.bf16 %v480, %v472
        %v905 = vpack.c.bf16 %v481, %v473
        %v906 = vpack.c.bf16 %v482, %v474
        %v907 = vpack.c.bf16 %v483, %v475
        %v908 = vpack.c.bf16 %v484, %v476
        %v909 = vpack.c.bf16 %v485, %v477
        %v910 = vpack.c.bf16 %v494, %v486
        %v911 = vpack.c.bf16 %v495, %v487
        %v912 = vpack.c.bf16 %v496, %v488
        %v913 = vpack.c.bf16 %v497, %v489
        %v914 = vpack.c.bf16 %v498, %v490
        %v915 = vpack.c.bf16 %v499, %v491
        %v916 = vpack.c.bf16 %v500, %v492
        %v917 = vpack.c.bf16 %v501, %v493
        %v918 = vpack.c.bf16 %v510, %v502
        %v919 = vpack.c.bf16 %v511, %v503
        %v920 = vpack.c.bf16 %v512, %v504
        %v921 = vpack.c.bf16 %v513, %v505
        %v922 = vpack.c.bf16 %v514, %v506
        %v923 = vpack.c.bf16 %v515, %v507
        %v924 = vpack.c.bf16 %v516, %v508
        %v925 = vpack.c.bf16 %v517, %v509
        %v926 = vpack.c.bf16 %v526, %v518
        %v927 = vpack.c.bf16 %v527, %v519
        %v928 = vpack.c.bf16 %v528, %v520
        %v929 = vpack.c.bf16 %v529, %v521
        %v930 = vpack.c.bf16 %v530, %v522
        %v931 = vpack.c.bf16 %v531, %v523
        %v932 = vpack.c.bf16 %v532, %v524
        %v933 = vpack.c.bf16 %v533, %v525
        %v934 = vpack.c.bf16 %v542, %v534
        %v935 = vpack.c.bf16 %v543, %v535
        %v936 = vpack.c.bf16 %v544, %v536
        %v937 = vpack.c.bf16 %v545, %v537
        %v938 = vpack.c.bf16 %v546, %v538
        %v939 = vpack.c.bf16 %v547, %v539
        %v940 = vpack.c.bf16 %v548, %v540
        %v941 = vpack.c.bf16 %v549, %v541
        %v942 = vpack.c.bf16 %v558, %v550
        %v943 = vpack.c.bf16 %v559, %v551
        %v944 = vpack.c.bf16 %v560, %v552
        %v945 = vpack.c.bf16 %v561, %v553
        %v946 = vpack.c.bf16 %v562, %v554
        %v947 = vpack.c.bf16 %v563, %v555
        %v948 = vpack.c.bf16 %v564, %v556
        %v949 = vpack.c.bf16 %v565, %v557
        %v950 = vpack.c.bf16 %v574, %v566
        %v951 = vpack.c.bf16 %v575, %v567
        %v952 = vpack.c.bf16 %v576, %v568
        %v953 = vpack.c.bf16 %v577, %v569
        %v954 = vpack.c.bf16 %v578, %v570
        %v955 = vpack.c.bf16 %v579, %v571
        %v956 = vpack.c.bf16 %v580, %v572
        %v957 = vpack.c.bf16 %v581, %v573
        %v958 = vpack.c.bf16 %v590, %v582
        %v959 = vpack.c.bf16 %v591, %v583
        %v960 = vpack.c.bf16 %v592, %v584
        %v961 = vpack.c.bf16 %v593, %v585
        %v962 = vpack.c.bf16 %v594, %v586
        %v963 = vpack.c.bf16 %v595, %v587
        %v964 = vpack.c.bf16 %v596, %v588
        %v965 = vpack.c.bf16 %v597, %v589
        %v966 = vpack.c.bf16 %v606, %v598
        %v967 = vpack.c.bf16 %v607, %v599
        %v968 = vpack.c.bf16 %v608, %v600
        %v969 = vpack.c.bf16 %v609, %v601
        %v970 = vpack.c.bf16 %v610, %v602
        %v971 = vpack.c.bf16 %v611, %v603
        %v972 = vpack.c.bf16 %v612, %v604
        %v973 = vpack.c.bf16 %v613, %v605
        %v974 = vpack.c.bf16 %v622, %v614
        %v975 = vpack.c.bf16 %v623, %v615
        %v976 = vpack.c.bf16 %v624, %v616
        %v977 = vpack.c.bf16 %v625, %v617
        %v978 = vpack.c.bf16 %v626, %v618
        %v979 = vpack.c.bf16 %v627, %v619
        %v980 = vpack.c.bf16 %v628, %v620
        %v981 = vpack.c.bf16 %v629, %v621
        %v982 = vpack.c.bf16 %v638, %v630
        %v983 = vpack.c.bf16 %v639, %v631
        %v984 = vpack.c.bf16 %v640, %v632
        %v985 = vpack.c.bf16 %v641, %v633
        %v986 = vpack.c.bf16 %v642, %v634
        %v987 = vpack.c.bf16 %v643, %v635
        %v988 = vpack.c.bf16 %v644, %v636
        %v989 = vpack.c.bf16 %v645, %v637
        %v990 = vpack.c.bf16 %v654, %v646
        %v991 = vpack.c.bf16 %v655, %v647
        %v992 = vpack.c.bf16 %v656, %v648
        %v993 = vpack.c.bf16 %v657, %v649
        %v994 = vpack.c.bf16 %v658, %v650
        %v995 = vpack.c.bf16 %v659, %v651
        %v996 = vpack.c.bf16 %v660, %v652
        %v997 = vpack.c.bf16 %v661, %v653
        %v998 = vpack.c.bf16 %v670, %v662
        %v999 = vpack.c.bf16 %v671, %v663
        %v1000 = vpack.c.bf16 %v672, %v664
        %v1001 = vpack.c.bf16 %v673, %v665
        %v1002 = vpack.c.bf16 %v674, %v666
        %v1003 = vpack.c.bf16 %v675, %v667
        %v1004 = vpack.c.bf16 %v676, %v668
        %v1005 = vpack.c.bf16 %v677, %v669
        %v1006 = vpack.c.bf16 %v686, %v678
        %v1007 = vpack.c.bf16 %v687, %v679
        %v1008 = vpack.c.bf16 %v688, %v680
        %v1009 = vpack.c.bf16 %v689, %v681
        %v1010 = vpack.c.bf16 %v690, %v682
        %v1011 = vpack.c.bf16 %v691, %v683
        %v1012 = vpack.c.bf16 %v692, %v684
        %v1013 = vpack.c.bf16 %v693, %v685
        %v1014 = vpack.c.bf16 %v702, %v694
        %v1015 = vpack.c.bf16 %v703, %v695
        %v1016 = vpack.c.bf16 %v704, %v696
        %v1017 = vpack.c.bf16 %v705, %v697
        %v1018 = vpack.c.bf16 %v706, %v698
        %v1019 = vpack.c.bf16 %v707, %v699
        %v1020 = vpack.c.bf16 %v708, %v700
        %v1021 = vpack.c.bf16 %v709, %v701
        %v1022 = vpack.c.bf16 %v718, %v710
        %v1023 = vpack.c.bf16 %v719, %v711
        %v1024 = vpack.c.bf16 %v720, %v712
        %v1025 = vpack.c.bf16 %v721, %v713
        %v1026 = vpack.c.bf16 %v722, %v714
        %v1027 = vpack.c.bf16 %v723, %v715
        %v1028 = vpack.c.bf16 %v724, %v716
        %v1029 = vpack.c.bf16 %v725, %v717
        %v1030 = vpack.c.bf16 %v734, %v726
        %v1031 = vpack.c.bf16 %v735, %v727
        %v1032 = vpack.c.bf16 %v736, %v728
        %v1033 = vpack.c.bf16 %v737, %v729
        %v1034 = vpack.c.bf16 %v738, %v730
        %v1035 = vpack.c.bf16 %v739, %v731
        %v1036 = vpack.c.bf16 %v740, %v732
        %v1037 = vpack.c.bf16 %v741, %v733
        %v1038 = vpack.c.bf16 %v750, %v742
        %v1039 = vpack.c.bf16 %v751, %v743
        %v1040 = vpack.c.bf16 %v752, %v744
        %v1041 = vpack.c.bf16 %v753, %v745
        %v1042 = vpack.c.bf16 %v754, %v746
        %v1043 = vpack.c.bf16 %v755, %v747
        %v1044 = vpack.c.bf16 %v756, %v748
        %v1045 = vpack.c.bf16 %v757, %v749
        %v1046 = vpack.c.bf16 %v766, %v758
        %v1047 = vpack.c.bf16 %v767, %v759
        %v1048 = vpack.c.bf16 %v768, %v760
        %v1049 = vpack.c.bf16 %v769, %v761
        %v1050 = vpack.c.bf16 %v770, %v762
        %v1051 = vpack.c.bf16 %v771, %v763
        %v1052 = vpack.c.bf16 %v772, %v764
        %v1053 = vpack.c.bf16 %v773, %v765
        %v1054 = vpack.c.bf16 %v782, %v774
        %v1055 = vpack.c.bf16 %v783, %v775
        %v1056 = vpack.c.bf16 %v784, %v776
        %v1057 = vpack.c.bf16 %v785, %v777
        %v1058 = vpack.c.bf16 %v786, %v778
        %v1059 = vpack.c.bf16 %v787, %v779
        %v1060 = vpack.c.bf16 %v788, %v780
        %v1061 = vpack.c.bf16 %v789, %v781
        %v1062 = vpack.c.bf16 %v798, %v790
        %v1063 = vpack.c.bf16 %v799, %v791
        %v1064 = vpack.c.bf16 %v800, %v792
        %v1065 = vpack.c.bf16 %v801, %v793
        %v1066 = vpack.c.bf16 %v802, %v794
        %v1067 = vpack.c.bf16 %v803, %v795
        %v1068 = vpack.c.bf16 %v804, %v796
        %v1069 = vpack.c.bf16 %v805, %v797
        %v1070 = vpack.c.bf16 %v814, %v806
        %v1071 = vpack.c.bf16 %v815, %v807
        %v1072 = vpack.c.bf16 %v816, %v808
        %v1073 = vpack.c.bf16 %v817, %v809
        %v1074 = vpack.c.bf16 %v818, %v810
        %v1075 = vpack.c.bf16 %v819, %v811
        %v1076 = vpack.c.bf16 %v820, %v812
        %v1077 = vpack.c.bf16 %v821, %v813
        %v1078 = vld [vmem:[#allocation5] sm:$0xff]
        %v1079 = vld [vmem:[#allocation5 + $0x8] sm:$0xff]
        %v1080 = vld [vmem:[#allocation5 + $0x10] sm:$0xff]
        %v1081 = vld [vmem:[#allocation5 + $0x18] sm:$0xff]
        %v1082 = vld [vmem:[#allocation5 + $0x20] sm:$0xff]
        %v1083 = vld [vmem:[#allocation5 + $0x28] sm:$0xff]
        %v1084 = vld [vmem:[#allocation5 + $0x30] sm:$0xff]
        %v1085 = vld [vmem:[#allocation5 + $0x38] sm:$0xff]
        %v1086 = vld [vmem:[#allocation5 + $0x40] sm:$0xff]
        %v1087 = vld [vmem:[#allocation5 + $0x48] sm:$0xff]
        %v1088 = vld [vmem:[#allocation5 + $0x50] sm:$0xff]
        %v1089 = vld [vmem:[#allocation5 + $0x58] sm:$0xff]
        %v1090 = vld [vmem:[#allocation5 + $0x60] sm:$0xff]
        %v1091 = vld [vmem:[#allocation5 + $0x68] sm:$0xff]
        %v1092 = vld [vmem:[#allocation5 + $0x70] sm:$0xff]
        %v1093 = vld [vmem:[#allocation5 + $0x78] sm:$0xff]
        %v1094 = vld [vmem:[#allocation5 + $0x80] sm:$0xff]
        %v1095 = vld [vmem:[#allocation5 + $0x88] sm:$0xff]
        %v1096 = vld [vmem:[#allocation5 + $0x90] sm:$0xff]
        %v1097 = vld [vmem:[#allocation5 + $0x98] sm:$0xff]
        %v1098 = vld [vmem:[#allocation5 + $0xa0] sm:$0xff]
        %v1099 = vld [vmem:[#allocation5 + $0xa8] sm:$0xff]
        %v1100 = vld [vmem:[#allocation5 + $0xb0] sm:$0xff]
        %v1101 = vld [vmem:[#allocation5 + $0xb8] sm:$0xff]
        %v1102 = vld [vmem:[#allocation5 + $0xc0] sm:$0xff]
        %v1103 = vld [vmem:[#allocation5 + $0xc8] sm:$0xff]
        %v1104 = vld [vmem:[#allocation5 + $0xd0] sm:$0xff]
        %v1105 = vld [vmem:[#allocation5 + $0xd8] sm:$0xff]
        %v1106 = vld [vmem:[#allocation5 + $0xe0] sm:$0xff]
        %v1107 = vld [vmem:[#allocation5 + $0xe8] sm:$0xff]
        %v1108 = vld [vmem:[#allocation5 + $0xf0] sm:$0xff]
        %v1109 = vld [vmem:[#allocation5 + $0xf8] sm:$0xff]
        %v1110 = vld [vmem:[#allocation5 + $0x100] sm:$0xff]
        %v1111 = vld [vmem:[#allocation5 + $0x108] sm:$0xff]
        %v1112 = vld [vmem:[#allocation5 + $0x110] sm:$0xff]
        %v1113 = vld [vmem:[#allocation5 + $0x118] sm:$0xff]
        %v1114 = vld [vmem:[#allocation5 + $0x120] sm:$0xff]
        %v1115 = vld [vmem:[#allocation5 + $0x128] sm:$0xff]
        %v1116 = vld [vmem:[#allocation5 + $0x130] sm:$0xff]
        %v1117 = vld [vmem:[#allocation5 + $0x138] sm:$0xff]
        %v1118 = vld [vmem:[#allocation5 + $0x140] sm:$0xff]
        %v1119 = vld [vmem:[#allocation5 + $0x148] sm:$0xff]
        %v1120 = vld [vmem:[#allocation5 + $0x150] sm:$0xff]
        %v1121 = vld [vmem:[#allocation5 + $0x158] sm:$0xff]
        %v1122 = vld [vmem:[#allocation5 + $0x160] sm:$0xff]
        %v1123 = vld [vmem:[#allocation5 + $0x168] sm:$0xff]
        %v1124 = vld [vmem:[#allocation5 + $0x170] sm:$0xff]
        %v1125 = vld [vmem:[#allocation5 + $0x178] sm:$0xff]
        %v1126 = vld [vmem:[#allocation5 + $0x180] sm:$0xff]
        %v1127 = vld [vmem:[#allocation5 + $0x188] sm:$0xff]
        %v1128 = vld [vmem:[#allocation5 + $0x190] sm:$0xff]
        %v1129 = vld [vmem:[#allocation5 + $0x198] sm:$0xff]
        %v1130 = vld [vmem:[#allocation5 + $0x1a0] sm:$0xff]
        %v1131 = vld [vmem:[#allocation5 + $0x1a8] sm:$0xff]
        %v1132 = vld [vmem:[#allocation5 + $0x1b0] sm:$0xff]
        %v1133 = vld [vmem:[#allocation5 + $0x1b8] sm:$0xff]
        %v1134 = vld [vmem:[#allocation5 + $0x1c0] sm:$0xff]
        %v1135 = vld [vmem:[#allocation5 + $0x1c8] sm:$0xff]
        %v1136 = vld [vmem:[#allocation5 + $0x1d0] sm:$0xff]
        %v1137 = vld [vmem:[#allocation5 + $0x1d8] sm:$0xff]
        %v1138 = vld [vmem:[#allocation5 + $0x1e0] sm:$0xff]
        %v1139 = vld [vmem:[#allocation5 + $0x1e8] sm:$0xff]
        %v1140 = vld [vmem:[#allocation5 + $0x1f0] sm:$0xff]
        %v1141 = vld [vmem:[#allocation5 + $0x1f8] sm:$0xff]
        %v1142 = vld [vmem:[#allocation5 + $0x200] sm:$0xff]
        %v1143 = vld [vmem:[#allocation5 + $0x208] sm:$0xff]
        %v1144 = vld [vmem:[#allocation5 + $0x210] sm:$0xff]
        %v1145 = vld [vmem:[#allocation5 + $0x218] sm:$0xff]
        %v1146 = vld [vmem:[#allocation5 + $0x220] sm:$0xff]
        %v1147 = vld [vmem:[#allocation5 + $0x228] sm:$0xff]
        %v1148 = vld [vmem:[#allocation5 + $0x230] sm:$0xff]
        %v1149 = vld [vmem:[#allocation5 + $0x238] sm:$0xff]
        %v1150 = vld [vmem:[#allocation5 + $0x240] sm:$0xff]
        %v1151 = vld [vmem:[#allocation5 + $0x248] sm:$0xff]
        %v1152 = vld [vmem:[#allocation5 + $0x250] sm:$0xff]
        %v1153 = vld [vmem:[#allocation5 + $0x258] sm:$0xff]
        %v1154 = vld [vmem:[#allocation5 + $0x260] sm:$0xff]
        %v1155 = vld [vmem:[#allocation5 + $0x268] sm:$0xff]
        %v1156 = vld [vmem:[#allocation5 + $0x270] sm:$0xff]
        %v1157 = vld [vmem:[#allocation5 + $0x278] sm:$0xff]
        %v1158 = vld [vmem:[#allocation5 + $0x280] sm:$0xff]
        %v1159 = vld [vmem:[#allocation5 + $0x288] sm:$0xff]
        %v1160 = vld [vmem:[#allocation5 + $0x290] sm:$0xff]
        %v1161 = vld [vmem:[#allocation5 + $0x298] sm:$0xff]
        %v1162 = vld [vmem:[#allocation5 + $0x2a0] sm:$0xff]
        %v1163 = vld [vmem:[#allocation5 + $0x2a8] sm:$0xff]
        %v1164 = vld [vmem:[#allocation5 + $0x2b0] sm:$0xff]
        %v1165 = vld [vmem:[#allocation5 + $0x2b8] sm:$0xff]
        %v1166 = vld [vmem:[#allocation5 + $0x2c0] sm:$0xff]
        %v1167 = vld [vmem:[#allocation5 + $0x2c8] sm:$0xff]
        %v1168 = vld [vmem:[#allocation5 + $0x2d0] sm:$0xff]
        %v1169 = vld [vmem:[#allocation5 + $0x2d8] sm:$0xff]
        %v1170 = vld [vmem:[#allocation5 + $0x2e0] sm:$0xff]
        %v1171 = vld [vmem:[#allocation5 + $0x2e8] sm:$0xff]
        %v1172 = vld [vmem:[#allocation5 + $0x2f0] sm:$0xff]
        %v1173 = vld [vmem:[#allocation5 + $0x2f8] sm:$0xff]
        %v1174 = vld [vmem:[#allocation5 + $0x300] sm:$0xff]
        %v1175 = vld [vmem:[#allocation5 + $0x308] sm:$0xff]
        %v1176 = vld [vmem:[#allocation5 + $0x310] sm:$0xff]
        %v1177 = vld [vmem:[#allocation5 + $0x318] sm:$0xff]
        %v1178 = vld [vmem:[#allocation5 + $0x320] sm:$0xff]
        %v1179 = vld [vmem:[#allocation5 + $0x328] sm:$0xff]
        %v1180 = vld [vmem:[#allocation5 + $0x330] sm:$0xff]
        %v1181 = vld [vmem:[#allocation5 + $0x338] sm:$0xff]
        %v1182 = vld [vmem:[#allocation5 + $0x340] sm:$0xff]
        %v1183 = vld [vmem:[#allocation5 + $0x348] sm:$0xff]
        %v1184 = vld [vmem:[#allocation5 + $0x350] sm:$0xff]
        %v1185 = vld [vmem:[#allocation5 + $0x358] sm:$0xff]
        %v1186 = vld [vmem:[#allocation5 + $0x360] sm:$0xff]
        %v1187 = vld [vmem:[#allocation5 + $0x368] sm:$0xff]
        %v1188 = vld [vmem:[#allocation5 + $0x370] sm:$0xff]
        %v1189 = vld [vmem:[#allocation5 + $0x378] sm:$0xff]
        %v1190 = vld [vmem:[#allocation5 + $0x380] sm:$0xff]
        %v1191 = vld [vmem:[#allocation5 + $0x388] sm:$0xff]
        %v1192 = vld [vmem:[#allocation5 + $0x390] sm:$0xff]
        %v1193 = vld [vmem:[#allocation5 + $0x398] sm:$0xff]
        %v1194 = vld [vmem:[#allocation5 + $0x3a0] sm:$0xff]
        %v1195 = vld [vmem:[#allocation5 + $0x3a8] sm:$0xff]
        %v1196 = vld [vmem:[#allocation5 + $0x3b0] sm:$0xff]
        %v1197 = vld [vmem:[#allocation5 + $0x3b8] sm:$0xff]
        %v1198 = vld [vmem:[#allocation5 + $0x3c0] sm:$0xff]
        %v1199 = vld [vmem:[#allocation5 + $0x3c8] sm:$0xff]
        %v1200 = vld [vmem:[#allocation5 + $0x3d0] sm:$0xff]
        %v1201 = vld [vmem:[#allocation5 + $0x3d8] sm:$0xff]
        %v1202 = vld [vmem:[#allocation5 + $0x3e0] sm:$0xff]
        %v1203 = vld [vmem:[#allocation5 + $0x3e8] sm:$0xff]
        %v1204 = vld [vmem:[#allocation5 + $0x3f0] sm:$0xff]
        %v1205 = vld [vmem:[#allocation5 + $0x3f8] sm:$0xff]
        %v1206 = vld [vmem:[#allocation5 + $0x400] sm:$0xff]
        %v1207 = vld [vmem:[#allocation5 + $0x408] sm:$0xff]
        %v1208 = vld [vmem:[#allocation5 + $0x410] sm:$0xff]
        %v1209 = vld [vmem:[#allocation5 + $0x418] sm:$0xff]
        %v1210 = vld [vmem:[#allocation5 + $0x420] sm:$0xff]
        %v1211 = vld [vmem:[#allocation5 + $0x428] sm:$0xff]
        %v1212 = vld [vmem:[#allocation5 + $0x430] sm:$0xff]
        %v1213 = vld [vmem:[#allocation5 + $0x438] sm:$0xff]
        %v1214 = vld [vmem:[#allocation5 + $0x440] sm:$0xff]
        %v1215 = vld [vmem:[#allocation5 + $0x448] sm:$0xff]
        %v1216 = vld [vmem:[#allocation5 + $0x450] sm:$0xff]
        %v1217 = vld [vmem:[#allocation5 + $0x458] sm:$0xff]
        %v1218 = vld [vmem:[#allocation5 + $0x460] sm:$0xff]
        %v1219 = vld [vmem:[#allocation5 + $0x468] sm:$0xff]
        %v1220 = vld [vmem:[#allocation5 + $0x470] sm:$0xff]
        %v1221 = vld [vmem:[#allocation5 + $0x478] sm:$0xff]
        %v1222 = vld [vmem:[#allocation5 + $0x480] sm:$0xff]
        %v1223 = vld [vmem:[#allocation5 + $0x488] sm:$0xff]
        %v1224 = vld [vmem:[#allocation5 + $0x490] sm:$0xff]
        %v1225 = vld [vmem:[#allocation5 + $0x498] sm:$0xff]
        %v1226 = vld [vmem:[#allocation5 + $0x4a0] sm:$0xff]
        %v1227 = vld [vmem:[#allocation5 + $0x4a8] sm:$0xff]
        %v1228 = vld [vmem:[#allocation5 + $0x4b0] sm:$0xff]
        %v1229 = vld [vmem:[#allocation5 + $0x4b8] sm:$0xff]
        %v1230 = vld [vmem:[#allocation5 + $0x4c0] sm:$0xff]
        %v1231 = vld [vmem:[#allocation5 + $0x4c8] sm:$0xff]
        %v1232 = vld [vmem:[#allocation5 + $0x4d0] sm:$0xff]
        %v1233 = vld [vmem:[#allocation5 + $0x4d8] sm:$0xff]
        %v1234 = vld [vmem:[#allocation5 + $0x4e0] sm:$0xff]
        %v1235 = vld [vmem:[#allocation5 + $0x4e8] sm:$0xff]
        %v1236 = vld [vmem:[#allocation5 + $0x4f0] sm:$0xff]
        %v1237 = vld [vmem:[#allocation5 + $0x4f8] sm:$0xff]
        %v1238 = vld [vmem:[#allocation5 + $0x500] sm:$0xff]
        %v1239 = vld [vmem:[#allocation5 + $0x508] sm:$0xff]
        %v1240 = vld [vmem:[#allocation5 + $0x510] sm:$0xff]
        %v1241 = vld [vmem:[#allocation5 + $0x518] sm:$0xff]
        %v1242 = vld [vmem:[#allocation5 + $0x520] sm:$0xff]
        %v1243 = vld [vmem:[#allocation5 + $0x528] sm:$0xff]
        %v1244 = vld [vmem:[#allocation5 + $0x530] sm:$0xff]
        %v1245 = vld [vmem:[#allocation5 + $0x538] sm:$0xff]
        %v1246 = vld [vmem:[#allocation5 + $0x540] sm:$0xff]
        %v1247 = vld [vmem:[#allocation5 + $0x548] sm:$0xff]
        %v1248 = vld [vmem:[#allocation5 + $0x550] sm:$0xff]
        %v1249 = vld [vmem:[#allocation5 + $0x558] sm:$0xff]
        %v1250 = vld [vmem:[#allocation5 + $0x560] sm:$0xff]
        %v1251 = vld [vmem:[#allocation5 + $0x568] sm:$0xff]
        %v1252 = vld [vmem:[#allocation5 + $0x570] sm:$0xff]
        %v1253 = vld [vmem:[#allocation5 + $0x578] sm:$0xff]
        %v1254 = vld [vmem:[#allocation5 + $0x580] sm:$0xff]
        %v1255 = vld [vmem:[#allocation5 + $0x588] sm:$0xff]
        %v1256 = vld [vmem:[#allocation5 + $0x590] sm:$0xff]
        %v1257 = vld [vmem:[#allocation5 + $0x598] sm:$0xff]
        %v1258 = vld [vmem:[#allocation5 + $0x5a0] sm:$0xff]
        %v1259 = vld [vmem:[#allocation5 + $0x5a8] sm:$0xff]
        %v1260 = vld [vmem:[#allocation5 + $0x5b0] sm:$0xff]
        %v1261 = vld [vmem:[#allocation5 + $0x5b8] sm:$0xff]
        %v1262 = vld [vmem:[#allocation5 + $0x5c0] sm:$0xff]
        %v1263 = vld [vmem:[#allocation5 + $0x5c8] sm:$0xff]
        %v1264 = vld [vmem:[#allocation5 + $0x5d0] sm:$0xff]
        %v1265 = vld [vmem:[#allocation5 + $0x5d8] sm:$0xff]
        %v1266 = vld [vmem:[#allocation5 + $0x5e0] sm:$0xff]
        %v1267 = vld [vmem:[#allocation5 + $0x5e8] sm:$0xff]
        %v1268 = vld [vmem:[#allocation5 + $0x5f0] sm:$0xff]
        %v1269 = vld [vmem:[#allocation5 + $0x5f8] sm:$0xff]
        %v1270 = vld [vmem:[#allocation5 + $0x600] sm:$0xff]
        %v1271 = vld [vmem:[#allocation5 + $0x608] sm:$0xff]
        %v1272 = vld [vmem:[#allocation5 + $0x610] sm:$0xff]
        %v1273 = vld [vmem:[#allocation5 + $0x618] sm:$0xff]
        %v1274 = vld [vmem:[#allocation5 + $0x620] sm:$0xff]
        %v1275 = vld [vmem:[#allocation5 + $0x628] sm:$0xff]
        %v1276 = vld [vmem:[#allocation5 + $0x630] sm:$0xff]
        %v1277 = vld [vmem:[#allocation5 + $0x638] sm:$0xff]
        %v1278 = vld [vmem:[#allocation5 + $0x640] sm:$0xff]
        %v1279 = vld [vmem:[#allocation5 + $0x648] sm:$0xff]
        %v1280 = vld [vmem:[#allocation5 + $0x650] sm:$0xff]
        %v1281 = vld [vmem:[#allocation5 + $0x658] sm:$0xff]
        %v1282 = vld [vmem:[#allocation5 + $0x660] sm:$0xff]
        %v1283 = vld [vmem:[#allocation5 + $0x668] sm:$0xff]
        %v1284 = vld [vmem:[#allocation5 + $0x670] sm:$0xff]
        %v1285 = vld [vmem:[#allocation5 + $0x678] sm:$0xff]
        %v1286 = vld [vmem:[#allocation5 + $0x680] sm:$0xff]
        %v1287 = vld [vmem:[#allocation5 + $0x688] sm:$0xff]
        %v1288 = vld [vmem:[#allocation5 + $0x690] sm:$0xff]
        %v1289 = vld [vmem:[#allocation5 + $0x698] sm:$0xff]
        %v1290 = vld [vmem:[#allocation5 + $0x6a0] sm:$0xff]
        %v1291 = vld [vmem:[#allocation5 + $0x6a8] sm:$0xff]
        %v1292 = vld [vmem:[#allocation5 + $0x6b0] sm:$0xff]
        %v1293 = vld [vmem:[#allocation5 + $0x6b8] sm:$0xff]
        %v1294 = vld [vmem:[#allocation5 + $0x6c0] sm:$0xff]
        %v1295 = vld [vmem:[#allocation5 + $0x6c8] sm:$0xff]
        %v1296 = vld [vmem:[#allocation5 + $0x6d0] sm:$0xff]
        %v1297 = vld [vmem:[#allocation5 + $0x6d8] sm:$0xff]
        %v1298 = vld [vmem:[#allocation5 + $0x6e0] sm:$0xff]
        %v1299 = vld [vmem:[#allocation5 + $0x6e8] sm:$0xff]
        %v1300 = vld [vmem:[#allocation5 + $0x6f0] sm:$0xff]
        %v1301 = vld [vmem:[#allocation5 + $0x6f8] sm:$0xff]
        %v1302 = vld [vmem:[#allocation5 + $0x700] sm:$0xff]
        %v1303 = vld [vmem:[#allocation5 + $0x708] sm:$0xff]
        %v1304 = vld [vmem:[#allocation5 + $0x710] sm:$0xff]
        %v1305 = vld [vmem:[#allocation5 + $0x718] sm:$0xff]
        %v1306 = vld [vmem:[#allocation5 + $0x720] sm:$0xff]
        %v1307 = vld [vmem:[#allocation5 + $0x728] sm:$0xff]
        %v1308 = vld [vmem:[#allocation5 + $0x730] sm:$0xff]
        %v1309 = vld [vmem:[#allocation5 + $0x738] sm:$0xff]
        %v1310 = vld [vmem:[#allocation5 + $0x740] sm:$0xff]
        %v1311 = vld [vmem:[#allocation5 + $0x748] sm:$0xff]
        %v1312 = vld [vmem:[#allocation5 + $0x750] sm:$0xff]
        %v1313 = vld [vmem:[#allocation5 + $0x758] sm:$0xff]
        %v1314 = vld [vmem:[#allocation5 + $0x760] sm:$0xff]
        %v1315 = vld [vmem:[#allocation5 + $0x768] sm:$0xff]
        %v1316 = vld [vmem:[#allocation5 + $0x770] sm:$0xff]
        %v1317 = vld [vmem:[#allocation5 + $0x778] sm:$0xff]
        %v1318 = vld [vmem:[#allocation5 + $0x780] sm:$0xff]
        %v1319 = vld [vmem:[#allocation5 + $0x788] sm:$0xff]
        %v1320 = vld [vmem:[#allocation5 + $0x790] sm:$0xff]
        %v1321 = vld [vmem:[#allocation5 + $0x798] sm:$0xff]
        %v1322 = vld [vmem:[#allocation5 + $0x7a0] sm:$0xff]
        %v1323 = vld [vmem:[#allocation5 + $0x7a8] sm:$0xff]
        %v1324 = vld [vmem:[#allocation5 + $0x7b0] sm:$0xff]
        %v1325 = vld [vmem:[#allocation5 + $0x7b8] sm:$0xff]
        %v1326 = vld [vmem:[#allocation5 + $0x7c0] sm:$0xff]
        %v1327 = vld [vmem:[#allocation5 + $0x7c8] sm:$0xff]
        %v1328 = vld [vmem:[#allocation5 + $0x7d0] sm:$0xff]
        %v1329 = vld [vmem:[#allocation5 + $0x7d8] sm:$0xff]
        %v1330 = vld [vmem:[#allocation5 + $0x7e0] sm:$0xff]
        %v1331 = vld [vmem:[#allocation5 + $0x7e8] sm:$0xff]
        %v1332 = vld [vmem:[#allocation5 + $0x7f0] sm:$0xff]
        %v1333 = vld [vmem:[#allocation5 + $0x7f8] sm:$0xff]
        %v1334 = vld [vmem:[#allocation7] sm:$0xf]
        %v1336 = vperm.slane %v1334, 0
        %v1337 = vperm.slane %v1334, 1
        %v1338 = vperm.slane %v1334, 2
        %v1339 = vperm.slane %v1334, 3
        %v1600 = vunpack.c.l.b16 %v1078
        %v1601 = vunpack.c.h.b16 %v1078
        %v1602 = vunpack.c.l.b16 %v1079
        %v1603 = vunpack.c.h.b16 %v1079
        %v1604 = vunpack.c.l.b16 %v1080
        %v1605 = vunpack.c.h.b16 %v1080
        %v1606 = vunpack.c.l.b16 %v1081
        %v1607 = vunpack.c.h.b16 %v1081
        %v1608 = vunpack.c.l.b16 %v1082
        %v1609 = vunpack.c.h.b16 %v1082
        %v1610 = vunpack.c.l.b16 %v1083
        %v1611 = vunpack.c.h.b16 %v1083
        %v1612 = vunpack.c.l.b16 %v1084
        %v1613 = vunpack.c.h.b16 %v1084
        %v1614 = vunpack.c.l.b16 %v1085
        %v1615 = vunpack.c.h.b16 %v1085
        %v1616 = vunpack.c.l.b16 %v1086
        %v1617 = vunpack.c.h.b16 %v1086
        %v1618 = vunpack.c.l.b16 %v1087
        %v1619 = vunpack.c.h.b16 %v1087
        %v1620 = vunpack.c.l.b16 %v1088
        %v1621 = vunpack.c.h.b16 %v1088
        %v1622 = vunpack.c.l.b16 %v1089
        %v1623 = vunpack.c.h.b16 %v1089
        %v1624 = vunpack.c.l.b16 %v1090
        %v1625 = vunpack.c.h.b16 %v1090
        %v1626 = vunpack.c.l.b16 %v1091
        %v1627 = vunpack.c.h.b16 %v1091
        %v1628 = vunpack.c.l.b16 %v1092
        %v1629 = vunpack.c.h.b16 %v1092
        %v1630 = vunpack.c.l.b16 %v1093
        %v1631 = vunpack.c.h.b16 %v1093
        %v1632 = vunpack.c.l.b16 %v1094
        %v1633 = vunpack.c.h.b16 %v1094
        %v1634 = vunpack.c.l.b16 %v1095
        %v1635 = vunpack.c.h.b16 %v1095
        %v1636 = vunpack.c.l.b16 %v1096
        %v1637 = vunpack.c.h.b16 %v1096
        %v1638 = vunpack.c.l.b16 %v1097
        %v1639 = vunpack.c.h.b16 %v1097
        %v1640 = vunpack.c.l.b16 %v1098
        %v1641 = vunpack.c.h.b16 %v1098
        %v1642 = vunpack.c.l.b16 %v1099
        %v1643 = vunpack.c.h.b16 %v1099
        %v1644 = vunpack.c.l.b16 %v1100
        %v1645 = vunpack.c.h.b16 %v1100
        %v1646 = vunpack.c.l.b16 %v1101
        %v1647 = vunpack.c.h.b16 %v1101
        %v1648 = vunpack.c.l.b16 %v1102
        %v1649 = vunpack.c.h.b16 %v1102
        %v1650 = vunpack.c.l.b16 %v1103
        %v1651 = vunpack.c.h.b16 %v1103
        %v1652 = vunpack.c.l.b16 %v1104
        %v1653 = vunpack.c.h.b16 %v1104
        %v1654 = vunpack.c.l.b16 %v1105
        %v1655 = vunpack.c.h.b16 %v1105
        %v1656 = vunpack.c.l.b16 %v1106
        %v1657 = vunpack.c.h.b16 %v1106
        %v1658 = vunpack.c.l.b16 %v1107
        %v1659 = vunpack.c.h.b16 %v1107
        %v1660 = vunpack.c.l.b16 %v1108
        %v1661 = vunpack.c.h.b16 %v1108
        %v1662 = vunpack.c.l.b16 %v1109
        %v1663 = vunpack.c.h.b16 %v1109
        %v1664 = vunpack.c.l.b16 %v1110
        %v1665 = vunpack.c.h.b16 %v1110
        %v1666 = vunpack.c.l.b16 %v1111
        %v1667 = vunpack.c.h.b16 %v1111
        %v1668 = vunpack.c.l.b16 %v1112
        %v1669 = vunpack.c.h.b16 %v1112
        %v1670 = vunpack.c.l.b16 %v1113
        %v1671 = vunpack.c.h.b16 %v1113
        %v1672 = vunpack.c.l.b16 %v1114
        %v1673 = vunpack.c.h.b16 %v1114
        %v1674 = vunpack.c.l.b16 %v1115
        %v1675 = vunpack.c.h.b16 %v1115
        %v1676 = vunpack.c.l.b16 %v1116
        %v1677 = vunpack.c.h.b16 %v1116
        %v1678 = vunpack.c.l.b16 %v1117
        %v1679 = vunpack.c.h.b16 %v1117
        %v1680 = vunpack.c.l.b16 %v1118
        %v1681 = vunpack.c.h.b16 %v1118
        %v1682 = vunpack.c.l.b16 %v1119
        %v1683 = vunpack.c.h.b16 %v1119
        %v1684 = vunpack.c.l.b16 %v1120
        %v1685 = vunpack.c.h.b16 %v1120
        %v1686 = vunpack.c.l.b16 %v1121
        %v1687 = vunpack.c.h.b16 %v1121
        %v1688 = vunpack.c.l.b16 %v1122
        %v1689 = vunpack.c.h.b16 %v1122
        %v1690 = vunpack.c.l.b16 %v1123
        %v1691 = vunpack.c.h.b16 %v1123
        %v1692 = vunpack.c.l.b16 %v1124
        %v1693 = vunpack.c.h.b16 %v1124
        %v1694 = vunpack.c.l.b16 %v1125
        %v1695 = vunpack.c.h.b16 %v1125
        %v1696 = vunpack.c.l.b16 %v1126
        %v1697 = vunpack.c.h.b16 %v1126
        %v1698 = vunpack.c.l.b16 %v1127
        %v1699 = vunpack.c.h.b16 %v1127
        %v1700 = vunpack.c.l.b16 %v1128
        %v1701 = vunpack.c.h.b16 %v1128
        %v1702 = vunpack.c.l.b16 %v1129
        %v1703 = vunpack.c.h.b16 %v1129
        %v1704 = vunpack.c.l.b16 %v1130
        %v1705 = vunpack.c.h.b16 %v1130
        %v1706 = vunpack.c.l.b16 %v1131
        %v1707 = vunpack.c.h.b16 %v1131
        %v1708 = vunpack.c.l.b16 %v1132
        %v1709 = vunpack.c.h.b16 %v1132
        %v1710 = vunpack.c.l.b16 %v1133
        %v1711 = vunpack.c.h.b16 %v1133
        %v1712 = vunpack.c.l.b16 %v1134
        %v1713 = vunpack.c.h.b16 %v1134
        %v1714 = vunpack.c.l.b16 %v1135
        %v1715 = vunpack.c.h.b16 %v1135
        %v1716 = vunpack.c.l.b16 %v1136
        %v1717 = vunpack.c.h.b16 %v1136
        %v1718 = vunpack.c.l.b16 %v1137
        %v1719 = vunpack.c.h.b16 %v1137
        %v1720 = vunpack.c.l.b16 %v1138
        %v1721 = vunpack.c.h.b16 %v1138
        %v1722 = vunpack.c.l.b16 %v1139
        %v1723 = vunpack.c.h.b16 %v1139
        %v1724 = vunpack.c.l.b16 %v1140
        %v1725 = vunpack.c.h.b16 %v1140
        %v1726 = vunpack.c.l.b16 %v1141
        %v1727 = vunpack.c.h.b16 %v1141
        %v1728 = vunpack.c.l.b16 %v1142
        %v1729 = vunpack.c.h.b16 %v1142
        %v1730 = vunpack.c.l.b16 %v1143
        %v1731 = vunpack.c.h.b16 %v1143
        %v1732 = vunpack.c.l.b16 %v1144
        %v1733 = vunpack.c.h.b16 %v1144
        %v1734 = vunpack.c.l.b16 %v1145
        %v1735 = vunpack.c.h.b16 %v1145
        %v1736 = vunpack.c.l.b16 %v1146
        %v1737 = vunpack.c.h.b16 %v1146
        %v1738 = vunpack.c.l.b16 %v1147
        %v1739 = vunpack.c.h.b16 %v1147
        %v1740 = vunpack.c.l.b16 %v1148
        %v1741 = vunpack.c.h.b16 %v1148
        %v1742 = vunpack.c.l.b16 %v1149
        %v1743 = vunpack.c.h.b16 %v1149
        %v1744 = vunpack.c.l.b16 %v1150
        %v1745 = vunpack.c.h.b16 %v1150
        %v1746 = vunpack.c.l.b16 %v1151
        %v1747 = vunpack.c.h.b16 %v1151
        %v1748 = vunpack.c.l.b16 %v1152
        %v1749 = vunpack.c.h.b16 %v1152
        %v1750 = vunpack.c.l.b16 %v1153
        %v1751 = vunpack.c.h.b16 %v1153
        %v1752 = vunpack.c.l.b16 %v1154
        %v1753 = vunpack.c.h.b16 %v1154
        %v1754 = vunpack.c.l.b16 %v1155
        %v1755 = vunpack.c.h.b16 %v1155
        %v1756 = vunpack.c.l.b16 %v1156
        %v1757 = vunpack.c.h.b16 %v1156
        %v1758 = vunpack.c.l.b16 %v1157
        %v1759 = vunpack.c.h.b16 %v1157
        %v1760 = vunpack.c.l.b16 %v1158
        %v1761 = vunpack.c.h.b16 %v1158
        %v1762 = vunpack.c.l.b16 %v1159
        %v1763 = vunpack.c.h.b16 %v1159
        %v1764 = vunpack.c.l.b16 %v1160
        %v1765 = vunpack.c.h.b16 %v1160
        %v1766 = vunpack.c.l.b16 %v1161
        %v1767 = vunpack.c.h.b16 %v1161
        %v1768 = vunpack.c.l.b16 %v1162
        %v1769 = vunpack.c.h.b16 %v1162
        %v1770 = vunpack.c.l.b16 %v1163
        %v1771 = vunpack.c.h.b16 %v1163
        %v1772 = vunpack.c.l.b16 %v1164
        %v1773 = vunpack.c.h.b16 %v1164
        %v1774 = vunpack.c.l.b16 %v1165
        %v1775 = vunpack.c.h.b16 %v1165
        %v1776 = vunpack.c.l.b16 %v1166
        %v1777 = vunpack.c.h.b16 %v1166
        %v1778 = vunpack.c.l.b16 %v1167
        %v1779 = vunpack.c.h.b16 %v1167
        %v1780 = vunpack.c.l.b16 %v1168
        %v1781 = vunpack.c.h.b16 %v1168
        %v1782 = vunpack.c.l.b16 %v1169
        %v1783 = vunpack.c.h.b16 %v1169
        %v1784 = vunpack.c.l.b16 %v1170
        %v1785 = vunpack.c.h.b16 %v1170
        %v1786 = vunpack.c.l.b16 %v1171
        %v1787 = vunpack.c.h.b16 %v1171
        %v1788 = vunpack.c.l.b16 %v1172
        %v1789 = vunpack.c.h.b16 %v1172
        %v1790 = vunpack.c.l.b16 %v1173
        %v1791 = vunpack.c.h.b16 %v1173
        %v1792 = vunpack.c.l.b16 %v1174
        %v1793 = vunpack.c.h.b16 %v1174
        %v1794 = vunpack.c.l.b16 %v1175
        %v1795 = vunpack.c.h.b16 %v1175
        %v1796 = vunpack.c.l.b16 %v1176
        %v1797 = vunpack.c.h.b16 %v1176
        %v1798 = vunpack.c.l.b16 %v1177
        %v1799 = vunpack.c.h.b16 %v1177
        %v1800 = vunpack.c.l.b16 %v1178
        %v1801 = vunpack.c.h.b16 %v1178
        %v1802 = vunpack.c.l.b16 %v1179
        %v1803 = vunpack.c.h.b16 %v1179
        %v1804 = vunpack.c.l.b16 %v1180
        %v1805 = vunpack.c.h.b16 %v1180
        %v1806 = vunpack.c.l.b16 %v1181
        %v1807 = vunpack.c.h.b16 %v1181
        %v1808 = vunpack.c.l.b16 %v1182
        %v1809 = vunpack.c.h.b16 %v1182
        %v1810 = vunpack.c.l.b16 %v1183
        %v1811 = vunpack.c.h.b16 %v1183
        %v1812 = vunpack.c.l.b16 %v1184
        %v1813 = vunpack.c.h.b16 %v1184
        %v1814 = vunpack.c.l.b16 %v1185
        %v1815 = vunpack.c.h.b16 %v1185
        %v1816 = vunpack.c.l.b16 %v1186
        %v1817 = vunpack.c.h.b16 %v1186
        %v1818 = vunpack.c.l.b16 %v1187
        %v1819 = vunpack.c.h.b16 %v1187
        %v1820 = vunpack.c.l.b16 %v1188
        %v1821 = vunpack.c.h.b16 %v1188
        %v1822 = vunpack.c.l.b16 %v1189
        %v1823 = vunpack.c.h.b16 %v1189
        %v1824 = vunpack.c.l.b16 %v1190
        %v1825 = vunpack.c.h.b16 %v1190
        %v1826 = vunpack.c.l.b16 %v1191
        %v1827 = vunpack.c.h.b16 %v1191
        %v1828 = vunpack.c.l.b16 %v1192
        %v1829 = vunpack.c.h.b16 %v1192
        %v1830 = vunpack.c.l.b16 %v1193
        %v1831 = vunpack.c.h.b16 %v1193
        %v1832 = vunpack.c.l.b16 %v1194
        %v1833 = vunpack.c.h.b16 %v1194
        %v1834 = vunpack.c.l.b16 %v1195
        %v1835 = vunpack.c.h.b16 %v1195
        %v1836 = vunpack.c.l.b16 %v1196
        %v1837 = vunpack.c.h.b16 %v1196
        %v1838 = vunpack.c.l.b16 %v1197
        %v1839 = vunpack.c.h.b16 %v1197
        %v1840 = vunpack.c.l.b16 %v1198
        %v1841 = vunpack.c.h.b16 %v1198
        %v1842 = vunpack.c.l.b16 %v1199
        %v1843 = vunpack.c.h.b16 %v1199
        %v1844 = vunpack.c.l.b16 %v1200
        %v1845 = vunpack.c.h.b16 %v1200
        %v1846 = vunpack.c.l.b16 %v1201
        %v1847 = vunpack.c.h.b16 %v1201
        %v1848 = vunpack.c.l.b16 %v1202
        %v1849 = vunpack.c.h.b16 %v1202
        %v1850 = vunpack.c.l.b16 %v1203
        %v1851 = vunpack.c.h.b16 %v1203
        %v1852 = vunpack.c.l.b16 %v1204
        %v1853 = vunpack.c.h.b16 %v1204
        %v1854 = vunpack.c.l.b16 %v1205
        %v1855 = vunpack.c.h.b16 %v1205
        %v1856 = vunpack.c.l.b16 %v1206
        %v1857 = vunpack.c.h.b16 %v1206
        %v1858 = vunpack.c.l.b16 %v1207
        %v1859 = vunpack.c.h.b16 %v1207
        %v1860 = vunpack.c.l.b16 %v1208
        %v1861 = vunpack.c.h.b16 %v1208
        %v1862 = vunpack.c.l.b16 %v1209
        %v1863 = vunpack.c.h.b16 %v1209
        %v1864 = vunpack.c.l.b16 %v1210
        %v1865 = vunpack.c.h.b16 %v1210
        %v1866 = vunpack.c.l.b16 %v1211
        %v1867 = vunpack.c.h.b16 %v1211
        %v1868 = vunpack.c.l.b16 %v1212
        %v1869 = vunpack.c.h.b16 %v1212
        %v1870 = vunpack.c.l.b16 %v1213
        %v1871 = vunpack.c.h.b16 %v1213
        %v1872 = vunpack.c.l.b16 %v1214
        %v1873 = vunpack.c.h.b16 %v1214
        %v1874 = vunpack.c.l.b16 %v1215
        %v1875 = vunpack.c.h.b16 %v1215
        %v1876 = vunpack.c.l.b16 %v1216
        %v1877 = vunpack.c.h.b16 %v1216
        %v1878 = vunpack.c.l.b16 %v1217
        %v1879 = vunpack.c.h.b16 %v1217
        %v1880 = vunpack.c.l.b16 %v1218
        %v1881 = vunpack.c.h.b16 %v1218
        %v1882 = vunpack.c.l.b16 %v1219
        %v1883 = vunpack.c.h.b16 %v1219
        %v1884 = vunpack.c.l.b16 %v1220
        %v1885 = vunpack.c.h.b16 %v1220
        %v1886 = vunpack.c.l.b16 %v1221
        %v1887 = vunpack.c.h.b16 %v1221
        %v1888 = vunpack.c.l.b16 %v1222
        %v1889 = vunpack.c.h.b16 %v1222
        %v1890 = vunpack.c.l.b16 %v1223
        %v1891 = vunpack.c.h.b16 %v1223
        %v1892 = vunpack.c.l.b16 %v1224
        %v1893 = vunpack.c.h.b16 %v1224
        %v1894 = vunpack.c.l.b16 %v1225
        %v1895 = vunpack.c.h.b16 %v1225
        %v1896 = vunpack.c.l.b16 %v1226
        %v1897 = vunpack.c.h.b16 %v1226
        %v1898 = vunpack.c.l.b16 %v1227
        %v1899 = vunpack.c.h.b16 %v1227
        %v1900 = vunpack.c.l.b16 %v1228
        %v1901 = vunpack.c.h.b16 %v1228
        %v1902 = vunpack.c.l.b16 %v1229
        %v1903 = vunpack.c.h.b16 %v1229
        %v1904 = vunpack.c.l.b16 %v1230
        %v1905 = vunpack.c.h.b16 %v1230
        %v1906 = vunpack.c.l.b16 %v1231
        %v1907 = vunpack.c.h.b16 %v1231
        %v1908 = vunpack.c.l.b16 %v1232
        %v1909 = vunpack.c.h.b16 %v1232
        %v1910 = vunpack.c.l.b16 %v1233
        %v1911 = vunpack.c.h.b16 %v1233
        %v1912 = vunpack.c.l.b16 %v1234
        %v1913 = vunpack.c.h.b16 %v1234
        %v1914 = vunpack.c.l.b16 %v1235
        %v1915 = vunpack.c.h.b16 %v1235
        %v1916 = vunpack.c.l.b16 %v1236
        %v1917 = vunpack.c.h.b16 %v1236
        %v1918 = vunpack.c.l.b16 %v1237
        %v1919 = vunpack.c.h.b16 %v1237
        %v1920 = vunpack.c.l.b16 %v1238
        %v1921 = vunpack.c.h.b16 %v1238
        %v1922 = vunpack.c.l.b16 %v1239
        %v1923 = vunpack.c.h.b16 %v1239
        %v1924 = vunpack.c.l.b16 %v1240
        %v1925 = vunpack.c.h.b16 %v1240
        %v1926 = vunpack.c.l.b16 %v1241
        %v1927 = vunpack.c.h.b16 %v1241
        %v1928 = vunpack.c.l.b16 %v1242
        %v1929 = vunpack.c.h.b16 %v1242
        %v1930 = vunpack.c.l.b16 %v1243
        %v1931 = vunpack.c.h.b16 %v1243
        %v1932 = vunpack.c.l.b16 %v1244
        %v1933 = vunpack.c.h.b16 %v1244
        %v1934 = vunpack.c.l.b16 %v1245
        %v1935 = vunpack.c.h.b16 %v1245
        %v1936 = vunpack.c.l.b16 %v1246
        %v1937 = vunpack.c.h.b16 %v1246
        %v1938 = vunpack.c.l.b16 %v1247
        %v1939 = vunpack.c.h.b16 %v1247
        %v1940 = vunpack.c.l.b16 %v1248
        %v1941 = vunpack.c.h.b16 %v1248
        %v1942 = vunpack.c.l.b16 %v1249
        %v1943 = vunpack.c.h.b16 %v1249
        %v1944 = vunpack.c.l.b16 %v1250
        %v1945 = vunpack.c.h.b16 %v1250
        %v1946 = vunpack.c.l.b16 %v1251
        %v1947 = vunpack.c.h.b16 %v1251
        %v1948 = vunpack.c.l.b16 %v1252
        %v1949 = vunpack.c.h.b16 %v1252
        %v1950 = vunpack.c.l.b16 %v1253
        %v1951 = vunpack.c.h.b16 %v1253
        %v1952 = vunpack.c.l.b16 %v1254
        %v1953 = vunpack.c.h.b16 %v1254
        %v1954 = vunpack.c.l.b16 %v1255
        %v1955 = vunpack.c.h.b16 %v1255
        %v1956 = vunpack.c.l.b16 %v1256
        %v1957 = vunpack.c.h.b16 %v1256
        %v1958 = vunpack.c.l.b16 %v1257
        %v1959 = vunpack.c.h.b16 %v1257
        %v1960 = vunpack.c.l.b16 %v1258
        %v1961 = vunpack.c.h.b16 %v1258
        %v1962 = vunpack.c.l.b16 %v1259
        %v1963 = vunpack.c.h.b16 %v1259
        %v1964 = vunpack.c.l.b16 %v1260
        %v1965 = vunpack.c.h.b16 %v1260
        %v1966 = vunpack.c.l.b16 %v1261
        %v1967 = vunpack.c.h.b16 %v1261
        %v1968 = vunpack.c.l.b16 %v1262
        %v1969 = vunpack.c.h.b16 %v1262
        %v1970 = vunpack.c.l.b16 %v1263
        %v1971 = vunpack.c.h.b16 %v1263
        %v1972 = vunpack.c.l.b16 %v1264
        %v1973 = vunpack.c.h.b16 %v1264
        %v1974 = vunpack.c.l.b16 %v1265
        %v1975 = vunpack.c.h.b16 %v1265
        %v1976 = vunpack.c.l.b16 %v1266
        %v1977 = vunpack.c.h.b16 %v1266
        %v1978 = vunpack.c.l.b16 %v1267
        %v1979 = vunpack.c.h.b16 %v1267
        %v1980 = vunpack.c.l.b16 %v1268
        %v1981 = vunpack.c.h.b16 %v1268
        %v1982 = vunpack.c.l.b16 %v1269
        %v1983 = vunpack.c.h.b16 %v1269
        %v1984 = vunpack.c.l.b16 %v1270
        %v1985 = vunpack.c.h.b16 %v1270
        %v1986 = vunpack.c.l.b16 %v1271
        %v1987 = vunpack.c.h.b16 %v1271
        %v1988 = vunpack.c.l.b16 %v1272
        %v1989 = vunpack.c.h.b16 %v1272
        %v1990 = vunpack.c.l.b16 %v1273
        %v1991 = vunpack.c.h.b16 %v1273
        %v1992 = vunpack.c.l.b16 %v1274
        %v1993 = vunpack.c.h.b16 %v1274
        %v1994 = vunpack.c.l.b16 %v1275
        %v1995 = vunpack.c.h.b16 %v1275
        %v1996 = vunpack.c.l.b16 %v1276
        %v1997 = vunpack.c.h.b16 %v1276
        %v1998 = vunpack.c.l.b16 %v1277
        %v1999 = vunpack.c.h.b16 %v1277
        %v2000 = vunpack.c.l.b16 %v1278
        %v2001 = vunpack.c.h.b16 %v1278
        %v2002 = vunpack.c.l.b16 %v1279
        %v2003 = vunpack.c.h.b16 %v1279
        %v2004 = vunpack.c.l.b16 %v1280
        %v2005 = vunpack.c.h.b16 %v1280
        %v2006 = vunpack.c.l.b16 %v1281
        %v2007 = vunpack.c.h.b16 %v1281
        %v2008 = vunpack.c.l.b16 %v1282
        %v2009 = vunpack.c.h.b16 %v1282
        %v2010 = vunpack.c.l.b16 %v1283
        %v2011 = vunpack.c.h.b16 %v1283
        %v2012 = vunpack.c.l.b16 %v1284
        %v2013 = vunpack.c.h.b16 %v1284
        %v2014 = vunpack.c.l.b16 %v1285
        %v2015 = vunpack.c.h.b16 %v1285
        %v2016 = vunpack.c.l.b16 %v1286
        %v2017 = vunpack.c.h.b16 %v1286
        %v2018 = vunpack.c.l.b16 %v1287
        %v2019 = vunpack.c.h.b16 %v1287
        %v2020 = vunpack.c.l.b16 %v1288
        %v2021 = vunpack.c.h.b16 %v1288
        %v2022 = vunpack.c.l.b16 %v1289
        %v2023 = vunpack.c.h.b16 %v1289
        %v2024 = vunpack.c.l.b16 %v1290
        %v2025 = vunpack.c.h.b16 %v1290
        %v2026 = vunpack.c.l.b16 %v1291
        %v2027 = vunpack.c.h.b16 %v1291
        %v2028 = vunpack.c.l.b16 %v1292
        %v2029 = vunpack.c.h.b16 %v1292
        %v2030 = vunpack.c.l.b16 %v1293
        %v2031 = vunpack.c.h.b16 %v1293
        %v2032 = vunpack.c.l.b16 %v1294
        %v2033 = vunpack.c.h.b16 %v1294
        %v2034 = vunpack.c.l.b16 %v1295
        %v2035 = vunpack.c.h.b16 %v1295
        %v2036 = vunpack.c.l.b16 %v1296
        %v2037 = vunpack.c.h.b16 %v1296
        %v2038 = vunpack.c.l.b16 %v1297
        %v2039 = vunpack.c.h.b16 %v1297
        %v2040 = vunpack.c.l.b16 %v1298
        %v2041 = vunpack.c.h.b16 %v1298
        %v2042 = vunpack.c.l.b16 %v1299
        %v2043 = vunpack.c.h.b16 %v1299
        %v2044 = vunpack.c.l.b16 %v1300
        %v2045 = vunpack.c.h.b16 %v1300
        %v2046 = vunpack.c.l.b16 %v1301
        %v2047 = vunpack.c.h.b16 %v1301
        %v2048 = vunpack.c.l.b16 %v1302
        %v2049 = vunpack.c.h.b16 %v1302
        %v2050 = vunpack.c.l.b16 %v1303
        %v2051 = vunpack.c.h.b16 %v1303
        %v2052 = vunpack.c.l.b16 %v1304
        %v2053 = vunpack.c.h.b16 %v1304
        %v2054 = vunpack.c.l.b16 %v1305
        %v2055 = vunpack.c.h.b16 %v1305
        %v2056 = vunpack.c.l.b16 %v1306
        %v2057 = vunpack.c.h.b16 %v1306
        %v2058 = vunpack.c.l.b16 %v1307
        %v2059 = vunpack.c.h.b16 %v1307
        %v2060 = vunpack.c.l.b16 %v1308
        %v2061 = vunpack.c.h.b16 %v1308
        %v2062 = vunpack.c.l.b16 %v1309
        %v2063 = vunpack.c.h.b16 %v1309
        %v2064 = vunpack.c.l.b16 %v1310
        %v2065 = vunpack.c.h.b16 %v1310
        %v2066 = vunpack.c.l.b16 %v1311
        %v2067 = vunpack.c.h.b16 %v1311
        %v2068 = vunpack.c.l.b16 %v1312
        %v2069 = vunpack.c.h.b16 %v1312
        %v2070 = vunpack.c.l.b16 %v1313
        %v2071 = vunpack.c.h.b16 %v1313
        %v2072 = vunpack.c.l.b16 %v1314
        %v2073 = vunpack.c.h.b16 %v1314
        %v2074 = vunpack.c.l.b16 %v1315
        %v2075 = vunpack.c.h.b16 %v1315
        %v2076 = vunpack.c.l.b16 %v1316
        %v2077 = vunpack.c.h.b16 %v1316
        %v2078 = vunpack.c.l.b16 %v1317
        %v2079 = vunpack.c.h.b16 %v1317
        %v2080 = vunpack.c.l.b16 %v1318
        %v2081 = vunpack.c.h.b16 %v1318
        %v2082 = vunpack.c.l.b16 %v1319
        %v2083 = vunpack.c.h.b16 %v1319
        %v2084 = vunpack.c.l.b16 %v1320
        %v2085 = vunpack.c.h.b16 %v1320
        %v2086 = vunpack.c.l.b16 %v1321
        %v2087 = vunpack.c.h.b16 %v1321
        %v2088 = vunpack.c.l.b16 %v1322
        %v2089 = vunpack.c.h.b16 %v1322
        %v2090 = vunpack.c.l.b16 %v1323
        %v2091 = vunpack.c.h.b16 %v1323
        %v2092 = vunpack.c.l.b16 %v1324
        %v2093 = vunpack.c.h.b16 %v1324
        %v2094 = vunpack.c.l.b16 %v1325
        %v2095 = vunpack.c.h.b16 %v1325
        %v2096 = vunpack.c.l.b16 %v1326
        %v2097 = vunpack.c.h.b16 %v1326
        %v2098 = vunpack.c.l.b16 %v1327
        %v2099 = vunpack.c.h.b16 %v1327
        %v2100 = vunpack.c.l.b16 %v1328
        %v2101 = vunpack.c.h.b16 %v1328
        %v2102 = vunpack.c.l.b16 %v1329
        %v2103 = vunpack.c.h.b16 %v1329
        %v2104 = vunpack.c.l.b16 %v1330
        %v2105 = vunpack.c.h.b16 %v1330
        %v2106 = vunpack.c.l.b16 %v1331
        %v2107 = vunpack.c.h.b16 %v1331
        %v2108 = vunpack.c.l.b16 %v1332
        %v2109 = vunpack.c.h.b16 %v1332
        %v2110 = vunpack.c.l.b16 %v1333
        %v2111 = vunpack.c.h.b16 %v1333
        %v2112 = vpack.c.b16 %v1604, %v1600
        %v2113 = vpack.c.b16 %v1605, %v1601
        %v2114 = vpack.c.b16 %v1606, %v1602
        %v2115 = vpack.c.b16 %v1607, %v1603
        %v2116 = vpack.c.b16 %v1612, %v1608
        %v2117 = vpack.c.b16 %v1613, %v1609
        %v2118 = vpack.c.b16 %v1614, %v1610
        %v2119 = vpack.c.b16 %v1615, %v1611
        %v2120 = vpack.c.b16 %v1620, %v1616
        %v2121 = vpack.c.b16 %v1621, %v1617
        %v2122 = vpack.c.b16 %v1622, %v1618
        %v2123 = vpack.c.b16 %v1623, %v1619
        %v2124 = vpack.c.b16 %v1628, %v1624
        %v2125 = vpack.c.b16 %v1629, %v1625
        %v2126 = vpack.c.b16 %v1630, %v1626
        %v2127 = vpack.c.b16 %v1631, %v1627
        %v2128 = vpack.c.b16 %v1636, %v1632
        %v2129 = vpack.c.b16 %v1637, %v1633
        %v2130 = vpack.c.b16 %v1638, %v1634
        %v2131 = vpack.c.b16 %v1639, %v1635
        %v2132 = vpack.c.b16 %v1644, %v1640
        %v2133 = vpack.c.b16 %v1645, %v1641
        %v2134 = vpack.c.b16 %v1646, %v1642
        %v2135 = vpack.c.b16 %v1647, %v1643
        %v2136 = vpack.c.b16 %v1652, %v1648
        %v2137 = vpack.c.b16 %v1653, %v1649
        %v2138 = vpack.c.b16 %v1654, %v1650
        %v2139 = vpack.c.b16 %v1655, %v1651
        %v2140 = vpack.c.b16 %v1660, %v1656
        %v2141 = vpack.c.b16 %v1661, %v1657
        %v2142 = vpack.c.b16 %v1662, %v1658
        %v2143 = vpack.c.b16 %v1663, %v1659
        %v2144 = vpack.c.b16 %v1668, %v1664
        %v2145 = vpack.c.b16 %v1669, %v1665
        %v2146 = vpack.c.b16 %v1670, %v1666
        %v2147 = vpack.c.b16 %v1671, %v1667
        %v2148 = vpack.c.b16 %v1676, %v1672
        %v2149 = vpack.c.b16 %v1677, %v1673
        %v2150 = vpack.c.b16 %v1678, %v1674
        %v2151 = vpack.c.b16 %v1679, %v1675
        %v2152 = vpack.c.b16 %v1684, %v1680
        %v2153 = vpack.c.b16 %v1685, %v1681
        %v2154 = vpack.c.b16 %v1686, %v1682
        %v2155 = vpack.c.b16 %v1687, %v1683
        %v2156 = vpack.c.b16 %v1692, %v1688
        %v2157 = vpack.c.b16 %v1693, %v1689
        %v2158 = vpack.c.b16 %v1694, %v1690
        %v2159 = vpack.c.b16 %v1695, %v1691
        %v2160 = vpack.c.b16 %v1700, %v1696
        %v2161 = vpack.c.b16 %v1701, %v1697
        %v2162 = vpack.c.b16 %v1702, %v1698
        %v2163 = vpack.c.b16 %v1703, %v1699
        %v2164 = vpack.c.b16 %v1708, %v1704
        %v2165 = vpack.c.b16 %v1709, %v1705
        %v2166 = vpack.c.b16 %v1710, %v1706
        %v2167 = vpack.c.b16 %v1711, %v1707
        %v2168 = vpack.c.b16 %v1716, %v1712
        %v2169 = vpack.c.b16 %v1717, %v1713
        %v2170 = vpack.c.b16 %v1718, %v1714
        %v2171 = vpack.c.b16 %v1719, %v1715
        %v2172 = vpack.c.b16 %v1724, %v1720
        %v2173 = vpack.c.b16 %v1725, %v1721
        %v2174 = vpack.c.b16 %v1726, %v1722
        %v2175 = vpack.c.b16 %v1727, %v1723
        %v2176 = vpack.c.b16 %v1732, %v1728
        %v2177 = vpack.c.b16 %v1733, %v1729
        %v2178 = vpack.c.b16 %v1734, %v1730
        %v2179 = vpack.c.b16 %v1735, %v1731
        %v2180 = vpack.c.b16 %v1740, %v1736
        %v2181 = vpack.c.b16 %v1741, %v1737
        %v2182 = vpack.c.b16 %v1742, %v1738
        %v2183 = vpack.c.b16 %v1743, %v1739
        %v2184 = vpack.c.b16 %v1748, %v1744
        %v2185 = vpack.c.b16 %v1749, %v1745
        %v2186 = vpack.c.b16 %v1750, %v1746
        %v2187 = vpack.c.b16 %v1751, %v1747
        %v2188 = vpack.c.b16 %v1756, %v1752
        %v2189 = vpack.c.b16 %v1757, %v1753
        %v2190 = vpack.c.b16 %v1758, %v1754
        %v2191 = vpack.c.b16 %v1759, %v1755
        %v2192 = vpack.c.b16 %v1764, %v1760
        %v2193 = vpack.c.b16 %v1765, %v1761
        %v2194 = vpack.c.b16 %v1766, %v1762
        %v2195 = vpack.c.b16 %v1767, %v1763
        %v2196 = vpack.c.b16 %v1772, %v1768
        %v2197 = vpack.c.b16 %v1773, %v1769
        %v2198 = vpack.c.b16 %v1774, %v1770
        %v2199 = vpack.c.b16 %v1775, %v1771
        %v2200 = vpack.c.b16 %v1780, %v1776
        %v2201 = vpack.c.b16 %v1781, %v1777
        %v2202 = vpack.c.b16 %v1782, %v1778
        %v2203 = vpack.c.b16 %v1783, %v1779
        %v2204 = vpack.c.b16 %v1788, %v1784
        %v2205 = vpack.c.b16 %v1789, %v1785
        %v2206 = vpack.c.b16 %v1790, %v1786
        %v2207 = vpack.c.b16 %v1791, %v1787
        %v2208 = vpack.c.b16 %v1796, %v1792
        %v2209 = vpack.c.b16 %v1797, %v1793
        %v2210 = vpack.c.b16 %v1798, %v1794
        %v2211 = vpack.c.b16 %v1799, %v1795
        %v2212 = vpack.c.b16 %v1804, %v1800
        %v2213 = vpack.c.b16 %v1805, %v1801
        %v2214 = vpack.c.b16 %v1806, %v1802
        %v2215 = vpack.c.b16 %v1807, %v1803
        %v2216 = vpack.c.b16 %v1812, %v1808
        %v2217 = vpack.c.b16 %v1813, %v1809
        %v2218 = vpack.c.b16 %v1814, %v1810
        %v2219 = vpack.c.b16 %v1815, %v1811
        %v2220 = vpack.c.b16 %v1820, %v1816
        %v2221 = vpack.c.b16 %v1821, %v1817
        %v2222 = vpack.c.b16 %v1822, %v1818
        %v2223 = vpack.c.b16 %v1823, %v1819
        %v2224 = vpack.c.b16 %v1828, %v1824
        %v2225 = vpack.c.b16 %v1829, %v1825
        %v2226 = vpack.c.b16 %v1830, %v1826
        %v2227 = vpack.c.b16 %v1831, %v1827
        %v2228 = vpack.c.b16 %v1836, %v1832
        %v2229 = vpack.c.b16 %v1837, %v1833
        %v2230 = vpack.c.b16 %v1838, %v1834
        %v2231 = vpack.c.b16 %v1839, %v1835
        %v2232 = vpack.c.b16 %v1844, %v1840
        %v2233 = vpack.c.b16 %v1845, %v1841
        %v2234 = vpack.c.b16 %v1846, %v1842
        %v2235 = vpack.c.b16 %v1847, %v1843
        %v2236 = vpack.c.b16 %v1852, %v1848
        %v2237 = vpack.c.b16 %v1853, %v1849
        %v2238 = vpack.c.b16 %v1854, %v1850
        %v2239 = vpack.c.b16 %v1855, %v1851
        %v2240 = vpack.c.b16 %v1860, %v1856
        %v2241 = vpack.c.b16 %v1861, %v1857
        %v2242 = vpack.c.b16 %v1862, %v1858
        %v2243 = vpack.c.b16 %v1863, %v1859
        %v2244 = vpack.c.b16 %v1868, %v1864
        %v2245 = vpack.c.b16 %v1869, %v1865
        %v2246 = vpack.c.b16 %v1870, %v1866
        %v2247 = vpack.c.b16 %v1871, %v1867
        %v2248 = vpack.c.b16 %v1876, %v1872
        %v2249 = vpack.c.b16 %v1877, %v1873
        %v2250 = vpack.c.b16 %v1878, %v1874
        %v2251 = vpack.c.b16 %v1879, %v1875
        %v2252 = vpack.c.b16 %v1884, %v1880
        %v2253 = vpack.c.b16 %v1885, %v1881
        %v2254 = vpack.c.b16 %v1886, %v1882
        %v2255 = vpack.c.b16 %v1887, %v1883
        %v2256 = vpack.c.b16 %v1892, %v1888
        %v2257 = vpack.c.b16 %v1893, %v1889
        %v2258 = vpack.c.b16 %v1894, %v1890
        %v2259 = vpack.c.b16 %v1895, %v1891
        %v2260 = vpack.c.b16 %v1900, %v1896
        %v2261 = vpack.c.b16 %v1901, %v1897
        %v2262 = vpack.c.b16 %v1902, %v1898
        %v2263 = vpack.c.b16 %v1903, %v1899
        %v2264 = vpack.c.b16 %v1908, %v1904
        %v2265 = vpack.c.b16 %v1909, %v1905
        %v2266 = vpack.c.b16 %v1910, %v1906
        %v2267 = vpack.c.b16 %v1911, %v1907
        %v2268 = vpack.c.b16 %v1916, %v1912
        %v2269 = vpack.c.b16 %v1917, %v1913
        %v2270 = vpack.c.b16 %v1918, %v1914
        %v2271 = vpack.c.b16 %v1919, %v1915
        %v2272 = vpack.c.b16 %v1924, %v1920
        %v2273 = vpack.c.b16 %v1925, %v1921
        %v2274 = vpack.c.b16 %v1926, %v1922
        %v2275 = vpack.c.b16 %v1927, %v1923
        %v2276 = vpack.c.b16 %v1932, %v1928
        %v2277 = vpack.c.b16 %v1933, %v1929
        %v2278 = vpack.c.b16 %v1934, %v1930
        %v2279 = vpack.c.b16 %v1935, %v1931
        %v2280 = vpack.c.b16 %v1940, %v1936
        %v2281 = vpack.c.b16 %v1941, %v1937
        %v2282 = vpack.c.b16 %v1942, %v1938
        %v2283 = vpack.c.b16 %v1943, %v1939
        %v2284 = vpack.c.b16 %v1948, %v1944
        %v2285 = vpack.c.b16 %v1949, %v1945
        %v2286 = vpack.c.b16 %v1950, %v1946
        %v2287 = vpack.c.b16 %v1951, %v1947
        %v2288 = vpack.c.b16 %v1956, %v1952
        %v2289 = vpack.c.b16 %v1957, %v1953
        %v2290 = vpack.c.b16 %v1958, %v1954
        %v2291 = vpack.c.b16 %v1959, %v1955
        %v2292 = vpack.c.b16 %v1964, %v1960
        %v2293 = vpack.c.b16 %v1965, %v1961
        %v2294 = vpack.c.b16 %v1966, %v1962
        %v2295 = vpack.c.b16 %v1967, %v1963
        %v2296 = vpack.c.b16 %v1972, %v1968
        %v2297 = vpack.c.b16 %v1973, %v1969
        %v2298 = vpack.c.b16 %v1974, %v1970
        %v2299 = vpack.c.b16 %v1975, %v1971
        %v2300 = vpack.c.b16 %v1980, %v1976
        %v2301 = vpack.c.b16 %v1981, %v1977
        %v2302 = vpack.c.b16 %v1982, %v1978
        %v2303 = vpack.c.b16 %v1983, %v1979
        %v2304 = vpack.c.b16 %v1988, %v1984
        %v2305 = vpack.c.b16 %v1989, %v1985
        %v2306 = vpack.c.b16 %v1990, %v1986
        %v2307 = vpack.c.b16 %v1991, %v1987
        %v2308 = vpack.c.b16 %v1996, %v1992
        %v2309 = vpack.c.b16 %v1997, %v1993
        %v2310 = vpack.c.b16 %v1998, %v1994
        %v2311 = vpack.c.b16 %v1999, %v1995
        %v2312 = vpack.c.b16 %v2004, %v2000
        %v2313 = vpack.c.b16 %v2005, %v2001
        %v2314 = vpack.c.b16 %v2006, %v2002
        %v2315 = vpack.c.b16 %v2007, %v2003
        %v2316 = vpack.c.b16 %v2012, %v2008
        %v2317 = vpack.c.b16 %v2013, %v2009
        %v2318 = vpack.c.b16 %v2014, %v2010
        %v2319 = vpack.c.b16 %v2015, %v2011
        %v2320 = vpack.c.b16 %v2020, %v2016
        %v2321 = vpack.c.b16 %v2021, %v2017
        %v2322 = vpack.c.b16 %v2022, %v2018
        %v2323 = vpack.c.b16 %v2023, %v2019
        %v2324 = vpack.c.b16 %v2028, %v2024
        %v2325 = vpack.c.b16 %v2029, %v2025
        %v2326 = vpack.c.b16 %v2030, %v2026
        %v2327 = vpack.c.b16 %v2031, %v2027
        %v2328 = vpack.c.b16 %v2036, %v2032
        %v2329 = vpack.c.b16 %v2037, %v2033
        %v2330 = vpack.c.b16 %v2038, %v2034
        %v2331 = vpack.c.b16 %v2039, %v2035
        %v2332 = vpack.c.b16 %v2044, %v2040
        %v2333 = vpack.c.b16 %v2045, %v2041
        %v2334 = vpack.c.b16 %v2046, %v2042
        %v2335 = vpack.c.b16 %v2047, %v2043
        %v2336 = vpack.c.b16 %v2052, %v2048
        %v2337 = vpack.c.b16 %v2053, %v2049
        %v2338 = vpack.c.b16 %v2054, %v2050
        %v2339 = vpack.c.b16 %v2055, %v2051
        %v2340 = vpack.c.b16 %v2060, %v2056
        %v2341 = vpack.c.b16 %v2061, %v2057
        %v2342 = vpack.c.b16 %v2062, %v2058
        %v2343 = vpack.c.b16 %v2063, %v2059
        %v2344 = vpack.c.b16 %v2068, %v2064
        %v2345 = vpack.c.b16 %v2069, %v2065
        %v2346 = vpack.c.b16 %v2070, %v2066
        %v2347 = vpack.c.b16 %v2071, %v2067
        %v2348 = vpack.c.b16 %v2076, %v2072
        %v2349 = vpack.c.b16 %v2077, %v2073
        %v2350 = vpack.c.b16 %v2078, %v2074
        %v2351 = vpack.c.b16 %v2079, %v2075
        %v2352 = vpack.c.b16 %v2084, %v2080
        %v2353 = vpack.c.b16 %v2085, %v2081
        %v2354 = vpack.c.b16 %v2086, %v2082
        %v2355 = vpack.c.b16 %v2087, %v2083
        %v2356 = vpack.c.b16 %v2092, %v2088
        %v2357 = vpack.c.b16 %v2093, %v2089
        %v2358 = vpack.c.b16 %v2094, %v2090
        %v2359 = vpack.c.b16 %v2095, %v2091
        %v2360 = vpack.c.b16 %v2100, %v2096
        %v2361 = vpack.c.b16 %v2101, %v2097
        %v2362 = vpack.c.b16 %v2102, %v2098
        %v2363 = vpack.c.b16 %v2103, %v2099
        %v2364 = vpack.c.b16 %v2108, %v2104
        %v2365 = vpack.c.b16 %v2109, %v2105
        %v2366 = vpack.c.b16 %v2110, %v2106
        %v2367 = vpack.c.b16 %v2111, %v2107
        %2624 = vmatpush.bf16.msra.mxu0 %v2140
        %2625 = vmatpush.bf16.msra.mxu0 %v2136
        %2626 = vmatpush.bf16.msra.mxu0 %v2132
        %2627 = vmatpush.bf16.msra.mxu0 %v2128
        %2628 = vmatpush.bf16.msra.mxu0 %v2124
        %2629 = vmatpush.bf16.msra.mxu0 %v2120
        %2630 = vmatpush.bf16.msra.mxu0 %v2116
        %2631 = vmatpush.bf16.msra.mxu0 %v2112
        %2632 = vmatmul.bf16.gmra.mxu0 %v822
        %v2633 = vpop.f32.mrf.mxu0
        %v2634 = vadd.f32 %v1336, %v2633
        %v2635 = vpop.f32.mrf.mxu0
        %v2636 = vadd.f32 %v1336, %v2635
        %2637 = vmatmul.bf16.gmra.mxu0 %v830
        %v2638 = vpop.f32.mrf.mxu0
        %v2639 = vadd.f32 %v1336, %v2638
        %v2640 = vpop.f32.mrf.mxu0
        %v2641 = vadd.f32 %v1336, %v2640
        %2642 = vmatmul.bf16.gmra.mxu0 %v838
        %v2643 = vpop.f32.mrf.mxu0
        %v2644 = vadd.f32 %v1336, %v2643
        %v2645 = vpop.f32.mrf.mxu0
        %v2646 = vadd.f32 %v1336, %v2645
        %2647 = vmatmul.bf16.gmra.mxu0 %v846
        %v2648 = vpop.f32.mrf.mxu0
        %v2649 = vadd.f32 %v1336, %v2648
        %v2650 = vpop.f32.mrf.mxu0
        %v2651 = vadd.f32 %v1336, %v2650
        %2652 = vmatmul.bf16.gmra.mxu0 %v854
        %v2653 = vpop.f32.mrf.mxu0
        %v2654 = vadd.f32 %v1336, %v2653
        %v2655 = vpop.f32.mrf.mxu0
        %v2656 = vadd.f32 %v1336, %v2655
        %2657 = vmatmul.bf16.gmra.mxu0 %v862
        %v2658 = vpop.f32.mrf.mxu0
        %v2659 = vadd.f32 %v1336, %v2658
        %v2660 = vpop.f32.mrf.mxu0
        %v2661 = vadd.f32 %v1336, %v2660
        %2662 = vmatmul.bf16.gmra.mxu0 %v870
        %v2663 = vpop.f32.mrf.mxu0
        %v2664 = vadd.f32 %v1336, %v2663
        %v2665 = vpop.f32.mrf.mxu0
        %v2666 = vadd.f32 %v1336, %v2665
        %2667 = vmatmul.bf16.gmra.mxu0 %v878
        %v2668 = vpop.f32.mrf.mxu0
        %v2669 = vadd.f32 %v1336, %v2668
        %v2670 = vpop.f32.mrf.mxu0
        %v2671 = vadd.f32 %v1336, %v2670
        %2672 = vmatmul.bf16.gmra.mxu0 %v886
        %v2673 = vpop.f32.mrf.mxu0
        %v2674 = vadd.f32 %v1336, %v2673
        %v2675 = vpop.f32.mrf.mxu0
        %v2676 = vadd.f32 %v1336, %v2675
        %2677 = vmatmul.bf16.gmra.mxu0 %v894
        %v2678 = vpop.f32.mrf.mxu0
        %v2679 = vadd.f32 %v1336, %v2678
        %v2680 = vpop.f32.mrf.mxu0
        %v2681 = vadd.f32 %v1336, %v2680
        %2682 = vmatmul.bf16.gmra.mxu0 %v902
        %v2683 = vpop.f32.mrf.mxu0
        %v2684 = vadd.f32 %v1336, %v2683
        %v2685 = vpop.f32.mrf.mxu0
        %v2686 = vadd.f32 %v1336, %v2685
        %2687 = vmatmul.bf16.gmra.mxu0 %v910
        %v2688 = vpop.f32.mrf.mxu0
        %v2689 = vadd.f32 %v1336, %v2688
        %v2690 = vpop.f32.mrf.mxu0
        %v2691 = vadd.f32 %v1336, %v2690
        %2692 = vmatmul.bf16.gmra.mxu0 %v918
        %v2693 = vpop.f32.mrf.mxu0
        %v2694 = vadd.f32 %v1336, %v2693
        %v2695 = vpop.f32.mrf.mxu0
        %v2696 = vadd.f32 %v1336, %v2695
        %2697 = vmatmul.bf16.gmra.mxu0 %v926
        %v2698 = vpop.f32.mrf.mxu0
        %v2699 = vadd.f32 %v1336, %v2698
        %v2700 = vpop.f32.mrf.mxu0
        %v2701 = vadd.f32 %v1336, %v2700
        %2702 = vmatmul.bf16.gmra.mxu0 %v934
        %v2703 = vpop.f32.mrf.mxu0
        %v2704 = vadd.f32 %v1336, %v2703
        %v2705 = vpop.f32.mrf.mxu0
        %v2706 = vadd.f32 %v1336, %v2705
        %2707 = vmatmul.bf16.gmra.mxu0 %v942
        %v2708 = vpop.f32.mrf.mxu0
        %v2709 = vadd.f32 %v1336, %v2708
        %v2710 = vpop.f32.mrf.mxu0
        %v2711 = vadd.f32 %v1336, %v2710
        %2712 = vmatmul.bf16.gmra.mxu0 %v950
        %v2713 = vpop.f32.mrf.mxu0
        %v2714 = vadd.f32 %v1336, %v2713
        %v2715 = vpop.f32.mrf.mxu0
        %v2716 = vadd.f32 %v1336, %v2715
        %2717 = vmatmul.bf16.gmra.mxu0 %v958
        %v2718 = vpop.f32.mrf.mxu0
        %v2719 = vadd.f32 %v1336, %v2718
        %v2720 = vpop.f32.mrf.mxu0
        %v2721 = vadd.f32 %v1336, %v2720
        %2722 = vmatmul.bf16.gmra.mxu0 %v966
        %v2723 = vpop.f32.mrf.mxu0
        %v2724 = vadd.f32 %v1336, %v2723
        %v2725 = vpop.f32.mrf.mxu0
        %v2726 = vadd.f32 %v1336, %v2725
        %2727 = vmatmul.bf16.gmra.mxu0 %v974
        %v2728 = vpop.f32.mrf.mxu0
        %v2729 = vadd.f32 %v1336, %v2728
        %v2730 = vpop.f32.mrf.mxu0
        %v2731 = vadd.f32 %v1336, %v2730
        %2732 = vmatmul.bf16.gmra.mxu0 %v982
        %v2733 = vpop.f32.mrf.mxu0
        %v2734 = vadd.f32 %v1336, %v2733
        %v2735 = vpop.f32.mrf.mxu0
        %v2736 = vadd.f32 %v1336, %v2735
        %2737 = vmatmul.bf16.gmra.mxu0 %v990
        %v2738 = vpop.f32.mrf.mxu0
        %v2739 = vadd.f32 %v1336, %v2738
        %v2740 = vpop.f32.mrf.mxu0
        %v2741 = vadd.f32 %v1336, %v2740
        %2742 = vmatmul.bf16.gmra.mxu0 %v998
        %v2743 = vpop.f32.mrf.mxu0
        %v2744 = vadd.f32 %v1336, %v2743
        %v2745 = vpop.f32.mrf.mxu0
        %v2746 = vadd.f32 %v1336, %v2745
        %2747 = vmatmul.bf16.gmra.mxu0 %v1006
        %v2748 = vpop.f32.mrf.mxu0
        %v2749 = vadd.f32 %v1336, %v2748
        %v2750 = vpop.f32.mrf.mxu0
        %v2751 = vadd.f32 %v1336, %v2750
        %2752 = vmatmul.bf16.gmra.mxu0 %v1014
        %v2753 = vpop.f32.mrf.mxu0
        %v2754 = vadd.f32 %v1336, %v2753
        %v2755 = vpop.f32.mrf.mxu0
        %v2756 = vadd.f32 %v1336, %v2755
        %2757 = vmatmul.bf16.gmra.mxu0 %v1022
        %v2758 = vpop.f32.mrf.mxu0
        %v2759 = vadd.f32 %v1336, %v2758
        %v2760 = vpop.f32.mrf.mxu0
        %v2761 = vadd.f32 %v1336, %v2760
        %2762 = vmatmul.bf16.gmra.mxu0 %v1030
        %v2763 = vpop.f32.mrf.mxu0
        %v2764 = vadd.f32 %v1336, %v2763
        %v2765 = vpop.f32.mrf.mxu0
        %v2766 = vadd.f32 %v1336, %v2765
        %2767 = vmatmul.bf16.gmra.mxu0 %v1038
        %v2768 = vpop.f32.mrf.mxu0
        %v2769 = vadd.f32 %v1336, %v2768
        %v2770 = vpop.f32.mrf.mxu0
        %v2771 = vadd.f32 %v1336, %v2770
        %2772 = vmatmul.bf16.gmra.mxu0 %v1046
        %v2773 = vpop.f32.mrf.mxu0
        %v2774 = vadd.f32 %v1336, %v2773
        %v2775 = vpop.f32.mrf.mxu0
        %v2776 = vadd.f32 %v1336, %v2775
        %2777 = vmatmul.bf16.gmra.mxu0 %v1054
        %v2778 = vpop.f32.mrf.mxu0
        %v2779 = vadd.f32 %v1336, %v2778
        %v2780 = vpop.f32.mrf.mxu0
        %v2781 = vadd.f32 %v1336, %v2780
        %2782 = vmatmul.bf16.gmra.mxu0 %v1062
        %v2783 = vpop.f32.mrf.mxu0
        %v2784 = vadd.f32 %v1336, %v2783
        %v2785 = vpop.f32.mrf.mxu0
        %v2786 = vadd.f32 %v1336, %v2785
        %2787 = vmatmul.bf16.gmra.mxu0 %v1070
        %v2788 = vpop.f32.mrf.mxu0
        %v2789 = vadd.f32 %v1336, %v2788
        %v2790 = vpop.f32.mrf.mxu0
        %v2791 = vadd.f32 %v1336, %v2790
        %2792 = vdwg.mxu0
        %2793 = vmatpush.bf16.msra.mxu0 %v2172
        %2794 = vmatpush.bf16.msra.mxu0 %v2168
        %2795 = vmatpush.bf16.msra.mxu0 %v2164
        %2796 = vmatpush.bf16.msra.mxu0 %v2160
        %2797 = vmatpush.bf16.msra.mxu0 %v2156
        %2798 = vmatpush.bf16.msra.mxu0 %v2152
        %2799 = vmatpush.bf16.msra.mxu0 %v2148
        %2800 = vmatpush.bf16.msra.mxu0 %v2144
        %2801 = vmatmul.bf16.gmra.mxu0 %v823
        %v2802 = vpop.f32.mrf.mxu0
        %v2803 = vadd.f32 %v2634, %v2802
        %v2804 = vpop.f32.mrf.mxu0
        %v2805 = vadd.f32 %v2636, %v2804
        %2806 = vmatmul.bf16.gmra.mxu0 %v831
        %v2807 = vpop.f32.mrf.mxu0
        %v2808 = vadd.f32 %v2639, %v2807
        %v2809 = vpop.f32.mrf.mxu0
        %v2810 = vadd.f32 %v2641, %v2809
        %2811 = vmatmul.bf16.gmra.mxu0 %v839
        %v2812 = vpop.f32.mrf.mxu0
        %v2813 = vadd.f32 %v2644, %v2812
        %v2814 = vpop.f32.mrf.mxu0
        %v2815 = vadd.f32 %v2646, %v2814
        %2816 = vmatmul.bf16.gmra.mxu0 %v847
        %v2817 = vpop.f32.mrf.mxu0
        %v2818 = vadd.f32 %v2649, %v2817
        %v2819 = vpop.f32.mrf.mxu0
        %v2820 = vadd.f32 %v2651, %v2819
        %2821 = vmatmul.bf16.gmra.mxu0 %v855
        %v2822 = vpop.f32.mrf.mxu0
        %v2823 = vadd.f32 %v2654, %v2822
        %v2824 = vpop.f32.mrf.mxu0
        %v2825 = vadd.f32 %v2656, %v2824
        %2826 = vmatmul.bf16.gmra.mxu0 %v863
        %v2827 = vpop.f32.mrf.mxu0
        %v2828 = vadd.f32 %v2659, %v2827
        %v2829 = vpop.f32.mrf.mxu0
        %v2830 = vadd.f32 %v2661, %v2829
        %2831 = vmatmul.bf16.gmra.mxu0 %v871
        %v2832 = vpop.f32.mrf.mxu0
        %v2833 = vadd.f32 %v2664, %v2832
        %v2834 = vpop.f32.mrf.mxu0
        %v2835 = vadd.f32 %v2666, %v2834
        %2836 = vmatmul.bf16.gmra.mxu0 %v879
        %v2837 = vpop.f32.mrf.mxu0
        %v2838 = vadd.f32 %v2669, %v2837
        %v2839 = vpop.f32.mrf.mxu0
        %v2840 = vadd.f32 %v2671, %v2839
        %2841 = vmatmul.bf16.gmra.mxu0 %v887
        %v2842 = vpop.f32.mrf.mxu0
        %v2843 = vadd.f32 %v2674, %v2842
        %v2844 = vpop.f32.mrf.mxu0
        %v2845 = vadd.f32 %v2676, %v2844
        %2846 = vmatmul.bf16.gmra.mxu0 %v895
        %v2847 = vpop.f32.mrf.mxu0
        %v2848 = vadd.f32 %v2679, %v2847
        %v2849 = vpop.f32.mrf.mxu0
        %v2850 = vadd.f32 %v2681, %v2849
        %2851 = vmatmul.bf16.gmra.mxu0 %v903
        %v2852 = vpop.f32.mrf.mxu0
        %v2853 = vadd.f32 %v2684, %v2852
        %v2854 = vpop.f32.mrf.mxu0
        %v2855 = vadd.f32 %v2686, %v2854
        %2856 = vmatmul.bf16.gmra.mxu0 %v911
        %v2857 = vpop.f32.mrf.mxu0
        %v2858 = vadd.f32 %v2689, %v2857
        %v2859 = vpop.f32.mrf.mxu0
        %v2860 = vadd.f32 %v2691, %v2859
        %2861 = vmatmul.bf16.gmra.mxu0 %v919
        %v2862 = vpop.f32.mrf.mxu0
        %v2863 = vadd.f32 %v2694, %v2862
        %v2864 = vpop.f32.mrf.mxu0
        %v2865 = vadd.f32 %v2696, %v2864
        %2866 = vmatmul.bf16.gmra.mxu0 %v927
        %v2867 = vpop.f32.mrf.mxu0
        %v2868 = vadd.f32 %v2699, %v2867
        %v2869 = vpop.f32.mrf.mxu0
        %v2870 = vadd.f32 %v2701, %v2869
        %2871 = vmatmul.bf16.gmra.mxu0 %v935
        %v2872 = vpop.f32.mrf.mxu0
        %v2873 = vadd.f32 %v2704, %v2872
        %v2874 = vpop.f32.mrf.mxu0
        %v2875 = vadd.f32 %v2706, %v2874
        %2876 = vmatmul.bf16.gmra.mxu0 %v943
        %v2877 = vpop.f32.mrf.mxu0
        %v2878 = vadd.f32 %v2709, %v2877
        %v2879 = vpop.f32.mrf.mxu0
        %v2880 = vadd.f32 %v2711, %v2879
        %2881 = vmatmul.bf16.gmra.mxu0 %v951
        %v2882 = vpop.f32.mrf.mxu0
        %v2883 = vadd.f32 %v2714, %v2882
        %v2884 = vpop.f32.mrf.mxu0
        %v2885 = vadd.f32 %v2716, %v2884
        %2886 = vmatmul.bf16.gmra.mxu0 %v959
        %v2887 = vpop.f32.mrf.mxu0
        %v2888 = vadd.f32 %v2719, %v2887
        %v2889 = vpop.f32.mrf.mxu0
        %v2890 = vadd.f32 %v2721, %v2889
        %2891 = vmatmul.bf16.gmra.mxu0 %v967
        %v2892 = vpop.f32.mrf.mxu0
        %v2893 = vadd.f32 %v2724, %v2892
        %v2894 = vpop.f32.mrf.mxu0
        %v2895 = vadd.f32 %v2726, %v2894
        %2896 = vmatmul.bf16.gmra.mxu0 %v975
        %v2897 = vpop.f32.mrf.mxu0
        %v2898 = vadd.f32 %v2729, %v2897
        %v2899 = vpop.f32.mrf.mxu0
        %v2900 = vadd.f32 %v2731, %v2899
        %2901 = vmatmul.bf16.gmra.mxu0 %v983
        %v2902 = vpop.f32.mrf.mxu0
        %v2903 = vadd.f32 %v2734, %v2902
        %v2904 = vpop.f32.mrf.mxu0
        %v2905 = vadd.f32 %v2736, %v2904
        %2906 = vmatmul.bf16.gmra.mxu0 %v991
        %v2907 = vpop.f32.mrf.mxu0
        %v2908 = vadd.f32 %v2739, %v2907
        %v2909 = vpop.f32.mrf.mxu0
        %v2910 = vadd.f32 %v2741, %v2909
        %2911 = vmatmul.bf16.gmra.mxu0 %v999
        %v2912 = vpop.f32.mrf.mxu0
        %v2913 = vadd.f32 %v2744, %v2912
        %v2914 = vpop.f32.mrf.mxu0
        %v2915 = vadd.f32 %v2746, %v2914
        %2916 = vmatmul.bf16.gmra.mxu0 %v1007
        %v2917 = vpop.f32.mrf.mxu0
        %v2918 = vadd.f32 %v2749, %v2917
        %v2919 = vpop.f32.mrf.mxu0
        %v2920 = vadd.f32 %v2751, %v2919
        %2921 = vmatmul.bf16.gmra.mxu0 %v1015
        %v2922 = vpop.f32.mrf.mxu0
        %v2923 = vadd.f32 %v2754, %v2922
        %v2924 = vpop.f32.mrf.mxu0
        %v2925 = vadd.f32 %v2756, %v2924
        %2926 = vmatmul.bf16.gmra.mxu0 %v1023
        %v2927 = vpop.f32.mrf.mxu0
        %v2928 = vadd.f32 %v2759, %v2927
        %v2929 = vpop.f32.mrf.mxu0
        %v2930 = vadd.f32 %v2761, %v2929
        %2931 = vmatmul.bf16.gmra.mxu0 %v1031
        %v2932 = vpop.f32.mrf.mxu0
        %v2933 = vadd.f32 %v2764, %v2932
        %v2934 = vpop.f32.mrf.mxu0
        %v2935 = vadd.f32 %v2766, %v2934
        %2936 = vmatmul.bf16.gmra.mxu0 %v1039
        %v2937 = vpop.f32.mrf.mxu0
        %v2938 = vadd.f32 %v2769, %v2937
        %v2939 = vpop.f32.mrf.mxu0
        %v2940 = vadd.f32 %v2771, %v2939
        %2941 = vmatmul.bf16.gmra.mxu0 %v1047
        %v2942 = vpop.f32.mrf.mxu0
        %v2943 = vadd.f32 %v2774, %v2942
        %v2944 = vpop.f32.mrf.mxu0
        %v2945 = vadd.f32 %v2776, %v2944
        %2946 = vmatmul.bf16.gmra.mxu0 %v1055
        %v2947 = vpop.f32.mrf.mxu0
        %v2948 = vadd.f32 %v2779, %v2947
        %v2949 = vpop.f32.mrf.mxu0
        %v2950 = vadd.f32 %v2781, %v2949
        %2951 = vmatmul.bf16.gmra.mxu0 %v1063
        %v2952 = vpop.f32.mrf.mxu0
        %v2953 = vadd.f32 %v2784, %v2952
        %v2954 = vpop.f32.mrf.mxu0
        %v2955 = vadd.f32 %v2786, %v2954
        %2956 = vmatmul.bf16.gmra.mxu0 %v1071
        %v2957 = vpop.f32.mrf.mxu0
        %v2958 = vadd.f32 %v2789, %v2957
        %v2959 = vpop.f32.mrf.mxu0
        %v2960 = vadd.f32 %v2791, %v2959
        %2961 = vdwg.mxu0
        %2962 = vmatpush.bf16.msra.mxu0 %v2204
        %2963 = vmatpush.bf16.msra.mxu0 %v2200
        %2964 = vmatpush.bf16.msra.mxu0 %v2196
        %2965 = vmatpush.bf16.msra.mxu0 %v2192
        %2966 = vmatpush.bf16.msra.mxu0 %v2188
        %2967 = vmatpush.bf16.msra.mxu0 %v2184
        %2968 = vmatpush.bf16.msra.mxu0 %v2180
        %2969 = vmatpush.bf16.msra.mxu0 %v2176
        %2970 = vmatmul.bf16.gmra.mxu0 %v824
        %v2971 = vpop.f32.mrf.mxu0
        %v2972 = vadd.f32 %v2803, %v2971
        %v2973 = vpop.f32.mrf.mxu0
        %v2974 = vadd.f32 %v2805, %v2973
        %2975 = vmatmul.bf16.gmra.mxu0 %v832
        %v2976 = vpop.f32.mrf.mxu0
        %v2977 = vadd.f32 %v2808, %v2976
        %v2978 = vpop.f32.mrf.mxu0
        %v2979 = vadd.f32 %v2810, %v2978
        %2980 = vmatmul.bf16.gmra.mxu0 %v840
        %v2981 = vpop.f32.mrf.mxu0
        %v2982 = vadd.f32 %v2813, %v2981
        %v2983 = vpop.f32.mrf.mxu0
        %v2984 = vadd.f32 %v2815, %v2983
        %2985 = vmatmul.bf16.gmra.mxu0 %v848
        %v2986 = vpop.f32.mrf.mxu0
        %v2987 = vadd.f32 %v2818, %v2986
        %v2988 = vpop.f32.mrf.mxu0
        %v2989 = vadd.f32 %v2820, %v2988
        %2990 = vmatmul.bf16.gmra.mxu0 %v856
        %v2991 = vpop.f32.mrf.mxu0
        %v2992 = vadd.f32 %v2823, %v2991
        %v2993 = vpop.f32.mrf.mxu0
        %v2994 = vadd.f32 %v2825, %v2993
        %2995 = vmatmul.bf16.gmra.mxu0 %v864
        %v2996 = vpop.f32.mrf.mxu0
        %v2997 = vadd.f32 %v2828, %v2996
        %v2998 = vpop.f32.mrf.mxu0
        %v2999 = vadd.f32 %v2830, %v2998
        %3000 = vmatmul.bf16.gmra.mxu0 %v872
        %v3001 = vpop.f32.mrf.mxu0
        %v3002 = vadd.f32 %v2833, %v3001
        %v3003 = vpop.f32.mrf.mxu0
        %v3004 = vadd.f32 %v2835, %v3003
        %3005 = vmatmul.bf16.gmra.mxu0 %v880
        %v3006 = vpop.f32.mrf.mxu0
        %v3007 = vadd.f32 %v2838, %v3006
        %v3008 = vpop.f32.mrf.mxu0
        %v3009 = vadd.f32 %v2840, %v3008
        %3010 = vmatmul.bf16.gmra.mxu0 %v888
        %v3011 = vpop.f32.mrf.mxu0
        %v3012 = vadd.f32 %v2843, %v3011
        %v3013 = vpop.f32.mrf.mxu0
        %v3014 = vadd.f32 %v2845, %v3013
        %3015 = vmatmul.bf16.gmra.mxu0 %v896
        %v3016 = vpop.f32.mrf.mxu0
        %v3017 = vadd.f32 %v2848, %v3016
        %v3018 = vpop.f32.mrf.mxu0
        %v3019 = vadd.f32 %v2850, %v3018
        %3020 = vmatmul.bf16.gmra.mxu0 %v904
        %v3021 = vpop.f32.mrf.mxu0
        %v3022 = vadd.f32 %v2853, %v3021
        %v3023 = vpop.f32.mrf.mxu0
        %v3024 = vadd.f32 %v2855, %v3023
        %3025 = vmatmul.bf16.gmra.mxu0 %v912
        %v3026 = vpop.f32.mrf.mxu0
        %v3027 = vadd.f32 %v2858, %v3026
        %v3028 = vpop.f32.mrf.mxu0
        %v3029 = vadd.f32 %v2860, %v3028
        %3030 = vmatmul.bf16.gmra.mxu0 %v920
        %v3031 = vpop.f32.mrf.mxu0
        %v3032 = vadd.f32 %v2863, %v3031
        %v3033 = vpop.f32.mrf.mxu0
        %v3034 = vadd.f32 %v2865, %v3033
        %3035 = vmatmul.bf16.gmra.mxu0 %v928
        %v3036 = vpop.f32.mrf.mxu0
        %v3037 = vadd.f32 %v2868, %v3036
        %v3038 = vpop.f32.mrf.mxu0
        %v3039 = vadd.f32 %v2870, %v3038
        %3040 = vmatmul.bf16.gmra.mxu0 %v936
        %v3041 = vpop.f32.mrf.mxu0
        %v3042 = vadd.f32 %v2873, %v3041
        %v3043 = vpop.f32.mrf.mxu0
        %v3044 = vadd.f32 %v2875, %v3043
        %3045 = vmatmul.bf16.gmra.mxu0 %v944
        %v3046 = vpop.f32.mrf.mxu0
        %v3047 = vadd.f32 %v2878, %v3046
        %v3048 = vpop.f32.mrf.mxu0
        %v3049 = vadd.f32 %v2880, %v3048
        %3050 = vmatmul.bf16.gmra.mxu0 %v952
        %v3051 = vpop.f32.mrf.mxu0
        %v3052 = vadd.f32 %v2883, %v3051
        %v3053 = vpop.f32.mrf.mxu0
        %v3054 = vadd.f32 %v2885, %v3053
        %3055 = vmatmul.bf16.gmra.mxu0 %v960
        %v3056 = vpop.f32.mrf.mxu0
        %v3057 = vadd.f32 %v2888, %v3056
        %v3058 = vpop.f32.mrf.mxu0
        %v3059 = vadd.f32 %v2890, %v3058
        %3060 = vmatmul.bf16.gmra.mxu0 %v968
        %v3061 = vpop.f32.mrf.mxu0
        %v3062 = vadd.f32 %v2893, %v3061
        %v3063 = vpop.f32.mrf.mxu0
        %v3064 = vadd.f32 %v2895, %v3063
        %3065 = vmatmul.bf16.gmra.mxu0 %v976
        %v3066 = vpop.f32.mrf.mxu0
        %v3067 = vadd.f32 %v2898, %v3066
        %v3068 = vpop.f32.mrf.mxu0
        %v3069 = vadd.f32 %v2900, %v3068
        %3070 = vmatmul.bf16.gmra.mxu0 %v984
        %v3071 = vpop.f32.mrf.mxu0
        %v3072 = vadd.f32 %v2903, %v3071
        %v3073 = vpop.f32.mrf.mxu0
        %v3074 = vadd.f32 %v2905, %v3073
        %3075 = vmatmul.bf16.gmra.mxu0 %v992
        %v3076 = vpop.f32.mrf.mxu0
        %v3077 = vadd.f32 %v2908, %v3076
        %v3078 = vpop.f32.mrf.mxu0
        %v3079 = vadd.f32 %v2910, %v3078
        %3080 = vmatmul.bf16.gmra.mxu0 %v1000
        %v3081 = vpop.f32.mrf.mxu0
        %v3082 = vadd.f32 %v2913, %v3081
        %v3083 = vpop.f32.mrf.mxu0
        %v3084 = vadd.f32 %v2915, %v3083
        %3085 = vmatmul.bf16.gmra.mxu0 %v1008
        %v3086 = vpop.f32.mrf.mxu0
        %v3087 = vadd.f32 %v2918, %v3086
        %v3088 = vpop.f32.mrf.mxu0
        %v3089 = vadd.f32 %v2920, %v3088
        %3090 = vmatmul.bf16.gmra.mxu0 %v1016
        %v3091 = vpop.f32.mrf.mxu0
        %v3092 = vadd.f32 %v2923, %v3091
        %v3093 = vpop.f32.mrf.mxu0
        %v3094 = vadd.f32 %v2925, %v3093
        %3095 = vmatmul.bf16.gmra.mxu0 %v1024
        %v3096 = vpop.f32.mrf.mxu0
        %v3097 = vadd.f32 %v2928, %v3096
        %v3098 = vpop.f32.mrf.mxu0
        %v3099 = vadd.f32 %v2930, %v3098
        %3100 = vmatmul.bf16.gmra.mxu0 %v1032
        %v3101 = vpop.f32.mrf.mxu0
        %v3102 = vadd.f32 %v2933, %v3101
        %v3103 = vpop.f32.mrf.mxu0
        %v3104 = vadd.f32 %v2935, %v3103
        %3105 = vmatmul.bf16.gmra.mxu0 %v1040
        %v3106 = vpop.f32.mrf.mxu0
        %v3107 = vadd.f32 %v2938, %v3106
        %v3108 = vpop.f32.mrf.mxu0
        %v3109 = vadd.f32 %v2940, %v3108
        %3110 = vmatmul.bf16.gmra.mxu0 %v1048
        %v3111 = vpop.f32.mrf.mxu0
        %v3112 = vadd.f32 %v2943, %v3111
        %v3113 = vpop.f32.mrf.mxu0
        %v3114 = vadd.f32 %v2945, %v3113
        %3115 = vmatmul.bf16.gmra.mxu0 %v1056
        %v3116 = vpop.f32.mrf.mxu0
        %v3117 = vadd.f32 %v2948, %v3116
        %v3118 = vpop.f32.mrf.mxu0
        %v3119 = vadd.f32 %v2950, %v3118
        %3120 = vmatmul.bf16.gmra.mxu0 %v1064
        %v3121 = vpop.f32.mrf.mxu0
        %v3122 = vadd.f32 %v2953, %v3121
        %v3123 = vpop.f32.mrf.mxu0
        %v3124 = vadd.f32 %v2955, %v3123
        %3125 = vmatmul.bf16.gmra.mxu0 %v1072
        %v3126 = vpop.f32.mrf.mxu0
        %v3127 = vadd.f32 %v2958, %v3126
        %v3128 = vpop.f32.mrf.mxu0
        %v3129 = vadd.f32 %v2960, %v3128
        %3130 = vdwg.mxu0
        %3131 = vmatpush.bf16.msra.mxu0 %v2236
        %3132 = vmatpush.bf16.msra.mxu0 %v2232
        %3133 = vmatpush.bf16.msra.mxu0 %v2228
        %3134 = vmatpush.bf16.msra.mxu0 %v2224
        %3135 = vmatpush.bf16.msra.mxu0 %v2220
        %3136 = vmatpush.bf16.msra.mxu0 %v2216
        %3137 = vmatpush.bf16.msra.mxu0 %v2212
        %3138 = vmatpush.bf16.msra.mxu0 %v2208
        %3139 = vmatmul.bf16.gmra.mxu0 %v825
        %v3140 = vpop.f32.mrf.mxu0
        %v3141 = vadd.f32 %v2972, %v3140
        %v3142 = vpop.f32.mrf.mxu0
        %v3143 = vadd.f32 %v2974, %v3142
        %3144 = vmatmul.bf16.gmra.mxu0 %v833
        %v3145 = vpop.f32.mrf.mxu0
        %v3146 = vadd.f32 %v2977, %v3145
        %v3147 = vpop.f32.mrf.mxu0
        %v3148 = vadd.f32 %v2979, %v3147
        %3149 = vmatmul.bf16.gmra.mxu0 %v841
        %v3150 = vpop.f32.mrf.mxu0
        %v3151 = vadd.f32 %v2982, %v3150
        %v3152 = vpop.f32.mrf.mxu0
        %v3153 = vadd.f32 %v2984, %v3152
        %3154 = vmatmul.bf16.gmra.mxu0 %v849
        %v3155 = vpop.f32.mrf.mxu0
        %v3156 = vadd.f32 %v2987, %v3155
        %v3157 = vpop.f32.mrf.mxu0
        %v3158 = vadd.f32 %v2989, %v3157
        %3159 = vmatmul.bf16.gmra.mxu0 %v857
        %v3160 = vpop.f32.mrf.mxu0
        %v3161 = vadd.f32 %v2992, %v3160
        %v3162 = vpop.f32.mrf.mxu0
        %v3163 = vadd.f32 %v2994, %v3162
        %3164 = vmatmul.bf16.gmra.mxu0 %v865
        %v3165 = vpop.f32.mrf.mxu0
        %v3166 = vadd.f32 %v2997, %v3165
        %v3167 = vpop.f32.mrf.mxu0
        %v3168 = vadd.f32 %v2999, %v3167
        %3169 = vmatmul.bf16.gmra.mxu0 %v873
        %v3170 = vpop.f32.mrf.mxu0
        %v3171 = vadd.f32 %v3002, %v3170
        %v3172 = vpop.f32.mrf.mxu0
        %v3173 = vadd.f32 %v3004, %v3172
        %3174 = vmatmul.bf16.gmra.mxu0 %v881
        %v3175 = vpop.f32.mrf.mxu0
        %v3176 = vadd.f32 %v3007, %v3175
        %v3177 = vpop.f32.mrf.mxu0
        %v3178 = vadd.f32 %v3009, %v3177
        %3179 = vmatmul.bf16.gmra.mxu0 %v889
        %v3180 = vpop.f32.mrf.mxu0
        %v3181 = vadd.f32 %v3012, %v3180
        %v3182 = vpop.f32.mrf.mxu0
        %v3183 = vadd.f32 %v3014, %v3182
        %3184 = vmatmul.bf16.gmra.mxu0 %v897
        %v3185 = vpop.f32.mrf.mxu0
        %v3186 = vadd.f32 %v3017, %v3185
        %v3187 = vpop.f32.mrf.mxu0
        %v3188 = vadd.f32 %v3019, %v3187
        %3189 = vmatmul.bf16.gmra.mxu0 %v905
        %v3190 = vpop.f32.mrf.mxu0
        %v3191 = vadd.f32 %v3022, %v3190
        %v3192 = vpop.f32.mrf.mxu0
        %v3193 = vadd.f32 %v3024, %v3192
        %3194 = vmatmul.bf16.gmra.mxu0 %v913
        %v3195 = vpop.f32.mrf.mxu0
        %v3196 = vadd.f32 %v3027, %v3195
        %v3197 = vpop.f32.mrf.mxu0
        %v3198 = vadd.f32 %v3029, %v3197
        %3199 = vmatmul.bf16.gmra.mxu0 %v921
        %v3200 = vpop.f32.mrf.mxu0
        %v3201 = vadd.f32 %v3032, %v3200
        %v3202 = vpop.f32.mrf.mxu0
        %v3203 = vadd.f32 %v3034, %v3202
        %3204 = vmatmul.bf16.gmra.mxu0 %v929
        %v3205 = vpop.f32.mrf.mxu0
        %v3206 = vadd.f32 %v3037, %v3205
        %v3207 = vpop.f32.mrf.mxu0
        %v3208 = vadd.f32 %v3039, %v3207
        %3209 = vmatmul.bf16.gmra.mxu0 %v937
        %v3210 = vpop.f32.mrf.mxu0
        %v3211 = vadd.f32 %v3042, %v3210
        %v3212 = vpop.f32.mrf.mxu0
        %v3213 = vadd.f32 %v3044, %v3212
        %3214 = vmatmul.bf16.gmra.mxu0 %v945
        %v3215 = vpop.f32.mrf.mxu0
        %v3216 = vadd.f32 %v3047, %v3215
        %v3217 = vpop.f32.mrf.mxu0
        %v3218 = vadd.f32 %v3049, %v3217
        %3219 = vmatmul.bf16.gmra.mxu0 %v953
        %v3220 = vpop.f32.mrf.mxu0
        %v3221 = vadd.f32 %v3052, %v3220
        %v3222 = vpop.f32.mrf.mxu0
        %v3223 = vadd.f32 %v3054, %v3222
        %3224 = vmatmul.bf16.gmra.mxu0 %v961
        %v3225 = vpop.f32.mrf.mxu0
        %v3226 = vadd.f32 %v3057, %v3225
        %v3227 = vpop.f32.mrf.mxu0
        %v3228 = vadd.f32 %v3059, %v3227
        %3229 = vmatmul.bf16.gmra.mxu0 %v969
        %v3230 = vpop.f32.mrf.mxu0
        %v3231 = vadd.f32 %v3062, %v3230
        %v3232 = vpop.f32.mrf.mxu0
        %v3233 = vadd.f32 %v3064, %v3232
        %3234 = vmatmul.bf16.gmra.mxu0 %v977
        %v3235 = vpop.f32.mrf.mxu0
        %v3236 = vadd.f32 %v3067, %v3235
        %v3237 = vpop.f32.mrf.mxu0
        %v3238 = vadd.f32 %v3069, %v3237
        %3239 = vmatmul.bf16.gmra.mxu0 %v985
        %v3240 = vpop.f32.mrf.mxu0
        %v3241 = vadd.f32 %v3072, %v3240
        %v3242 = vpop.f32.mrf.mxu0
        %v3243 = vadd.f32 %v3074, %v3242
        %3244 = vmatmul.bf16.gmra.mxu0 %v993
        %v3245 = vpop.f32.mrf.mxu0
        %v3246 = vadd.f32 %v3077, %v3245
        %v3247 = vpop.f32.mrf.mxu0
        %v3248 = vadd.f32 %v3079, %v3247
        %3249 = vmatmul.bf16.gmra.mxu0 %v1001
        %v3250 = vpop.f32.mrf.mxu0
        %v3251 = vadd.f32 %v3082, %v3250
        %v3252 = vpop.f32.mrf.mxu0
        %v3253 = vadd.f32 %v3084, %v3252
        %3254 = vmatmul.bf16.gmra.mxu0 %v1009
        %v3255 = vpop.f32.mrf.mxu0
        %v3256 = vadd.f32 %v3087, %v3255
        %v3257 = vpop.f32.mrf.mxu0
        %v3258 = vadd.f32 %v3089, %v3257
        %3259 = vmatmul.bf16.gmra.mxu0 %v1017
        %v3260 = vpop.f32.mrf.mxu0
        %v3261 = vadd.f32 %v3092, %v3260
        %v3262 = vpop.f32.mrf.mxu0
        %v3263 = vadd.f32 %v3094, %v3262
        %3264 = vmatmul.bf16.gmra.mxu0 %v1025
        %v3265 = vpop.f32.mrf.mxu0
        %v3266 = vadd.f32 %v3097, %v3265
        %v3267 = vpop.f32.mrf.mxu0
        %v3268 = vadd.f32 %v3099, %v3267
        %3269 = vmatmul.bf16.gmra.mxu0 %v1033
        %v3270 = vpop.f32.mrf.mxu0
        %v3271 = vadd.f32 %v3102, %v3270
        %v3272 = vpop.f32.mrf.mxu0
        %v3273 = vadd.f32 %v3104, %v3272
        %3274 = vmatmul.bf16.gmra.mxu0 %v1041
        %v3275 = vpop.f32.mrf.mxu0
        %v3276 = vadd.f32 %v3107, %v3275
        %v3277 = vpop.f32.mrf.mxu0
        %v3278 = vadd.f32 %v3109, %v3277
        %3279 = vmatmul.bf16.gmra.mxu0 %v1049
        %v3280 = vpop.f32.mrf.mxu0
        %v3281 = vadd.f32 %v3112, %v3280
        %v3282 = vpop.f32.mrf.mxu0
        %v3283 = vadd.f32 %v3114, %v3282
        %3284 = vmatmul.bf16.gmra.mxu0 %v1057
        %v3285 = vpop.f32.mrf.mxu0
        %v3286 = vadd.f32 %v3117, %v3285
        %v3287 = vpop.f32.mrf.mxu0
        %v3288 = vadd.f32 %v3119, %v3287
        %3289 = vmatmul.bf16.gmra.mxu0 %v1065
        %v3290 = vpop.f32.mrf.mxu0
        %v3291 = vadd.f32 %v3122, %v3290
        %v3292 = vpop.f32.mrf.mxu0
        %v3293 = vadd.f32 %v3124, %v3292
        %3294 = vmatmul.bf16.gmra.mxu0 %v1073
        %v3295 = vpop.f32.mrf.mxu0
        %v3296 = vadd.f32 %v3127, %v3295
        %v3297 = vpop.f32.mrf.mxu0
        %v3298 = vadd.f32 %v3129, %v3297
        %3299 = vdwg.mxu0
        %3300 = vmatpush.bf16.msra.mxu0 %v2268
        %3301 = vmatpush.bf16.msra.mxu0 %v2264
        %3302 = vmatpush.bf16.msra.mxu0 %v2260
        %3303 = vmatpush.bf16.msra.mxu0 %v2256
        %3304 = vmatpush.bf16.msra.mxu0 %v2252
        %3305 = vmatpush.bf16.msra.mxu0 %v2248
        %3306 = vmatpush.bf16.msra.mxu0 %v2244
        %3307 = vmatpush.bf16.msra.mxu0 %v2240
        %3308 = vmatmul.bf16.gmra.mxu0 %v826
        %v3309 = vpop.f32.mrf.mxu0
        %v3310 = vadd.f32 %v3141, %v3309
        %v3311 = vpop.f32.mrf.mxu0
        %v3312 = vadd.f32 %v3143, %v3311
        %3313 = vmatmul.bf16.gmra.mxu0 %v834
        %v3314 = vpop.f32.mrf.mxu0
        %v3315 = vadd.f32 %v3146, %v3314
        %v3316 = vpop.f32.mrf.mxu0
        %v3317 = vadd.f32 %v3148, %v3316
        %3318 = vmatmul.bf16.gmra.mxu0 %v842
        %v3319 = vpop.f32.mrf.mxu0
        %v3320 = vadd.f32 %v3151, %v3319
        %v3321 = vpop.f32.mrf.mxu0
        %v3322 = vadd.f32 %v3153, %v3321
        %3323 = vmatmul.bf16.gmra.mxu0 %v850
        %v3324 = vpop.f32.mrf.mxu0
        %v3325 = vadd.f32 %v3156, %v3324
        %v3326 = vpop.f32.mrf.mxu0
        %v3327 = vadd.f32 %v3158, %v3326
        %3328 = vmatmul.bf16.gmra.mxu0 %v858
        %v3329 = vpop.f32.mrf.mxu0
        %v3330 = vadd.f32 %v3161, %v3329
        %v3331 = vpop.f32.mrf.mxu0
        %v3332 = vadd.f32 %v3163, %v3331
        %3333 = vmatmul.bf16.gmra.mxu0 %v866
        %v3334 = vpop.f32.mrf.mxu0
        %v3335 = vadd.f32 %v3166, %v3334
        %v3336 = vpop.f32.mrf.mxu0
        %v3337 = vadd.f32 %v3168, %v3336
        %3338 = vmatmul.bf16.gmra.mxu0 %v874
        %v3339 = vpop.f32.mrf.mxu0
        %v3340 = vadd.f32 %v3171, %v3339
        %v3341 = vpop.f32.mrf.mxu0
        %v3342 = vadd.f32 %v3173, %v3341
        %3343 = vmatmul.bf16.gmra.mxu0 %v882
        %v3344 = vpop.f32.mrf.mxu0
        %v3345 = vadd.f32 %v3176, %v3344
        %v3346 = vpop.f32.mrf.mxu0
        %v3347 = vadd.f32 %v3178, %v3346
        %3348 = vmatmul.bf16.gmra.mxu0 %v890
        %v3349 = vpop.f32.mrf.mxu0
        %v3350 = vadd.f32 %v3181, %v3349
        %v3351 = vpop.f32.mrf.mxu0
        %v3352 = vadd.f32 %v3183, %v3351
        %3353 = vmatmul.bf16.gmra.mxu0 %v898
        %v3354 = vpop.f32.mrf.mxu0
        %v3355 = vadd.f32 %v3186, %v3354
        %v3356 = vpop.f32.mrf.mxu0
        %v3357 = vadd.f32 %v3188, %v3356
        %3358 = vmatmul.bf16.gmra.mxu0 %v906
        %v3359 = vpop.f32.mrf.mxu0
        %v3360 = vadd.f32 %v3191, %v3359
        %v3361 = vpop.f32.mrf.mxu0
        %v3362 = vadd.f32 %v3193, %v3361
        %3363 = vmatmul.bf16.gmra.mxu0 %v914
        %v3364 = vpop.f32.mrf.mxu0
        %v3365 = vadd.f32 %v3196, %v3364
        %v3366 = vpop.f32.mrf.mxu0
        %v3367 = vadd.f32 %v3198, %v3366
        %3368 = vmatmul.bf16.gmra.mxu0 %v922
        %v3369 = vpop.f32.mrf.mxu0
        %v3370 = vadd.f32 %v3201, %v3369
        %v3371 = vpop.f32.mrf.mxu0
        %v3372 = vadd.f32 %v3203, %v3371
        %3373 = vmatmul.bf16.gmra.mxu0 %v930
        %v3374 = vpop.f32.mrf.mxu0
        %v3375 = vadd.f32 %v3206, %v3374
        %v3376 = vpop.f32.mrf.mxu0
        %v3377 = vadd.f32 %v3208, %v3376
        %3378 = vmatmul.bf16.gmra.mxu0 %v938
        %v3379 = vpop.f32.mrf.mxu0
        %v3380 = vadd.f32 %v3211, %v3379
        %v3381 = vpop.f32.mrf.mxu0
        %v3382 = vadd.f32 %v3213, %v3381
        %3383 = vmatmul.bf16.gmra.mxu0 %v946
        %v3384 = vpop.f32.mrf.mxu0
        %v3385 = vadd.f32 %v3216, %v3384
        %v3386 = vpop.f32.mrf.mxu0
        %v3387 = vadd.f32 %v3218, %v3386
        %3388 = vmatmul.bf16.gmra.mxu0 %v954
        %v3389 = vpop.f32.mrf.mxu0
        %v3390 = vadd.f32 %v3221, %v3389
        %v3391 = vpop.f32.mrf.mxu0
        %v3392 = vadd.f32 %v3223, %v3391
        %3393 = vmatmul.bf16.gmra.mxu0 %v962
        %v3394 = vpop.f32.mrf.mxu0
        %v3395 = vadd.f32 %v3226, %v3394
        %v3396 = vpop.f32.mrf.mxu0
        %v3397 = vadd.f32 %v3228, %v3396
        %3398 = vmatmul.bf16.gmra.mxu0 %v970
        %v3399 = vpop.f32.mrf.mxu0
        %v3400 = vadd.f32 %v3231, %v3399
        %v3401 = vpop.f32.mrf.mxu0
        %v3402 = vadd.f32 %v3233, %v3401
        %3403 = vmatmul.bf16.gmra.mxu0 %v978
        %v3404 = vpop.f32.mrf.mxu0
        %v3405 = vadd.f32 %v3236, %v3404
        %v3406 = vpop.f32.mrf.mxu0
        %v3407 = vadd.f32 %v3238, %v3406
        %3408 = vmatmul.bf16.gmra.mxu0 %v986
        %v3409 = vpop.f32.mrf.mxu0
        %v3410 = vadd.f32 %v3241, %v3409
        %v3411 = vpop.f32.mrf.mxu0
        %v3412 = vadd.f32 %v3243, %v3411
        %3413 = vmatmul.bf16.gmra.mxu0 %v994
        %v3414 = vpop.f32.mrf.mxu0
        %v3415 = vadd.f32 %v3246, %v3414
        %v3416 = vpop.f32.mrf.mxu0
        %v3417 = vadd.f32 %v3248, %v3416
        %3418 = vmatmul.bf16.gmra.mxu0 %v1002
        %v3419 = vpop.f32.mrf.mxu0
        %v3420 = vadd.f32 %v3251, %v3419
        %v3421 = vpop.f32.mrf.mxu0
        %v3422 = vadd.f32 %v3253, %v3421
        %3423 = vmatmul.bf16.gmra.mxu0 %v1010
        %v3424 = vpop.f32.mrf.mxu0
        %v3425 = vadd.f32 %v3256, %v3424
        %v3426 = vpop.f32.mrf.mxu0
        %v3427 = vadd.f32 %v3258, %v3426
        %3428 = vmatmul.bf16.gmra.mxu0 %v1018
        %v3429 = vpop.f32.mrf.mxu0
        %v3430 = vadd.f32 %v3261, %v3429
        %v3431 = vpop.f32.mrf.mxu0
        %v3432 = vadd.f32 %v3263, %v3431
        %3433 = vmatmul.bf16.gmra.mxu0 %v1026
        %v3434 = vpop.f32.mrf.mxu0
        %v3435 = vadd.f32 %v3266, %v3434
        %v3436 = vpop.f32.mrf.mxu0
        %v3437 = vadd.f32 %v3268, %v3436
        %3438 = vmatmul.bf16.gmra.mxu0 %v1034
        %v3439 = vpop.f32.mrf.mxu0
        %v3440 = vadd.f32 %v3271, %v3439
        %v3441 = vpop.f32.mrf.mxu0
        %v3442 = vadd.f32 %v3273, %v3441
        %3443 = vmatmul.bf16.gmra.mxu0 %v1042
        %v3444 = vpop.f32.mrf.mxu0
        %v3445 = vadd.f32 %v3276, %v3444
        %v3446 = vpop.f32.mrf.mxu0
        %v3447 = vadd.f32 %v3278, %v3446
        %3448 = vmatmul.bf16.gmra.mxu0 %v1050
        %v3449 = vpop.f32.mrf.mxu0
        %v3450 = vadd.f32 %v3281, %v3449
        %v3451 = vpop.f32.mrf.mxu0
        %v3452 = vadd.f32 %v3283, %v3451
        %3453 = vmatmul.bf16.gmra.mxu0 %v1058
        %v3454 = vpop.f32.mrf.mxu0
        %v3455 = vadd.f32 %v3286, %v3454
        %v3456 = vpop.f32.mrf.mxu0
        %v3457 = vadd.f32 %v3288, %v3456
        %3458 = vmatmul.bf16.gmra.mxu0 %v1066
        %v3459 = vpop.f32.mrf.mxu0
        %v3460 = vadd.f32 %v3291, %v3459
        %v3461 = vpop.f32.mrf.mxu0
        %v3462 = vadd.f32 %v3293, %v3461
        %3463 = vmatmul.bf16.gmra.mxu0 %v1074
        %v3464 = vpop.f32.mrf.mxu0
        %v3465 = vadd.f32 %v3296, %v3464
        %v3466 = vpop.f32.mrf.mxu0
        %v3467 = vadd.f32 %v3298, %v3466
        %3468 = vdwg.mxu0
        %3469 = vmatpush.bf16.msra.mxu0 %v2300
        %3470 = vmatpush.bf16.msra.mxu0 %v2296
        %3471 = vmatpush.bf16.msra.mxu0 %v2292
        %3472 = vmatpush.bf16.msra.mxu0 %v2288
        %3473 = vmatpush.bf16.msra.mxu0 %v2284
        %3474 = vmatpush.bf16.msra.mxu0 %v2280
        %3475 = vmatpush.bf16.msra.mxu0 %v2276
        %3476 = vmatpush.bf16.msra.mxu0 %v2272
        %3477 = vmatmul.bf16.gmra.mxu0 %v827
        %v3478 = vpop.f32.mrf.mxu0
        %v3479 = vadd.f32 %v3310, %v3478
        %v3480 = vpop.f32.mrf.mxu0
        %v3481 = vadd.f32 %v3312, %v3480
        %3482 = vmatmul.bf16.gmra.mxu0 %v835
        %v3483 = vpop.f32.mrf.mxu0
        %v3484 = vadd.f32 %v3315, %v3483
        %v3485 = vpop.f32.mrf.mxu0
        %v3486 = vadd.f32 %v3317, %v3485
        %3487 = vmatmul.bf16.gmra.mxu0 %v843
        %v3488 = vpop.f32.mrf.mxu0
        %v3489 = vadd.f32 %v3320, %v3488
        %v3490 = vpop.f32.mrf.mxu0
        %v3491 = vadd.f32 %v3322, %v3490
        %3492 = vmatmul.bf16.gmra.mxu0 %v851
        %v3493 = vpop.f32.mrf.mxu0
        %v3494 = vadd.f32 %v3325, %v3493
        %v3495 = vpop.f32.mrf.mxu0
        %v3496 = vadd.f32 %v3327, %v3495
        %3497 = vmatmul.bf16.gmra.mxu0 %v859
        %v3498 = vpop.f32.mrf.mxu0
        %v3499 = vadd.f32 %v3330, %v3498
        %v3500 = vpop.f32.mrf.mxu0
        %v3501 = vadd.f32 %v3332, %v3500
        %3502 = vmatmul.bf16.gmra.mxu0 %v867
        %v3503 = vpop.f32.mrf.mxu0
        %v3504 = vadd.f32 %v3335, %v3503
        %v3505 = vpop.f32.mrf.mxu0
        %v3506 = vadd.f32 %v3337, %v3505
        %3507 = vmatmul.bf16.gmra.mxu0 %v875
        %v3508 = vpop.f32.mrf.mxu0
        %v3509 = vadd.f32 %v3340, %v3508
        %v3510 = vpop.f32.mrf.mxu0
        %v3511 = vadd.f32 %v3342, %v3510
        %3512 = vmatmul.bf16.gmra.mxu0 %v883
        %v3513 = vpop.f32.mrf.mxu0
        %v3514 = vadd.f32 %v3345, %v3513
        %v3515 = vpop.f32.mrf.mxu0
        %v3516 = vadd.f32 %v3347, %v3515
        %3517 = vmatmul.bf16.gmra.mxu0 %v891
        %v3518 = vpop.f32.mrf.mxu0
        %v3519 = vadd.f32 %v3350, %v3518
        %v3520 = vpop.f32.mrf.mxu0
        %v3521 = vadd.f32 %v3352, %v3520
        %3522 = vmatmul.bf16.gmra.mxu0 %v899
        %v3523 = vpop.f32.mrf.mxu0
        %v3524 = vadd.f32 %v3355, %v3523
        %v3525 = vpop.f32.mrf.mxu0
        %v3526 = vadd.f32 %v3357, %v3525
        %3527 = vmatmul.bf16.gmra.mxu0 %v907
        %v3528 = vpop.f32.mrf.mxu0
        %v3529 = vadd.f32 %v3360, %v3528
        %v3530 = vpop.f32.mrf.mxu0
        %v3531 = vadd.f32 %v3362, %v3530
        %3532 = vmatmul.bf16.gmra.mxu0 %v915
        %v3533 = vpop.f32.mrf.mxu0
        %v3534 = vadd.f32 %v3365, %v3533
        %v3535 = vpop.f32.mrf.mxu0
        %v3536 = vadd.f32 %v3367, %v3535
        %3537 = vmatmul.bf16.gmra.mxu0 %v923
        %v3538 = vpop.f32.mrf.mxu0
        %v3539 = vadd.f32 %v3370, %v3538
        %v3540 = vpop.f32.mrf.mxu0
        %v3541 = vadd.f32 %v3372, %v3540
        %3542 = vmatmul.bf16.gmra.mxu0 %v931
        %v3543 = vpop.f32.mrf.mxu0
        %v3544 = vadd.f32 %v3375, %v3543
        %v3545 = vpop.f32.mrf.mxu0
        %v3546 = vadd.f32 %v3377, %v3545
        %3547 = vmatmul.bf16.gmra.mxu0 %v939
        %v3548 = vpop.f32.mrf.mxu0
        %v3549 = vadd.f32 %v3380, %v3548
        %v3550 = vpop.f32.mrf.mxu0
        %v3551 = vadd.f32 %v3382, %v3550
        %3552 = vmatmul.bf16.gmra.mxu0 %v947
        %v3553 = vpop.f32.mrf.mxu0
        %v3554 = vadd.f32 %v3385, %v3553
        %v3555 = vpop.f32.mrf.mxu0
        %v3556 = vadd.f32 %v3387, %v3555
        %3557 = vmatmul.bf16.gmra.mxu0 %v955
        %v3558 = vpop.f32.mrf.mxu0
        %v3559 = vadd.f32 %v3390, %v3558
        %v3560 = vpop.f32.mrf.mxu0
        %v3561 = vadd.f32 %v3392, %v3560
        %3562 = vmatmul.bf16.gmra.mxu0 %v963
        %v3563 = vpop.f32.mrf.mxu0
        %v3564 = vadd.f32 %v3395, %v3563
        %v3565 = vpop.f32.mrf.mxu0
        %v3566 = vadd.f32 %v3397, %v3565
        %3567 = vmatmul.bf16.gmra.mxu0 %v971
        %v3568 = vpop.f32.mrf.mxu0
        %v3569 = vadd.f32 %v3400, %v3568
        %v3570 = vpop.f32.mrf.mxu0
        %v3571 = vadd.f32 %v3402, %v3570
        %3572 = vmatmul.bf16.gmra.mxu0 %v979
        %v3573 = vpop.f32.mrf.mxu0
        %v3574 = vadd.f32 %v3405, %v3573
        %v3575 = vpop.f32.mrf.mxu0
        %v3576 = vadd.f32 %v3407, %v3575
        %3577 = vmatmul.bf16.gmra.mxu0 %v987
        %v3578 = vpop.f32.mrf.mxu0
        %v3579 = vadd.f32 %v3410, %v3578
        %v3580 = vpop.f32.mrf.mxu0
        %v3581 = vadd.f32 %v3412, %v3580
        %3582 = vmatmul.bf16.gmra.mxu0 %v995
        %v3583 = vpop.f32.mrf.mxu0
        %v3584 = vadd.f32 %v3415, %v3583
        %v3585 = vpop.f32.mrf.mxu0
        %v3586 = vadd.f32 %v3417, %v3585
        %3587 = vmatmul.bf16.gmra.mxu0 %v1003
        %v3588 = vpop.f32.mrf.mxu0
        %v3589 = vadd.f32 %v3420, %v3588
        %v3590 = vpop.f32.mrf.mxu0
        %v3591 = vadd.f32 %v3422, %v3590
        %3592 = vmatmul.bf16.gmra.mxu0 %v1011
        %v3593 = vpop.f32.mrf.mxu0
        %v3594 = vadd.f32 %v3425, %v3593
        %v3595 = vpop.f32.mrf.mxu0
        %v3596 = vadd.f32 %v3427, %v3595
        %3597 = vmatmul.bf16.gmra.mxu0 %v1019
        %v3598 = vpop.f32.mrf.mxu0
        %v3599 = vadd.f32 %v3430, %v3598
        %v3600 = vpop.f32.mrf.mxu0
        %v3601 = vadd.f32 %v3432, %v3600
        %3602 = vmatmul.bf16.gmra.mxu0 %v1027
        %v3603 = vpop.f32.mrf.mxu0
        %v3604 = vadd.f32 %v3435, %v3603
        %v3605 = vpop.f32.mrf.mxu0
        %v3606 = vadd.f32 %v3437, %v3605
        %3607 = vmatmul.bf16.gmra.mxu0 %v1035
        %v3608 = vpop.f32.mrf.mxu0
        %v3609 = vadd.f32 %v3440, %v3608
        %v3610 = vpop.f32.mrf.mxu0
        %v3611 = vadd.f32 %v3442, %v3610
        %3612 = vmatmul.bf16.gmra.mxu0 %v1043
        %v3613 = vpop.f32.mrf.mxu0
        %v3614 = vadd.f32 %v3445, %v3613
        %v3615 = vpop.f32.mrf.mxu0
        %v3616 = vadd.f32 %v3447, %v3615
        %3617 = vmatmul.bf16.gmra.mxu0 %v1051
        %v3618 = vpop.f32.mrf.mxu0
        %v3619 = vadd.f32 %v3450, %v3618
        %v3620 = vpop.f32.mrf.mxu0
        %v3621 = vadd.f32 %v3452, %v3620
        %3622 = vmatmul.bf16.gmra.mxu0 %v1059
        %v3623 = vpop.f32.mrf.mxu0
        %v3624 = vadd.f32 %v3455, %v3623
        %v3625 = vpop.f32.mrf.mxu0
        %v3626 = vadd.f32 %v3457, %v3625
        %3627 = vmatmul.bf16.gmra.mxu0 %v1067
        %v3628 = vpop.f32.mrf.mxu0
        %v3629 = vadd.f32 %v3460, %v3628
        %v3630 = vpop.f32.mrf.mxu0
        %v3631 = vadd.f32 %v3462, %v3630
        %3632 = vmatmul.bf16.gmra.mxu0 %v1075
        %v3633 = vpop.f32.mrf.mxu0
        %v3634 = vadd.f32 %v3465, %v3633
        %v3635 = vpop.f32.mrf.mxu0
        %v3636 = vadd.f32 %v3467, %v3635
        %3637 = vdwg.mxu0
        %3638 = vmatpush.bf16.msra.mxu0 %v2332
        %3639 = vmatpush.bf16.msra.mxu0 %v2328
        %3640 = vmatpush.bf16.msra.mxu0 %v2324
        %3641 = vmatpush.bf16.msra.mxu0 %v2320
        %3642 = vmatpush.bf16.msra.mxu0 %v2316
        %3643 = vmatpush.bf16.msra.mxu0 %v2312
        %3644 = vmatpush.bf16.msra.mxu0 %v2308
        %3645 = vmatpush.bf16.msra.mxu0 %v2304
        %3646 = vmatmul.bf16.gmra.mxu0 %v828
        %v3647 = vpop.f32.mrf.mxu0
        %v3648 = vadd.f32 %v3479, %v3647
        %v3649 = vpop.f32.mrf.mxu0
        %v3650 = vadd.f32 %v3481, %v3649
        %3651 = vmatmul.bf16.gmra.mxu0 %v836
        %v3652 = vpop.f32.mrf.mxu0
        %v3653 = vadd.f32 %v3484, %v3652
        %v3654 = vpop.f32.mrf.mxu0
        %v3655 = vadd.f32 %v3486, %v3654
        %3656 = vmatmul.bf16.gmra.mxu0 %v844
        %v3657 = vpop.f32.mrf.mxu0
        %v3658 = vadd.f32 %v3489, %v3657
        %v3659 = vpop.f32.mrf.mxu0
        %v3660 = vadd.f32 %v3491, %v3659
        %3661 = vmatmul.bf16.gmra.mxu0 %v852
        %v3662 = vpop.f32.mrf.mxu0
        %v3663 = vadd.f32 %v3494, %v3662
        %v3664 = vpop.f32.mrf.mxu0
        %v3665 = vadd.f32 %v3496, %v3664
        %3666 = vmatmul.bf16.gmra.mxu0 %v860
        %v3667 = vpop.f32.mrf.mxu0
        %v3668 = vadd.f32 %v3499, %v3667
        %v3669 = vpop.f32.mrf.mxu0
        %v3670 = vadd.f32 %v3501, %v3669
        %3671 = vmatmul.bf16.gmra.mxu0 %v868
        %v3672 = vpop.f32.mrf.mxu0
        %v3673 = vadd.f32 %v3504, %v3672
        %v3674 = vpop.f32.mrf.mxu0
        %v3675 = vadd.f32 %v3506, %v3674
        %3676 = vmatmul.bf16.gmra.mxu0 %v876
        %v3677 = vpop.f32.mrf.mxu0
        %v3678 = vadd.f32 %v3509, %v3677
        %v3679 = vpop.f32.mrf.mxu0
        %v3680 = vadd.f32 %v3511, %v3679
        %3681 = vmatmul.bf16.gmra.mxu0 %v884
        %v3682 = vpop.f32.mrf.mxu0
        %v3683 = vadd.f32 %v3514, %v3682
        %v3684 = vpop.f32.mrf.mxu0
        %v3685 = vadd.f32 %v3516, %v3684
        %3686 = vmatmul.bf16.gmra.mxu0 %v892
        %v3687 = vpop.f32.mrf.mxu0
        %v3688 = vadd.f32 %v3519, %v3687
        %v3689 = vpop.f32.mrf.mxu0
        %v3690 = vadd.f32 %v3521, %v3689
        %3691 = vmatmul.bf16.gmra.mxu0 %v900
        %v3692 = vpop.f32.mrf.mxu0
        %v3693 = vadd.f32 %v3524, %v3692
        %v3694 = vpop.f32.mrf.mxu0
        %v3695 = vadd.f32 %v3526, %v3694
        %3696 = vmatmul.bf16.gmra.mxu0 %v908
        %v3697 = vpop.f32.mrf.mxu0
        %v3698 = vadd.f32 %v3529, %v3697
        %v3699 = vpop.f32.mrf.mxu0
        %v3700 = vadd.f32 %v3531, %v3699
        %3701 = vmatmul.bf16.gmra.mxu0 %v916
        %v3702 = vpop.f32.mrf.mxu0
        %v3703 = vadd.f32 %v3534, %v3702
        %v3704 = vpop.f32.mrf.mxu0
        %v3705 = vadd.f32 %v3536, %v3704
        %3706 = vmatmul.bf16.gmra.mxu0 %v924
        %v3707 = vpop.f32.mrf.mxu0
        %v3708 = vadd.f32 %v3539, %v3707
        %v3709 = vpop.f32.mrf.mxu0
        %v3710 = vadd.f32 %v3541, %v3709
        %3711 = vmatmul.bf16.gmra.mxu0 %v932
        %v3712 = vpop.f32.mrf.mxu0
        %v3713 = vadd.f32 %v3544, %v3712
        %v3714 = vpop.f32.mrf.mxu0
        %v3715 = vadd.f32 %v3546, %v3714
        %3716 = vmatmul.bf16.gmra.mxu0 %v940
        %v3717 = vpop.f32.mrf.mxu0
        %v3718 = vadd.f32 %v3549, %v3717
        %v3719 = vpop.f32.mrf.mxu0
        %v3720 = vadd.f32 %v3551, %v3719
        %3721 = vmatmul.bf16.gmra.mxu0 %v948
        %v3722 = vpop.f32.mrf.mxu0
        %v3723 = vadd.f32 %v3554, %v3722
        %v3724 = vpop.f32.mrf.mxu0
        %v3725 = vadd.f32 %v3556, %v3724
        %3726 = vmatmul.bf16.gmra.mxu0 %v956
        %v3727 = vpop.f32.mrf.mxu0
        %v3728 = vadd.f32 %v3559, %v3727
        %v3729 = vpop.f32.mrf.mxu0
        %v3730 = vadd.f32 %v3561, %v3729
        %3731 = vmatmul.bf16.gmra.mxu0 %v964
        %v3732 = vpop.f32.mrf.mxu0
        %v3733 = vadd.f32 %v3564, %v3732
        %v3734 = vpop.f32.mrf.mxu0
        %v3735 = vadd.f32 %v3566, %v3734
        %3736 = vmatmul.bf16.gmra.mxu0 %v972
        %v3737 = vpop.f32.mrf.mxu0
        %v3738 = vadd.f32 %v3569, %v3737
        %v3739 = vpop.f32.mrf.mxu0
        %v3740 = vadd.f32 %v3571, %v3739
        %3741 = vmatmul.bf16.gmra.mxu0 %v980
        %v3742 = vpop.f32.mrf.mxu0
        %v3743 = vadd.f32 %v3574, %v3742
        %v3744 = vpop.f32.mrf.mxu0
        %v3745 = vadd.f32 %v3576, %v3744
        %3746 = vmatmul.bf16.gmra.mxu0 %v988
        %v3747 = vpop.f32.mrf.mxu0
        %v3748 = vadd.f32 %v3579, %v3747
        %v3749 = vpop.f32.mrf.mxu0
        %v3750 = vadd.f32 %v3581, %v3749
        %3751 = vmatmul.bf16.gmra.mxu0 %v996
        %v3752 = vpop.f32.mrf.mxu0
        %v3753 = vadd.f32 %v3584, %v3752
        %v3754 = vpop.f32.mrf.mxu0
        %v3755 = vadd.f32 %v3586, %v3754
        %3756 = vmatmul.bf16.gmra.mxu0 %v1004
        %v3757 = vpop.f32.mrf.mxu0
        %v3758 = vadd.f32 %v3589, %v3757
        %v3759 = vpop.f32.mrf.mxu0
        %v3760 = vadd.f32 %v3591, %v3759
        %3761 = vmatmul.bf16.gmra.mxu0 %v1012
        %v3762 = vpop.f32.mrf.mxu0
        %v3763 = vadd.f32 %v3594, %v3762
        %v3764 = vpop.f32.mrf.mxu0
        %v3765 = vadd.f32 %v3596, %v3764
        %3766 = vmatmul.bf16.gmra.mxu0 %v1020
        %v3767 = vpop.f32.mrf.mxu0
        %v3768 = vadd.f32 %v3599, %v3767
        %v3769 = vpop.f32.mrf.mxu0
        %v3770 = vadd.f32 %v3601, %v3769
        %3771 = vmatmul.bf16.gmra.mxu0 %v1028
        %v3772 = vpop.f32.mrf.mxu0
        %v3773 = vadd.f32 %v3604, %v3772
        %v3774 = vpop.f32.mrf.mxu0
        %v3775 = vadd.f32 %v3606, %v3774
        %3776 = vmatmul.bf16.gmra.mxu0 %v1036
        %v3777 = vpop.f32.mrf.mxu0
        %v3778 = vadd.f32 %v3609, %v3777
        %v3779 = vpop.f32.mrf.mxu0
        %v3780 = vadd.f32 %v3611, %v3779
        %3781 = vmatmul.bf16.gmra.mxu0 %v1044
        %v3782 = vpop.f32.mrf.mxu0
        %v3783 = vadd.f32 %v3614, %v3782
        %v3784 = vpop.f32.mrf.mxu0
        %v3785 = vadd.f32 %v3616, %v3784
        %3786 = vmatmul.bf16.gmra.mxu0 %v1052
        %v3787 = vpop.f32.mrf.mxu0
        %v3788 = vadd.f32 %v3619, %v3787
        %v3789 = vpop.f32.mrf.mxu0
        %v3790 = vadd.f32 %v3621, %v3789
        %3791 = vmatmul.bf16.gmra.mxu0 %v1060
        %v3792 = vpop.f32.mrf.mxu0
        %v3793 = vadd.f32 %v3624, %v3792
        %v3794 = vpop.f32.mrf.mxu0
        %v3795 = vadd.f32 %v3626, %v3794
        %3796 = vmatmul.bf16.gmra.mxu0 %v1068
        %v3797 = vpop.f32.mrf.mxu0
        %v3798 = vadd.f32 %v3629, %v3797
        %v3799 = vpop.f32.mrf.mxu0
        %v3800 = vadd.f32 %v3631, %v3799
        %3801 = vmatmul.bf16.gmra.mxu0 %v1076
        %v3802 = vpop.f32.mrf.mxu0
        %v3803 = vadd.f32 %v3634, %v3802
        %v3804 = vpop.f32.mrf.mxu0
        %v3805 = vadd.f32 %v3636, %v3804
        %3806 = vdwg.mxu0
        %3807 = vmatpush.bf16.msra.mxu0 %v2364
        %3808 = vmatpush.bf16.msra.mxu0 %v2360
        %3809 = vmatpush.bf16.msra.mxu0 %v2356
        %3810 = vmatpush.bf16.msra.mxu0 %v2352
        %3811 = vmatpush.bf16.msra.mxu0 %v2348
        %3812 = vmatpush.bf16.msra.mxu0 %v2344
        %3813 = vmatpush.bf16.msra.mxu0 %v2340
        %3814 = vmatpush.bf16.msra.mxu0 %v2336
        %3815 = vmatmul.bf16.gmra.mxu0 %v829
        %v3816 = vpop.f32.mrf.mxu0
        %v3817 = vadd.f32 %v3648, %v3816
        %v3818 = vpop.f32.mrf.mxu0
        %v3819 = vadd.f32 %v3650, %v3818
        %3820 = vmatmul.bf16.gmra.mxu0 %v837
        %v3821 = vpop.f32.mrf.mxu0
        %v3822 = vadd.f32 %v3653, %v3821
        %v3823 = vpop.f32.mrf.mxu0
        %v3824 = vadd.f32 %v3655, %v3823
        %3825 = vmatmul.bf16.gmra.mxu0 %v845
        %v3826 = vpop.f32.mrf.mxu0
        %v3827 = vadd.f32 %v3658, %v3826
        %v3828 = vpop.f32.mrf.mxu0
        %v3829 = vadd.f32 %v3660, %v3828
        %3830 = vmatmul.bf16.gmra.mxu0 %v853
        %v3831 = vpop.f32.mrf.mxu0
        %v3832 = vadd.f32 %v3663, %v3831
        %v3833 = vpop.f32.mrf.mxu0
        %v3834 = vadd.f32 %v3665, %v3833
        %3835 = vmatmul.bf16.gmra.mxu0 %v861
        %v3836 = vpop.f32.mrf.mxu0
        %v3837 = vadd.f32 %v3668, %v3836
        %v3838 = vpop.f32.mrf.mxu0
        %v3839 = vadd.f32 %v3670, %v3838
        %3840 = vmatmul.bf16.gmra.mxu0 %v869
        %v3841 = vpop.f32.mrf.mxu0
        %v3842 = vadd.f32 %v3673, %v3841
        %v3843 = vpop.f32.mrf.mxu0
        %v3844 = vadd.f32 %v3675, %v3843
        %3845 = vmatmul.bf16.gmra.mxu0 %v877
        %v3846 = vpop.f32.mrf.mxu0
        %v3847 = vadd.f32 %v3678, %v3846
        %v3848 = vpop.f32.mrf.mxu0
        %v3849 = vadd.f32 %v3680, %v3848
        %3850 = vmatmul.bf16.gmra.mxu0 %v885
        %v3851 = vpop.f32.mrf.mxu0
        %v3852 = vadd.f32 %v3683, %v3851
        %v3853 = vpop.f32.mrf.mxu0
        %v3854 = vadd.f32 %v3685, %v3853
        %3855 = vmatmul.bf16.gmra.mxu0 %v893
        %v3856 = vpop.f32.mrf.mxu0
        %v3857 = vadd.f32 %v3688, %v3856
        %v3858 = vpop.f32.mrf.mxu0
        %v3859 = vadd.f32 %v3690, %v3858
        %3860 = vmatmul.bf16.gmra.mxu0 %v901
        %v3861 = vpop.f32.mrf.mxu0
        %v3862 = vadd.f32 %v3693, %v3861
        %v3863 = vpop.f32.mrf.mxu0
        %v3864 = vadd.f32 %v3695, %v3863
        %3865 = vmatmul.bf16.gmra.mxu0 %v909
        %v3866 = vpop.f32.mrf.mxu0
        %v3867 = vadd.f32 %v3698, %v3866
        %v3868 = vpop.f32.mrf.mxu0
        %v3869 = vadd.f32 %v3700, %v3868
        %3870 = vmatmul.bf16.gmra.mxu0 %v917
        %v3871 = vpop.f32.mrf.mxu0
        %v3872 = vadd.f32 %v3703, %v3871
        %v3873 = vpop.f32.mrf.mxu0
        %v3874 = vadd.f32 %v3705, %v3873
        %3875 = vmatmul.bf16.gmra.mxu0 %v925
        %v3876 = vpop.f32.mrf.mxu0
        %v3877 = vadd.f32 %v3708, %v3876
        %v3878 = vpop.f32.mrf.mxu0
        %v3879 = vadd.f32 %v3710, %v3878
        %3880 = vmatmul.bf16.gmra.mxu0 %v933
        %v3881 = vpop.f32.mrf.mxu0
        %v3882 = vadd.f32 %v3713, %v3881
        %v3883 = vpop.f32.mrf.mxu0
        %v3884 = vadd.f32 %v3715, %v3883
        %3885 = vmatmul.bf16.gmra.mxu0 %v941
        %v3886 = vpop.f32.mrf.mxu0
        %v3887 = vadd.f32 %v3718, %v3886
        %v3888 = vpop.f32.mrf.mxu0
        %v3889 = vadd.f32 %v3720, %v3888
        %3890 = vmatmul.bf16.gmra.mxu0 %v949
        %v3891 = vpop.f32.mrf.mxu0
        %v3892 = vadd.f32 %v3723, %v3891
        %v3893 = vpop.f32.mrf.mxu0
        %v3894 = vadd.f32 %v3725, %v3893
        %3895 = vmatmul.bf16.gmra.mxu0 %v957
        %v3896 = vpop.f32.mrf.mxu0
        %v3897 = vadd.f32 %v3728, %v3896
        %v3898 = vpop.f32.mrf.mxu0
        %v3899 = vadd.f32 %v3730, %v3898
        %3900 = vmatmul.bf16.gmra.mxu0 %v965
        %v3901 = vpop.f32.mrf.mxu0
        %v3902 = vadd.f32 %v3733, %v3901
        %v3903 = vpop.f32.mrf.mxu0
        %v3904 = vadd.f32 %v3735, %v3903
        %3905 = vmatmul.bf16.gmra.mxu0 %v973
        %v3906 = vpop.f32.mrf.mxu0
        %v3907 = vadd.f32 %v3738, %v3906
        %v3908 = vpop.f32.mrf.mxu0
        %v3909 = vadd.f32 %v3740, %v3908
        %3910 = vmatmul.bf16.gmra.mxu0 %v981
        %v3911 = vpop.f32.mrf.mxu0
        %v3912 = vadd.f32 %v3743, %v3911
        %v3913 = vpop.f32.mrf.mxu0
        %v3914 = vadd.f32 %v3745, %v3913
        %3915 = vmatmul.bf16.gmra.mxu0 %v989
        %v3916 = vpop.f32.mrf.mxu0
        %v3917 = vadd.f32 %v3748, %v3916
        %v3918 = vpop.f32.mrf.mxu0
        %v3919 = vadd.f32 %v3750, %v3918
        %3920 = vmatmul.bf16.gmra.mxu0 %v997
        %v3921 = vpop.f32.mrf.mxu0
        %v3922 = vadd.f32 %v3753, %v3921
        %v3923 = vpop.f32.mrf.mxu0
        %v3924 = vadd.f32 %v3755, %v3923
        %3925 = vmatmul.bf16.gmra.mxu0 %v1005
        %v3926 = vpop.f32.mrf.mxu0
        %v3927 = vadd.f32 %v3758, %v3926
        %v3928 = vpop.f32.mrf.mxu0
        %v3929 = vadd.f32 %v3760, %v3928
        %3930 = vmatmul.bf16.gmra.mxu0 %v1013
        %v3931 = vpop.f32.mrf.mxu0
        %v3932 = vadd.f32 %v3763, %v3931
        %v3933 = vpop.f32.mrf.mxu0
        %v3934 = vadd.f32 %v3765, %v3933
        %3935 = vmatmul.bf16.gmra.mxu0 %v1021
        %v3936 = vpop.f32.mrf.mxu0
        %v3937 = vadd.f32 %v3768, %v3936
        %v3938 = vpop.f32.mrf.mxu0
        %v3939 = vadd.f32 %v3770, %v3938
        %3940 = vmatmul.bf16.gmra.mxu0 %v1029
        %v3941 = vpop.f32.mrf.mxu0
        %v3942 = vadd.f32 %v3773, %v3941
        %v3943 = vpop.f32.mrf.mxu0
        %v3944 = vadd.f32 %v3775, %v3943
        %3945 = vmatmul.bf16.gmra.mxu0 %v1037
        %v3946 = vpop.f32.mrf.mxu0
        %v3947 = vadd.f32 %v3778, %v3946
        %v3948 = vpop.f32.mrf.mxu0
        %v3949 = vadd.f32 %v3780, %v3948
        %3950 = vmatmul.bf16.gmra.mxu0 %v1045
        %v3951 = vpop.f32.mrf.mxu0
        %v3952 = vadd.f32 %v3783, %v3951
        %v3953 = vpop.f32.mrf.mxu0
        %v3954 = vadd.f32 %v3785, %v3953
        %3955 = vmatmul.bf16.gmra.mxu0 %v1053
        %v3956 = vpop.f32.mrf.mxu0
        %v3957 = vadd.f32 %v3788, %v3956
        %v3958 = vpop.f32.mrf.mxu0
        %v3959 = vadd.f32 %v3790, %v3958
        %3960 = vmatmul.bf16.gmra.mxu0 %v1061
        %v3961 = vpop.f32.mrf.mxu0
        %v3962 = vadd.f32 %v3793, %v3961
        %v3963 = vpop.f32.mrf.mxu0
        %v3964 = vadd.f32 %v3795, %v3963
        %3965 = vmatmul.bf16.gmra.mxu0 %v1069
        %v3966 = vpop.f32.mrf.mxu0
        %v3967 = vadd.f32 %v3798, %v3966
        %v3968 = vpop.f32.mrf.mxu0
        %v3969 = vadd.f32 %v3800, %v3968
        %3970 = vmatmul.bf16.gmra.mxu0 %v1077
        %v3971 = vpop.f32.mrf.mxu0
        %v3972 = vadd.f32 %v3803, %v3971
        %v3973 = vpop.f32.mrf.mxu0
        %v3974 = vadd.f32 %v3805, %v3973
        %3975 = vdwg.mxu0
        %3976 = vmatpush.bf16.msra.mxu0 %v2141
        %3977 = vmatpush.bf16.msra.mxu0 %v2137
        %3978 = vmatpush.bf16.msra.mxu0 %v2133
        %3979 = vmatpush.bf16.msra.mxu0 %v2129
        %3980 = vmatpush.bf16.msra.mxu0 %v2125
        %3981 = vmatpush.bf16.msra.mxu0 %v2121
        %3982 = vmatpush.bf16.msra.mxu0 %v2117
        %3983 = vmatpush.bf16.msra.mxu0 %v2113
        %3984 = vmatmul.bf16.gmra.mxu0 %v822
        %v3985 = vpop.f32.mrf.mxu0
        %v3986 = vadd.f32 %v1337, %v3985
        %v3987 = vpop.f32.mrf.mxu0
        %v3988 = vadd.f32 %v1337, %v3987
        %3989 = vmatmul.bf16.gmra.mxu0 %v830
        %v3990 = vpop.f32.mrf.mxu0
        %v3991 = vadd.f32 %v1337, %v3990
        %v3992 = vpop.f32.mrf.mxu0
        %v3993 = vadd.f32 %v1337, %v3992
        %3994 = vmatmul.bf16.gmra.mxu0 %v838
        %v3995 = vpop.f32.mrf.mxu0
        %v3996 = vadd.f32 %v1337, %v3995
        %v3997 = vpop.f32.mrf.mxu0
        %v3998 = vadd.f32 %v1337, %v3997
        %3999 = vmatmul.bf16.gmra.mxu0 %v846
        %v4000 = vpop.f32.mrf.mxu0
        %v4001 = vadd.f32 %v1337, %v4000
        %v4002 = vpop.f32.mrf.mxu0
        %v4003 = vadd.f32 %v1337, %v4002
        %4004 = vmatmul.bf16.gmra.mxu0 %v854
        %v4005 = vpop.f32.mrf.mxu0
        %v4006 = vadd.f32 %v1337, %v4005
        %v4007 = vpop.f32.mrf.mxu0
        %v4008 = vadd.f32 %v1337, %v4007
        %4009 = vmatmul.bf16.gmra.mxu0 %v862
        %v4010 = vpop.f32.mrf.mxu0
        %v4011 = vadd.f32 %v1337, %v4010
        %v4012 = vpop.f32.mrf.mxu0
        %v4013 = vadd.f32 %v1337, %v4012
        %4014 = vmatmul.bf16.gmra.mxu0 %v870
        %v4015 = vpop.f32.mrf.mxu0
        %v4016 = vadd.f32 %v1337, %v4015
        %v4017 = vpop.f32.mrf.mxu0
        %v4018 = vadd.f32 %v1337, %v4017
        %4019 = vmatmul.bf16.gmra.mxu0 %v878
        %v4020 = vpop.f32.mrf.mxu0
        %v4021 = vadd.f32 %v1337, %v4020
        %v4022 = vpop.f32.mrf.mxu0
        %v4023 = vadd.f32 %v1337, %v4022
        %4024 = vmatmul.bf16.gmra.mxu0 %v886
        %v4025 = vpop.f32.mrf.mxu0
        %v4026 = vadd.f32 %v1337, %v4025
        %v4027 = vpop.f32.mrf.mxu0
        %v4028 = vadd.f32 %v1337, %v4027
        %4029 = vmatmul.bf16.gmra.mxu0 %v894
        %v4030 = vpop.f32.mrf.mxu0
        %v4031 = vadd.f32 %v1337, %v4030
        %v4032 = vpop.f32.mrf.mxu0
        %v4033 = vadd.f32 %v1337, %v4032
        %4034 = vmatmul.bf16.gmra.mxu0 %v902
        %v4035 = vpop.f32.mrf.mxu0
        %v4036 = vadd.f32 %v1337, %v4035
        %v4037 = vpop.f32.mrf.mxu0
        %v4038 = vadd.f32 %v1337, %v4037
        %4039 = vmatmul.bf16.gmra.mxu0 %v910
        %v4040 = vpop.f32.mrf.mxu0
        %v4041 = vadd.f32 %v1337, %v4040
        %v4042 = vpop.f32.mrf.mxu0
        %v4043 = vadd.f32 %v1337, %v4042
        %4044 = vmatmul.bf16.gmra.mxu0 %v918
        %v4045 = vpop.f32.mrf.mxu0
        %v4046 = vadd.f32 %v1337, %v4045
        %v4047 = vpop.f32.mrf.mxu0
        %v4048 = vadd.f32 %v1337, %v4047
        %4049 = vmatmul.bf16.gmra.mxu0 %v926
        %v4050 = vpop.f32.mrf.mxu0
        %v4051 = vadd.f32 %v1337, %v4050
        %v4052 = vpop.f32.mrf.mxu0
        %v4053 = vadd.f32 %v1337, %v4052
        %4054 = vmatmul.bf16.gmra.mxu0 %v934
        %v4055 = vpop.f32.mrf.mxu0
        %v4056 = vadd.f32 %v1337, %v4055
        %v4057 = vpop.f32.mrf.mxu0
        %v4058 = vadd.f32 %v1337, %v4057
        %4059 = vmatmul.bf16.gmra.mxu0 %v942
        %v4060 = vpop.f32.mrf.mxu0
        %v4061 = vadd.f32 %v1337, %v4060
        %v4062 = vpop.f32.mrf.mxu0
        %v4063 = vadd.f32 %v1337, %v4062
        %4064 = vmatmul.bf16.gmra.mxu0 %v950
        %v4065 = vpop.f32.mrf.mxu0
        %v4066 = vadd.f32 %v1337, %v4065
        %v4067 = vpop.f32.mrf.mxu0
        %v4068 = vadd.f32 %v1337, %v4067
        %4069 = vmatmul.bf16.gmra.mxu0 %v958
        %v4070 = vpop.f32.mrf.mxu0
        %v4071 = vadd.f32 %v1337, %v4070
        %v4072 = vpop.f32.mrf.mxu0
        %v4073 = vadd.f32 %v1337, %v4072
        %4074 = vmatmul.bf16.gmra.mxu0 %v966
        %v4075 = vpop.f32.mrf.mxu0
        %v4076 = vadd.f32 %v1337, %v4075
        %v4077 = vpop.f32.mrf.mxu0
        %v4078 = vadd.f32 %v1337, %v4077
        %4079 = vmatmul.bf16.gmra.mxu0 %v974
        %v4080 = vpop.f32.mrf.mxu0
        %v4081 = vadd.f32 %v1337, %v4080
        %v4082 = vpop.f32.mrf.mxu0
        %v4083 = vadd.f32 %v1337, %v4082
        %4084 = vmatmul.bf16.gmra.mxu0 %v982
        %v4085 = vpop.f32.mrf.mxu0
        %v4086 = vadd.f32 %v1337, %v4085
        %v4087 = vpop.f32.mrf.mxu0
        %v4088 = vadd.f32 %v1337, %v4087
        %4089 = vmatmul.bf16.gmra.mxu0 %v990
        %v4090 = vpop.f32.mrf.mxu0
        %v4091 = vadd.f32 %v1337, %v4090
        %v4092 = vpop.f32.mrf.mxu0
        %v4093 = vadd.f32 %v1337, %v4092
        %4094 = vmatmul.bf16.gmra.mxu0 %v998
        %v4095 = vpop.f32.mrf.mxu0
        %v4096 = vadd.f32 %v1337, %v4095
        %v4097 = vpop.f32.mrf.mxu0
        %v4098 = vadd.f32 %v1337, %v4097
        %4099 = vmatmul.bf16.gmra.mxu0 %v1006
        %v4100 = vpop.f32.mrf.mxu0
        %v4101 = vadd.f32 %v1337, %v4100
        %v4102 = vpop.f32.mrf.mxu0
        %v4103 = vadd.f32 %v1337, %v4102
        %4104 = vmatmul.bf16.gmra.mxu0 %v1014
        %v4105 = vpop.f32.mrf.mxu0
        %v4106 = vadd.f32 %v1337, %v4105
        %v4107 = vpop.f32.mrf.mxu0
        %v4108 = vadd.f32 %v1337, %v4107
        %4109 = vmatmul.bf16.gmra.mxu0 %v1022
        %v4110 = vpop.f32.mrf.mxu0
        %v4111 = vadd.f32 %v1337, %v4110
        %v4112 = vpop.f32.mrf.mxu0
        %v4113 = vadd.f32 %v1337, %v4112
        %4114 = vmatmul.bf16.gmra.mxu0 %v1030
        %v4115 = vpop.f32.mrf.mxu0
        %v4116 = vadd.f32 %v1337, %v4115
        %v4117 = vpop.f32.mrf.mxu0
        %v4118 = vadd.f32 %v1337, %v4117
        %4119 = vmatmul.bf16.gmra.mxu0 %v1038
        %v4120 = vpop.f32.mrf.mxu0
        %v4121 = vadd.f32 %v1337, %v4120
        %v4122 = vpop.f32.mrf.mxu0
        %v4123 = vadd.f32 %v1337, %v4122
        %4124 = vmatmul.bf16.gmra.mxu0 %v1046
        %v4125 = vpop.f32.mrf.mxu0
        %v4126 = vadd.f32 %v1337, %v4125
        %v4127 = vpop.f32.mrf.mxu0
        %v4128 = vadd.f32 %v1337, %v4127
        %4129 = vmatmul.bf16.gmra.mxu0 %v1054
        %v4130 = vpop.f32.mrf.mxu0
        %v4131 = vadd.f32 %v1337, %v4130
        %v4132 = vpop.f32.mrf.mxu0
        %v4133 = vadd.f32 %v1337, %v4132
        %4134 = vmatmul.bf16.gmra.mxu0 %v1062
        %v4135 = vpop.f32.mrf.mxu0
        %v4136 = vadd.f32 %v1337, %v4135
        %v4137 = vpop.f32.mrf.mxu0
        %v4138 = vadd.f32 %v1337, %v4137
        %4139 = vmatmul.bf16.gmra.mxu0 %v1070
        %v4140 = vpop.f32.mrf.mxu0
        %v4141 = vadd.f32 %v1337, %v4140
        %v4142 = vpop.f32.mrf.mxu0
        %v4143 = vadd.f32 %v1337, %v4142
        %4144 = vdwg.mxu0
        %4145 = vmatpush.bf16.msra.mxu0 %v2173
        %4146 = vmatpush.bf16.msra.mxu0 %v2169
        %4147 = vmatpush.bf16.msra.mxu0 %v2165
        %4148 = vmatpush.bf16.msra.mxu0 %v2161
        %4149 = vmatpush.bf16.msra.mxu0 %v2157
        %4150 = vmatpush.bf16.msra.mxu0 %v2153
        %4151 = vmatpush.bf16.msra.mxu0 %v2149
        %4152 = vmatpush.bf16.msra.mxu0 %v2145
        %4153 = vmatmul.bf16.gmra.mxu0 %v823
        %v4154 = vpop.f32.mrf.mxu0
        %v4155 = vadd.f32 %v3986, %v4154
        %v4156 = vpop.f32.mrf.mxu0
        %v4157 = vadd.f32 %v3988, %v4156
        %4158 = vmatmul.bf16.gmra.mxu0 %v831
        %v4159 = vpop.f32.mrf.mxu0
        %v4160 = vadd.f32 %v3991, %v4159
        %v4161 = vpop.f32.mrf.mxu0
        %v4162 = vadd.f32 %v3993, %v4161
        %4163 = vmatmul.bf16.gmra.mxu0 %v839
        %v4164 = vpop.f32.mrf.mxu0
        %v4165 = vadd.f32 %v3996, %v4164
        %v4166 = vpop.f32.mrf.mxu0
        %v4167 = vadd.f32 %v3998, %v4166
        %4168 = vmatmul.bf16.gmra.mxu0 %v847
        %v4169 = vpop.f32.mrf.mxu0
        %v4170 = vadd.f32 %v4001, %v4169
        %v4171 = vpop.f32.mrf.mxu0
        %v4172 = vadd.f32 %v4003, %v4171
        %4173 = vmatmul.bf16.gmra.mxu0 %v855
        %v4174 = vpop.f32.mrf.mxu0
        %v4175 = vadd.f32 %v4006, %v4174
        %v4176 = vpop.f32.mrf.mxu0
        %v4177 = vadd.f32 %v4008, %v4176
        %4178 = vmatmul.bf16.gmra.mxu0 %v863
        %v4179 = vpop.f32.mrf.mxu0
        %v4180 = vadd.f32 %v4011, %v4179
        %v4181 = vpop.f32.mrf.mxu0
        %v4182 = vadd.f32 %v4013, %v4181
        %4183 = vmatmul.bf16.gmra.mxu0 %v871
        %v4184 = vpop.f32.mrf.mxu0
        %v4185 = vadd.f32 %v4016, %v4184
        %v4186 = vpop.f32.mrf.mxu0
        %v4187 = vadd.f32 %v4018, %v4186
        %4188 = vmatmul.bf16.gmra.mxu0 %v879
        %v4189 = vpop.f32.mrf.mxu0
        %v4190 = vadd.f32 %v4021, %v4189
        %v4191 = vpop.f32.mrf.mxu0
        %v4192 = vadd.f32 %v4023, %v4191
        %4193 = vmatmul.bf16.gmra.mxu0 %v887
        %v4194 = vpop.f32.mrf.mxu0
        %v4195 = vadd.f32 %v4026, %v4194
        %v4196 = vpop.f32.mrf.mxu0
        %v4197 = vadd.f32 %v4028, %v4196
        %4198 = vmatmul.bf16.gmra.mxu0 %v895
        %v4199 = vpop.f32.mrf.mxu0
        %v4200 = vadd.f32 %v4031, %v4199
        %v4201 = vpop.f32.mrf.mxu0
        %v4202 = vadd.f32 %v4033, %v4201
        %4203 = vmatmul.bf16.gmra.mxu0 %v903
        %v4204 = vpop.f32.mrf.mxu0
        %v4205 = vadd.f32 %v4036, %v4204
        %v4206 = vpop.f32.mrf.mxu0
        %v4207 = vadd.f32 %v4038, %v4206
        %4208 = vmatmul.bf16.gmra.mxu0 %v911
        %v4209 = vpop.f32.mrf.mxu0
        %v4210 = vadd.f32 %v4041, %v4209
        %v4211 = vpop.f32.mrf.mxu0
        %v4212 = vadd.f32 %v4043, %v4211
        %4213 = vmatmul.bf16.gmra.mxu0 %v919
        %v4214 = vpop.f32.mrf.mxu0
        %v4215 = vadd.f32 %v4046, %v4214
        %v4216 = vpop.f32.mrf.mxu0
        %v4217 = vadd.f32 %v4048, %v4216
        %4218 = vmatmul.bf16.gmra.mxu0 %v927
        %v4219 = vpop.f32.mrf.mxu0
        %v4220 = vadd.f32 %v4051, %v4219
        %v4221 = vpop.f32.mrf.mxu0
        %v4222 = vadd.f32 %v4053, %v4221
        %4223 = vmatmul.bf16.gmra.mxu0 %v935
        %v4224 = vpop.f32.mrf.mxu0
        %v4225 = vadd.f32 %v4056, %v4224
        %v4226 = vpop.f32.mrf.mxu0
        %v4227 = vadd.f32 %v4058, %v4226
        %4228 = vmatmul.bf16.gmra.mxu0 %v943
        %v4229 = vpop.f32.mrf.mxu0
        %v4230 = vadd.f32 %v4061, %v4229
        %v4231 = vpop.f32.mrf.mxu0
        %v4232 = vadd.f32 %v4063, %v4231
        %4233 = vmatmul.bf16.gmra.mxu0 %v951
        %v4234 = vpop.f32.mrf.mxu0
        %v4235 = vadd.f32 %v4066, %v4234
        %v4236 = vpop.f32.mrf.mxu0
        %v4237 = vadd.f32 %v4068, %v4236
        %4238 = vmatmul.bf16.gmra.mxu0 %v959
        %v4239 = vpop.f32.mrf.mxu0
        %v4240 = vadd.f32 %v4071, %v4239
        %v4241 = vpop.f32.mrf.mxu0
        %v4242 = vadd.f32 %v4073, %v4241
        %4243 = vmatmul.bf16.gmra.mxu0 %v967
        %v4244 = vpop.f32.mrf.mxu0
        %v4245 = vadd.f32 %v4076, %v4244
        %v4246 = vpop.f32.mrf.mxu0
        %v4247 = vadd.f32 %v4078, %v4246
        %4248 = vmatmul.bf16.gmra.mxu0 %v975
        %v4249 = vpop.f32.mrf.mxu0
        %v4250 = vadd.f32 %v4081, %v4249
        %v4251 = vpop.f32.mrf.mxu0
        %v4252 = vadd.f32 %v4083, %v4251
        %4253 = vmatmul.bf16.gmra.mxu0 %v983
        %v4254 = vpop.f32.mrf.mxu0
        %v4255 = vadd.f32 %v4086, %v4254
        %v4256 = vpop.f32.mrf.mxu0
        %v4257 = vadd.f32 %v4088, %v4256
        %4258 = vmatmul.bf16.gmra.mxu0 %v991
        %v4259 = vpop.f32.mrf.mxu0
        %v4260 = vadd.f32 %v4091, %v4259
        %v4261 = vpop.f32.mrf.mxu0
        %v4262 = vadd.f32 %v4093, %v4261
        %4263 = vmatmul.bf16.gmra.mxu0 %v999
        %v4264 = vpop.f32.mrf.mxu0
        %v4265 = vadd.f32 %v4096, %v4264
        %v4266 = vpop.f32.mrf.mxu0
        %v4267 = vadd.f32 %v4098, %v4266
        %4268 = vmatmul.bf16.gmra.mxu0 %v1007
        %v4269 = vpop.f32.mrf.mxu0
        %v4270 = vadd.f32 %v4101, %v4269
        %v4271 = vpop.f32.mrf.mxu0
        %v4272 = vadd.f32 %v4103, %v4271
        %4273 = vmatmul.bf16.gmra.mxu0 %v1015
        %v4274 = vpop.f32.mrf.mxu0
        %v4275 = vadd.f32 %v4106, %v4274
        %v4276 = vpop.f32.mrf.mxu0
        %v4277 = vadd.f32 %v4108, %v4276
        %4278 = vmatmul.bf16.gmra.mxu0 %v1023
        %v4279 = vpop.f32.mrf.mxu0
        %v4280 = vadd.f32 %v4111, %v4279
        %v4281 = vpop.f32.mrf.mxu0
        %v4282 = vadd.f32 %v4113, %v4281
        %4283 = vmatmul.bf16.gmra.mxu0 %v1031
        %v4284 = vpop.f32.mrf.mxu0
        %v4285 = vadd.f32 %v4116, %v4284
        %v4286 = vpop.f32.mrf.mxu0
        %v4287 = vadd.f32 %v4118, %v4286
        %4288 = vmatmul.bf16.gmra.mxu0 %v1039
        %v4289 = vpop.f32.mrf.mxu0
        %v4290 = vadd.f32 %v4121, %v4289
        %v4291 = vpop.f32.mrf.mxu0
        %v4292 = vadd.f32 %v4123, %v4291
        %4293 = vmatmul.bf16.gmra.mxu0 %v1047
        %v4294 = vpop.f32.mrf.mxu0
        %v4295 = vadd.f32 %v4126, %v4294
        %v4296 = vpop.f32.mrf.mxu0
        %v4297 = vadd.f32 %v4128, %v4296
        %4298 = vmatmul.bf16.gmra.mxu0 %v1055
        %v4299 = vpop.f32.mrf.mxu0
        %v4300 = vadd.f32 %v4131, %v4299
        %v4301 = vpop.f32.mrf.mxu0
        %v4302 = vadd.f32 %v4133, %v4301
        %4303 = vmatmul.bf16.gmra.mxu0 %v1063
        %v4304 = vpop.f32.mrf.mxu0
        %v4305 = vadd.f32 %v4136, %v4304
        %v4306 = vpop.f32.mrf.mxu0
        %v4307 = vadd.f32 %v4138, %v4306
        %4308 = vmatmul.bf16.gmra.mxu0 %v1071
        %v4309 = vpop.f32.mrf.mxu0
        %v4310 = vadd.f32 %v4141, %v4309
        %v4311 = vpop.f32.mrf.mxu0
        %v4312 = vadd.f32 %v4143, %v4311
        %4313 = vdwg.mxu0
        %4314 = vmatpush.bf16.msra.mxu0 %v2205
        %4315 = vmatpush.bf16.msra.mxu0 %v2201
        %4316 = vmatpush.bf16.msra.mxu0 %v2197
        %4317 = vmatpush.bf16.msra.mxu0 %v2193
        %4318 = vmatpush.bf16.msra.mxu0 %v2189
        %4319 = vmatpush.bf16.msra.mxu0 %v2185
        %4320 = vmatpush.bf16.msra.mxu0 %v2181
        %4321 = vmatpush.bf16.msra.mxu0 %v2177
        %4322 = vmatmul.bf16.gmra.mxu0 %v824
        %v4323 = vpop.f32.mrf.mxu0
        %v4324 = vadd.f32 %v4155, %v4323
        %v4325 = vpop.f32.mrf.mxu0
        %v4326 = vadd.f32 %v4157, %v4325
        %4327 = vmatmul.bf16.gmra.mxu0 %v832
        %v4328 = vpop.f32.mrf.mxu0
        %v4329 = vadd.f32 %v4160, %v4328
        %v4330 = vpop.f32.mrf.mxu0
        %v4331 = vadd.f32 %v4162, %v4330
        %4332 = vmatmul.bf16.gmra.mxu0 %v840
        %v4333 = vpop.f32.mrf.mxu0
        %v4334 = vadd.f32 %v4165, %v4333
        %v4335 = vpop.f32.mrf.mxu0
        %v4336 = vadd.f32 %v4167, %v4335
        %4337 = vmatmul.bf16.gmra.mxu0 %v848
        %v4338 = vpop.f32.mrf.mxu0
        %v4339 = vadd.f32 %v4170, %v4338
        %v4340 = vpop.f32.mrf.mxu0
        %v4341 = vadd.f32 %v4172, %v4340
        %4342 = vmatmul.bf16.gmra.mxu0 %v856
        %v4343 = vpop.f32.mrf.mxu0
        %v4344 = vadd.f32 %v4175, %v4343
        %v4345 = vpop.f32.mrf.mxu0
        %v4346 = vadd.f32 %v4177, %v4345
        %4347 = vmatmul.bf16.gmra.mxu0 %v864
        %v4348 = vpop.f32.mrf.mxu0
        %v4349 = vadd.f32 %v4180, %v4348
        %v4350 = vpop.f32.mrf.mxu0
        %v4351 = vadd.f32 %v4182, %v4350
        %4352 = vmatmul.bf16.gmra.mxu0 %v872
        %v4353 = vpop.f32.mrf.mxu0
        %v4354 = vadd.f32 %v4185, %v4353
        %v4355 = vpop.f32.mrf.mxu0
        %v4356 = vadd.f32 %v4187, %v4355
        %4357 = vmatmul.bf16.gmra.mxu0 %v880
        %v4358 = vpop.f32.mrf.mxu0
        %v4359 = vadd.f32 %v4190, %v4358
        %v4360 = vpop.f32.mrf.mxu0
        %v4361 = vadd.f32 %v4192, %v4360
        %4362 = vmatmul.bf16.gmra.mxu0 %v888
        %v4363 = vpop.f32.mrf.mxu0
        %v4364 = vadd.f32 %v4195, %v4363
        %v4365 = vpop.f32.mrf.mxu0
        %v4366 = vadd.f32 %v4197, %v4365
        %4367 = vmatmul.bf16.gmra.mxu0 %v896
        %v4368 = vpop.f32.mrf.mxu0
        %v4369 = vadd.f32 %v4200, %v4368
        %v4370 = vpop.f32.mrf.mxu0
        %v4371 = vadd.f32 %v4202, %v4370
        %4372 = vmatmul.bf16.gmra.mxu0 %v904
        %v4373 = vpop.f32.mrf.mxu0
        %v4374 = vadd.f32 %v4205, %v4373
        %v4375 = vpop.f32.mrf.mxu0
        %v4376 = vadd.f32 %v4207, %v4375
        %4377 = vmatmul.bf16.gmra.mxu0 %v912
        %v4378 = vpop.f32.mrf.mxu0
        %v4379 = vadd.f32 %v4210, %v4378
        %v4380 = vpop.f32.mrf.mxu0
        %v4381 = vadd.f32 %v4212, %v4380
        %4382 = vmatmul.bf16.gmra.mxu0 %v920
        %v4383 = vpop.f32.mrf.mxu0
        %v4384 = vadd.f32 %v4215, %v4383
        %v4385 = vpop.f32.mrf.mxu0
        %v4386 = vadd.f32 %v4217, %v4385
        %4387 = vmatmul.bf16.gmra.mxu0 %v928
        %v4388 = vpop.f32.mrf.mxu0
        %v4389 = vadd.f32 %v4220, %v4388
        %v4390 = vpop.f32.mrf.mxu0
        %v4391 = vadd.f32 %v4222, %v4390
        %4392 = vmatmul.bf16.gmra.mxu0 %v936
        %v4393 = vpop.f32.mrf.mxu0
        %v4394 = vadd.f32 %v4225, %v4393
        %v4395 = vpop.f32.mrf.mxu0
        %v4396 = vadd.f32 %v4227, %v4395
        %4397 = vmatmul.bf16.gmra.mxu0 %v944
        %v4398 = vpop.f32.mrf.mxu0
        %v4399 = vadd.f32 %v4230, %v4398
        %v4400 = vpop.f32.mrf.mxu0
        %v4401 = vadd.f32 %v4232, %v4400
        %4402 = vmatmul.bf16.gmra.mxu0 %v952
        %v4403 = vpop.f32.mrf.mxu0
        %v4404 = vadd.f32 %v4235, %v4403
        %v4405 = vpop.f32.mrf.mxu0
        %v4406 = vadd.f32 %v4237, %v4405
        %4407 = vmatmul.bf16.gmra.mxu0 %v960
        %v4408 = vpop.f32.mrf.mxu0
        %v4409 = vadd.f32 %v4240, %v4408
        %v4410 = vpop.f32.mrf.mxu0
        %v4411 = vadd.f32 %v4242, %v4410
        %4412 = vmatmul.bf16.gmra.mxu0 %v968
        %v4413 = vpop.f32.mrf.mxu0
        %v4414 = vadd.f32 %v4245, %v4413
        %v4415 = vpop.f32.mrf.mxu0
        %v4416 = vadd.f32 %v4247, %v4415
        %4417 = vmatmul.bf16.gmra.mxu0 %v976
        %v4418 = vpop.f32.mrf.mxu0
        %v4419 = vadd.f32 %v4250, %v4418
        %v4420 = vpop.f32.mrf.mxu0
        %v4421 = vadd.f32 %v4252, %v4420
        %4422 = vmatmul.bf16.gmra.mxu0 %v984
        %v4423 = vpop.f32.mrf.mxu0
        %v4424 = vadd.f32 %v4255, %v4423
        %v4425 = vpop.f32.mrf.mxu0
        %v4426 = vadd.f32 %v4257, %v4425
        %4427 = vmatmul.bf16.gmra.mxu0 %v992
        %v4428 = vpop.f32.mrf.mxu0
        %v4429 = vadd.f32 %v4260, %v4428
        %v4430 = vpop.f32.mrf.mxu0
        %v4431 = vadd.f32 %v4262, %v4430
        %4432 = vmatmul.bf16.gmra.mxu0 %v1000
        %v4433 = vpop.f32.mrf.mxu0
        %v4434 = vadd.f32 %v4265, %v4433
        %v4435 = vpop.f32.mrf.mxu0
        %v4436 = vadd.f32 %v4267, %v4435
        %4437 = vmatmul.bf16.gmra.mxu0 %v1008
        %v4438 = vpop.f32.mrf.mxu0
        %v4439 = vadd.f32 %v4270, %v4438
        %v4440 = vpop.f32.mrf.mxu0
        %v4441 = vadd.f32 %v4272, %v4440
        %4442 = vmatmul.bf16.gmra.mxu0 %v1016
        %v4443 = vpop.f32.mrf.mxu0
        %v4444 = vadd.f32 %v4275, %v4443
        %v4445 = vpop.f32.mrf.mxu0
        %v4446 = vadd.f32 %v4277, %v4445
        %4447 = vmatmul.bf16.gmra.mxu0 %v1024
        %v4448 = vpop.f32.mrf.mxu0
        %v4449 = vadd.f32 %v4280, %v4448
        %v4450 = vpop.f32.mrf.mxu0
        %v4451 = vadd.f32 %v4282, %v4450
        %4452 = vmatmul.bf16.gmra.mxu0 %v1032
        %v4453 = vpop.f32.mrf.mxu0
        %v4454 = vadd.f32 %v4285, %v4453
        %v4455 = vpop.f32.mrf.mxu0
        %v4456 = vadd.f32 %v4287, %v4455
        %4457 = vmatmul.bf16.gmra.mxu0 %v1040
        %v4458 = vpop.f32.mrf.mxu0
        %v4459 = vadd.f32 %v4290, %v4458
        %v4460 = vpop.f32.mrf.mxu0
        %v4461 = vadd.f32 %v4292, %v4460
        %4462 = vmatmul.bf16.gmra.mxu0 %v1048
        %v4463 = vpop.f32.mrf.mxu0
        %v4464 = vadd.f32 %v4295, %v4463
        %v4465 = vpop.f32.mrf.mxu0
        %v4466 = vadd.f32 %v4297, %v4465
        %4467 = vmatmul.bf16.gmra.mxu0 %v1056
        %v4468 = vpop.f32.mrf.mxu0
        %v4469 = vadd.f32 %v4300, %v4468
        %v4470 = vpop.f32.mrf.mxu0
        %v4471 = vadd.f32 %v4302, %v4470
        %4472 = vmatmul.bf16.gmra.mxu0 %v1064
        %v4473 = vpop.f32.mrf.mxu0
        %v4474 = vadd.f32 %v4305, %v4473
        %v4475 = vpop.f32.mrf.mxu0
        %v4476 = vadd.f32 %v4307, %v4475
        %4477 = vmatmul.bf16.gmra.mxu0 %v1072
        %v4478 = vpop.f32.mrf.mxu0
        %v4479 = vadd.f32 %v4310, %v4478
        %v4480 = vpop.f32.mrf.mxu0
        %v4481 = vadd.f32 %v4312, %v4480
        %4482 = vdwg.mxu0
        %4483 = vmatpush.bf16.msra.mxu0 %v2237
        %4484 = vmatpush.bf16.msra.mxu0 %v2233
        %4485 = vmatpush.bf16.msra.mxu0 %v2229
        %4486 = vmatpush.bf16.msra.mxu0 %v2225
        %4487 = vmatpush.bf16.msra.mxu0 %v2221
        %4488 = vmatpush.bf16.msra.mxu0 %v2217
        %4489 = vmatpush.bf16.msra.mxu0 %v2213
        %4490 = vmatpush.bf16.msra.mxu0 %v2209
        %4491 = vmatmul.bf16.gmra.mxu0 %v825
        %v4492 = vpop.f32.mrf.mxu0
        %v4493 = vadd.f32 %v4324, %v4492
        %v4494 = vpop.f32.mrf.mxu0
        %v4495 = vadd.f32 %v4326, %v4494
        %4496 = vmatmul.bf16.gmra.mxu0 %v833
        %v4497 = vpop.f32.mrf.mxu0
        %v4498 = vadd.f32 %v4329, %v4497
        %v4499 = vpop.f32.mrf.mxu0
        %v4500 = vadd.f32 %v4331, %v4499
        %4501 = vmatmul.bf16.gmra.mxu0 %v841
        %v4502 = vpop.f32.mrf.mxu0
        %v4503 = vadd.f32 %v4334, %v4502
        %v4504 = vpop.f32.mrf.mxu0
        %v4505 = vadd.f32 %v4336, %v4504
        %4506 = vmatmul.bf16.gmra.mxu0 %v849
        %v4507 = vpop.f32.mrf.mxu0
        %v4508 = vadd.f32 %v4339, %v4507
        %v4509 = vpop.f32.mrf.mxu0
        %v4510 = vadd.f32 %v4341, %v4509
        %4511 = vmatmul.bf16.gmra.mxu0 %v857
        %v4512 = vpop.f32.mrf.mxu0
        %v4513 = vadd.f32 %v4344, %v4512
        %v4514 = vpop.f32.mrf.mxu0
        %v4515 = vadd.f32 %v4346, %v4514
        %4516 = vmatmul.bf16.gmra.mxu0 %v865
        %v4517 = vpop.f32.mrf.mxu0
        %v4518 = vadd.f32 %v4349, %v4517
        %v4519 = vpop.f32.mrf.mxu0
        %v4520 = vadd.f32 %v4351, %v4519
        %4521 = vmatmul.bf16.gmra.mxu0 %v873
        %v4522 = vpop.f32.mrf.mxu0
        %v4523 = vadd.f32 %v4354, %v4522
        %v4524 = vpop.f32.mrf.mxu0
        %v4525 = vadd.f32 %v4356, %v4524
        %4526 = vmatmul.bf16.gmra.mxu0 %v881
        %v4527 = vpop.f32.mrf.mxu0
        %v4528 = vadd.f32 %v4359, %v4527
        %v4529 = vpop.f32.mrf.mxu0
        %v4530 = vadd.f32 %v4361, %v4529
        %4531 = vmatmul.bf16.gmra.mxu0 %v889
        %v4532 = vpop.f32.mrf.mxu0
        %v4533 = vadd.f32 %v4364, %v4532
        %v4534 = vpop.f32.mrf.mxu0
        %v4535 = vadd.f32 %v4366, %v4534
        %4536 = vmatmul.bf16.gmra.mxu0 %v897
        %v4537 = vpop.f32.mrf.mxu0
        %v4538 = vadd.f32 %v4369, %v4537
        %v4539 = vpop.f32.mrf.mxu0
        %v4540 = vadd.f32 %v4371, %v4539
        %4541 = vmatmul.bf16.gmra.mxu0 %v905
        %v4542 = vpop.f32.mrf.mxu0
        %v4543 = vadd.f32 %v4374, %v4542
        %v4544 = vpop.f32.mrf.mxu0
        %v4545 = vadd.f32 %v4376, %v4544
        %4546 = vmatmul.bf16.gmra.mxu0 %v913
        %v4547 = vpop.f32.mrf.mxu0
        %v4548 = vadd.f32 %v4379, %v4547
        %v4549 = vpop.f32.mrf.mxu0
        %v4550 = vadd.f32 %v4381, %v4549
        %4551 = vmatmul.bf16.gmra.mxu0 %v921
        %v4552 = vpop.f32.mrf.mxu0
        %v4553 = vadd.f32 %v4384, %v4552
        %v4554 = vpop.f32.mrf.mxu0
        %v4555 = vadd.f32 %v4386, %v4554
        %4556 = vmatmul.bf16.gmra.mxu0 %v929
        %v4557 = vpop.f32.mrf.mxu0
        %v4558 = vadd.f32 %v4389, %v4557
        %v4559 = vpop.f32.mrf.mxu0
        %v4560 = vadd.f32 %v4391, %v4559
        %4561 = vmatmul.bf16.gmra.mxu0 %v937
        %v4562 = vpop.f32.mrf.mxu0
        %v4563 = vadd.f32 %v4394, %v4562
        %v4564 = vpop.f32.mrf.mxu0
        %v4565 = vadd.f32 %v4396, %v4564
        %4566 = vmatmul.bf16.gmra.mxu0 %v945
        %v4567 = vpop.f32.mrf.mxu0
        %v4568 = vadd.f32 %v4399, %v4567
        %v4569 = vpop.f32.mrf.mxu0
        %v4570 = vadd.f32 %v4401, %v4569
        %4571 = vmatmul.bf16.gmra.mxu0 %v953
        %v4572 = vpop.f32.mrf.mxu0
        %v4573 = vadd.f32 %v4404, %v4572
        %v4574 = vpop.f32.mrf.mxu0
        %v4575 = vadd.f32 %v4406, %v4574
        %4576 = vmatmul.bf16.gmra.mxu0 %v961
        %v4577 = vpop.f32.mrf.mxu0
        %v4578 = vadd.f32 %v4409, %v4577
        %v4579 = vpop.f32.mrf.mxu0
        %v4580 = vadd.f32 %v4411, %v4579
        %4581 = vmatmul.bf16.gmra.mxu0 %v969
        %v4582 = vpop.f32.mrf.mxu0
        %v4583 = vadd.f32 %v4414, %v4582
        %v4584 = vpop.f32.mrf.mxu0
        %v4585 = vadd.f32 %v4416, %v4584
        %4586 = vmatmul.bf16.gmra.mxu0 %v977
        %v4587 = vpop.f32.mrf.mxu0
        %v4588 = vadd.f32 %v4419, %v4587
        %v4589 = vpop.f32.mrf.mxu0
        %v4590 = vadd.f32 %v4421, %v4589
        %4591 = vmatmul.bf16.gmra.mxu0 %v985
        %v4592 = vpop.f32.mrf.mxu0
        %v4593 = vadd.f32 %v4424, %v4592
        %v4594 = vpop.f32.mrf.mxu0
        %v4595 = vadd.f32 %v4426, %v4594
        %4596 = vmatmul.bf16.gmra.mxu0 %v993
        %v4597 = vpop.f32.mrf.mxu0
        %v4598 = vadd.f32 %v4429, %v4597
        %v4599 = vpop.f32.mrf.mxu0
        %v4600 = vadd.f32 %v4431, %v4599
        %4601 = vmatmul.bf16.gmra.mxu0 %v1001
        %v4602 = vpop.f32.mrf.mxu0
        %v4603 = vadd.f32 %v4434, %v4602
        %v4604 = vpop.f32.mrf.mxu0
        %v4605 = vadd.f32 %v4436, %v4604
        %4606 = vmatmul.bf16.gmra.mxu0 %v1009
        %v4607 = vpop.f32.mrf.mxu0
        %v4608 = vadd.f32 %v4439, %v4607
        %v4609 = vpop.f32.mrf.mxu0
        %v4610 = vadd.f32 %v4441, %v4609
        %4611 = vmatmul.bf16.gmra.mxu0 %v1017
        %v4612 = vpop.f32.mrf.mxu0
        %v4613 = vadd.f32 %v4444, %v4612
        %v4614 = vpop.f32.mrf.mxu0
        %v4615 = vadd.f32 %v4446, %v4614
        %4616 = vmatmul.bf16.gmra.mxu0 %v1025
        %v4617 = vpop.f32.mrf.mxu0
        %v4618 = vadd.f32 %v4449, %v4617
        %v4619 = vpop.f32.mrf.mxu0
        %v4620 = vadd.f32 %v4451, %v4619
        %4621 = vmatmul.bf16.gmra.mxu0 %v1033
        %v4622 = vpop.f32.mrf.mxu0
        %v4623 = vadd.f32 %v4454, %v4622
        %v4624 = vpop.f32.mrf.mxu0
        %v4625 = vadd.f32 %v4456, %v4624
        %4626 = vmatmul.bf16.gmra.mxu0 %v1041
        %v4627 = vpop.f32.mrf.mxu0
        %v4628 = vadd.f32 %v4459, %v4627
        %v4629 = vpop.f32.mrf.mxu0
        %v4630 = vadd.f32 %v4461, %v4629
        %4631 = vmatmul.bf16.gmra.mxu0 %v1049
        %v4632 = vpop.f32.mrf.mxu0
        %v4633 = vadd.f32 %v4464, %v4632
        %v4634 = vpop.f32.mrf.mxu0
        %v4635 = vadd.f32 %v4466, %v4634
        %4636 = vmatmul.bf16.gmra.mxu0 %v1057
        %v4637 = vpop.f32.mrf.mxu0
        %v4638 = vadd.f32 %v4469, %v4637
        %v4639 = vpop.f32.mrf.mxu0
        %v4640 = vadd.f32 %v4471, %v4639
        %4641 = vmatmul.bf16.gmra.mxu0 %v1065
        %v4642 = vpop.f32.mrf.mxu0
        %v4643 = vadd.f32 %v4474, %v4642
        %v4644 = vpop.f32.mrf.mxu0
        %v4645 = vadd.f32 %v4476, %v4644
        %4646 = vmatmul.bf16.gmra.mxu0 %v1073
        %v4647 = vpop.f32.mrf.mxu0
        %v4648 = vadd.f32 %v4479, %v4647
        %v4649 = vpop.f32.mrf.mxu0
        %v4650 = vadd.f32 %v4481, %v4649
        %4651 = vdwg.mxu0
        %4652 = vmatpush.bf16.msra.mxu0 %v2269
        %4653 = vmatpush.bf16.msra.mxu0 %v2265
        %4654 = vmatpush.bf16.msra.mxu0 %v2261
        %4655 = vmatpush.bf16.msra.mxu0 %v2257
        %4656 = vmatpush.bf16.msra.mxu0 %v2253
        %4657 = vmatpush.bf16.msra.mxu0 %v2249
        %4658 = vmatpush.bf16.msra.mxu0 %v2245
        %4659 = vmatpush.bf16.msra.mxu0 %v2241
        %4660 = vmatmul.bf16.gmra.mxu0 %v826
        %v4661 = vpop.f32.mrf.mxu0
        %v4662 = vadd.f32 %v4493, %v4661
        %v4663 = vpop.f32.mrf.mxu0
        %v4664 = vadd.f32 %v4495, %v4663
        %4665 = vmatmul.bf16.gmra.mxu0 %v834
        %v4666 = vpop.f32.mrf.mxu0
        %v4667 = vadd.f32 %v4498, %v4666
        %v4668 = vpop.f32.mrf.mxu0
        %v4669 = vadd.f32 %v4500, %v4668
        %4670 = vmatmul.bf16.gmra.mxu0 %v842
        %v4671 = vpop.f32.mrf.mxu0
        %v4672 = vadd.f32 %v4503, %v4671
        %v4673 = vpop.f32.mrf.mxu0
        %v4674 = vadd.f32 %v4505, %v4673
        %4675 = vmatmul.bf16.gmra.mxu0 %v850
        %v4676 = vpop.f32.mrf.mxu0
        %v4677 = vadd.f32 %v4508, %v4676
        %v4678 = vpop.f32.mrf.mxu0
        %v4679 = vadd.f32 %v4510, %v4678
        %4680 = vmatmul.bf16.gmra.mxu0 %v858
        %v4681 = vpop.f32.mrf.mxu0
        %v4682 = vadd.f32 %v4513, %v4681
        %v4683 = vpop.f32.mrf.mxu0
        %v4684 = vadd.f32 %v4515, %v4683
        %4685 = vmatmul.bf16.gmra.mxu0 %v866
        %v4686 = vpop.f32.mrf.mxu0
        %v4687 = vadd.f32 %v4518, %v4686
        %v4688 = vpop.f32.mrf.mxu0
        %v4689 = vadd.f32 %v4520, %v4688
        %4690 = vmatmul.bf16.gmra.mxu0 %v874
        %v4691 = vpop.f32.mrf.mxu0
        %v4692 = vadd.f32 %v4523, %v4691
        %v4693 = vpop.f32.mrf.mxu0
        %v4694 = vadd.f32 %v4525, %v4693
        %4695 = vmatmul.bf16.gmra.mxu0 %v882
        %v4696 = vpop.f32.mrf.mxu0
        %v4697 = vadd.f32 %v4528, %v4696
        %v4698 = vpop.f32.mrf.mxu0
        %v4699 = vadd.f32 %v4530, %v4698
        %4700 = vmatmul.bf16.gmra.mxu0 %v890
        %v4701 = vpop.f32.mrf.mxu0
        %v4702 = vadd.f32 %v4533, %v4701
        %v4703 = vpop.f32.mrf.mxu0
        %v4704 = vadd.f32 %v4535, %v4703
        %4705 = vmatmul.bf16.gmra.mxu0 %v898
        %v4706 = vpop.f32.mrf.mxu0
        %v4707 = vadd.f32 %v4538, %v4706
        %v4708 = vpop.f32.mrf.mxu0
        %v4709 = vadd.f32 %v4540, %v4708
        %4710 = vmatmul.bf16.gmra.mxu0 %v906
        %v4711 = vpop.f32.mrf.mxu0
        %v4712 = vadd.f32 %v4543, %v4711
        %v4713 = vpop.f32.mrf.mxu0
        %v4714 = vadd.f32 %v4545, %v4713
        %4715 = vmatmul.bf16.gmra.mxu0 %v914
        %v4716 = vpop.f32.mrf.mxu0
        %v4717 = vadd.f32 %v4548, %v4716
        %v4718 = vpop.f32.mrf.mxu0
        %v4719 = vadd.f32 %v4550, %v4718
        %4720 = vmatmul.bf16.gmra.mxu0 %v922
        %v4721 = vpop.f32.mrf.mxu0
        %v4722 = vadd.f32 %v4553, %v4721
        %v4723 = vpop.f32.mrf.mxu0
        %v4724 = vadd.f32 %v4555, %v4723
        %4725 = vmatmul.bf16.gmra.mxu0 %v930
        %v4726 = vpop.f32.mrf.mxu0
        %v4727 = vadd.f32 %v4558, %v4726
        %v4728 = vpop.f32.mrf.mxu0
        %v4729 = vadd.f32 %v4560, %v4728
        %4730 = vmatmul.bf16.gmra.mxu0 %v938
        %v4731 = vpop.f32.mrf.mxu0
        %v4732 = vadd.f32 %v4563, %v4731
        %v4733 = vpop.f32.mrf.mxu0
        %v4734 = vadd.f32 %v4565, %v4733
        %4735 = vmatmul.bf16.gmra.mxu0 %v946
        %v4736 = vpop.f32.mrf.mxu0
        %v4737 = vadd.f32 %v4568, %v4736
        %v4738 = vpop.f32.mrf.mxu0
        %v4739 = vadd.f32 %v4570, %v4738
        %4740 = vmatmul.bf16.gmra.mxu0 %v954
        %v4741 = vpop.f32.mrf.mxu0
        %v4742 = vadd.f32 %v4573, %v4741
        %v4743 = vpop.f32.mrf.mxu0
        %v4744 = vadd.f32 %v4575, %v4743
        %4745 = vmatmul.bf16.gmra.mxu0 %v962
        %v4746 = vpop.f32.mrf.mxu0
        %v4747 = vadd.f32 %v4578, %v4746
        %v4748 = vpop.f32.mrf.mxu0
        %v4749 = vadd.f32 %v4580, %v4748
        %4750 = vmatmul.bf16.gmra.mxu0 %v970
        %v4751 = vpop.f32.mrf.mxu0
        %v4752 = vadd.f32 %v4583, %v4751
        %v4753 = vpop.f32.mrf.mxu0
        %v4754 = vadd.f32 %v4585, %v4753
        %4755 = vmatmul.bf16.gmra.mxu0 %v978
        %v4756 = vpop.f32.mrf.mxu0
        %v4757 = vadd.f32 %v4588, %v4756
        %v4758 = vpop.f32.mrf.mxu0
        %v4759 = vadd.f32 %v4590, %v4758
        %4760 = vmatmul.bf16.gmra.mxu0 %v986
        %v4761 = vpop.f32.mrf.mxu0
        %v4762 = vadd.f32 %v4593, %v4761
        %v4763 = vpop.f32.mrf.mxu0
        %v4764 = vadd.f32 %v4595, %v4763
        %4765 = vmatmul.bf16.gmra.mxu0 %v994
        %v4766 = vpop.f32.mrf.mxu0
        %v4767 = vadd.f32 %v4598, %v4766
        %v4768 = vpop.f32.mrf.mxu0
        %v4769 = vadd.f32 %v4600, %v4768
        %4770 = vmatmul.bf16.gmra.mxu0 %v1002
        %v4771 = vpop.f32.mrf.mxu0
        %v4772 = vadd.f32 %v4603, %v4771
        %v4773 = vpop.f32.mrf.mxu0
        %v4774 = vadd.f32 %v4605, %v4773
        %4775 = vmatmul.bf16.gmra.mxu0 %v1010
        %v4776 = vpop.f32.mrf.mxu0
        %v4777 = vadd.f32 %v4608, %v4776
        %v4778 = vpop.f32.mrf.mxu0
        %v4779 = vadd.f32 %v4610, %v4778
        %4780 = vmatmul.bf16.gmra.mxu0 %v1018
        %v4781 = vpop.f32.mrf.mxu0
        %v4782 = vadd.f32 %v4613, %v4781
        %v4783 = vpop.f32.mrf.mxu0
        %v4784 = vadd.f32 %v4615, %v4783
        %4785 = vmatmul.bf16.gmra.mxu0 %v1026
        %v4786 = vpop.f32.mrf.mxu0
        %v4787 = vadd.f32 %v4618, %v4786
        %v4788 = vpop.f32.mrf.mxu0
        %v4789 = vadd.f32 %v4620, %v4788
        %4790 = vmatmul.bf16.gmra.mxu0 %v1034
        %v4791 = vpop.f32.mrf.mxu0
        %v4792 = vadd.f32 %v4623, %v4791
        %v4793 = vpop.f32.mrf.mxu0
        %v4794 = vadd.f32 %v4625, %v4793
        %4795 = vmatmul.bf16.gmra.mxu0 %v1042
        %v4796 = vpop.f32.mrf.mxu0
        %v4797 = vadd.f32 %v4628, %v4796
        %v4798 = vpop.f32.mrf.mxu0
        %v4799 = vadd.f32 %v4630, %v4798
        %4800 = vmatmul.bf16.gmra.mxu0 %v1050
        %v4801 = vpop.f32.mrf.mxu0
        %v4802 = vadd.f32 %v4633, %v4801
        %v4803 = vpop.f32.mrf.mxu0
        %v4804 = vadd.f32 %v4635, %v4803
        %4805 = vmatmul.bf16.gmra.mxu0 %v1058
        %v4806 = vpop.f32.mrf.mxu0
        %v4807 = vadd.f32 %v4638, %v4806
        %v4808 = vpop.f32.mrf.mxu0
        %v4809 = vadd.f32 %v4640, %v4808
        %4810 = vmatmul.bf16.gmra.mxu0 %v1066
        %v4811 = vpop.f32.mrf.mxu0
        %v4812 = vadd.f32 %v4643, %v4811
        %v4813 = vpop.f32.mrf.mxu0
        %v4814 = vadd.f32 %v4645, %v4813
        %4815 = vmatmul.bf16.gmra.mxu0 %v1074
        %v4816 = vpop.f32.mrf.mxu0
        %v4817 = vadd.f32 %v4648, %v4816
        %v4818 = vpop.f32.mrf.mxu0
        %v4819 = vadd.f32 %v4650, %v4818
        %4820 = vdwg.mxu0
        %4821 = vmatpush.bf16.msra.mxu0 %v2301
        %4822 = vmatpush.bf16.msra.mxu0 %v2297
        %4823 = vmatpush.bf16.msra.mxu0 %v2293
        %4824 = vmatpush.bf16.msra.mxu0 %v2289
        %4825 = vmatpush.bf16.msra.mxu0 %v2285
        %4826 = vmatpush.bf16.msra.mxu0 %v2281
        %4827 = vmatpush.bf16.msra.mxu0 %v2277
        %4828 = vmatpush.bf16.msra.mxu0 %v2273
        %4829 = vmatmul.bf16.gmra.mxu0 %v827
        %v4830 = vpop.f32.mrf.mxu0
        %v4831 = vadd.f32 %v4662, %v4830
        %v4832 = vpop.f32.mrf.mxu0
        %v4833 = vadd.f32 %v4664, %v4832
        %4834 = vmatmul.bf16.gmra.mxu0 %v835
        %v4835 = vpop.f32.mrf.mxu0
        %v4836 = vadd.f32 %v4667, %v4835
        %v4837 = vpop.f32.mrf.mxu0
        %v4838 = vadd.f32 %v4669, %v4837
        %4839 = vmatmul.bf16.gmra.mxu0 %v843
        %v4840 = vpop.f32.mrf.mxu0
        %v4841 = vadd.f32 %v4672, %v4840
        %v4842 = vpop.f32.mrf.mxu0
        %v4843 = vadd.f32 %v4674, %v4842
        %4844 = vmatmul.bf16.gmra.mxu0 %v851
        %v4845 = vpop.f32.mrf.mxu0
        %v4846 = vadd.f32 %v4677, %v4845
        %v4847 = vpop.f32.mrf.mxu0
        %v4848 = vadd.f32 %v4679, %v4847
        %4849 = vmatmul.bf16.gmra.mxu0 %v859
        %v4850 = vpop.f32.mrf.mxu0
        %v4851 = vadd.f32 %v4682, %v4850
        %v4852 = vpop.f32.mrf.mxu0
        %v4853 = vadd.f32 %v4684, %v4852
        %4854 = vmatmul.bf16.gmra.mxu0 %v867
        %v4855 = vpop.f32.mrf.mxu0
        %v4856 = vadd.f32 %v4687, %v4855
        %v4857 = vpop.f32.mrf.mxu0
        %v4858 = vadd.f32 %v4689, %v4857
        %4859 = vmatmul.bf16.gmra.mxu0 %v875
        %v4860 = vpop.f32.mrf.mxu0
        %v4861 = vadd.f32 %v4692, %v4860
        %v4862 = vpop.f32.mrf.mxu0
        %v4863 = vadd.f32 %v4694, %v4862
        %4864 = vmatmul.bf16.gmra.mxu0 %v883
        %v4865 = vpop.f32.mrf.mxu0
        %v4866 = vadd.f32 %v4697, %v4865
        %v4867 = vpop.f32.mrf.mxu0
        %v4868 = vadd.f32 %v4699, %v4867
        %4869 = vmatmul.bf16.gmra.mxu0 %v891
        %v4870 = vpop.f32.mrf.mxu0
        %v4871 = vadd.f32 %v4702, %v4870
        %v4872 = vpop.f32.mrf.mxu0
        %v4873 = vadd.f32 %v4704, %v4872
        %4874 = vmatmul.bf16.gmra.mxu0 %v899
        %v4875 = vpop.f32.mrf.mxu0
        %v4876 = vadd.f32 %v4707, %v4875
        %v4877 = vpop.f32.mrf.mxu0
        %v4878 = vadd.f32 %v4709, %v4877
        %4879 = vmatmul.bf16.gmra.mxu0 %v907
        %v4880 = vpop.f32.mrf.mxu0
        %v4881 = vadd.f32 %v4712, %v4880
        %v4882 = vpop.f32.mrf.mxu0
        %v4883 = vadd.f32 %v4714, %v4882
        %4884 = vmatmul.bf16.gmra.mxu0 %v915
        %v4885 = vpop.f32.mrf.mxu0
        %v4886 = vadd.f32 %v4717, %v4885
        %v4887 = vpop.f32.mrf.mxu0
        %v4888 = vadd.f32 %v4719, %v4887
        %4889 = vmatmul.bf16.gmra.mxu0 %v923
        %v4890 = vpop.f32.mrf.mxu0
        %v4891 = vadd.f32 %v4722, %v4890
        %v4892 = vpop.f32.mrf.mxu0
        %v4893 = vadd.f32 %v4724, %v4892
        %4894 = vmatmul.bf16.gmra.mxu0 %v931
        %v4895 = vpop.f32.mrf.mxu0
        %v4896 = vadd.f32 %v4727, %v4895
        %v4897 = vpop.f32.mrf.mxu0
        %v4898 = vadd.f32 %v4729, %v4897
        %4899 = vmatmul.bf16.gmra.mxu0 %v939
        %v4900 = vpop.f32.mrf.mxu0
        %v4901 = vadd.f32 %v4732, %v4900
        %v4902 = vpop.f32.mrf.mxu0
        %v4903 = vadd.f32 %v4734, %v4902
        %4904 = vmatmul.bf16.gmra.mxu0 %v947
        %v4905 = vpop.f32.mrf.mxu0
        %v4906 = vadd.f32 %v4737, %v4905
        %v4907 = vpop.f32.mrf.mxu0
        %v4908 = vadd.f32 %v4739, %v4907
        %4909 = vmatmul.bf16.gmra.mxu0 %v955
        %v4910 = vpop.f32.mrf.mxu0
        %v4911 = vadd.f32 %v4742, %v4910
        %v4912 = vpop.f32.mrf.mxu0
        %v4913 = vadd.f32 %v4744, %v4912
        %4914 = vmatmul.bf16.gmra.mxu0 %v963
        %v4915 = vpop.f32.mrf.mxu0
        %v4916 = vadd.f32 %v4747, %v4915
        %v4917 = vpop.f32.mrf.mxu0
        %v4918 = vadd.f32 %v4749, %v4917
        %4919 = vmatmul.bf16.gmra.mxu0 %v971
        %v4920 = vpop.f32.mrf.mxu0
        %v4921 = vadd.f32 %v4752, %v4920
        %v4922 = vpop.f32.mrf.mxu0
        %v4923 = vadd.f32 %v4754, %v4922
        %4924 = vmatmul.bf16.gmra.mxu0 %v979
        %v4925 = vpop.f32.mrf.mxu0
        %v4926 = vadd.f32 %v4757, %v4925
        %v4927 = vpop.f32.mrf.mxu0
        %v4928 = vadd.f32 %v4759, %v4927
        %4929 = vmatmul.bf16.gmra.mxu0 %v987
        %v4930 = vpop.f32.mrf.mxu0
        %v4931 = vadd.f32 %v4762, %v4930
        %v4932 = vpop.f32.mrf.mxu0
        %v4933 = vadd.f32 %v4764, %v4932
        %4934 = vmatmul.bf16.gmra.mxu0 %v995
        %v4935 = vpop.f32.mrf.mxu0
        %v4936 = vadd.f32 %v4767, %v4935
        %v4937 = vpop.f32.mrf.mxu0
        %v4938 = vadd.f32 %v4769, %v4937
        %4939 = vmatmul.bf16.gmra.mxu0 %v1003
        %v4940 = vpop.f32.mrf.mxu0
        %v4941 = vadd.f32 %v4772, %v4940
        %v4942 = vpop.f32.mrf.mxu0
        %v4943 = vadd.f32 %v4774, %v4942
        %4944 = vmatmul.bf16.gmra.mxu0 %v1011
        %v4945 = vpop.f32.mrf.mxu0
        %v4946 = vadd.f32 %v4777, %v4945
        %v4947 = vpop.f32.mrf.mxu0
        %v4948 = vadd.f32 %v4779, %v4947
        %4949 = vmatmul.bf16.gmra.mxu0 %v1019
        %v4950 = vpop.f32.mrf.mxu0
        %v4951 = vadd.f32 %v4782, %v4950
        %v4952 = vpop.f32.mrf.mxu0
        %v4953 = vadd.f32 %v4784, %v4952
        %4954 = vmatmul.bf16.gmra.mxu0 %v1027
        %v4955 = vpop.f32.mrf.mxu0
        %v4956 = vadd.f32 %v4787, %v4955
        %v4957 = vpop.f32.mrf.mxu0
        %v4958 = vadd.f32 %v4789, %v4957
        %4959 = vmatmul.bf16.gmra.mxu0 %v1035
        %v4960 = vpop.f32.mrf.mxu0
        %v4961 = vadd.f32 %v4792, %v4960
        %v4962 = vpop.f32.mrf.mxu0
        %v4963 = vadd.f32 %v4794, %v4962
        %4964 = vmatmul.bf16.gmra.mxu0 %v1043
        %v4965 = vpop.f32.mrf.mxu0
        %v4966 = vadd.f32 %v4797, %v4965
        %v4967 = vpop.f32.mrf.mxu0
        %v4968 = vadd.f32 %v4799, %v4967
        %4969 = vmatmul.bf16.gmra.mxu0 %v1051
        %v4970 = vpop.f32.mrf.mxu0
        %v4971 = vadd.f32 %v4802, %v4970
        %v4972 = vpop.f32.mrf.mxu0
        %v4973 = vadd.f32 %v4804, %v4972
        %4974 = vmatmul.bf16.gmra.mxu0 %v1059
        %v4975 = vpop.f32.mrf.mxu0
        %v4976 = vadd.f32 %v4807, %v4975
        %v4977 = vpop.f32.mrf.mxu0
        %v4978 = vadd.f32 %v4809, %v4977
        %4979 = vmatmul.bf16.gmra.mxu0 %v1067
        %v4980 = vpop.f32.mrf.mxu0
        %v4981 = vadd.f32 %v4812, %v4980
        %v4982 = vpop.f32.mrf.mxu0
        %v4983 = vadd.f32 %v4814, %v4982
        %4984 = vmatmul.bf16.gmra.mxu0 %v1075
        %v4985 = vpop.f32.mrf.mxu0
        %v4986 = vadd.f32 %v4817, %v4985
        %v4987 = vpop.f32.mrf.mxu0
        %v4988 = vadd.f32 %v4819, %v4987
        %4989 = vdwg.mxu0
        %4990 = vmatpush.bf16.msra.mxu0 %v2333
        %4991 = vmatpush.bf16.msra.mxu0 %v2329
        %4992 = vmatpush.bf16.msra.mxu0 %v2325
        %4993 = vmatpush.bf16.msra.mxu0 %v2321
        %4994 = vmatpush.bf16.msra.mxu0 %v2317
        %4995 = vmatpush.bf16.msra.mxu0 %v2313
        %4996 = vmatpush.bf16.msra.mxu0 %v2309
        %4997 = vmatpush.bf16.msra.mxu0 %v2305
        %4998 = vmatmul.bf16.gmra.mxu0 %v828
        %v4999 = vpop.f32.mrf.mxu0
        %v5000 = vadd.f32 %v4831, %v4999
        %v5001 = vpop.f32.mrf.mxu0
        %v5002 = vadd.f32 %v4833, %v5001
        %5003 = vmatmul.bf16.gmra.mxu0 %v836
        %v5004 = vpop.f32.mrf.mxu0
        %v5005 = vadd.f32 %v4836, %v5004
        %v5006 = vpop.f32.mrf.mxu0
        %v5007 = vadd.f32 %v4838, %v5006
        %5008 = vmatmul.bf16.gmra.mxu0 %v844
        %v5009 = vpop.f32.mrf.mxu0
        %v5010 = vadd.f32 %v4841, %v5009
        %v5011 = vpop.f32.mrf.mxu0
        %v5012 = vadd.f32 %v4843, %v5011
        %5013 = vmatmul.bf16.gmra.mxu0 %v852
        %v5014 = vpop.f32.mrf.mxu0
        %v5015 = vadd.f32 %v4846, %v5014
        %v5016 = vpop.f32.mrf.mxu0
        %v5017 = vadd.f32 %v4848, %v5016
        %5018 = vmatmul.bf16.gmra.mxu0 %v860
        %v5019 = vpop.f32.mrf.mxu0
        %v5020 = vadd.f32 %v4851, %v5019
        %v5021 = vpop.f32.mrf.mxu0
        %v5022 = vadd.f32 %v4853, %v5021
        %5023 = vmatmul.bf16.gmra.mxu0 %v868
        %v5024 = vpop.f32.mrf.mxu0
        %v5025 = vadd.f32 %v4856, %v5024
        %v5026 = vpop.f32.mrf.mxu0
        %v5027 = vadd.f32 %v4858, %v5026
        %5028 = vmatmul.bf16.gmra.mxu0 %v876
        %v5029 = vpop.f32.mrf.mxu0
        %v5030 = vadd.f32 %v4861, %v5029
        %v5031 = vpop.f32.mrf.mxu0
        %v5032 = vadd.f32 %v4863, %v5031
        %5033 = vmatmul.bf16.gmra.mxu0 %v884
        %v5034 = vpop.f32.mrf.mxu0
        %v5035 = vadd.f32 %v4866, %v5034
        %v5036 = vpop.f32.mrf.mxu0
        %v5037 = vadd.f32 %v4868, %v5036
        %5038 = vmatmul.bf16.gmra.mxu0 %v892
        %v5039 = vpop.f32.mrf.mxu0
        %v5040 = vadd.f32 %v4871, %v5039
        %v5041 = vpop.f32.mrf.mxu0
        %v5042 = vadd.f32 %v4873, %v5041
        %5043 = vmatmul.bf16.gmra.mxu0 %v900
        %v5044 = vpop.f32.mrf.mxu0
        %v5045 = vadd.f32 %v4876, %v5044
        %v5046 = vpop.f32.mrf.mxu0
        %v5047 = vadd.f32 %v4878, %v5046
        %5048 = vmatmul.bf16.gmra.mxu0 %v908
        %v5049 = vpop.f32.mrf.mxu0
        %v5050 = vadd.f32 %v4881, %v5049
        %v5051 = vpop.f32.mrf.mxu0
        %v5052 = vadd.f32 %v4883, %v5051
        %5053 = vmatmul.bf16.gmra.mxu0 %v916
        %v5054 = vpop.f32.mrf.mxu0
        %v5055 = vadd.f32 %v4886, %v5054
        %v5056 = vpop.f32.mrf.mxu0
        %v5057 = vadd.f32 %v4888, %v5056
        %5058 = vmatmul.bf16.gmra.mxu0 %v924
        %v5059 = vpop.f32.mrf.mxu0
        %v5060 = vadd.f32 %v4891, %v5059
        %v5061 = vpop.f32.mrf.mxu0
        %v5062 = vadd.f32 %v4893, %v5061
        %5063 = vmatmul.bf16.gmra.mxu0 %v932
        %v5064 = vpop.f32.mrf.mxu0
        %v5065 = vadd.f32 %v4896, %v5064
        %v5066 = vpop.f32.mrf.mxu0
        %v5067 = vadd.f32 %v4898, %v5066
        %5068 = vmatmul.bf16.gmra.mxu0 %v940
        %v5069 = vpop.f32.mrf.mxu0
        %v5070 = vadd.f32 %v4901, %v5069
        %v5071 = vpop.f32.mrf.mxu0
        %v5072 = vadd.f32 %v4903, %v5071
        %5073 = vmatmul.bf16.gmra.mxu0 %v948
        %v5074 = vpop.f32.mrf.mxu0
        %v5075 = vadd.f32 %v4906, %v5074
        %v5076 = vpop.f32.mrf.mxu0
        %v5077 = vadd.f32 %v4908, %v5076
        %5078 = vmatmul.bf16.gmra.mxu0 %v956
        %v5079 = vpop.f32.mrf.mxu0
        %v5080 = vadd.f32 %v4911, %v5079
        %v5081 = vpop.f32.mrf.mxu0
        %v5082 = vadd.f32 %v4913, %v5081
        %5083 = vmatmul.bf16.gmra.mxu0 %v964
        %v5084 = vpop.f32.mrf.mxu0
        %v5085 = vadd.f32 %v4916, %v5084
        %v5086 = vpop.f32.mrf.mxu0
        %v5087 = vadd.f32 %v4918, %v5086
        %5088 = vmatmul.bf16.gmra.mxu0 %v972
        %v5089 = vpop.f32.mrf.mxu0
        %v5090 = vadd.f32 %v4921, %v5089
        %v5091 = vpop.f32.mrf.mxu0
        %v5092 = vadd.f32 %v4923, %v5091
        %5093 = vmatmul.bf16.gmra.mxu0 %v980
        %v5094 = vpop.f32.mrf.mxu0
        %v5095 = vadd.f32 %v4926, %v5094
        %v5096 = vpop.f32.mrf.mxu0
        %v5097 = vadd.f32 %v4928, %v5096
        %5098 = vmatmul.bf16.gmra.mxu0 %v988
        %v5099 = vpop.f32.mrf.mxu0
        %v5100 = vadd.f32 %v4931, %v5099
        %v5101 = vpop.f32.mrf.mxu0
        %v5102 = vadd.f32 %v4933, %v5101
        %5103 = vmatmul.bf16.gmra.mxu0 %v996
        %v5104 = vpop.f32.mrf.mxu0
        %v5105 = vadd.f32 %v4936, %v5104
        %v5106 = vpop.f32.mrf.mxu0
        %v5107 = vadd.f32 %v4938, %v5106
        %5108 = vmatmul.bf16.gmra.mxu0 %v1004
        %v5109 = vpop.f32.mrf.mxu0
        %v5110 = vadd.f32 %v4941, %v5109
        %v5111 = vpop.f32.mrf.mxu0
        %v5112 = vadd.f32 %v4943, %v5111
        %5113 = vmatmul.bf16.gmra.mxu0 %v1012
        %v5114 = vpop.f32.mrf.mxu0
        %v5115 = vadd.f32 %v4946, %v5114
        %v5116 = vpop.f32.mrf.mxu0
        %v5117 = vadd.f32 %v4948, %v5116
        %5118 = vmatmul.bf16.gmra.mxu0 %v1020
        %v5119 = vpop.f32.mrf.mxu0
        %v5120 = vadd.f32 %v4951, %v5119
        %v5121 = vpop.f32.mrf.mxu0
        %v5122 = vadd.f32 %v4953, %v5121
        %5123 = vmatmul.bf16.gmra.mxu0 %v1028
        %v5124 = vpop.f32.mrf.mxu0
        %v5125 = vadd.f32 %v4956, %v5124
        %v5126 = vpop.f32.mrf.mxu0
        %v5127 = vadd.f32 %v4958, %v5126
        %5128 = vmatmul.bf16.gmra.mxu0 %v1036
        %v5129 = vpop.f32.mrf.mxu0
        %v5130 = vadd.f32 %v4961, %v5129
        %v5131 = vpop.f32.mrf.mxu0
        %v5132 = vadd.f32 %v4963, %v5131
        %5133 = vmatmul.bf16.gmra.mxu0 %v1044
        %v5134 = vpop.f32.mrf.mxu0
        %v5135 = vadd.f32 %v4966, %v5134
        %v5136 = vpop.f32.mrf.mxu0
        %v5137 = vadd.f32 %v4968, %v5136
        %5138 = vmatmul.bf16.gmra.mxu0 %v1052
        %v5139 = vpop.f32.mrf.mxu0
        %v5140 = vadd.f32 %v4971, %v5139
        %v5141 = vpop.f32.mrf.mxu0
        %v5142 = vadd.f32 %v4973, %v5141
        %5143 = vmatmul.bf16.gmra.mxu0 %v1060
        %v5144 = vpop.f32.mrf.mxu0
        %v5145 = vadd.f32 %v4976, %v5144
        %v5146 = vpop.f32.mrf.mxu0
        %v5147 = vadd.f32 %v4978, %v5146
        %5148 = vmatmul.bf16.gmra.mxu0 %v1068
        %v5149 = vpop.f32.mrf.mxu0
        %v5150 = vadd.f32 %v4981, %v5149
        %v5151 = vpop.f32.mrf.mxu0
        %v5152 = vadd.f32 %v4983, %v5151
        %5153 = vmatmul.bf16.gmra.mxu0 %v1076
        %v5154 = vpop.f32.mrf.mxu0
        %v5155 = vadd.f32 %v4986, %v5154
        %v5156 = vpop.f32.mrf.mxu0
        %v5157 = vadd.f32 %v4988, %v5156
        %5158 = vdwg.mxu0
        %5159 = vmatpush.bf16.msra.mxu0 %v2365
        %5160 = vmatpush.bf16.msra.mxu0 %v2361
        %5161 = vmatpush.bf16.msra.mxu0 %v2357
        %5162 = vmatpush.bf16.msra.mxu0 %v2353
        %5163 = vmatpush.bf16.msra.mxu0 %v2349
        %5164 = vmatpush.bf16.msra.mxu0 %v2345
        %5165 = vmatpush.bf16.msra.mxu0 %v2341
        %5166 = vmatpush.bf16.msra.mxu0 %v2337
        %5167 = vmatmul.bf16.gmra.mxu0 %v829
        %v5168 = vpop.f32.mrf.mxu0
        %v5169 = vadd.f32 %v5000, %v5168
        %v5170 = vpop.f32.mrf.mxu0
        %v5171 = vadd.f32 %v5002, %v5170
        %5172 = vmatmul.bf16.gmra.mxu0 %v837
        %v5173 = vpop.f32.mrf.mxu0
        %v5174 = vadd.f32 %v5005, %v5173
        %v5175 = vpop.f32.mrf.mxu0
        %v5176 = vadd.f32 %v5007, %v5175
        %5177 = vmatmul.bf16.gmra.mxu0 %v845
        %v5178 = vpop.f32.mrf.mxu0
        %v5179 = vadd.f32 %v5010, %v5178
        %v5180 = vpop.f32.mrf.mxu0
        %v5181 = vadd.f32 %v5012, %v5180
        %5182 = vmatmul.bf16.gmra.mxu0 %v853
        %v5183 = vpop.f32.mrf.mxu0
        %v5184 = vadd.f32 %v5015, %v5183
        %v5185 = vpop.f32.mrf.mxu0
        %v5186 = vadd.f32 %v5017, %v5185
        %5187 = vmatmul.bf16.gmra.mxu0 %v861
        %v5188 = vpop.f32.mrf.mxu0
        %v5189 = vadd.f32 %v5020, %v5188
        %v5190 = vpop.f32.mrf.mxu0
        %v5191 = vadd.f32 %v5022, %v5190
        %5192 = vmatmul.bf16.gmra.mxu0 %v869
        %v5193 = vpop.f32.mrf.mxu0
        %v5194 = vadd.f32 %v5025, %v5193
        %v5195 = vpop.f32.mrf.mxu0
        %v5196 = vadd.f32 %v5027, %v5195
        %5197 = vmatmul.bf16.gmra.mxu0 %v877
        %v5198 = vpop.f32.mrf.mxu0
        %v5199 = vadd.f32 %v5030, %v5198
        %v5200 = vpop.f32.mrf.mxu0
        %v5201 = vadd.f32 %v5032, %v5200
        %5202 = vmatmul.bf16.gmra.mxu0 %v885
        %v5203 = vpop.f32.mrf.mxu0
        %v5204 = vadd.f32 %v5035, %v5203
        %v5205 = vpop.f32.mrf.mxu0
        %v5206 = vadd.f32 %v5037, %v5205
        %5207 = vmatmul.bf16.gmra.mxu0 %v893
        %v5208 = vpop.f32.mrf.mxu0
        %v5209 = vadd.f32 %v5040, %v5208
        %v5210 = vpop.f32.mrf.mxu0
        %v5211 = vadd.f32 %v5042, %v5210
        %5212 = vmatmul.bf16.gmra.mxu0 %v901
        %v5213 = vpop.f32.mrf.mxu0
        %v5214 = vadd.f32 %v5045, %v5213
        %v5215 = vpop.f32.mrf.mxu0
        %v5216 = vadd.f32 %v5047, %v5215
        %5217 = vmatmul.bf16.gmra.mxu0 %v909
        %v5218 = vpop.f32.mrf.mxu0
        %v5219 = vadd.f32 %v5050, %v5218
        %v5220 = vpop.f32.mrf.mxu0
        %v5221 = vadd.f32 %v5052, %v5220
        %5222 = vmatmul.bf16.gmra.mxu0 %v917
        %v5223 = vpop.f32.mrf.mxu0
        %v5224 = vadd.f32 %v5055, %v5223
        %v5225 = vpop.f32.mrf.mxu0
        %v5226 = vadd.f32 %v5057, %v5225
        %5227 = vmatmul.bf16.gmra.mxu0 %v925
        %v5228 = vpop.f32.mrf.mxu0
        %v5229 = vadd.f32 %v5060, %v5228
        %v5230 = vpop.f32.mrf.mxu0
        %v5231 = vadd.f32 %v5062, %v5230
        %5232 = vmatmul.bf16.gmra.mxu0 %v933
        %v5233 = vpop.f32.mrf.mxu0
        %v5234 = vadd.f32 %v5065, %v5233
        %v5235 = vpop.f32.mrf.mxu0
        %v5236 = vadd.f32 %v5067, %v5235
        %5237 = vmatmul.bf16.gmra.mxu0 %v941
        %v5238 = vpop.f32.mrf.mxu0
        %v5239 = vadd.f32 %v5070, %v5238
        %v5240 = vpop.f32.mrf.mxu0
        %v5241 = vadd.f32 %v5072, %v5240
        %5242 = vmatmul.bf16.gmra.mxu0 %v949
        %v5243 = vpop.f32.mrf.mxu0
        %v5244 = vadd.f32 %v5075, %v5243
        %v5245 = vpop.f32.mrf.mxu0
        %v5246 = vadd.f32 %v5077, %v5245
        %5247 = vmatmul.bf16.gmra.mxu0 %v957
        %v5248 = vpop.f32.mrf.mxu0
        %v5249 = vadd.f32 %v5080, %v5248
        %v5250 = vpop.f32.mrf.mxu0
        %v5251 = vadd.f32 %v5082, %v5250
        %5252 = vmatmul.bf16.gmra.mxu0 %v965
        %v5253 = vpop.f32.mrf.mxu0
        %v5254 = vadd.f32 %v5085, %v5253
        %v5255 = vpop.f32.mrf.mxu0
        %v5256 = vadd.f32 %v5087, %v5255
        %5257 = vmatmul.bf16.gmra.mxu0 %v973
        %v5258 = vpop.f32.mrf.mxu0
        %v5259 = vadd.f32 %v5090, %v5258
        %v5260 = vpop.f32.mrf.mxu0
        %v5261 = vadd.f32 %v5092, %v5260
        %5262 = vmatmul.bf16.gmra.mxu0 %v981
        %v5263 = vpop.f32.mrf.mxu0
        %v5264 = vadd.f32 %v5095, %v5263
        %v5265 = vpop.f32.mrf.mxu0
        %v5266 = vadd.f32 %v5097, %v5265
        %5267 = vmatmul.bf16.gmra.mxu0 %v989
        %v5268 = vpop.f32.mrf.mxu0
        %v5269 = vadd.f32 %v5100, %v5268
        %v5270 = vpop.f32.mrf.mxu0
        %v5271 = vadd.f32 %v5102, %v5270
        %5272 = vmatmul.bf16.gmra.mxu0 %v997
        %v5273 = vpop.f32.mrf.mxu0
        %v5274 = vadd.f32 %v5105, %v5273
        %v5275 = vpop.f32.mrf.mxu0
        %v5276 = vadd.f32 %v5107, %v5275
        %5277 = vmatmul.bf16.gmra.mxu0 %v1005
        %v5278 = vpop.f32.mrf.mxu0
        %v5279 = vadd.f32 %v5110, %v5278
        %v5280 = vpop.f32.mrf.mxu0
        %v5281 = vadd.f32 %v5112, %v5280
        %5282 = vmatmul.bf16.gmra.mxu0 %v1013
        %v5283 = vpop.f32.mrf.mxu0
        %v5284 = vadd.f32 %v5115, %v5283
        %v5285 = vpop.f32.mrf.mxu0
        %v5286 = vadd.f32 %v5117, %v5285
        %5287 = vmatmul.bf16.gmra.mxu0 %v1021
        %v5288 = vpop.f32.mrf.mxu0
        %v5289 = vadd.f32 %v5120, %v5288
        %v5290 = vpop.f32.mrf.mxu0
        %v5291 = vadd.f32 %v5122, %v5290
        %5292 = vmatmul.bf16.gmra.mxu0 %v1029
        %v5293 = vpop.f32.mrf.mxu0
        %v5294 = vadd.f32 %v5125, %v5293
        %v5295 = vpop.f32.mrf.mxu0
        %v5296 = vadd.f32 %v5127, %v5295
        %5297 = vmatmul.bf16.gmra.mxu0 %v1037
        %v5298 = vpop.f32.mrf.mxu0
        %v5299 = vadd.f32 %v5130, %v5298
        %v5300 = vpop.f32.mrf.mxu0
        %v5301 = vadd.f32 %v5132, %v5300
        %5302 = vmatmul.bf16.gmra.mxu0 %v1045
        %v5303 = vpop.f32.mrf.mxu0
        %v5304 = vadd.f32 %v5135, %v5303
        %v5305 = vpop.f32.mrf.mxu0
        %v5306 = vadd.f32 %v5137, %v5305
        %5307 = vmatmul.bf16.gmra.mxu0 %v1053
        %v5308 = vpop.f32.mrf.mxu0
        %v5309 = vadd.f32 %v5140, %v5308
        %v5310 = vpop.f32.mrf.mxu0
        %v5311 = vadd.f32 %v5142, %v5310
        %5312 = vmatmul.bf16.gmra.mxu0 %v1061
        %v5313 = vpop.f32.mrf.mxu0
        %v5314 = vadd.f32 %v5145, %v5313
        %v5315 = vpop.f32.mrf.mxu0
        %v5316 = vadd.f32 %v5147, %v5315
        %5317 = vmatmul.bf16.gmra.mxu0 %v1069
        %v5318 = vpop.f32.mrf.mxu0
        %v5319 = vadd.f32 %v5150, %v5318
        %v5320 = vpop.f32.mrf.mxu0
        %v5321 = vadd.f32 %v5152, %v5320
        %5322 = vmatmul.bf16.gmra.mxu0 %v1077
        %v5323 = vpop.f32.mrf.mxu0
        %v5324 = vadd.f32 %v5155, %v5323
        %v5325 = vpop.f32.mrf.mxu0
        %v5326 = vadd.f32 %v5157, %v5325
        %5327 = vdwg.mxu0
        %5328 = vmatpush.bf16.msra.mxu0 %v2142
        %5329 = vmatpush.bf16.msra.mxu0 %v2138
        %5330 = vmatpush.bf16.msra.mxu0 %v2134
        %5331 = vmatpush.bf16.msra.mxu0 %v2130
        %5332 = vmatpush.bf16.msra.mxu0 %v2126
        %5333 = vmatpush.bf16.msra.mxu0 %v2122
        %5334 = vmatpush.bf16.msra.mxu0 %v2118
        %5335 = vmatpush.bf16.msra.mxu0 %v2114
        %5336 = vmatmul.bf16.gmra.mxu0 %v822
        %v5337 = vpop.f32.mrf.mxu0
        %v5338 = vadd.f32 %v1338, %v5337
        %v5339 = vpop.f32.mrf.mxu0
        %v5340 = vadd.f32 %v1338, %v5339
        %5341 = vmatmul.bf16.gmra.mxu0 %v830
        %v5342 = vpop.f32.mrf.mxu0
        %v5343 = vadd.f32 %v1338, %v5342
        %v5344 = vpop.f32.mrf.mxu0
        %v5345 = vadd.f32 %v1338, %v5344
        %5346 = vmatmul.bf16.gmra.mxu0 %v838
        %v5347 = vpop.f32.mrf.mxu0
        %v5348 = vadd.f32 %v1338, %v5347
        %v5349 = vpop.f32.mrf.mxu0
        %v5350 = vadd.f32 %v1338, %v5349
        %5351 = vmatmul.bf16.gmra.mxu0 %v846
        %v5352 = vpop.f32.mrf.mxu0
        %v5353 = vadd.f32 %v1338, %v5352
        %v5354 = vpop.f32.mrf.mxu0
        %v5355 = vadd.f32 %v1338, %v5354
        %5356 = vmatmul.bf16.gmra.mxu0 %v854
        %v5357 = vpop.f32.mrf.mxu0
        %v5358 = vadd.f32 %v1338, %v5357
        %v5359 = vpop.f32.mrf.mxu0
        %v5360 = vadd.f32 %v1338, %v5359
        %5361 = vmatmul.bf16.gmra.mxu0 %v862
        %v5362 = vpop.f32.mrf.mxu0
        %v5363 = vadd.f32 %v1338, %v5362
        %v5364 = vpop.f32.mrf.mxu0
        %v5365 = vadd.f32 %v1338, %v5364
        %5366 = vmatmul.bf16.gmra.mxu0 %v870
        %v5367 = vpop.f32.mrf.mxu0
        %v5368 = vadd.f32 %v1338, %v5367
        %v5369 = vpop.f32.mrf.mxu0
        %v5370 = vadd.f32 %v1338, %v5369
        %5371 = vmatmul.bf16.gmra.mxu0 %v878
        %v5372 = vpop.f32.mrf.mxu0
        %v5373 = vadd.f32 %v1338, %v5372
        %v5374 = vpop.f32.mrf.mxu0
        %v5375 = vadd.f32 %v1338, %v5374
        %5376 = vmatmul.bf16.gmra.mxu0 %v886
        %v5377 = vpop.f32.mrf.mxu0
        %v5378 = vadd.f32 %v1338, %v5377
        %v5379 = vpop.f32.mrf.mxu0
        %v5380 = vadd.f32 %v1338, %v5379
        %5381 = vmatmul.bf16.gmra.mxu0 %v894
        %v5382 = vpop.f32.mrf.mxu0
        %v5383 = vadd.f32 %v1338, %v5382
        %v5384 = vpop.f32.mrf.mxu0
        %v5385 = vadd.f32 %v1338, %v5384
        %5386 = vmatmul.bf16.gmra.mxu0 %v902
        %v5387 = vpop.f32.mrf.mxu0
        %v5388 = vadd.f32 %v1338, %v5387
        %v5389 = vpop.f32.mrf.mxu0
        %v5390 = vadd.f32 %v1338, %v5389
        %5391 = vmatmul.bf16.gmra.mxu0 %v910
        %v5392 = vpop.f32.mrf.mxu0
        %v5393 = vadd.f32 %v1338, %v5392
        %v5394 = vpop.f32.mrf.mxu0
        %v5395 = vadd.f32 %v1338, %v5394
        %5396 = vmatmul.bf16.gmra.mxu0 %v918
        %v5397 = vpop.f32.mrf.mxu0
        %v5398 = vadd.f32 %v1338, %v5397
        %v5399 = vpop.f32.mrf.mxu0
        %v5400 = vadd.f32 %v1338, %v5399
        %5401 = vmatmul.bf16.gmra.mxu0 %v926
        %v5402 = vpop.f32.mrf.mxu0
        %v5403 = vadd.f32 %v1338, %v5402
        %v5404 = vpop.f32.mrf.mxu0
        %v5405 = vadd.f32 %v1338, %v5404
        %5406 = vmatmul.bf16.gmra.mxu0 %v934
        %v5407 = vpop.f32.mrf.mxu0
        %v5408 = vadd.f32 %v1338, %v5407
        %v5409 = vpop.f32.mrf.mxu0
        %v5410 = vadd.f32 %v1338, %v5409
        %5411 = vmatmul.bf16.gmra.mxu0 %v942
        %v5412 = vpop.f32.mrf.mxu0
        %v5413 = vadd.f32 %v1338, %v5412
        %v5414 = vpop.f32.mrf.mxu0
        %v5415 = vadd.f32 %v1338, %v5414
        %5416 = vmatmul.bf16.gmra.mxu0 %v950
        %v5417 = vpop.f32.mrf.mxu0
        %v5418 = vadd.f32 %v1338, %v5417
        %v5419 = vpop.f32.mrf.mxu0
        %v5420 = vadd.f32 %v1338, %v5419
        %5421 = vmatmul.bf16.gmra.mxu0 %v958
        %v5422 = vpop.f32.mrf.mxu0
        %v5423 = vadd.f32 %v1338, %v5422
        %v5424 = vpop.f32.mrf.mxu0
        %v5425 = vadd.f32 %v1338, %v5424
        %5426 = vmatmul.bf16.gmra.mxu0 %v966
        %v5427 = vpop.f32.mrf.mxu0
        %v5428 = vadd.f32 %v1338, %v5427
        %v5429 = vpop.f32.mrf.mxu0
        %v5430 = vadd.f32 %v1338, %v5429
        %5431 = vmatmul.bf16.gmra.mxu0 %v974
        %v5432 = vpop.f32.mrf.mxu0
        %v5433 = vadd.f32 %v1338, %v5432
        %v5434 = vpop.f32.mrf.mxu0
        %v5435 = vadd.f32 %v1338, %v5434
        %5436 = vmatmul.bf16.gmra.mxu0 %v982
        %v5437 = vpop.f32.mrf.mxu0
        %v5438 = vadd.f32 %v1338, %v5437
        %v5439 = vpop.f32.mrf.mxu0
        %v5440 = vadd.f32 %v1338, %v5439
        %5441 = vmatmul.bf16.gmra.mxu0 %v990
        %v5442 = vpop.f32.mrf.mxu0
        %v5443 = vadd.f32 %v1338, %v5442
        %v5444 = vpop.f32.mrf.mxu0
        %v5445 = vadd.f32 %v1338, %v5444
        %5446 = vmatmul.bf16.gmra.mxu0 %v998
        %v5447 = vpop.f32.mrf.mxu0
        %v5448 = vadd.f32 %v1338, %v5447
        %v5449 = vpop.f32.mrf.mxu0
        %v5450 = vadd.f32 %v1338, %v5449
        %5451 = vmatmul.bf16.gmra.mxu0 %v1006
        %v5452 = vpop.f32.mrf.mxu0
        %v5453 = vadd.f32 %v1338, %v5452
        %v5454 = vpop.f32.mrf.mxu0
        %v5455 = vadd.f32 %v1338, %v5454
        %5456 = vmatmul.bf16.gmra.mxu0 %v1014
        %v5457 = vpop.f32.mrf.mxu0
        %v5458 = vadd.f32 %v1338, %v5457
        %v5459 = vpop.f32.mrf.mxu0
        %v5460 = vadd.f32 %v1338, %v5459
        %5461 = vmatmul.bf16.gmra.mxu0 %v1022
        %v5462 = vpop.f32.mrf.mxu0
        %v5463 = vadd.f32 %v1338, %v5462
        %v5464 = vpop.f32.mrf.mxu0
        %v5465 = vadd.f32 %v1338, %v5464
        %5466 = vmatmul.bf16.gmra.mxu0 %v1030
        %v5467 = vpop.f32.mrf.mxu0
        %v5468 = vadd.f32 %v1338, %v5467
        %v5469 = vpop.f32.mrf.mxu0
        %v5470 = vadd.f32 %v1338, %v5469
        %5471 = vmatmul.bf16.gmra.mxu0 %v1038
        %v5472 = vpop.f32.mrf.mxu0
        %v5473 = vadd.f32 %v1338, %v5472
        %v5474 = vpop.f32.mrf.mxu0
        %v5475 = vadd.f32 %v1338, %v5474
        %5476 = vmatmul.bf16.gmra.mxu0 %v1046
        %v5477 = vpop.f32.mrf.mxu0
        %v5478 = vadd.f32 %v1338, %v5477
        %v5479 = vpop.f32.mrf.mxu0
        %v5480 = vadd.f32 %v1338, %v5479
        %5481 = vmatmul.bf16.gmra.mxu0 %v1054
        %v5482 = vpop.f32.mrf.mxu0
        %v5483 = vadd.f32 %v1338, %v5482
        %v5484 = vpop.f32.mrf.mxu0
        %v5485 = vadd.f32 %v1338, %v5484
        %5486 = vmatmul.bf16.gmra.mxu0 %v1062
        %v5487 = vpop.f32.mrf.mxu0
        %v5488 = vadd.f32 %v1338, %v5487
        %v5489 = vpop.f32.mrf.mxu0
        %v5490 = vadd.f32 %v1338, %v5489
        %5491 = vmatmul.bf16.gmra.mxu0 %v1070
        %v5492 = vpop.f32.mrf.mxu0
        %v5493 = vadd.f32 %v1338, %v5492
        %v5494 = vpop.f32.mrf.mxu0
        %v5495 = vadd.f32 %v1338, %v5494
        %5496 = vdwg.mxu0
        %5497 = vmatpush.bf16.msra.mxu0 %v2174
        %5498 = vmatpush.bf16.msra.mxu0 %v2170
        %5499 = vmatpush.bf16.msra.mxu0 %v2166
        %5500 = vmatpush.bf16.msra.mxu0 %v2162
        %5501 = vmatpush.bf16.msra.mxu0 %v2158
        %5502 = vmatpush.bf16.msra.mxu0 %v2154
        %5503 = vmatpush.bf16.msra.mxu0 %v2150
        %5504 = vmatpush.bf16.msra.mxu0 %v2146
        %5505 = vmatmul.bf16.gmra.mxu0 %v823
        %v5506 = vpop.f32.mrf.mxu0
        %v5507 = vadd.f32 %v5338, %v5506
        %v5508 = vpop.f32.mrf.mxu0
        %v5509 = vadd.f32 %v5340, %v5508
        %5510 = vmatmul.bf16.gmra.mxu0 %v831
        %v5511 = vpop.f32.mrf.mxu0
        %v5512 = vadd.f32 %v5343, %v5511
        %v5513 = vpop.f32.mrf.mxu0
        %v5514 = vadd.f32 %v5345, %v5513
        %5515 = vmatmul.bf16.gmra.mxu0 %v839
        %v5516 = vpop.f32.mrf.mxu0
        %v5517 = vadd.f32 %v5348, %v5516
        %v5518 = vpop.f32.mrf.mxu0
        %v5519 = vadd.f32 %v5350, %v5518
        %5520 = vmatmul.bf16.gmra.mxu0 %v847
        %v5521 = vpop.f32.mrf.mxu0
        %v5522 = vadd.f32 %v5353, %v5521
        %v5523 = vpop.f32.mrf.mxu0
        %v5524 = vadd.f32 %v5355, %v5523
        %5525 = vmatmul.bf16.gmra.mxu0 %v855
        %v5526 = vpop.f32.mrf.mxu0
        %v5527 = vadd.f32 %v5358, %v5526
        %v5528 = vpop.f32.mrf.mxu0
        %v5529 = vadd.f32 %v5360, %v5528
        %5530 = vmatmul.bf16.gmra.mxu0 %v863
        %v5531 = vpop.f32.mrf.mxu0
        %v5532 = vadd.f32 %v5363, %v5531
        %v5533 = vpop.f32.mrf.mxu0
        %v5534 = vadd.f32 %v5365, %v5533
        %5535 = vmatmul.bf16.gmra.mxu0 %v871
        %v5536 = vpop.f32.mrf.mxu0
        %v5537 = vadd.f32 %v5368, %v5536
        %v5538 = vpop.f32.mrf.mxu0
        %v5539 = vadd.f32 %v5370, %v5538
        %5540 = vmatmul.bf16.gmra.mxu0 %v879
        %v5541 = vpop.f32.mrf.mxu0
        %v5542 = vadd.f32 %v5373, %v5541
        %v5543 = vpop.f32.mrf.mxu0
        %v5544 = vadd.f32 %v5375, %v5543
        %5545 = vmatmul.bf16.gmra.mxu0 %v887
        %v5546 = vpop.f32.mrf.mxu0
        %v5547 = vadd.f32 %v5378, %v5546
        %v5548 = vpop.f32.mrf.mxu0
        %v5549 = vadd.f32 %v5380, %v5548
        %5550 = vmatmul.bf16.gmra.mxu0 %v895
        %v5551 = vpop.f32.mrf.mxu0
        %v5552 = vadd.f32 %v5383, %v5551
        %v5553 = vpop.f32.mrf.mxu0
        %v5554 = vadd.f32 %v5385, %v5553
        %5555 = vmatmul.bf16.gmra.mxu0 %v903
        %v5556 = vpop.f32.mrf.mxu0
        %v5557 = vadd.f32 %v5388, %v5556
        %v5558 = vpop.f32.mrf.mxu0
        %v5559 = vadd.f32 %v5390, %v5558
        %5560 = vmatmul.bf16.gmra.mxu0 %v911
        %v5561 = vpop.f32.mrf.mxu0
        %v5562 = vadd.f32 %v5393, %v5561
        %v5563 = vpop.f32.mrf.mxu0
        %v5564 = vadd.f32 %v5395, %v5563
        %5565 = vmatmul.bf16.gmra.mxu0 %v919
        %v5566 = vpop.f32.mrf.mxu0
        %v5567 = vadd.f32 %v5398, %v5566
        %v5568 = vpop.f32.mrf.mxu0
        %v5569 = vadd.f32 %v5400, %v5568
        %5570 = vmatmul.bf16.gmra.mxu0 %v927
        %v5571 = vpop.f32.mrf.mxu0
        %v5572 = vadd.f32 %v5403, %v5571
        %v5573 = vpop.f32.mrf.mxu0
        %v5574 = vadd.f32 %v5405, %v5573
        %5575 = vmatmul.bf16.gmra.mxu0 %v935
        %v5576 = vpop.f32.mrf.mxu0
        %v5577 = vadd.f32 %v5408, %v5576
        %v5578 = vpop.f32.mrf.mxu0
        %v5579 = vadd.f32 %v5410, %v5578
        %5580 = vmatmul.bf16.gmra.mxu0 %v943
        %v5581 = vpop.f32.mrf.mxu0
        %v5582 = vadd.f32 %v5413, %v5581
        %v5583 = vpop.f32.mrf.mxu0
        %v5584 = vadd.f32 %v5415, %v5583
        %5585 = vmatmul.bf16.gmra.mxu0 %v951
        %v5586 = vpop.f32.mrf.mxu0
        %v5587 = vadd.f32 %v5418, %v5586
        %v5588 = vpop.f32.mrf.mxu0
        %v5589 = vadd.f32 %v5420, %v5588
        %5590 = vmatmul.bf16.gmra.mxu0 %v959
        %v5591 = vpop.f32.mrf.mxu0
        %v5592 = vadd.f32 %v5423, %v5591
        %v5593 = vpop.f32.mrf.mxu0
        %v5594 = vadd.f32 %v5425, %v5593
        %5595 = vmatmul.bf16.gmra.mxu0 %v967
        %v5596 = vpop.f32.mrf.mxu0
        %v5597 = vadd.f32 %v5428, %v5596
        %v5598 = vpop.f32.mrf.mxu0
        %v5599 = vadd.f32 %v5430, %v5598
        %5600 = vmatmul.bf16.gmra.mxu0 %v975
        %v5601 = vpop.f32.mrf.mxu0
        %v5602 = vadd.f32 %v5433, %v5601
        %v5603 = vpop.f32.mrf.mxu0
        %v5604 = vadd.f32 %v5435, %v5603
        %5605 = vmatmul.bf16.gmra.mxu0 %v983
        %v5606 = vpop.f32.mrf.mxu0
        %v5607 = vadd.f32 %v5438, %v5606
        %v5608 = vpop.f32.mrf.mxu0
        %v5609 = vadd.f32 %v5440, %v5608
        %5610 = vmatmul.bf16.gmra.mxu0 %v991
        %v5611 = vpop.f32.mrf.mxu0
        %v5612 = vadd.f32 %v5443, %v5611
        %v5613 = vpop.f32.mrf.mxu0
        %v5614 = vadd.f32 %v5445, %v5613
        %5615 = vmatmul.bf16.gmra.mxu0 %v999
        %v5616 = vpop.f32.mrf.mxu0
        %v5617 = vadd.f32 %v5448, %v5616
        %v5618 = vpop.f32.mrf.mxu0
        %v5619 = vadd.f32 %v5450, %v5618
        %5620 = vmatmul.bf16.gmra.mxu0 %v1007
        %v5621 = vpop.f32.mrf.mxu0
        %v5622 = vadd.f32 %v5453, %v5621
        %v5623 = vpop.f32.mrf.mxu0
        %v5624 = vadd.f32 %v5455, %v5623
        %5625 = vmatmul.bf16.gmra.mxu0 %v1015
        %v5626 = vpop.f32.mrf.mxu0
        %v5627 = vadd.f32 %v5458, %v5626
        %v5628 = vpop.f32.mrf.mxu0
        %v5629 = vadd.f32 %v5460, %v5628
        %5630 = vmatmul.bf16.gmra.mxu0 %v1023
        %v5631 = vpop.f32.mrf.mxu0
        %v5632 = vadd.f32 %v5463, %v5631
        %v5633 = vpop.f32.mrf.mxu0
        %v5634 = vadd.f32 %v5465, %v5633
        %5635 = vmatmul.bf16.gmra.mxu0 %v1031
        %v5636 = vpop.f32.mrf.mxu0
        %v5637 = vadd.f32 %v5468, %v5636
        %v5638 = vpop.f32.mrf.mxu0
        %v5639 = vadd.f32 %v5470, %v5638
        %5640 = vmatmul.bf16.gmra.mxu0 %v1039
        %v5641 = vpop.f32.mrf.mxu0
        %v5642 = vadd.f32 %v5473, %v5641
        %v5643 = vpop.f32.mrf.mxu0
        %v5644 = vadd.f32 %v5475, %v5643
        %5645 = vmatmul.bf16.gmra.mxu0 %v1047
        %v5646 = vpop.f32.mrf.mxu0
        %v5647 = vadd.f32 %v5478, %v5646
        %v5648 = vpop.f32.mrf.mxu0
        %v5649 = vadd.f32 %v5480, %v5648
        %5650 = vmatmul.bf16.gmra.mxu0 %v1055
        %v5651 = vpop.f32.mrf.mxu0
        %v5652 = vadd.f32 %v5483, %v5651
        %v5653 = vpop.f32.mrf.mxu0
        %v5654 = vadd.f32 %v5485, %v5653
        %5655 = vmatmul.bf16.gmra.mxu0 %v1063
        %v5656 = vpop.f32.mrf.mxu0
        %v5657 = vadd.f32 %v5488, %v5656
        %v5658 = vpop.f32.mrf.mxu0
        %v5659 = vadd.f32 %v5490, %v5658
        %5660 = vmatmul.bf16.gmra.mxu0 %v1071
        %v5661 = vpop.f32.mrf.mxu0
        %v5662 = vadd.f32 %v5493, %v5661
        %v5663 = vpop.f32.mrf.mxu0
        %v5664 = vadd.f32 %v5495, %v5663
        %5665 = vdwg.mxu0
        %5666 = vmatpush.bf16.msra.mxu0 %v2206
        %5667 = vmatpush.bf16.msra.mxu0 %v2202
        %5668 = vmatpush.bf16.msra.mxu0 %v2198
        %5669 = vmatpush.bf16.msra.mxu0 %v2194
        %5670 = vmatpush.bf16.msra.mxu0 %v2190
        %5671 = vmatpush.bf16.msra.mxu0 %v2186
        %5672 = vmatpush.bf16.msra.mxu0 %v2182
        %5673 = vmatpush.bf16.msra.mxu0 %v2178
        %5674 = vmatmul.bf16.gmra.mxu0 %v824
        %v5675 = vpop.f32.mrf.mxu0
        %v5676 = vadd.f32 %v5507, %v5675
        %v5677 = vpop.f32.mrf.mxu0
        %v5678 = vadd.f32 %v5509, %v5677
        %5679 = vmatmul.bf16.gmra.mxu0 %v832
        %v5680 = vpop.f32.mrf.mxu0
        %v5681 = vadd.f32 %v5512, %v5680
        %v5682 = vpop.f32.mrf.mxu0
        %v5683 = vadd.f32 %v5514, %v5682
        %5684 = vmatmul.bf16.gmra.mxu0 %v840
        %v5685 = vpop.f32.mrf.mxu0
        %v5686 = vadd.f32 %v5517, %v5685
        %v5687 = vpop.f32.mrf.mxu0
        %v5688 = vadd.f32 %v5519, %v5687
        %5689 = vmatmul.bf16.gmra.mxu0 %v848
        %v5690 = vpop.f32.mrf.mxu0
        %v5691 = vadd.f32 %v5522, %v5690
        %v5692 = vpop.f32.mrf.mxu0
        %v5693 = vadd.f32 %v5524, %v5692
        %5694 = vmatmul.bf16.gmra.mxu0 %v856
        %v5695 = vpop.f32.mrf.mxu0
        %v5696 = vadd.f32 %v5527, %v5695
        %v5697 = vpop.f32.mrf.mxu0
        %v5698 = vadd.f32 %v5529, %v5697
        %5699 = vmatmul.bf16.gmra.mxu0 %v864
        %v5700 = vpop.f32.mrf.mxu0
        %v5701 = vadd.f32 %v5532, %v5700
        %v5702 = vpop.f32.mrf.mxu0
        %v5703 = vadd.f32 %v5534, %v5702
        %5704 = vmatmul.bf16.gmra.mxu0 %v872
        %v5705 = vpop.f32.mrf.mxu0
        %v5706 = vadd.f32 %v5537, %v5705
        %v5707 = vpop.f32.mrf.mxu0
        %v5708 = vadd.f32 %v5539, %v5707
        %5709 = vmatmul.bf16.gmra.mxu0 %v880
        %v5710 = vpop.f32.mrf.mxu0
        %v5711 = vadd.f32 %v5542, %v5710
        %v5712 = vpop.f32.mrf.mxu0
        %v5713 = vadd.f32 %v5544, %v5712
        %5714 = vmatmul.bf16.gmra.mxu0 %v888
        %v5715 = vpop.f32.mrf.mxu0
        %v5716 = vadd.f32 %v5547, %v5715
        %v5717 = vpop.f32.mrf.mxu0
        %v5718 = vadd.f32 %v5549, %v5717
        %5719 = vmatmul.bf16.gmra.mxu0 %v896
        %v5720 = vpop.f32.mrf.mxu0
        %v5721 = vadd.f32 %v5552, %v5720
        %v5722 = vpop.f32.mrf.mxu0
        %v5723 = vadd.f32 %v5554, %v5722
        %5724 = vmatmul.bf16.gmra.mxu0 %v904
        %v5725 = vpop.f32.mrf.mxu0
        %v5726 = vadd.f32 %v5557, %v5725
        %v5727 = vpop.f32.mrf.mxu0
        %v5728 = vadd.f32 %v5559, %v5727
        %5729 = vmatmul.bf16.gmra.mxu0 %v912
        %v5730 = vpop.f32.mrf.mxu0
        %v5731 = vadd.f32 %v5562, %v5730
        %v5732 = vpop.f32.mrf.mxu0
        %v5733 = vadd.f32 %v5564, %v5732
        %5734 = vmatmul.bf16.gmra.mxu0 %v920
        %v5735 = vpop.f32.mrf.mxu0
        %v5736 = vadd.f32 %v5567, %v5735
        %v5737 = vpop.f32.mrf.mxu0
        %v5738 = vadd.f32 %v5569, %v5737
        %5739 = vmatmul.bf16.gmra.mxu0 %v928
        %v5740 = vpop.f32.mrf.mxu0
        %v5741 = vadd.f32 %v5572, %v5740
        %v5742 = vpop.f32.mrf.mxu0
        %v5743 = vadd.f32 %v5574, %v5742
        %5744 = vmatmul.bf16.gmra.mxu0 %v936
        %v5745 = vpop.f32.mrf.mxu0
        %v5746 = vadd.f32 %v5577, %v5745
        %v5747 = vpop.f32.mrf.mxu0
        %v5748 = vadd.f32 %v5579, %v5747
        %5749 = vmatmul.bf16.gmra.mxu0 %v944
        %v5750 = vpop.f32.mrf.mxu0
        %v5751 = vadd.f32 %v5582, %v5750
        %v5752 = vpop.f32.mrf.mxu0
        %v5753 = vadd.f32 %v5584, %v5752
        %5754 = vmatmul.bf16.gmra.mxu0 %v952
        %v5755 = vpop.f32.mrf.mxu0
        %v5756 = vadd.f32 %v5587, %v5755
        %v5757 = vpop.f32.mrf.mxu0
        %v5758 = vadd.f32 %v5589, %v5757
        %5759 = vmatmul.bf16.gmra.mxu0 %v960
        %v5760 = vpop.f32.mrf.mxu0
        %v5761 = vadd.f32 %v5592, %v5760
        %v5762 = vpop.f32.mrf.mxu0
        %v5763 = vadd.f32 %v5594, %v5762
        %5764 = vmatmul.bf16.gmra.mxu0 %v968
        %v5765 = vpop.f32.mrf.mxu0
        %v5766 = vadd.f32 %v5597, %v5765
        %v5767 = vpop.f32.mrf.mxu0
        %v5768 = vadd.f32 %v5599, %v5767
        %5769 = vmatmul.bf16.gmra.mxu0 %v976
        %v5770 = vpop.f32.mrf.mxu0
        %v5771 = vadd.f32 %v5602, %v5770
        %v5772 = vpop.f32.mrf.mxu0
        %v5773 = vadd.f32 %v5604, %v5772
        %5774 = vmatmul.bf16.gmra.mxu0 %v984
        %v5775 = vpop.f32.mrf.mxu0
        %v5776 = vadd.f32 %v5607, %v5775
        %v5777 = vpop.f32.mrf.mxu0
        %v5778 = vadd.f32 %v5609, %v5777
        %5779 = vmatmul.bf16.gmra.mxu0 %v992
        %v5780 = vpop.f32.mrf.mxu0
        %v5781 = vadd.f32 %v5612, %v5780
        %v5782 = vpop.f32.mrf.mxu0
        %v5783 = vadd.f32 %v5614, %v5782
        %5784 = vmatmul.bf16.gmra.mxu0 %v1000
        %v5785 = vpop.f32.mrf.mxu0
        %v5786 = vadd.f32 %v5617, %v5785
        %v5787 = vpop.f32.mrf.mxu0
        %v5788 = vadd.f32 %v5619, %v5787
        %5789 = vmatmul.bf16.gmra.mxu0 %v1008
        %v5790 = vpop.f32.mrf.mxu0
        %v5791 = vadd.f32 %v5622, %v5790
        %v5792 = vpop.f32.mrf.mxu0
        %v5793 = vadd.f32 %v5624, %v5792
        %5794 = vmatmul.bf16.gmra.mxu0 %v1016
        %v5795 = vpop.f32.mrf.mxu0
        %v5796 = vadd.f32 %v5627, %v5795
        %v5797 = vpop.f32.mrf.mxu0
        %v5798 = vadd.f32 %v5629, %v5797
        %5799 = vmatmul.bf16.gmra.mxu0 %v1024
        %v5800 = vpop.f32.mrf.mxu0
        %v5801 = vadd.f32 %v5632, %v5800
        %v5802 = vpop.f32.mrf.mxu0
        %v5803 = vadd.f32 %v5634, %v5802
        %5804 = vmatmul.bf16.gmra.mxu0 %v1032
        %v5805 = vpop.f32.mrf.mxu0
        %v5806 = vadd.f32 %v5637, %v5805
        %v5807 = vpop.f32.mrf.mxu0
        %v5808 = vadd.f32 %v5639, %v5807
        %5809 = vmatmul.bf16.gmra.mxu0 %v1040
        %v5810 = vpop.f32.mrf.mxu0
        %v5811 = vadd.f32 %v5642, %v5810
        %v5812 = vpop.f32.mrf.mxu0
        %v5813 = vadd.f32 %v5644, %v5812
        %5814 = vmatmul.bf16.gmra.mxu0 %v1048
        %v5815 = vpop.f32.mrf.mxu0
        %v5816 = vadd.f32 %v5647, %v5815
        %v5817 = vpop.f32.mrf.mxu0
        %v5818 = vadd.f32 %v5649, %v5817
        %5819 = vmatmul.bf16.gmra.mxu0 %v1056
        %v5820 = vpop.f32.mrf.mxu0
        %v5821 = vadd.f32 %v5652, %v5820
        %v5822 = vpop.f32.mrf.mxu0
        %v5823 = vadd.f32 %v5654, %v5822
        %5824 = vmatmul.bf16.gmra.mxu0 %v1064
        %v5825 = vpop.f32.mrf.mxu0
        %v5826 = vadd.f32 %v5657, %v5825
        %v5827 = vpop.f32.mrf.mxu0
        %v5828 = vadd.f32 %v5659, %v5827
        %5829 = vmatmul.bf16.gmra.mxu0 %v1072
        %v5830 = vpop.f32.mrf.mxu0
        %v5831 = vadd.f32 %v5662, %v5830
        %v5832 = vpop.f32.mrf.mxu0
        %v5833 = vadd.f32 %v5664, %v5832
        %5834 = vdwg.mxu0
        %5835 = vmatpush.bf16.msra.mxu0 %v2238
        %5836 = vmatpush.bf16.msra.mxu0 %v2234
        %5837 = vmatpush.bf16.msra.mxu0 %v2230
        %5838 = vmatpush.bf16.msra.mxu0 %v2226
        %5839 = vmatpush.bf16.msra.mxu0 %v2222
        %5840 = vmatpush.bf16.msra.mxu0 %v2218
        %5841 = vmatpush.bf16.msra.mxu0 %v2214
        %5842 = vmatpush.bf16.msra.mxu0 %v2210
        %5843 = vmatmul.bf16.gmra.mxu0 %v825
        %v5844 = vpop.f32.mrf.mxu0
        %v5845 = vadd.f32 %v5676, %v5844
        %v5846 = vpop.f32.mrf.mxu0
        %v5847 = vadd.f32 %v5678, %v5846
        %5848 = vmatmul.bf16.gmra.mxu0 %v833
        %v5849 = vpop.f32.mrf.mxu0
        %v5850 = vadd.f32 %v5681, %v5849
        %v5851 = vpop.f32.mrf.mxu0
        %v5852 = vadd.f32 %v5683, %v5851
        %5853 = vmatmul.bf16.gmra.mxu0 %v841
        %v5854 = vpop.f32.mrf.mxu0
        %v5855 = vadd.f32 %v5686, %v5854
        %v5856 = vpop.f32.mrf.mxu0
        %v5857 = vadd.f32 %v5688, %v5856
        %5858 = vmatmul.bf16.gmra.mxu0 %v849
        %v5859 = vpop.f32.mrf.mxu0
        %v5860 = vadd.f32 %v5691, %v5859
        %v5861 = vpop.f32.mrf.mxu0
        %v5862 = vadd.f32 %v5693, %v5861
        %5863 = vmatmul.bf16.gmra.mxu0 %v857
        %v5864 = vpop.f32.mrf.mxu0
        %v5865 = vadd.f32 %v5696, %v5864
        %v5866 = vpop.f32.mrf.mxu0
        %v5867 = vadd.f32 %v5698, %v5866
        %5868 = vmatmul.bf16.gmra.mxu0 %v865
        %v5869 = vpop.f32.mrf.mxu0
        %v5870 = vadd.f32 %v5701, %v5869
        %v5871 = vpop.f32.mrf.mxu0
        %v5872 = vadd.f32 %v5703, %v5871
        %5873 = vmatmul.bf16.gmra.mxu0 %v873
        %v5874 = vpop.f32.mrf.mxu0
        %v5875 = vadd.f32 %v5706, %v5874
        %v5876 = vpop.f32.mrf.mxu0
        %v5877 = vadd.f32 %v5708, %v5876
        %5878 = vmatmul.bf16.gmra.mxu0 %v881
        %v5879 = vpop.f32.mrf.mxu0
        %v5880 = vadd.f32 %v5711, %v5879
        %v5881 = vpop.f32.mrf.mxu0
        %v5882 = vadd.f32 %v5713, %v5881
        %5883 = vmatmul.bf16.gmra.mxu0 %v889
        %v5884 = vpop.f32.mrf.mxu0
        %v5885 = vadd.f32 %v5716, %v5884
        %v5886 = vpop.f32.mrf.mxu0
        %v5887 = vadd.f32 %v5718, %v5886
        %5888 = vmatmul.bf16.gmra.mxu0 %v897
        %v5889 = vpop.f32.mrf.mxu0
        %v5890 = vadd.f32 %v5721, %v5889
        %v5891 = vpop.f32.mrf.mxu0
        %v5892 = vadd.f32 %v5723, %v5891
        %5893 = vmatmul.bf16.gmra.mxu0 %v905
        %v5894 = vpop.f32.mrf.mxu0
        %v5895 = vadd.f32 %v5726, %v5894
        %v5896 = vpop.f32.mrf.mxu0
        %v5897 = vadd.f32 %v5728, %v5896
        %5898 = vmatmul.bf16.gmra.mxu0 %v913
        %v5899 = vpop.f32.mrf.mxu0
        %v5900 = vadd.f32 %v5731, %v5899
        %v5901 = vpop.f32.mrf.mxu0
        %v5902 = vadd.f32 %v5733, %v5901
        %5903 = vmatmul.bf16.gmra.mxu0 %v921
        %v5904 = vpop.f32.mrf.mxu0
        %v5905 = vadd.f32 %v5736, %v5904
        %v5906 = vpop.f32.mrf.mxu0
        %v5907 = vadd.f32 %v5738, %v5906
        %5908 = vmatmul.bf16.gmra.mxu0 %v929
        %v5909 = vpop.f32.mrf.mxu0
        %v5910 = vadd.f32 %v5741, %v5909
        %v5911 = vpop.f32.mrf.mxu0
        %v5912 = vadd.f32 %v5743, %v5911
        %5913 = vmatmul.bf16.gmra.mxu0 %v937
        %v5914 = vpop.f32.mrf.mxu0
        %v5915 = vadd.f32 %v5746, %v5914
        %v5916 = vpop.f32.mrf.mxu0
        %v5917 = vadd.f32 %v5748, %v5916
        %5918 = vmatmul.bf16.gmra.mxu0 %v945
        %v5919 = vpop.f32.mrf.mxu0
        %v5920 = vadd.f32 %v5751, %v5919
        %v5921 = vpop.f32.mrf.mxu0
        %v5922 = vadd.f32 %v5753, %v5921
        %5923 = vmatmul.bf16.gmra.mxu0 %v953
        %v5924 = vpop.f32.mrf.mxu0
        %v5925 = vadd.f32 %v5756, %v5924
        %v5926 = vpop.f32.mrf.mxu0
        %v5927 = vadd.f32 %v5758, %v5926
        %5928 = vmatmul.bf16.gmra.mxu0 %v961
        %v5929 = vpop.f32.mrf.mxu0
        %v5930 = vadd.f32 %v5761, %v5929
        %v5931 = vpop.f32.mrf.mxu0
        %v5932 = vadd.f32 %v5763, %v5931
        %5933 = vmatmul.bf16.gmra.mxu0 %v969
        %v5934 = vpop.f32.mrf.mxu0
        %v5935 = vadd.f32 %v5766, %v5934
        %v5936 = vpop.f32.mrf.mxu0
        %v5937 = vadd.f32 %v5768, %v5936
        %5938 = vmatmul.bf16.gmra.mxu0 %v977
        %v5939 = vpop.f32.mrf.mxu0
        %v5940 = vadd.f32 %v5771, %v5939
        %v5941 = vpop.f32.mrf.mxu0
        %v5942 = vadd.f32 %v5773, %v5941
        %5943 = vmatmul.bf16.gmra.mxu0 %v985
        %v5944 = vpop.f32.mrf.mxu0
        %v5945 = vadd.f32 %v5776, %v5944
        %v5946 = vpop.f32.mrf.mxu0
        %v5947 = vadd.f32 %v5778, %v5946
        %5948 = vmatmul.bf16.gmra.mxu0 %v993
        %v5949 = vpop.f32.mrf.mxu0
        %v5950 = vadd.f32 %v5781, %v5949
        %v5951 = vpop.f32.mrf.mxu0
        %v5952 = vadd.f32 %v5783, %v5951
        %5953 = vmatmul.bf16.gmra.mxu0 %v1001
        %v5954 = vpop.f32.mrf.mxu0
        %v5955 = vadd.f32 %v5786, %v5954
        %v5956 = vpop.f32.mrf.mxu0
        %v5957 = vadd.f32 %v5788, %v5956
        %5958 = vmatmul.bf16.gmra.mxu0 %v1009
        %v5959 = vpop.f32.mrf.mxu0
        %v5960 = vadd.f32 %v5791, %v5959
        %v5961 = vpop.f32.mrf.mxu0
        %v5962 = vadd.f32 %v5793, %v5961
        %5963 = vmatmul.bf16.gmra.mxu0 %v1017
        %v5964 = vpop.f32.mrf.mxu0
        %v5965 = vadd.f32 %v5796, %v5964
        %v5966 = vpop.f32.mrf.mxu0
        %v5967 = vadd.f32 %v5798, %v5966
        %5968 = vmatmul.bf16.gmra.mxu0 %v1025
        %v5969 = vpop.f32.mrf.mxu0
        %v5970 = vadd.f32 %v5801, %v5969
        %v5971 = vpop.f32.mrf.mxu0
        %v5972 = vadd.f32 %v5803, %v5971
        %5973 = vmatmul.bf16.gmra.mxu0 %v1033
        %v5974 = vpop.f32.mrf.mxu0
        %v5975 = vadd.f32 %v5806, %v5974
        %v5976 = vpop.f32.mrf.mxu0
        %v5977 = vadd.f32 %v5808, %v5976
        %5978 = vmatmul.bf16.gmra.mxu0 %v1041
        %v5979 = vpop.f32.mrf.mxu0
        %v5980 = vadd.f32 %v5811, %v5979
        %v5981 = vpop.f32.mrf.mxu0
        %v5982 = vadd.f32 %v5813, %v5981
        %5983 = vmatmul.bf16.gmra.mxu0 %v1049
        %v5984 = vpop.f32.mrf.mxu0
        %v5985 = vadd.f32 %v5816, %v5984
        %v5986 = vpop.f32.mrf.mxu0
        %v5987 = vadd.f32 %v5818, %v5986
        %5988 = vmatmul.bf16.gmra.mxu0 %v1057
        %v5989 = vpop.f32.mrf.mxu0
        %v5990 = vadd.f32 %v5821, %v5989
        %v5991 = vpop.f32.mrf.mxu0
        %v5992 = vadd.f32 %v5823, %v5991
        %5993 = vmatmul.bf16.gmra.mxu0 %v1065
        %v5994 = vpop.f32.mrf.mxu0
        %v5995 = vadd.f32 %v5826, %v5994
        %v5996 = vpop.f32.mrf.mxu0
        %v5997 = vadd.f32 %v5828, %v5996
        %5998 = vmatmul.bf16.gmra.mxu0 %v1073
        %v5999 = vpop.f32.mrf.mxu0
        %v6000 = vadd.f32 %v5831, %v5999
        %v6001 = vpop.f32.mrf.mxu0
        %v6002 = vadd.f32 %v5833, %v6001
        %6003 = vdwg.mxu0
        %6004 = vmatpush.bf16.msra.mxu0 %v2270
        %6005 = vmatpush.bf16.msra.mxu0 %v2266
        %6006 = vmatpush.bf16.msra.mxu0 %v2262
        %6007 = vmatpush.bf16.msra.mxu0 %v2258
        %6008 = vmatpush.bf16.msra.mxu0 %v2254
        %6009 = vmatpush.bf16.msra.mxu0 %v2250
        %6010 = vmatpush.bf16.msra.mxu0 %v2246
        %6011 = vmatpush.bf16.msra.mxu0 %v2242
        %6012 = vmatmul.bf16.gmra.mxu0 %v826
        %v6013 = vpop.f32.mrf.mxu0
        %v6014 = vadd.f32 %v5845, %v6013
        %v6015 = vpop.f32.mrf.mxu0
        %v6016 = vadd.f32 %v5847, %v6015
        %6017 = vmatmul.bf16.gmra.mxu0 %v834
        %v6018 = vpop.f32.mrf.mxu0
        %v6019 = vadd.f32 %v5850, %v6018
        %v6020 = vpop.f32.mrf.mxu0
        %v6021 = vadd.f32 %v5852, %v6020
        %6022 = vmatmul.bf16.gmra.mxu0 %v842
        %v6023 = vpop.f32.mrf.mxu0
        %v6024 = vadd.f32 %v5855, %v6023
        %v6025 = vpop.f32.mrf.mxu0
        %v6026 = vadd.f32 %v5857, %v6025
        %6027 = vmatmul.bf16.gmra.mxu0 %v850
        %v6028 = vpop.f32.mrf.mxu0
        %v6029 = vadd.f32 %v5860, %v6028
        %v6030 = vpop.f32.mrf.mxu0
        %v6031 = vadd.f32 %v5862, %v6030
        %6032 = vmatmul.bf16.gmra.mxu0 %v858
        %v6033 = vpop.f32.mrf.mxu0
        %v6034 = vadd.f32 %v5865, %v6033
        %v6035 = vpop.f32.mrf.mxu0
        %v6036 = vadd.f32 %v5867, %v6035
        %6037 = vmatmul.bf16.gmra.mxu0 %v866
        %v6038 = vpop.f32.mrf.mxu0
        %v6039 = vadd.f32 %v5870, %v6038
        %v6040 = vpop.f32.mrf.mxu0
        %v6041 = vadd.f32 %v5872, %v6040
        %6042 = vmatmul.bf16.gmra.mxu0 %v874
        %v6043 = vpop.f32.mrf.mxu0
        %v6044 = vadd.f32 %v5875, %v6043
        %v6045 = vpop.f32.mrf.mxu0
        %v6046 = vadd.f32 %v5877, %v6045
        %6047 = vmatmul.bf16.gmra.mxu0 %v882
        %v6048 = vpop.f32.mrf.mxu0
        %v6049 = vadd.f32 %v5880, %v6048
        %v6050 = vpop.f32.mrf.mxu0
        %v6051 = vadd.f32 %v5882, %v6050
        %6052 = vmatmul.bf16.gmra.mxu0 %v890
        %v6053 = vpop.f32.mrf.mxu0
        %v6054 = vadd.f32 %v5885, %v6053
        %v6055 = vpop.f32.mrf.mxu0
        %v6056 = vadd.f32 %v5887, %v6055
        %6057 = vmatmul.bf16.gmra.mxu0 %v898
        %v6058 = vpop.f32.mrf.mxu0
        %v6059 = vadd.f32 %v5890, %v6058
        %v6060 = vpop.f32.mrf.mxu0
        %v6061 = vadd.f32 %v5892, %v6060
        %6062 = vmatmul.bf16.gmra.mxu0 %v906
        %v6063 = vpop.f32.mrf.mxu0
        %v6064 = vadd.f32 %v5895, %v6063
        %v6065 = vpop.f32.mrf.mxu0
        %v6066 = vadd.f32 %v5897, %v6065
        %6067 = vmatmul.bf16.gmra.mxu0 %v914
        %v6068 = vpop.f32.mrf.mxu0
        %v6069 = vadd.f32 %v5900, %v6068
        %v6070 = vpop.f32.mrf.mxu0
        %v6071 = vadd.f32 %v5902, %v6070
        %6072 = vmatmul.bf16.gmra.mxu0 %v922
        %v6073 = vpop.f32.mrf.mxu0
        %v6074 = vadd.f32 %v5905, %v6073
        %v6075 = vpop.f32.mrf.mxu0
        %v6076 = vadd.f32 %v5907, %v6075
        %6077 = vmatmul.bf16.gmra.mxu0 %v930
        %v6078 = vpop.f32.mrf.mxu0
        %v6079 = vadd.f32 %v5910, %v6078
        %v6080 = vpop.f32.mrf.mxu0
        %v6081 = vadd.f32 %v5912, %v6080
        %6082 = vmatmul.bf16.gmra.mxu0 %v938
        %v6083 = vpop.f32.mrf.mxu0
        %v6084 = vadd.f32 %v5915, %v6083
        %v6085 = vpop.f32.mrf.mxu0
        %v6086 = vadd.f32 %v5917, %v6085
        %6087 = vmatmul.bf16.gmra.mxu0 %v946
        %v6088 = vpop.f32.mrf.mxu0
        %v6089 = vadd.f32 %v5920, %v6088
        %v6090 = vpop.f32.mrf.mxu0
        %v6091 = vadd.f32 %v5922, %v6090
        %6092 = vmatmul.bf16.gmra.mxu0 %v954
        %v6093 = vpop.f32.mrf.mxu0
        %v6094 = vadd.f32 %v5925, %v6093
        %v6095 = vpop.f32.mrf.mxu0
        %v6096 = vadd.f32 %v5927, %v6095
        %6097 = vmatmul.bf16.gmra.mxu0 %v962
        %v6098 = vpop.f32.mrf.mxu0
        %v6099 = vadd.f32 %v5930, %v6098
        %v6100 = vpop.f32.mrf.mxu0
        %v6101 = vadd.f32 %v5932, %v6100
        %6102 = vmatmul.bf16.gmra.mxu0 %v970
        %v6103 = vpop.f32.mrf.mxu0
        %v6104 = vadd.f32 %v5935, %v6103
        %v6105 = vpop.f32.mrf.mxu0
        %v6106 = vadd.f32 %v5937, %v6105
        %6107 = vmatmul.bf16.gmra.mxu0 %v978
        %v6108 = vpop.f32.mrf.mxu0
        %v6109 = vadd.f32 %v5940, %v6108
        %v6110 = vpop.f32.mrf.mxu0
        %v6111 = vadd.f32 %v5942, %v6110
        %6112 = vmatmul.bf16.gmra.mxu0 %v986
        %v6113 = vpop.f32.mrf.mxu0
        %v6114 = vadd.f32 %v5945, %v6113
        %v6115 = vpop.f32.mrf.mxu0
        %v6116 = vadd.f32 %v5947, %v6115
        %6117 = vmatmul.bf16.gmra.mxu0 %v994
        %v6118 = vpop.f32.mrf.mxu0
        %v6119 = vadd.f32 %v5950, %v6118
        %v6120 = vpop.f32.mrf.mxu0
        %v6121 = vadd.f32 %v5952, %v6120
        %6122 = vmatmul.bf16.gmra.mxu0 %v1002
        %v6123 = vpop.f32.mrf.mxu0
        %v6124 = vadd.f32 %v5955, %v6123
        %v6125 = vpop.f32.mrf.mxu0
        %v6126 = vadd.f32 %v5957, %v6125
        %6127 = vmatmul.bf16.gmra.mxu0 %v1010
        %v6128 = vpop.f32.mrf.mxu0
        %v6129 = vadd.f32 %v5960, %v6128
        %v6130 = vpop.f32.mrf.mxu0
        %v6131 = vadd.f32 %v5962, %v6130
        %6132 = vmatmul.bf16.gmra.mxu0 %v1018
        %v6133 = vpop.f32.mrf.mxu0
        %v6134 = vadd.f32 %v5965, %v6133
        %v6135 = vpop.f32.mrf.mxu0
        %v6136 = vadd.f32 %v5967, %v6135
        %6137 = vmatmul.bf16.gmra.mxu0 %v1026
        %v6138 = vpop.f32.mrf.mxu0
        %v6139 = vadd.f32 %v5970, %v6138
        %v6140 = vpop.f32.mrf.mxu0
        %v6141 = vadd.f32 %v5972, %v6140
        %6142 = vmatmul.bf16.gmra.mxu0 %v1034
        %v6143 = vpop.f32.mrf.mxu0
        %v6144 = vadd.f32 %v5975, %v6143
        %v6145 = vpop.f32.mrf.mxu0
        %v6146 = vadd.f32 %v5977, %v6145
        %6147 = vmatmul.bf16.gmra.mxu0 %v1042
        %v6148 = vpop.f32.mrf.mxu0
        %v6149 = vadd.f32 %v5980, %v6148
        %v6150 = vpop.f32.mrf.mxu0
        %v6151 = vadd.f32 %v5982, %v6150
        %6152 = vmatmul.bf16.gmra.mxu0 %v1050
        %v6153 = vpop.f32.mrf.mxu0
        %v6154 = vadd.f32 %v5985, %v6153
        %v6155 = vpop.f32.mrf.mxu0
        %v6156 = vadd.f32 %v5987, %v6155
        %6157 = vmatmul.bf16.gmra.mxu0 %v1058
        %v6158 = vpop.f32.mrf.mxu0
        %v6159 = vadd.f32 %v5990, %v6158
        %v6160 = vpop.f32.mrf.mxu0
        %v6161 = vadd.f32 %v5992, %v6160
        %6162 = vmatmul.bf16.gmra.mxu0 %v1066
        %v6163 = vpop.f32.mrf.mxu0
        %v6164 = vadd.f32 %v5995, %v6163
        %v6165 = vpop.f32.mrf.mxu0
        %v6166 = vadd.f32 %v5997, %v6165
        %6167 = vmatmul.bf16.gmra.mxu0 %v1074
        %v6168 = vpop.f32.mrf.mxu0
        %v6169 = vadd.f32 %v6000, %v6168
        %v6170 = vpop.f32.mrf.mxu0
        %v6171 = vadd.f32 %v6002, %v6170
        %6172 = vdwg.mxu0
        %6173 = vmatpush.bf16.msra.mxu0 %v2302
        %6174 = vmatpush.bf16.msra.mxu0 %v2298
        %6175 = vmatpush.bf16.msra.mxu0 %v2294
        %6176 = vmatpush.bf16.msra.mxu0 %v2290
        %6177 = vmatpush.bf16.msra.mxu0 %v2286
        %6178 = vmatpush.bf16.msra.mxu0 %v2282
        %6179 = vmatpush.bf16.msra.mxu0 %v2278
        %6180 = vmatpush.bf16.msra.mxu0 %v2274
        %6181 = vmatmul.bf16.gmra.mxu0 %v827
        %v6182 = vpop.f32.mrf.mxu0
        %v6183 = vadd.f32 %v6014, %v6182
        %v6184 = vpop.f32.mrf.mxu0
        %v6185 = vadd.f32 %v6016, %v6184
        %6186 = vmatmul.bf16.gmra.mxu0 %v835
        %v6187 = vpop.f32.mrf.mxu0
        %v6188 = vadd.f32 %v6019, %v6187
        %v6189 = vpop.f32.mrf.mxu0
        %v6190 = vadd.f32 %v6021, %v6189
        %6191 = vmatmul.bf16.gmra.mxu0 %v843
        %v6192 = vpop.f32.mrf.mxu0
        %v6193 = vadd.f32 %v6024, %v6192
        %v6194 = vpop.f32.mrf.mxu0
        %v6195 = vadd.f32 %v6026, %v6194
        %6196 = vmatmul.bf16.gmra.mxu0 %v851
        %v6197 = vpop.f32.mrf.mxu0
        %v6198 = vadd.f32 %v6029, %v6197
        %v6199 = vpop.f32.mrf.mxu0
        %v6200 = vadd.f32 %v6031, %v6199
        %6201 = vmatmul.bf16.gmra.mxu0 %v859
        %v6202 = vpop.f32.mrf.mxu0
        %v6203 = vadd.f32 %v6034, %v6202
        %v6204 = vpop.f32.mrf.mxu0
        %v6205 = vadd.f32 %v6036, %v6204
        %6206 = vmatmul.bf16.gmra.mxu0 %v867
        %v6207 = vpop.f32.mrf.mxu0
        %v6208 = vadd.f32 %v6039, %v6207
        %v6209 = vpop.f32.mrf.mxu0
        %v6210 = vadd.f32 %v6041, %v6209
        %6211 = vmatmul.bf16.gmra.mxu0 %v875
        %v6212 = vpop.f32.mrf.mxu0
        %v6213 = vadd.f32 %v6044, %v6212
        %v6214 = vpop.f32.mrf.mxu0
        %v6215 = vadd.f32 %v6046, %v6214
        %6216 = vmatmul.bf16.gmra.mxu0 %v883
        %v6217 = vpop.f32.mrf.mxu0
        %v6218 = vadd.f32 %v6049, %v6217
        %v6219 = vpop.f32.mrf.mxu0
        %v6220 = vadd.f32 %v6051, %v6219
        %6221 = vmatmul.bf16.gmra.mxu0 %v891
        %v6222 = vpop.f32.mrf.mxu0
        %v6223 = vadd.f32 %v6054, %v6222
        %v6224 = vpop.f32.mrf.mxu0
        %v6225 = vadd.f32 %v6056, %v6224
        %6226 = vmatmul.bf16.gmra.mxu0 %v899
        %v6227 = vpop.f32.mrf.mxu0
        %v6228 = vadd.f32 %v6059, %v6227
        %v6229 = vpop.f32.mrf.mxu0
        %v6230 = vadd.f32 %v6061, %v6229
        %6231 = vmatmul.bf16.gmra.mxu0 %v907
        %v6232 = vpop.f32.mrf.mxu0
        %v6233 = vadd.f32 %v6064, %v6232
        %v6234 = vpop.f32.mrf.mxu0
        %v6235 = vadd.f32 %v6066, %v6234
        %6236 = vmatmul.bf16.gmra.mxu0 %v915
        %v6237 = vpop.f32.mrf.mxu0
        %v6238 = vadd.f32 %v6069, %v6237
        %v6239 = vpop.f32.mrf.mxu0
        %v6240 = vadd.f32 %v6071, %v6239
        %6241 = vmatmul.bf16.gmra.mxu0 %v923
        %v6242 = vpop.f32.mrf.mxu0
        %v6243 = vadd.f32 %v6074, %v6242
        %v6244 = vpop.f32.mrf.mxu0
        %v6245 = vadd.f32 %v6076, %v6244
        %6246 = vmatmul.bf16.gmra.mxu0 %v931
        %v6247 = vpop.f32.mrf.mxu0
        %v6248 = vadd.f32 %v6079, %v6247
        %v6249 = vpop.f32.mrf.mxu0
        %v6250 = vadd.f32 %v6081, %v6249
        %6251 = vmatmul.bf16.gmra.mxu0 %v939
        %v6252 = vpop.f32.mrf.mxu0
        %v6253 = vadd.f32 %v6084, %v6252
        %v6254 = vpop.f32.mrf.mxu0
        %v6255 = vadd.f32 %v6086, %v6254
        %6256 = vmatmul.bf16.gmra.mxu0 %v947
        %v6257 = vpop.f32.mrf.mxu0
        %v6258 = vadd.f32 %v6089, %v6257
        %v6259 = vpop.f32.mrf.mxu0
        %v6260 = vadd.f32 %v6091, %v6259
        %6261 = vmatmul.bf16.gmra.mxu0 %v955
        %v6262 = vpop.f32.mrf.mxu0
        %v6263 = vadd.f32 %v6094, %v6262
        %v6264 = vpop.f32.mrf.mxu0
        %v6265 = vadd.f32 %v6096, %v6264
        %6266 = vmatmul.bf16.gmra.mxu0 %v963
        %v6267 = vpop.f32.mrf.mxu0
        %v6268 = vadd.f32 %v6099, %v6267
        %v6269 = vpop.f32.mrf.mxu0
        %v6270 = vadd.f32 %v6101, %v6269
        %6271 = vmatmul.bf16.gmra.mxu0 %v971
        %v6272 = vpop.f32.mrf.mxu0
        %v6273 = vadd.f32 %v6104, %v6272
        %v6274 = vpop.f32.mrf.mxu0
        %v6275 = vadd.f32 %v6106, %v6274
        %6276 = vmatmul.bf16.gmra.mxu0 %v979
        %v6277 = vpop.f32.mrf.mxu0
        %v6278 = vadd.f32 %v6109, %v6277
        %v6279 = vpop.f32.mrf.mxu0
        %v6280 = vadd.f32 %v6111, %v6279
        %6281 = vmatmul.bf16.gmra.mxu0 %v987
        %v6282 = vpop.f32.mrf.mxu0
        %v6283 = vadd.f32 %v6114, %v6282
        %v6284 = vpop.f32.mrf.mxu0
        %v6285 = vadd.f32 %v6116, %v6284
        %6286 = vmatmul.bf16.gmra.mxu0 %v995
        %v6287 = vpop.f32.mrf.mxu0
        %v6288 = vadd.f32 %v6119, %v6287
        %v6289 = vpop.f32.mrf.mxu0
        %v6290 = vadd.f32 %v6121, %v6289
        %6291 = vmatmul.bf16.gmra.mxu0 %v1003
        %v6292 = vpop.f32.mrf.mxu0
        %v6293 = vadd.f32 %v6124, %v6292
        %v6294 = vpop.f32.mrf.mxu0
        %v6295 = vadd.f32 %v6126, %v6294
        %6296 = vmatmul.bf16.gmra.mxu0 %v1011
        %v6297 = vpop.f32.mrf.mxu0
        %v6298 = vadd.f32 %v6129, %v6297
        %v6299 = vpop.f32.mrf.mxu0
        %v6300 = vadd.f32 %v6131, %v6299
        %6301 = vmatmul.bf16.gmra.mxu0 %v1019
        %v6302 = vpop.f32.mrf.mxu0
        %v6303 = vadd.f32 %v6134, %v6302
        %v6304 = vpop.f32.mrf.mxu0
        %v6305 = vadd.f32 %v6136, %v6304
        %6306 = vmatmul.bf16.gmra.mxu0 %v1027
        %v6307 = vpop.f32.mrf.mxu0
        %v6308 = vadd.f32 %v6139, %v6307
        %v6309 = vpop.f32.mrf.mxu0
        %v6310 = vadd.f32 %v6141, %v6309
        %6311 = vmatmul.bf16.gmra.mxu0 %v1035
        %v6312 = vpop.f32.mrf.mxu0
        %v6313 = vadd.f32 %v6144, %v6312
        %v6314 = vpop.f32.mrf.mxu0
        %v6315 = vadd.f32 %v6146, %v6314
        %6316 = vmatmul.bf16.gmra.mxu0 %v1043
        %v6317 = vpop.f32.mrf.mxu0
        %v6318 = vadd.f32 %v6149, %v6317
        %v6319 = vpop.f32.mrf.mxu0
        %v6320 = vadd.f32 %v6151, %v6319
        %6321 = vmatmul.bf16.gmra.mxu0 %v1051
        %v6322 = vpop.f32.mrf.mxu0
        %v6323 = vadd.f32 %v6154, %v6322
        %v6324 = vpop.f32.mrf.mxu0
        %v6325 = vadd.f32 %v6156, %v6324
        %6326 = vmatmul.bf16.gmra.mxu0 %v1059
        %v6327 = vpop.f32.mrf.mxu0
        %v6328 = vadd.f32 %v6159, %v6327
        %v6329 = vpop.f32.mrf.mxu0
        %v6330 = vadd.f32 %v6161, %v6329
        %6331 = vmatmul.bf16.gmra.mxu0 %v1067
        %v6332 = vpop.f32.mrf.mxu0
        %v6333 = vadd.f32 %v6164, %v6332
        %v6334 = vpop.f32.mrf.mxu0
        %v6335 = vadd.f32 %v6166, %v6334
        %6336 = vmatmul.bf16.gmra.mxu0 %v1075
        %v6337 = vpop.f32.mrf.mxu0
        %v6338 = vadd.f32 %v6169, %v6337
        %v6339 = vpop.f32.mrf.mxu0
        %v6340 = vadd.f32 %v6171, %v6339
        %6341 = vdwg.mxu0
        %6342 = vmatpush.bf16.msra.mxu0 %v2334
        %6343 = vmatpush.bf16.msra.mxu0 %v2330
        %6344 = vmatpush.bf16.msra.mxu0 %v2326
        %6345 = vmatpush.bf16.msra.mxu0 %v2322
        %6346 = vmatpush.bf16.msra.mxu0 %v2318
        %6347 = vmatpush.bf16.msra.mxu0 %v2314
        %6348 = vmatpush.bf16.msra.mxu0 %v2310
        %6349 = vmatpush.bf16.msra.mxu0 %v2306
        %6350 = vmatmul.bf16.gmra.mxu0 %v828
        %v6351 = vpop.f32.mrf.mxu0
        %v6352 = vadd.f32 %v6183, %v6351
        %v6353 = vpop.f32.mrf.mxu0
        %v6354 = vadd.f32 %v6185, %v6353
        %6355 = vmatmul.bf16.gmra.mxu0 %v836
        %v6356 = vpop.f32.mrf.mxu0
        %v6357 = vadd.f32 %v6188, %v6356
        %v6358 = vpop.f32.mrf.mxu0
        %v6359 = vadd.f32 %v6190, %v6358
        %6360 = vmatmul.bf16.gmra.mxu0 %v844
        %v6361 = vpop.f32.mrf.mxu0
        %v6362 = vadd.f32 %v6193, %v6361
        %v6363 = vpop.f32.mrf.mxu0
        %v6364 = vadd.f32 %v6195, %v6363
        %6365 = vmatmul.bf16.gmra.mxu0 %v852
        %v6366 = vpop.f32.mrf.mxu0
        %v6367 = vadd.f32 %v6198, %v6366
        %v6368 = vpop.f32.mrf.mxu0
        %v6369 = vadd.f32 %v6200, %v6368
        %6370 = vmatmul.bf16.gmra.mxu0 %v860
        %v6371 = vpop.f32.mrf.mxu0
        %v6372 = vadd.f32 %v6203, %v6371
        %v6373 = vpop.f32.mrf.mxu0
        %v6374 = vadd.f32 %v6205, %v6373
        %6375 = vmatmul.bf16.gmra.mxu0 %v868
        %v6376 = vpop.f32.mrf.mxu0
        %v6377 = vadd.f32 %v6208, %v6376
        %v6378 = vpop.f32.mrf.mxu0
        %v6379 = vadd.f32 %v6210, %v6378
        %6380 = vmatmul.bf16.gmra.mxu0 %v876
        %v6381 = vpop.f32.mrf.mxu0
        %v6382 = vadd.f32 %v6213, %v6381
        %v6383 = vpop.f32.mrf.mxu0
        %v6384 = vadd.f32 %v6215, %v6383
        %6385 = vmatmul.bf16.gmra.mxu0 %v884
        %v6386 = vpop.f32.mrf.mxu0
        %v6387 = vadd.f32 %v6218, %v6386
        %v6388 = vpop.f32.mrf.mxu0
        %v6389 = vadd.f32 %v6220, %v6388
        %6390 = vmatmul.bf16.gmra.mxu0 %v892
        %v6391 = vpop.f32.mrf.mxu0
        %v6392 = vadd.f32 %v6223, %v6391
        %v6393 = vpop.f32.mrf.mxu0
        %v6394 = vadd.f32 %v6225, %v6393
        %6395 = vmatmul.bf16.gmra.mxu0 %v900
        %v6396 = vpop.f32.mrf.mxu0
        %v6397 = vadd.f32 %v6228, %v6396
        %v6398 = vpop.f32.mrf.mxu0
        %v6399 = vadd.f32 %v6230, %v6398
        %6400 = vmatmul.bf16.gmra.mxu0 %v908
        %v6401 = vpop.f32.mrf.mxu0
        %v6402 = vadd.f32 %v6233, %v6401
        %v6403 = vpop.f32.mrf.mxu0
        %v6404 = vadd.f32 %v6235, %v6403
        %6405 = vmatmul.bf16.gmra.mxu0 %v916
        %v6406 = vpop.f32.mrf.mxu0
        %v6407 = vadd.f32 %v6238, %v6406
        %v6408 = vpop.f32.mrf.mxu0
        %v6409 = vadd.f32 %v6240, %v6408
        %6410 = vmatmul.bf16.gmra.mxu0 %v924
        %v6411 = vpop.f32.mrf.mxu0
        %v6412 = vadd.f32 %v6243, %v6411
        %v6413 = vpop.f32.mrf.mxu0
        %v6414 = vadd.f32 %v6245, %v6413
        %6415 = vmatmul.bf16.gmra.mxu0 %v932
        %v6416 = vpop.f32.mrf.mxu0
        %v6417 = vadd.f32 %v6248, %v6416
        %v6418 = vpop.f32.mrf.mxu0
        %v6419 = vadd.f32 %v6250, %v6418
        %6420 = vmatmul.bf16.gmra.mxu0 %v940
        %v6421 = vpop.f32.mrf.mxu0
        %v6422 = vadd.f32 %v6253, %v6421
        %v6423 = vpop.f32.mrf.mxu0
        %v6424 = vadd.f32 %v6255, %v6423
        %6425 = vmatmul.bf16.gmra.mxu0 %v948
        %v6426 = vpop.f32.mrf.mxu0
        %v6427 = vadd.f32 %v6258, %v6426
        %v6428 = vpop.f32.mrf.mxu0
        %v6429 = vadd.f32 %v6260, %v6428
        %6430 = vmatmul.bf16.gmra.mxu0 %v956
        %v6431 = vpop.f32.mrf.mxu0
        %v6432 = vadd.f32 %v6263, %v6431
        %v6433 = vpop.f32.mrf.mxu0
        %v6434 = vadd.f32 %v6265, %v6433
        %6435 = vmatmul.bf16.gmra.mxu0 %v964
        %v6436 = vpop.f32.mrf.mxu0
        %v6437 = vadd.f32 %v6268, %v6436
        %v6438 = vpop.f32.mrf.mxu0
        %v6439 = vadd.f32 %v6270, %v6438
        %6440 = vmatmul.bf16.gmra.mxu0 %v972
        %v6441 = vpop.f32.mrf.mxu0
        %v6442 = vadd.f32 %v6273, %v6441
        %v6443 = vpop.f32.mrf.mxu0
        %v6444 = vadd.f32 %v6275, %v6443
        %6445 = vmatmul.bf16.gmra.mxu0 %v980
        %v6446 = vpop.f32.mrf.mxu0
        %v6447 = vadd.f32 %v6278, %v6446
        %v6448 = vpop.f32.mrf.mxu0
        %v6449 = vadd.f32 %v6280, %v6448
        %6450 = vmatmul.bf16.gmra.mxu0 %v988
        %v6451 = vpop.f32.mrf.mxu0
        %v6452 = vadd.f32 %v6283, %v6451
        %v6453 = vpop.f32.mrf.mxu0
        %v6454 = vadd.f32 %v6285, %v6453
        %6455 = vmatmul.bf16.gmra.mxu0 %v996
        %v6456 = vpop.f32.mrf.mxu0
        %v6457 = vadd.f32 %v6288, %v6456
        %v6458 = vpop.f32.mrf.mxu0
        %v6459 = vadd.f32 %v6290, %v6458
        %6460 = vmatmul.bf16.gmra.mxu0 %v1004
        %v6461 = vpop.f32.mrf.mxu0
        %v6462 = vadd.f32 %v6293, %v6461
        %v6463 = vpop.f32.mrf.mxu0
        %v6464 = vadd.f32 %v6295, %v6463
        %6465 = vmatmul.bf16.gmra.mxu0 %v1012
        %v6466 = vpop.f32.mrf.mxu0
        %v6467 = vadd.f32 %v6298, %v6466
        %v6468 = vpop.f32.mrf.mxu0
        %v6469 = vadd.f32 %v6300, %v6468
        %6470 = vmatmul.bf16.gmra.mxu0 %v1020
        %v6471 = vpop.f32.mrf.mxu0
        %v6472 = vadd.f32 %v6303, %v6471
        %v6473 = vpop.f32.mrf.mxu0
        %v6474 = vadd.f32 %v6305, %v6473
        %6475 = vmatmul.bf16.gmra.mxu0 %v1028
        %v6476 = vpop.f32.mrf.mxu0
        %v6477 = vadd.f32 %v6308, %v6476
        %v6478 = vpop.f32.mrf.mxu0
        %v6479 = vadd.f32 %v6310, %v6478
        %6480 = vmatmul.bf16.gmra.mxu0 %v1036
        %v6481 = vpop.f32.mrf.mxu0
        %v6482 = vadd.f32 %v6313, %v6481
        %v6483 = vpop.f32.mrf.mxu0
        %v6484 = vadd.f32 %v6315, %v6483
        %6485 = vmatmul.bf16.gmra.mxu0 %v1044
        %v6486 = vpop.f32.mrf.mxu0
        %v6487 = vadd.f32 %v6318, %v6486
        %v6488 = vpop.f32.mrf.mxu0
        %v6489 = vadd.f32 %v6320, %v6488
        %6490 = vmatmul.bf16.gmra.mxu0 %v1052
        %v6491 = vpop.f32.mrf.mxu0
        %v6492 = vadd.f32 %v6323, %v6491
        %v6493 = vpop.f32.mrf.mxu0
        %v6494 = vadd.f32 %v6325, %v6493
        %6495 = vmatmul.bf16.gmra.mxu0 %v1060
        %v6496 = vpop.f32.mrf.mxu0
        %v6497 = vadd.f32 %v6328, %v6496
        %v6498 = vpop.f32.mrf.mxu0
        %v6499 = vadd.f32 %v6330, %v6498
        %6500 = vmatmul.bf16.gmra.mxu0 %v1068
        %v6501 = vpop.f32.mrf.mxu0
        %v6502 = vadd.f32 %v6333, %v6501
        %v6503 = vpop.f32.mrf.mxu0
        %v6504 = vadd.f32 %v6335, %v6503
        %6505 = vmatmul.bf16.gmra.mxu0 %v1076
        %v6506 = vpop.f32.mrf.mxu0
        %v6507 = vadd.f32 %v6338, %v6506
        %v6508 = vpop.f32.mrf.mxu0
        %v6509 = vadd.f32 %v6340, %v6508
        %6510 = vdwg.mxu0
        %6511 = vmatpush.bf16.msra.mxu0 %v2366
        %6512 = vmatpush.bf16.msra.mxu0 %v2362
        %6513 = vmatpush.bf16.msra.mxu0 %v2358
        %6514 = vmatpush.bf16.msra.mxu0 %v2354
        %6515 = vmatpush.bf16.msra.mxu0 %v2350
        %6516 = vmatpush.bf16.msra.mxu0 %v2346
        %6517 = vmatpush.bf16.msra.mxu0 %v2342
        %6518 = vmatpush.bf16.msra.mxu0 %v2338
        %6519 = vmatmul.bf16.gmra.mxu0 %v829
        %v6520 = vpop.f32.mrf.mxu0
        %v6521 = vadd.f32 %v6352, %v6520
        %v6522 = vpop.f32.mrf.mxu0
        %v6523 = vadd.f32 %v6354, %v6522
        %6524 = vmatmul.bf16.gmra.mxu0 %v837
        %v6525 = vpop.f32.mrf.mxu0
        %v6526 = vadd.f32 %v6357, %v6525
        %v6527 = vpop.f32.mrf.mxu0
        %v6528 = vadd.f32 %v6359, %v6527
        %6529 = vmatmul.bf16.gmra.mxu0 %v845
        %v6530 = vpop.f32.mrf.mxu0
        %v6531 = vadd.f32 %v6362, %v6530
        %v6532 = vpop.f32.mrf.mxu0
        %v6533 = vadd.f32 %v6364, %v6532
        %6534 = vmatmul.bf16.gmra.mxu0 %v853
        %v6535 = vpop.f32.mrf.mxu0
        %v6536 = vadd.f32 %v6367, %v6535
        %v6537 = vpop.f32.mrf.mxu0
        %v6538 = vadd.f32 %v6369, %v6537
        %6539 = vmatmul.bf16.gmra.mxu0 %v861
        %v6540 = vpop.f32.mrf.mxu0
        %v6541 = vadd.f32 %v6372, %v6540
        %v6542 = vpop.f32.mrf.mxu0
        %v6543 = vadd.f32 %v6374, %v6542
        %6544 = vmatmul.bf16.gmra.mxu0 %v869
        %v6545 = vpop.f32.mrf.mxu0
        %v6546 = vadd.f32 %v6377, %v6545
        %v6547 = vpop.f32.mrf.mxu0
        %v6548 = vadd.f32 %v6379, %v6547
        %6549 = vmatmul.bf16.gmra.mxu0 %v877
        %v6550 = vpop.f32.mrf.mxu0
        %v6551 = vadd.f32 %v6382, %v6550
        %v6552 = vpop.f32.mrf.mxu0
        %v6553 = vadd.f32 %v6384, %v6552
        %6554 = vmatmul.bf16.gmra.mxu0 %v885
        %v6555 = vpop.f32.mrf.mxu0
        %v6556 = vadd.f32 %v6387, %v6555
        %v6557 = vpop.f32.mrf.mxu0
        %v6558 = vadd.f32 %v6389, %v6557
        %6559 = vmatmul.bf16.gmra.mxu0 %v893
        %v6560 = vpop.f32.mrf.mxu0
        %v6561 = vadd.f32 %v6392, %v6560
        %v6562 = vpop.f32.mrf.mxu0
        %v6563 = vadd.f32 %v6394, %v6562
        %6564 = vmatmul.bf16.gmra.mxu0 %v901
        %v6565 = vpop.f32.mrf.mxu0
        %v6566 = vadd.f32 %v6397, %v6565
        %v6567 = vpop.f32.mrf.mxu0
        %v6568 = vadd.f32 %v6399, %v6567
        %6569 = vmatmul.bf16.gmra.mxu0 %v909
        %v6570 = vpop.f32.mrf.mxu0
        %v6571 = vadd.f32 %v6402, %v6570
        %v6572 = vpop.f32.mrf.mxu0
        %v6573 = vadd.f32 %v6404, %v6572
        %6574 = vmatmul.bf16.gmra.mxu0 %v917
        %v6575 = vpop.f32.mrf.mxu0
        %v6576 = vadd.f32 %v6407, %v6575
        %v6577 = vpop.f32.mrf.mxu0
        %v6578 = vadd.f32 %v6409, %v6577
        %6579 = vmatmul.bf16.gmra.mxu0 %v925
        %v6580 = vpop.f32.mrf.mxu0
        %v6581 = vadd.f32 %v6412, %v6580
        %v6582 = vpop.f32.mrf.mxu0
        %v6583 = vadd.f32 %v6414, %v6582
        %6584 = vmatmul.bf16.gmra.mxu0 %v933
        %v6585 = vpop.f32.mrf.mxu0
        %v6586 = vadd.f32 %v6417, %v6585
        %v6587 = vpop.f32.mrf.mxu0
        %v6588 = vadd.f32 %v6419, %v6587
        %6589 = vmatmul.bf16.gmra.mxu0 %v941
        %v6590 = vpop.f32.mrf.mxu0
        %v6591 = vadd.f32 %v6422, %v6590
        %v6592 = vpop.f32.mrf.mxu0
        %v6593 = vadd.f32 %v6424, %v6592
        %6594 = vmatmul.bf16.gmra.mxu0 %v949
        %v6595 = vpop.f32.mrf.mxu0
        %v6596 = vadd.f32 %v6427, %v6595
        %v6597 = vpop.f32.mrf.mxu0
        %v6598 = vadd.f32 %v6429, %v6597
        %6599 = vmatmul.bf16.gmra.mxu0 %v957
        %v6600 = vpop.f32.mrf.mxu0
        %v6601 = vadd.f32 %v6432, %v6600
        %v6602 = vpop.f32.mrf.mxu0
        %v6603 = vadd.f32 %v6434, %v6602
        %6604 = vmatmul.bf16.gmra.mxu0 %v965
        %v6605 = vpop.f32.mrf.mxu0
        %v6606 = vadd.f32 %v6437, %v6605
        %v6607 = vpop.f32.mrf.mxu0
        %v6608 = vadd.f32 %v6439, %v6607
        %6609 = vmatmul.bf16.gmra.mxu0 %v973
        %v6610 = vpop.f32.mrf.mxu0
        %v6611 = vadd.f32 %v6442, %v6610
        %v6612 = vpop.f32.mrf.mxu0
        %v6613 = vadd.f32 %v6444, %v6612
        %6614 = vmatmul.bf16.gmra.mxu0 %v981
        %v6615 = vpop.f32.mrf.mxu0
        %v6616 = vadd.f32 %v6447, %v6615
        %v6617 = vpop.f32.mrf.mxu0
        %v6618 = vadd.f32 %v6449, %v6617
        %6619 = vmatmul.bf16.gmra.mxu0 %v989
        %v6620 = vpop.f32.mrf.mxu0
        %v6621 = vadd.f32 %v6452, %v6620
        %v6622 = vpop.f32.mrf.mxu0
        %v6623 = vadd.f32 %v6454, %v6622
        %6624 = vmatmul.bf16.gmra.mxu0 %v997
        %v6625 = vpop.f32.mrf.mxu0
        %v6626 = vadd.f32 %v6457, %v6625
        %v6627 = vpop.f32.mrf.mxu0
        %v6628 = vadd.f32 %v6459, %v6627
        %6629 = vmatmul.bf16.gmra.mxu0 %v1005
        %v6630 = vpop.f32.mrf.mxu0
        %v6631 = vadd.f32 %v6462, %v6630
        %v6632 = vpop.f32.mrf.mxu0
        %v6633 = vadd.f32 %v6464, %v6632
        %6634 = vmatmul.bf16.gmra.mxu0 %v1013
        %v6635 = vpop.f32.mrf.mxu0
        %v6636 = vadd.f32 %v6467, %v6635
        %v6637 = vpop.f32.mrf.mxu0
        %v6638 = vadd.f32 %v6469, %v6637
        %6639 = vmatmul.bf16.gmra.mxu0 %v1021
        %v6640 = vpop.f32.mrf.mxu0
        %v6641 = vadd.f32 %v6472, %v6640
        %v6642 = vpop.f32.mrf.mxu0
        %v6643 = vadd.f32 %v6474, %v6642
        %6644 = vmatmul.bf16.gmra.mxu0 %v1029
        %v6645 = vpop.f32.mrf.mxu0
        %v6646 = vadd.f32 %v6477, %v6645
        %v6647 = vpop.f32.mrf.mxu0
        %v6648 = vadd.f32 %v6479, %v6647
        %6649 = vmatmul.bf16.gmra.mxu0 %v1037
        %v6650 = vpop.f32.mrf.mxu0
        %v6651 = vadd.f32 %v6482, %v6650
        %v6652 = vpop.f32.mrf.mxu0
        %v6653 = vadd.f32 %v6484, %v6652
        %6654 = vmatmul.bf16.gmra.mxu0 %v1045
        %v6655 = vpop.f32.mrf.mxu0
        %v6656 = vadd.f32 %v6487, %v6655
        %v6657 = vpop.f32.mrf.mxu0
        %v6658 = vadd.f32 %v6489, %v6657
        %6659 = vmatmul.bf16.gmra.mxu0 %v1053
        %v6660 = vpop.f32.mrf.mxu0
        %v6661 = vadd.f32 %v6492, %v6660
        %v6662 = vpop.f32.mrf.mxu0
        %v6663 = vadd.f32 %v6494, %v6662
        %6664 = vmatmul.bf16.gmra.mxu0 %v1061
        %v6665 = vpop.f32.mrf.mxu0
        %v6666 = vadd.f32 %v6497, %v6665
        %v6667 = vpop.f32.mrf.mxu0
        %v6668 = vadd.f32 %v6499, %v6667
        %6669 = vmatmul.bf16.gmra.mxu0 %v1069
        %v6670 = vpop.f32.mrf.mxu0
        %v6671 = vadd.f32 %v6502, %v6670
        %v6672 = vpop.f32.mrf.mxu0
        %v6673 = vadd.f32 %v6504, %v6672
        %6674 = vmatmul.bf16.gmra.mxu0 %v1077
        %v6675 = vpop.f32.mrf.mxu0
        %v6676 = vadd.f32 %v6507, %v6675
        %v6677 = vpop.f32.mrf.mxu0
        %v6678 = vadd.f32 %v6509, %v6677
        %6679 = vdwg.mxu0
        %6680 = vmatpush.bf16.msra.mxu0 %v2143
        %6681 = vmatpush.bf16.msra.mxu0 %v2139
        %6682 = vmatpush.bf16.msra.mxu0 %v2135
        %6683 = vmatpush.bf16.msra.mxu0 %v2131
        %6684 = vmatpush.bf16.msra.mxu0 %v2127
        %6685 = vmatpush.bf16.msra.mxu0 %v2123
        %6686 = vmatpush.bf16.msra.mxu0 %v2119
        %6687 = vmatpush.bf16.msra.mxu0 %v2115
        %6688 = vmatmul.bf16.gmra.mxu0 %v822
        %v6689 = vpop.f32.mrf.mxu0
        %v6690 = vadd.f32 %v1339, %v6689
        %v6691 = vpop.f32.mrf.mxu0
        %v6692 = vadd.f32 %v1339, %v6691
        %6693 = vmatmul.bf16.gmra.mxu0 %v830
        %v6694 = vpop.f32.mrf.mxu0
        %v6695 = vadd.f32 %v1339, %v6694
        %v6696 = vpop.f32.mrf.mxu0
        %v6697 = vadd.f32 %v1339, %v6696
        %6698 = vmatmul.bf16.gmra.mxu0 %v838
        %v6699 = vpop.f32.mrf.mxu0
        %v6700 = vadd.f32 %v1339, %v6699
        %v6701 = vpop.f32.mrf.mxu0
        %v6702 = vadd.f32 %v1339, %v6701
        %6703 = vmatmul.bf16.gmra.mxu0 %v846
        %v6704 = vpop.f32.mrf.mxu0
        %v6705 = vadd.f32 %v1339, %v6704
        %v6706 = vpop.f32.mrf.mxu0
        %v6707 = vadd.f32 %v1339, %v6706
        %6708 = vmatmul.bf16.gmra.mxu0 %v854
        %v6709 = vpop.f32.mrf.mxu0
        %v6710 = vadd.f32 %v1339, %v6709
        %v6711 = vpop.f32.mrf.mxu0
        %v6712 = vadd.f32 %v1339, %v6711
        %6713 = vmatmul.bf16.gmra.mxu0 %v862
        %v6714 = vpop.f32.mrf.mxu0
        %v6715 = vadd.f32 %v1339, %v6714
        %v6716 = vpop.f32.mrf.mxu0
        %v6717 = vadd.f32 %v1339, %v6716
        %6718 = vmatmul.bf16.gmra.mxu0 %v870
        %v6719 = vpop.f32.mrf.mxu0
        %v6720 = vadd.f32 %v1339, %v6719
        %v6721 = vpop.f32.mrf.mxu0
        %v6722 = vadd.f32 %v1339, %v6721
        %6723 = vmatmul.bf16.gmra.mxu0 %v878
        %v6724 = vpop.f32.mrf.mxu0
        %v6725 = vadd.f32 %v1339, %v6724
        %v6726 = vpop.f32.mrf.mxu0
        %v6727 = vadd.f32 %v1339, %v6726
        %6728 = vmatmul.bf16.gmra.mxu0 %v886
        %v6729 = vpop.f32.mrf.mxu0
        %v6730 = vadd.f32 %v1339, %v6729
        %v6731 = vpop.f32.mrf.mxu0
        %v6732 = vadd.f32 %v1339, %v6731
        %6733 = vmatmul.bf16.gmra.mxu0 %v894
        %v6734 = vpop.f32.mrf.mxu0
        %v6735 = vadd.f32 %v1339, %v6734
        %v6736 = vpop.f32.mrf.mxu0
        %v6737 = vadd.f32 %v1339, %v6736
        %6738 = vmatmul.bf16.gmra.mxu0 %v902
        %v6739 = vpop.f32.mrf.mxu0
        %v6740 = vadd.f32 %v1339, %v6739
        %v6741 = vpop.f32.mrf.mxu0
        %v6742 = vadd.f32 %v1339, %v6741
        %6743 = vmatmul.bf16.gmra.mxu0 %v910
        %v6744 = vpop.f32.mrf.mxu0
        %v6745 = vadd.f32 %v1339, %v6744
        %v6746 = vpop.f32.mrf.mxu0
        %v6747 = vadd.f32 %v1339, %v6746
        %6748 = vmatmul.bf16.gmra.mxu0 %v918
        %v6749 = vpop.f32.mrf.mxu0
        %v6750 = vadd.f32 %v1339, %v6749
        %v6751 = vpop.f32.mrf.mxu0
        %v6752 = vadd.f32 %v1339, %v6751
        %6753 = vmatmul.bf16.gmra.mxu0 %v926
        %v6754 = vpop.f32.mrf.mxu0
        %v6755 = vadd.f32 %v1339, %v6754
        %v6756 = vpop.f32.mrf.mxu0
        %v6757 = vadd.f32 %v1339, %v6756
        %6758 = vmatmul.bf16.gmra.mxu0 %v934
        %v6759 = vpop.f32.mrf.mxu0
        %v6760 = vadd.f32 %v1339, %v6759
        %v6761 = vpop.f32.mrf.mxu0
        %v6762 = vadd.f32 %v1339, %v6761
        %6763 = vmatmul.bf16.gmra.mxu0 %v942
        %v6764 = vpop.f32.mrf.mxu0
        %v6765 = vadd.f32 %v1339, %v6764
        %v6766 = vpop.f32.mrf.mxu0
        %v6767 = vadd.f32 %v1339, %v6766
        %6768 = vmatmul.bf16.gmra.mxu0 %v950
        %v6769 = vpop.f32.mrf.mxu0
        %v6770 = vadd.f32 %v1339, %v6769
        %v6771 = vpop.f32.mrf.mxu0
        %v6772 = vadd.f32 %v1339, %v6771
        %6773 = vmatmul.bf16.gmra.mxu0 %v958
        %v6774 = vpop.f32.mrf.mxu0
        %v6775 = vadd.f32 %v1339, %v6774
        %v6776 = vpop.f32.mrf.mxu0
        %v6777 = vadd.f32 %v1339, %v6776
        %6778 = vmatmul.bf16.gmra.mxu0 %v966
        %v6779 = vpop.f32.mrf.mxu0
        %v6780 = vadd.f32 %v1339, %v6779
        %v6781 = vpop.f32.mrf.mxu0
        %v6782 = vadd.f32 %v1339, %v6781
        %6783 = vmatmul.bf16.gmra.mxu0 %v974
        %v6784 = vpop.f32.mrf.mxu0
        %v6785 = vadd.f32 %v1339, %v6784
        %v6786 = vpop.f32.mrf.mxu0
        %v6787 = vadd.f32 %v1339, %v6786
        %6788 = vmatmul.bf16.gmra.mxu0 %v982
        %v6789 = vpop.f32.mrf.mxu0
        %v6790 = vadd.f32 %v1339, %v6789
        %v6791 = vpop.f32.mrf.mxu0
        %v6792 = vadd.f32 %v1339, %v6791
        %6793 = vmatmul.bf16.gmra.mxu0 %v990
        %v6794 = vpop.f32.mrf.mxu0
        %v6795 = vadd.f32 %v1339, %v6794
        %v6796 = vpop.f32.mrf.mxu0
        %v6797 = vadd.f32 %v1339, %v6796
        %6798 = vmatmul.bf16.gmra.mxu0 %v998
        %v6799 = vpop.f32.mrf.mxu0
        %v6800 = vadd.f32 %v1339, %v6799
        %v6801 = vpop.f32.mrf.mxu0
        %v6802 = vadd.f32 %v1339, %v6801
        %6803 = vmatmul.bf16.gmra.mxu0 %v1006
        %v6804 = vpop.f32.mrf.mxu0
        %v6805 = vadd.f32 %v1339, %v6804
        %v6806 = vpop.f32.mrf.mxu0
        %v6807 = vadd.f32 %v1339, %v6806
        %6808 = vmatmul.bf16.gmra.mxu0 %v1014
        %v6809 = vpop.f32.mrf.mxu0
        %v6810 = vadd.f32 %v1339, %v6809
        %v6811 = vpop.f32.mrf.mxu0
        %v6812 = vadd.f32 %v1339, %v6811
        %6813 = vmatmul.bf16.gmra.mxu0 %v1022
        %v6814 = vpop.f32.mrf.mxu0
        %v6815 = vadd.f32 %v1339, %v6814
        %v6816 = vpop.f32.mrf.mxu0
        %v6817 = vadd.f32 %v1339, %v6816
        %6818 = vmatmul.bf16.gmra.mxu0 %v1030
        %v6819 = vpop.f32.mrf.mxu0
        %v6820 = vadd.f32 %v1339, %v6819
        %v6821 = vpop.f32.mrf.mxu0
        %v6822 = vadd.f32 %v1339, %v6821
        %6823 = vmatmul.bf16.gmra.mxu0 %v1038
        %v6824 = vpop.f32.mrf.mxu0
        %v6825 = vadd.f32 %v1339, %v6824
        %v6826 = vpop.f32.mrf.mxu0
        %v6827 = vadd.f32 %v1339, %v6826
        %6828 = vmatmul.bf16.gmra.mxu0 %v1046
        %v6829 = vpop.f32.mrf.mxu0
        %v6830 = vadd.f32 %v1339, %v6829
        %v6831 = vpop.f32.mrf.mxu0
        %v6832 = vadd.f32 %v1339, %v6831
        %6833 = vmatmul.bf16.gmra.mxu0 %v1054
        %v6834 = vpop.f32.mrf.mxu0
        %v6835 = vadd.f32 %v1339, %v6834
        %v6836 = vpop.f32.mrf.mxu0
        %v6837 = vadd.f32 %v1339, %v6836
        %6838 = vmatmul.bf16.gmra.mxu0 %v1062
        %v6839 = vpop.f32.mrf.mxu0
        %v6840 = vadd.f32 %v1339, %v6839
        %v6841 = vpop.f32.mrf.mxu0
        %v6842 = vadd.f32 %v1339, %v6841
        %6843 = vmatmul.bf16.gmra.mxu0 %v1070
        %v6844 = vpop.f32.mrf.mxu0
        %v6845 = vadd.f32 %v1339, %v6844
        %v6846 = vpop.f32.mrf.mxu0
        %v6847 = vadd.f32 %v1339, %v6846
        %6848 = vdwg.mxu0
        %6849 = vmatpush.bf16.msra.mxu0 %v2175
        %6850 = vmatpush.bf16.msra.mxu0 %v2171
        %6851 = vmatpush.bf16.msra.mxu0 %v2167
        %6852 = vmatpush.bf16.msra.mxu0 %v2163
        %6853 = vmatpush.bf16.msra.mxu0 %v2159
        %6854 = vmatpush.bf16.msra.mxu0 %v2155
        %6855 = vmatpush.bf16.msra.mxu0 %v2151
        %6856 = vmatpush.bf16.msra.mxu0 %v2147
        %6857 = vmatmul.bf16.gmra.mxu0 %v823
        %v6858 = vpop.f32.mrf.mxu0
        %v6859 = vadd.f32 %v6690, %v6858
        %v6860 = vpop.f32.mrf.mxu0
        %v6861 = vadd.f32 %v6692, %v6860
        %6862 = vmatmul.bf16.gmra.mxu0 %v831
        %v6863 = vpop.f32.mrf.mxu0
        %v6864 = vadd.f32 %v6695, %v6863
        %v6865 = vpop.f32.mrf.mxu0
        %v6866 = vadd.f32 %v6697, %v6865
        %6867 = vmatmul.bf16.gmra.mxu0 %v839
        %v6868 = vpop.f32.mrf.mxu0
        %v6869 = vadd.f32 %v6700, %v6868
        %v6870 = vpop.f32.mrf.mxu0
        %v6871 = vadd.f32 %v6702, %v6870
        %6872 = vmatmul.bf16.gmra.mxu0 %v847
        %v6873 = vpop.f32.mrf.mxu0
        %v6874 = vadd.f32 %v6705, %v6873
        %v6875 = vpop.f32.mrf.mxu0
        %v6876 = vadd.f32 %v6707, %v6875
        %6877 = vmatmul.bf16.gmra.mxu0 %v855
        %v6878 = vpop.f32.mrf.mxu0
        %v6879 = vadd.f32 %v6710, %v6878
        %v6880 = vpop.f32.mrf.mxu0
        %v6881 = vadd.f32 %v6712, %v6880
        %6882 = vmatmul.bf16.gmra.mxu0 %v863
        %v6883 = vpop.f32.mrf.mxu0
        %v6884 = vadd.f32 %v6715, %v6883
        %v6885 = vpop.f32.mrf.mxu0
        %v6886 = vadd.f32 %v6717, %v6885
        %6887 = vmatmul.bf16.gmra.mxu0 %v871
        %v6888 = vpop.f32.mrf.mxu0
        %v6889 = vadd.f32 %v6720, %v6888
        %v6890 = vpop.f32.mrf.mxu0
        %v6891 = vadd.f32 %v6722, %v6890
        %6892 = vmatmul.bf16.gmra.mxu0 %v879
        %v6893 = vpop.f32.mrf.mxu0
        %v6894 = vadd.f32 %v6725, %v6893
        %v6895 = vpop.f32.mrf.mxu0
        %v6896 = vadd.f32 %v6727, %v6895
        %6897 = vmatmul.bf16.gmra.mxu0 %v887
        %v6898 = vpop.f32.mrf.mxu0
        %v6899 = vadd.f32 %v6730, %v6898
        %v6900 = vpop.f32.mrf.mxu0
        %v6901 = vadd.f32 %v6732, %v6900
        %6902 = vmatmul.bf16.gmra.mxu0 %v895
        %v6903 = vpop.f32.mrf.mxu0
        %v6904 = vadd.f32 %v6735, %v6903
        %v6905 = vpop.f32.mrf.mxu0
        %v6906 = vadd.f32 %v6737, %v6905
        %6907 = vmatmul.bf16.gmra.mxu0 %v903
        %v6908 = vpop.f32.mrf.mxu0
        %v6909 = vadd.f32 %v6740, %v6908
        %v6910 = vpop.f32.mrf.mxu0
        %v6911 = vadd.f32 %v6742, %v6910
        %6912 = vmatmul.bf16.gmra.mxu0 %v911
        %v6913 = vpop.f32.mrf.mxu0
        %v6914 = vadd.f32 %v6745, %v6913
        %v6915 = vpop.f32.mrf.mxu0
        %v6916 = vadd.f32 %v6747, %v6915
        %6917 = vmatmul.bf16.gmra.mxu0 %v919
        %v6918 = vpop.f32.mrf.mxu0
        %v6919 = vadd.f32 %v6750, %v6918
        %v6920 = vpop.f32.mrf.mxu0
        %v6921 = vadd.f32 %v6752, %v6920
        %6922 = vmatmul.bf16.gmra.mxu0 %v927
        %v6923 = vpop.f32.mrf.mxu0
        %v6924 = vadd.f32 %v6755, %v6923
        %v6925 = vpop.f32.mrf.mxu0
        %v6926 = vadd.f32 %v6757, %v6925
        %6927 = vmatmul.bf16.gmra.mxu0 %v935
        %v6928 = vpop.f32.mrf.mxu0
        %v6929 = vadd.f32 %v6760, %v6928
        %v6930 = vpop.f32.mrf.mxu0
        %v6931 = vadd.f32 %v6762, %v6930
        %6932 = vmatmul.bf16.gmra.mxu0 %v943
        %v6933 = vpop.f32.mrf.mxu0
        %v6934 = vadd.f32 %v6765, %v6933
        %v6935 = vpop.f32.mrf.mxu0
        %v6936 = vadd.f32 %v6767, %v6935
        %6937 = vmatmul.bf16.gmra.mxu0 %v951
        %v6938 = vpop.f32.mrf.mxu0
        %v6939 = vadd.f32 %v6770, %v6938
        %v6940 = vpop.f32.mrf.mxu0
        %v6941 = vadd.f32 %v6772, %v6940
        %6942 = vmatmul.bf16.gmra.mxu0 %v959
        %v6943 = vpop.f32.mrf.mxu0
        %v6944 = vadd.f32 %v6775, %v6943
        %v6945 = vpop.f32.mrf.mxu0
        %v6946 = vadd.f32 %v6777, %v6945
        %6947 = vmatmul.bf16.gmra.mxu0 %v967
        %v6948 = vpop.f32.mrf.mxu0
        %v6949 = vadd.f32 %v6780, %v6948
        %v6950 = vpop.f32.mrf.mxu0
        %v6951 = vadd.f32 %v6782, %v6950
        %6952 = vmatmul.bf16.gmra.mxu0 %v975
        %v6953 = vpop.f32.mrf.mxu0
        %v6954 = vadd.f32 %v6785, %v6953
        %v6955 = vpop.f32.mrf.mxu0
        %v6956 = vadd.f32 %v6787, %v6955
        %6957 = vmatmul.bf16.gmra.mxu0 %v983
        %v6958 = vpop.f32.mrf.mxu0
        %v6959 = vadd.f32 %v6790, %v6958
        %v6960 = vpop.f32.mrf.mxu0
        %v6961 = vadd.f32 %v6792, %v6960
        %6962 = vmatmul.bf16.gmra.mxu0 %v991
        %v6963 = vpop.f32.mrf.mxu0
        %v6964 = vadd.f32 %v6795, %v6963
        %v6965 = vpop.f32.mrf.mxu0
        %v6966 = vadd.f32 %v6797, %v6965
        %6967 = vmatmul.bf16.gmra.mxu0 %v999
        %v6968 = vpop.f32.mrf.mxu0
        %v6969 = vadd.f32 %v6800, %v6968
        %v6970 = vpop.f32.mrf.mxu0
        %v6971 = vadd.f32 %v6802, %v6970
        %6972 = vmatmul.bf16.gmra.mxu0 %v1007
        %v6973 = vpop.f32.mrf.mxu0
        %v6974 = vadd.f32 %v6805, %v6973
        %v6975 = vpop.f32.mrf.mxu0
        %v6976 = vadd.f32 %v6807, %v6975
        %6977 = vmatmul.bf16.gmra.mxu0 %v1015
        %v6978 = vpop.f32.mrf.mxu0
        %v6979 = vadd.f32 %v6810, %v6978
        %v6980 = vpop.f32.mrf.mxu0
        %v6981 = vadd.f32 %v6812, %v6980
        %6982 = vmatmul.bf16.gmra.mxu0 %v1023
        %v6983 = vpop.f32.mrf.mxu0
        %v6984 = vadd.f32 %v6815, %v6983
        %v6985 = vpop.f32.mrf.mxu0
        %v6986 = vadd.f32 %v6817, %v6985
        %6987 = vmatmul.bf16.gmra.mxu0 %v1031
        %v6988 = vpop.f32.mrf.mxu0
        %v6989 = vadd.f32 %v6820, %v6988
        %v6990 = vpop.f32.mrf.mxu0
        %v6991 = vadd.f32 %v6822, %v6990
        %6992 = vmatmul.bf16.gmra.mxu0 %v1039
        %v6993 = vpop.f32.mrf.mxu0
        %v6994 = vadd.f32 %v6825, %v6993
        %v6995 = vpop.f32.mrf.mxu0
        %v6996 = vadd.f32 %v6827, %v6995
        %6997 = vmatmul.bf16.gmra.mxu0 %v1047
        %v6998 = vpop.f32.mrf.mxu0
        %v6999 = vadd.f32 %v6830, %v6998
        %v7000 = vpop.f32.mrf.mxu0
        %v7001 = vadd.f32 %v6832, %v7000
        %7002 = vmatmul.bf16.gmra.mxu0 %v1055
        %v7003 = vpop.f32.mrf.mxu0
        %v7004 = vadd.f32 %v6835, %v7003
        %v7005 = vpop.f32.mrf.mxu0
        %v7006 = vadd.f32 %v6837, %v7005
        %7007 = vmatmul.bf16.gmra.mxu0 %v1063
        %v7008 = vpop.f32.mrf.mxu0
        %v7009 = vadd.f32 %v6840, %v7008
        %v7010 = vpop.f32.mrf.mxu0
        %v7011 = vadd.f32 %v6842, %v7010
        %7012 = vmatmul.bf16.gmra.mxu0 %v1071
        %v7013 = vpop.f32.mrf.mxu0
        %v7014 = vadd.f32 %v6845, %v7013
        %v7015 = vpop.f32.mrf.mxu0
        %v7016 = vadd.f32 %v6847, %v7015
        %7017 = vdwg.mxu0
        %7018 = vmatpush.bf16.msra.mxu0 %v2207
        %7019 = vmatpush.bf16.msra.mxu0 %v2203
        %7020 = vmatpush.bf16.msra.mxu0 %v2199
        %7021 = vmatpush.bf16.msra.mxu0 %v2195
        %7022 = vmatpush.bf16.msra.mxu0 %v2191
        %7023 = vmatpush.bf16.msra.mxu0 %v2187
        %7024 = vmatpush.bf16.msra.mxu0 %v2183
        %7025 = vmatpush.bf16.msra.mxu0 %v2179
        %7026 = vmatmul.bf16.gmra.mxu0 %v824
        %v7027 = vpop.f32.mrf.mxu0
        %v7028 = vadd.f32 %v6859, %v7027
        %v7029 = vpop.f32.mrf.mxu0
        %v7030 = vadd.f32 %v6861, %v7029
        %7031 = vmatmul.bf16.gmra.mxu0 %v832
        %v7032 = vpop.f32.mrf.mxu0
        %v7033 = vadd.f32 %v6864, %v7032
        %v7034 = vpop.f32.mrf.mxu0
        %v7035 = vadd.f32 %v6866, %v7034
        %7036 = vmatmul.bf16.gmra.mxu0 %v840
        %v7037 = vpop.f32.mrf.mxu0
        %v7038 = vadd.f32 %v6869, %v7037
        %v7039 = vpop.f32.mrf.mxu0
        %v7040 = vadd.f32 %v6871, %v7039
        %7041 = vmatmul.bf16.gmra.mxu0 %v848
        %v7042 = vpop.f32.mrf.mxu0
        %v7043 = vadd.f32 %v6874, %v7042
        %v7044 = vpop.f32.mrf.mxu0
        %v7045 = vadd.f32 %v6876, %v7044
        %7046 = vmatmul.bf16.gmra.mxu0 %v856
        %v7047 = vpop.f32.mrf.mxu0
        %v7048 = vadd.f32 %v6879, %v7047
        %v7049 = vpop.f32.mrf.mxu0
        %v7050 = vadd.f32 %v6881, %v7049
        %7051 = vmatmul.bf16.gmra.mxu0 %v864
        %v7052 = vpop.f32.mrf.mxu0
        %v7053 = vadd.f32 %v6884, %v7052
        %v7054 = vpop.f32.mrf.mxu0
        %v7055 = vadd.f32 %v6886, %v7054
        %7056 = vmatmul.bf16.gmra.mxu0 %v872
        %v7057 = vpop.f32.mrf.mxu0
        %v7058 = vadd.f32 %v6889, %v7057
        %v7059 = vpop.f32.mrf.mxu0
        %v7060 = vadd.f32 %v6891, %v7059
        %7061 = vmatmul.bf16.gmra.mxu0 %v880
        %v7062 = vpop.f32.mrf.mxu0
        %v7063 = vadd.f32 %v6894, %v7062
        %v7064 = vpop.f32.mrf.mxu0
        %v7065 = vadd.f32 %v6896, %v7064
        %7066 = vmatmul.bf16.gmra.mxu0 %v888
        %v7067 = vpop.f32.mrf.mxu0
        %v7068 = vadd.f32 %v6899, %v7067
        %v7069 = vpop.f32.mrf.mxu0
        %v7070 = vadd.f32 %v6901, %v7069
        %7071 = vmatmul.bf16.gmra.mxu0 %v896
        %v7072 = vpop.f32.mrf.mxu0
        %v7073 = vadd.f32 %v6904, %v7072
        %v7074 = vpop.f32.mrf.mxu0
        %v7075 = vadd.f32 %v6906, %v7074
        %7076 = vmatmul.bf16.gmra.mxu0 %v904
        %v7077 = vpop.f32.mrf.mxu0
        %v7078 = vadd.f32 %v6909, %v7077
        %v7079 = vpop.f32.mrf.mxu0
        %v7080 = vadd.f32 %v6911, %v7079
        %7081 = vmatmul.bf16.gmra.mxu0 %v912
        %v7082 = vpop.f32.mrf.mxu0
        %v7083 = vadd.f32 %v6914, %v7082
        %v7084 = vpop.f32.mrf.mxu0
        %v7085 = vadd.f32 %v6916, %v7084
        %7086 = vmatmul.bf16.gmra.mxu0 %v920
        %v7087 = vpop.f32.mrf.mxu0
        %v7088 = vadd.f32 %v6919, %v7087
        %v7089 = vpop.f32.mrf.mxu0
        %v7090 = vadd.f32 %v6921, %v7089
        %7091 = vmatmul.bf16.gmra.mxu0 %v928
        %v7092 = vpop.f32.mrf.mxu0
        %v7093 = vadd.f32 %v6924, %v7092
        %v7094 = vpop.f32.mrf.mxu0
        %v7095 = vadd.f32 %v6926, %v7094
        %7096 = vmatmul.bf16.gmra.mxu0 %v936
        %v7097 = vpop.f32.mrf.mxu0
        %v7098 = vadd.f32 %v6929, %v7097
        %v7099 = vpop.f32.mrf.mxu0
        %v7100 = vadd.f32 %v6931, %v7099
        %7101 = vmatmul.bf16.gmra.mxu0 %v944
        %v7102 = vpop.f32.mrf.mxu0
        %v7103 = vadd.f32 %v6934, %v7102
        %v7104 = vpop.f32.mrf.mxu0
        %v7105 = vadd.f32 %v6936, %v7104
        %7106 = vmatmul.bf16.gmra.mxu0 %v952
        %v7107 = vpop.f32.mrf.mxu0
        %v7108 = vadd.f32 %v6939, %v7107
        %v7109 = vpop.f32.mrf.mxu0
        %v7110 = vadd.f32 %v6941, %v7109
        %7111 = vmatmul.bf16.gmra.mxu0 %v960
        %v7112 = vpop.f32.mrf.mxu0
        %v7113 = vadd.f32 %v6944, %v7112
        %v7114 = vpop.f32.mrf.mxu0
        %v7115 = vadd.f32 %v6946, %v7114
        %7116 = vmatmul.bf16.gmra.mxu0 %v968
        %v7117 = vpop.f32.mrf.mxu0
        %v7118 = vadd.f32 %v6949, %v7117
        %v7119 = vpop.f32.mrf.mxu0
        %v7120 = vadd.f32 %v6951, %v7119
        %7121 = vmatmul.bf16.gmra.mxu0 %v976
        %v7122 = vpop.f32.mrf.mxu0
        %v7123 = vadd.f32 %v6954, %v7122
        %v7124 = vpop.f32.mrf.mxu0
        %v7125 = vadd.f32 %v6956, %v7124
        %7126 = vmatmul.bf16.gmra.mxu0 %v984
        %v7127 = vpop.f32.mrf.mxu0
        %v7128 = vadd.f32 %v6959, %v7127
        %v7129 = vpop.f32.mrf.mxu0
        %v7130 = vadd.f32 %v6961, %v7129
        %7131 = vmatmul.bf16.gmra.mxu0 %v992
        %v7132 = vpop.f32.mrf.mxu0
        %v7133 = vadd.f32 %v6964, %v7132
        %v7134 = vpop.f32.mrf.mxu0
        %v7135 = vadd.f32 %v6966, %v7134
        %7136 = vmatmul.bf16.gmra.mxu0 %v1000
        %v7137 = vpop.f32.mrf.mxu0
        %v7138 = vadd.f32 %v6969, %v7137
        %v7139 = vpop.f32.mrf.mxu0
        %v7140 = vadd.f32 %v6971, %v7139
        %7141 = vmatmul.bf16.gmra.mxu0 %v1008
        %v7142 = vpop.f32.mrf.mxu0
        %v7143 = vadd.f32 %v6974, %v7142
        %v7144 = vpop.f32.mrf.mxu0
        %v7145 = vadd.f32 %v6976, %v7144
        %7146 = vmatmul.bf16.gmra.mxu0 %v1016
        %v7147 = vpop.f32.mrf.mxu0
        %v7148 = vadd.f32 %v6979, %v7147
        %v7149 = vpop.f32.mrf.mxu0
        %v7150 = vadd.f32 %v6981, %v7149
        %7151 = vmatmul.bf16.gmra.mxu0 %v1024
        %v7152 = vpop.f32.mrf.mxu0
        %v7153 = vadd.f32 %v6984, %v7152
        %v7154 = vpop.f32.mrf.mxu0
        %v7155 = vadd.f32 %v6986, %v7154
        %7156 = vmatmul.bf16.gmra.mxu0 %v1032
        %v7157 = vpop.f32.mrf.mxu0
        %v7158 = vadd.f32 %v6989, %v7157
        %v7159 = vpop.f32.mrf.mxu0
        %v7160 = vadd.f32 %v6991, %v7159
        %7161 = vmatmul.bf16.gmra.mxu0 %v1040
        %v7162 = vpop.f32.mrf.mxu0
        %v7163 = vadd.f32 %v6994, %v7162
        %v7164 = vpop.f32.mrf.mxu0
        %v7165 = vadd.f32 %v6996, %v7164
        %7166 = vmatmul.bf16.gmra.mxu0 %v1048
        %v7167 = vpop.f32.mrf.mxu0
        %v7168 = vadd.f32 %v6999, %v7167
        %v7169 = vpop.f32.mrf.mxu0
        %v7170 = vadd.f32 %v7001, %v7169
        %7171 = vmatmul.bf16.gmra.mxu0 %v1056
        %v7172 = vpop.f32.mrf.mxu0
        %v7173 = vadd.f32 %v7004, %v7172
        %v7174 = vpop.f32.mrf.mxu0
        %v7175 = vadd.f32 %v7006, %v7174
        %7176 = vmatmul.bf16.gmra.mxu0 %v1064
        %v7177 = vpop.f32.mrf.mxu0
        %v7178 = vadd.f32 %v7009, %v7177
        %v7179 = vpop.f32.mrf.mxu0
        %v7180 = vadd.f32 %v7011, %v7179
        %7181 = vmatmul.bf16.gmra.mxu0 %v1072
        %v7182 = vpop.f32.mrf.mxu0
        %v7183 = vadd.f32 %v7014, %v7182
        %v7184 = vpop.f32.mrf.mxu0
        %v7185 = vadd.f32 %v7016, %v7184
        %7186 = vdwg.mxu0
        %7187 = vmatpush.bf16.msra.mxu0 %v2239
        %7188 = vmatpush.bf16.msra.mxu0 %v2235
        %7189 = vmatpush.bf16.msra.mxu0 %v2231
        %7190 = vmatpush.bf16.msra.mxu0 %v2227
        %7191 = vmatpush.bf16.msra.mxu0 %v2223
        %7192 = vmatpush.bf16.msra.mxu0 %v2219
        %7193 = vmatpush.bf16.msra.mxu0 %v2215
        %7194 = vmatpush.bf16.msra.mxu0 %v2211
        %7195 = vmatmul.bf16.gmra.mxu0 %v825
        %v7196 = vpop.f32.mrf.mxu0
        %v7197 = vadd.f32 %v7028, %v7196
        %v7198 = vpop.f32.mrf.mxu0
        %v7199 = vadd.f32 %v7030, %v7198
        %7200 = vmatmul.bf16.gmra.mxu0 %v833
        %v7201 = vpop.f32.mrf.mxu0
        %v7202 = vadd.f32 %v7033, %v7201
        %v7203 = vpop.f32.mrf.mxu0
        %v7204 = vadd.f32 %v7035, %v7203
        %7205 = vmatmul.bf16.gmra.mxu0 %v841
        %v7206 = vpop.f32.mrf.mxu0
        %v7207 = vadd.f32 %v7038, %v7206
        %v7208 = vpop.f32.mrf.mxu0
        %v7209 = vadd.f32 %v7040, %v7208
        %7210 = vmatmul.bf16.gmra.mxu0 %v849
        %v7211 = vpop.f32.mrf.mxu0
        %v7212 = vadd.f32 %v7043, %v7211
        %v7213 = vpop.f32.mrf.mxu0
        %v7214 = vadd.f32 %v7045, %v7213
        %7215 = vmatmul.bf16.gmra.mxu0 %v857
        %v7216 = vpop.f32.mrf.mxu0
        %v7217 = vadd.f32 %v7048, %v7216
        %v7218 = vpop.f32.mrf.mxu0
        %v7219 = vadd.f32 %v7050, %v7218
        %7220 = vmatmul.bf16.gmra.mxu0 %v865
        %v7221 = vpop.f32.mrf.mxu0
        %v7222 = vadd.f32 %v7053, %v7221
        %v7223 = vpop.f32.mrf.mxu0
        %v7224 = vadd.f32 %v7055, %v7223
        %7225 = vmatmul.bf16.gmra.mxu0 %v873
        %v7226 = vpop.f32.mrf.mxu0
        %v7227 = vadd.f32 %v7058, %v7226
        %v7228 = vpop.f32.mrf.mxu0
        %v7229 = vadd.f32 %v7060, %v7228
        %7230 = vmatmul.bf16.gmra.mxu0 %v881
        %v7231 = vpop.f32.mrf.mxu0
        %v7232 = vadd.f32 %v7063, %v7231
        %v7233 = vpop.f32.mrf.mxu0
        %v7234 = vadd.f32 %v7065, %v7233
        %7235 = vmatmul.bf16.gmra.mxu0 %v889
        %v7236 = vpop.f32.mrf.mxu0
        %v7237 = vadd.f32 %v7068, %v7236
        %v7238 = vpop.f32.mrf.mxu0
        %v7239 = vadd.f32 %v7070, %v7238
        %7240 = vmatmul.bf16.gmra.mxu0 %v897
        %v7241 = vpop.f32.mrf.mxu0
        %v7242 = vadd.f32 %v7073, %v7241
        %v7243 = vpop.f32.mrf.mxu0
        %v7244 = vadd.f32 %v7075, %v7243
        %7245 = vmatmul.bf16.gmra.mxu0 %v905
        %v7246 = vpop.f32.mrf.mxu0
        %v7247 = vadd.f32 %v7078, %v7246
        %v7248 = vpop.f32.mrf.mxu0
        %v7249 = vadd.f32 %v7080, %v7248
        %7250 = vmatmul.bf16.gmra.mxu0 %v913
        %v7251 = vpop.f32.mrf.mxu0
        %v7252 = vadd.f32 %v7083, %v7251
        %v7253 = vpop.f32.mrf.mxu0
        %v7254 = vadd.f32 %v7085, %v7253
        %7255 = vmatmul.bf16.gmra.mxu0 %v921
        %v7256 = vpop.f32.mrf.mxu0
        %v7257 = vadd.f32 %v7088, %v7256
        %v7258 = vpop.f32.mrf.mxu0
        %v7259 = vadd.f32 %v7090, %v7258
        %7260 = vmatmul.bf16.gmra.mxu0 %v929
        %v7261 = vpop.f32.mrf.mxu0
        %v7262 = vadd.f32 %v7093, %v7261
        %v7263 = vpop.f32.mrf.mxu0
        %v7264 = vadd.f32 %v7095, %v7263
        %7265 = vmatmul.bf16.gmra.mxu0 %v937
        %v7266 = vpop.f32.mrf.mxu0
        %v7267 = vadd.f32 %v7098, %v7266
        %v7268 = vpop.f32.mrf.mxu0
        %v7269 = vadd.f32 %v7100, %v7268
        %7270 = vmatmul.bf16.gmra.mxu0 %v945
        %v7271 = vpop.f32.mrf.mxu0
        %v7272 = vadd.f32 %v7103, %v7271
        %v7273 = vpop.f32.mrf.mxu0
        %v7274 = vadd.f32 %v7105, %v7273
        %7275 = vmatmul.bf16.gmra.mxu0 %v953
        %v7276 = vpop.f32.mrf.mxu0
        %v7277 = vadd.f32 %v7108, %v7276
        %v7278 = vpop.f32.mrf.mxu0
        %v7279 = vadd.f32 %v7110, %v7278
        %7280 = vmatmul.bf16.gmra.mxu0 %v961
        %v7281 = vpop.f32.mrf.mxu0
        %v7282 = vadd.f32 %v7113, %v7281
        %v7283 = vpop.f32.mrf.mxu0
        %v7284 = vadd.f32 %v7115, %v7283
        %7285 = vmatmul.bf16.gmra.mxu0 %v969
        %v7286 = vpop.f32.mrf.mxu0
        %v7287 = vadd.f32 %v7118, %v7286
        %v7288 = vpop.f32.mrf.mxu0
        %v7289 = vadd.f32 %v7120, %v7288
        %7290 = vmatmul.bf16.gmra.mxu0 %v977
        %v7291 = vpop.f32.mrf.mxu0
        %v7292 = vadd.f32 %v7123, %v7291
        %v7293 = vpop.f32.mrf.mxu0
        %v7294 = vadd.f32 %v7125, %v7293
        %7295 = vmatmul.bf16.gmra.mxu0 %v985
        %v7296 = vpop.f32.mrf.mxu0
        %v7297 = vadd.f32 %v7128, %v7296
        %v7298 = vpop.f32.mrf.mxu0
        %v7299 = vadd.f32 %v7130, %v7298
        %7300 = vmatmul.bf16.gmra.mxu0 %v993
        %v7301 = vpop.f32.mrf.mxu0
        %v7302 = vadd.f32 %v7133, %v7301
        %v7303 = vpop.f32.mrf.mxu0
        %v7304 = vadd.f32 %v7135, %v7303
        %7305 = vmatmul.bf16.gmra.mxu0 %v1001
        %v7306 = vpop.f32.mrf.mxu0
        %v7307 = vadd.f32 %v7138, %v7306
        %v7308 = vpop.f32.mrf.mxu0
        %v7309 = vadd.f32 %v7140, %v7308
        %7310 = vmatmul.bf16.gmra.mxu0 %v1009
        %v7311 = vpop.f32.mrf.mxu0
        %v7312 = vadd.f32 %v7143, %v7311
        %v7313 = vpop.f32.mrf.mxu0
        %v7314 = vadd.f32 %v7145, %v7313
        %7315 = vmatmul.bf16.gmra.mxu0 %v1017
        %v7316 = vpop.f32.mrf.mxu0
        %v7317 = vadd.f32 %v7148, %v7316
        %v7318 = vpop.f32.mrf.mxu0
        %v7319 = vadd.f32 %v7150, %v7318
        %7320 = vmatmul.bf16.gmra.mxu0 %v1025
        %v7321 = vpop.f32.mrf.mxu0
        %v7322 = vadd.f32 %v7153, %v7321
        %v7323 = vpop.f32.mrf.mxu0
        %v7324 = vadd.f32 %v7155, %v7323
        %7325 = vmatmul.bf16.gmra.mxu0 %v1033
        %v7326 = vpop.f32.mrf.mxu0
        %v7327 = vadd.f32 %v7158, %v7326
        %v7328 = vpop.f32.mrf.mxu0
        %v7329 = vadd.f32 %v7160, %v7328
        %7330 = vmatmul.bf16.gmra.mxu0 %v1041
        %v7331 = vpop.f32.mrf.mxu0
        %v7332 = vadd.f32 %v7163, %v7331
        %v7333 = vpop.f32.mrf.mxu0
        %v7334 = vadd.f32 %v7165, %v7333
        %7335 = vmatmul.bf16.gmra.mxu0 %v1049
        %v7336 = vpop.f32.mrf.mxu0
        %v7337 = vadd.f32 %v7168, %v7336
        %v7338 = vpop.f32.mrf.mxu0
        %v7339 = vadd.f32 %v7170, %v7338
        %7340 = vmatmul.bf16.gmra.mxu0 %v1057
        %v7341 = vpop.f32.mrf.mxu0
        %v7342 = vadd.f32 %v7173, %v7341
        %v7343 = vpop.f32.mrf.mxu0
        %v7344 = vadd.f32 %v7175, %v7343
        %7345 = vmatmul.bf16.gmra.mxu0 %v1065
        %v7346 = vpop.f32.mrf.mxu0
        %v7347 = vadd.f32 %v7178, %v7346
        %v7348 = vpop.f32.mrf.mxu0
        %v7349 = vadd.f32 %v7180, %v7348
        %7350 = vmatmul.bf16.gmra.mxu0 %v1073
        %v7351 = vpop.f32.mrf.mxu0
        %v7352 = vadd.f32 %v7183, %v7351
        %v7353 = vpop.f32.mrf.mxu0
        %v7354 = vadd.f32 %v7185, %v7353
        %7355 = vdwg.mxu0
        %7356 = vmatpush.bf16.msra.mxu0 %v2271
        %7357 = vmatpush.bf16.msra.mxu0 %v2267
        %7358 = vmatpush.bf16.msra.mxu0 %v2263
        %7359 = vmatpush.bf16.msra.mxu0 %v2259
        %7360 = vmatpush.bf16.msra.mxu0 %v2255
        %7361 = vmatpush.bf16.msra.mxu0 %v2251
        %7362 = vmatpush.bf16.msra.mxu0 %v2247
        %7363 = vmatpush.bf16.msra.mxu0 %v2243
        %7364 = vmatmul.bf16.gmra.mxu0 %v826
        %v7365 = vpop.f32.mrf.mxu0
        %v7366 = vadd.f32 %v7197, %v7365
        %v7367 = vpop.f32.mrf.mxu0
        %v7368 = vadd.f32 %v7199, %v7367
        %7369 = vmatmul.bf16.gmra.mxu0 %v834
        %v7370 = vpop.f32.mrf.mxu0
        %v7371 = vadd.f32 %v7202, %v7370
        %v7372 = vpop.f32.mrf.mxu0
        %v7373 = vadd.f32 %v7204, %v7372
        %7374 = vmatmul.bf16.gmra.mxu0 %v842
        %v7375 = vpop.f32.mrf.mxu0
        %v7376 = vadd.f32 %v7207, %v7375
        %v7377 = vpop.f32.mrf.mxu0
        %v7378 = vadd.f32 %v7209, %v7377
        %7379 = vmatmul.bf16.gmra.mxu0 %v850
        %v7380 = vpop.f32.mrf.mxu0
        %v7381 = vadd.f32 %v7212, %v7380
        %v7382 = vpop.f32.mrf.mxu0
        %v7383 = vadd.f32 %v7214, %v7382
        %7384 = vmatmul.bf16.gmra.mxu0 %v858
        %v7385 = vpop.f32.mrf.mxu0
        %v7386 = vadd.f32 %v7217, %v7385
        %v7387 = vpop.f32.mrf.mxu0
        %v7388 = vadd.f32 %v7219, %v7387
        %7389 = vmatmul.bf16.gmra.mxu0 %v866
        %v7390 = vpop.f32.mrf.mxu0
        %v7391 = vadd.f32 %v7222, %v7390
        %v7392 = vpop.f32.mrf.mxu0
        %v7393 = vadd.f32 %v7224, %v7392
        %7394 = vmatmul.bf16.gmra.mxu0 %v874
        %v7395 = vpop.f32.mrf.mxu0
        %v7396 = vadd.f32 %v7227, %v7395
        %v7397 = vpop.f32.mrf.mxu0
        %v7398 = vadd.f32 %v7229, %v7397
        %7399 = vmatmul.bf16.gmra.mxu0 %v882
        %v7400 = vpop.f32.mrf.mxu0
        %v7401 = vadd.f32 %v7232, %v7400
        %v7402 = vpop.f32.mrf.mxu0
        %v7403 = vadd.f32 %v7234, %v7402
        %7404 = vmatmul.bf16.gmra.mxu0 %v890
        %v7405 = vpop.f32.mrf.mxu0
        %v7406 = vadd.f32 %v7237, %v7405
        %v7407 = vpop.f32.mrf.mxu0
        %v7408 = vadd.f32 %v7239, %v7407
        %7409 = vmatmul.bf16.gmra.mxu0 %v898
        %v7410 = vpop.f32.mrf.mxu0
        %v7411 = vadd.f32 %v7242, %v7410
        %v7412 = vpop.f32.mrf.mxu0
        %v7413 = vadd.f32 %v7244, %v7412
        %7414 = vmatmul.bf16.gmra.mxu0 %v906
        %v7415 = vpop.f32.mrf.mxu0
        %v7416 = vadd.f32 %v7247, %v7415
        %v7417 = vpop.f32.mrf.mxu0
        %v7418 = vadd.f32 %v7249, %v7417
        %7419 = vmatmul.bf16.gmra.mxu0 %v914
        %v7420 = vpop.f32.mrf.mxu0
        %v7421 = vadd.f32 %v7252, %v7420
        %v7422 = vpop.f32.mrf.mxu0
        %v7423 = vadd.f32 %v7254, %v7422
        %7424 = vmatmul.bf16.gmra.mxu0 %v922
        %v7425 = vpop.f32.mrf.mxu0
        %v7426 = vadd.f32 %v7257, %v7425
        %v7427 = vpop.f32.mrf.mxu0
        %v7428 = vadd.f32 %v7259, %v7427
        %7429 = vmatmul.bf16.gmra.mxu0 %v930
        %v7430 = vpop.f32.mrf.mxu0
        %v7431 = vadd.f32 %v7262, %v7430
        %v7432 = vpop.f32.mrf.mxu0
        %v7433 = vadd.f32 %v7264, %v7432
        %7434 = vmatmul.bf16.gmra.mxu0 %v938
        %v7435 = vpop.f32.mrf.mxu0
        %v7436 = vadd.f32 %v7267, %v7435
        %v7437 = vpop.f32.mrf.mxu0
        %v7438 = vadd.f32 %v7269, %v7437
        %7439 = vmatmul.bf16.gmra.mxu0 %v946
        %v7440 = vpop.f32.mrf.mxu0
        %v7441 = vadd.f32 %v7272, %v7440
        %v7442 = vpop.f32.mrf.mxu0
        %v7443 = vadd.f32 %v7274, %v7442
        %7444 = vmatmul.bf16.gmra.mxu0 %v954
        %v7445 = vpop.f32.mrf.mxu0
        %v7446 = vadd.f32 %v7277, %v7445
        %v7447 = vpop.f32.mrf.mxu0
        %v7448 = vadd.f32 %v7279, %v7447
        %7449 = vmatmul.bf16.gmra.mxu0 %v962
        %v7450 = vpop.f32.mrf.mxu0
        %v7451 = vadd.f32 %v7282, %v7450
        %v7452 = vpop.f32.mrf.mxu0
        %v7453 = vadd.f32 %v7284, %v7452
        %7454 = vmatmul.bf16.gmra.mxu0 %v970
        %v7455 = vpop.f32.mrf.mxu0
        %v7456 = vadd.f32 %v7287, %v7455
        %v7457 = vpop.f32.mrf.mxu0
        %v7458 = vadd.f32 %v7289, %v7457
        %7459 = vmatmul.bf16.gmra.mxu0 %v978
        %v7460 = vpop.f32.mrf.mxu0
        %v7461 = vadd.f32 %v7292, %v7460
        %v7462 = vpop.f32.mrf.mxu0
        %v7463 = vadd.f32 %v7294, %v7462
        %7464 = vmatmul.bf16.gmra.mxu0 %v986
        %v7465 = vpop.f32.mrf.mxu0
        %v7466 = vadd.f32 %v7297, %v7465
        %v7467 = vpop.f32.mrf.mxu0
        %v7468 = vadd.f32 %v7299, %v7467
        %7469 = vmatmul.bf16.gmra.mxu0 %v994
        %v7470 = vpop.f32.mrf.mxu0
        %v7471 = vadd.f32 %v7302, %v7470
        %v7472 = vpop.f32.mrf.mxu0
        %v7473 = vadd.f32 %v7304, %v7472
        %7474 = vmatmul.bf16.gmra.mxu0 %v1002
        %v7475 = vpop.f32.mrf.mxu0
        %v7476 = vadd.f32 %v7307, %v7475
        %v7477 = vpop.f32.mrf.mxu0
        %v7478 = vadd.f32 %v7309, %v7477
        %7479 = vmatmul.bf16.gmra.mxu0 %v1010
        %v7480 = vpop.f32.mrf.mxu0
        %v7481 = vadd.f32 %v7312, %v7480
        %v7482 = vpop.f32.mrf.mxu0
        %v7483 = vadd.f32 %v7314, %v7482
        %7484 = vmatmul.bf16.gmra.mxu0 %v1018
        %v7485 = vpop.f32.mrf.mxu0
        %v7486 = vadd.f32 %v7317, %v7485
        %v7487 = vpop.f32.mrf.mxu0
        %v7488 = vadd.f32 %v7319, %v7487
        %7489 = vmatmul.bf16.gmra.mxu0 %v1026
        %v7490 = vpop.f32.mrf.mxu0
        %v7491 = vadd.f32 %v7322, %v7490
        %v7492 = vpop.f32.mrf.mxu0
        %v7493 = vadd.f32 %v7324, %v7492
        %7494 = vmatmul.bf16.gmra.mxu0 %v1034
        %v7495 = vpop.f32.mrf.mxu0
        %v7496 = vadd.f32 %v7327, %v7495
        %v7497 = vpop.f32.mrf.mxu0
        %v7498 = vadd.f32 %v7329, %v7497
        %7499 = vmatmul.bf16.gmra.mxu0 %v1042
        %v7500 = vpop.f32.mrf.mxu0
        %v7501 = vadd.f32 %v7332, %v7500
        %v7502 = vpop.f32.mrf.mxu0
        %v7503 = vadd.f32 %v7334, %v7502
        %7504 = vmatmul.bf16.gmra.mxu0 %v1050
        %v7505 = vpop.f32.mrf.mxu0
        %v7506 = vadd.f32 %v7337, %v7505
        %v7507 = vpop.f32.mrf.mxu0
        %v7508 = vadd.f32 %v7339, %v7507
        %7509 = vmatmul.bf16.gmra.mxu0 %v1058
        %v7510 = vpop.f32.mrf.mxu0
        %v7511 = vadd.f32 %v7342, %v7510
        %v7512 = vpop.f32.mrf.mxu0
        %v7513 = vadd.f32 %v7344, %v7512
        %7514 = vmatmul.bf16.gmra.mxu0 %v1066
        %v7515 = vpop.f32.mrf.mxu0
        %v7516 = vadd.f32 %v7347, %v7515
        %v7517 = vpop.f32.mrf.mxu0
        %v7518 = vadd.f32 %v7349, %v7517
        %7519 = vmatmul.bf16.gmra.mxu0 %v1074
        %v7520 = vpop.f32.mrf.mxu0
        %v7521 = vadd.f32 %v7352, %v7520
        %v7522 = vpop.f32.mrf.mxu0
        %v7523 = vadd.f32 %v7354, %v7522
        %7524 = vdwg.mxu0
        %7525 = vmatpush.bf16.msra.mxu0 %v2303
        %7526 = vmatpush.bf16.msra.mxu0 %v2299
        %7527 = vmatpush.bf16.msra.mxu0 %v2295
        %7528 = vmatpush.bf16.msra.mxu0 %v2291
        %7529 = vmatpush.bf16.msra.mxu0 %v2287
        %7530 = vmatpush.bf16.msra.mxu0 %v2283
        %7531 = vmatpush.bf16.msra.mxu0 %v2279
        %7532 = vmatpush.bf16.msra.mxu0 %v2275
        %7533 = vmatmul.bf16.gmra.mxu0 %v827
        %v7534 = vpop.f32.mrf.mxu0
        %v7535 = vadd.f32 %v7366, %v7534
        %v7536 = vpop.f32.mrf.mxu0
        %v7537 = vadd.f32 %v7368, %v7536
        %7538 = vmatmul.bf16.gmra.mxu0 %v835
        %v7539 = vpop.f32.mrf.mxu0
        %v7540 = vadd.f32 %v7371, %v7539
        %v7541 = vpop.f32.mrf.mxu0
        %v7542 = vadd.f32 %v7373, %v7541
        %7543 = vmatmul.bf16.gmra.mxu0 %v843
        %v7544 = vpop.f32.mrf.mxu0
        %v7545 = vadd.f32 %v7376, %v7544
        %v7546 = vpop.f32.mrf.mxu0
        %v7547 = vadd.f32 %v7378, %v7546
        %7548 = vmatmul.bf16.gmra.mxu0 %v851
        %v7549 = vpop.f32.mrf.mxu0
        %v7550 = vadd.f32 %v7381, %v7549
        %v7551 = vpop.f32.mrf.mxu0
        %v7552 = vadd.f32 %v7383, %v7551
        %7553 = vmatmul.bf16.gmra.mxu0 %v859
        %v7554 = vpop.f32.mrf.mxu0
        %v7555 = vadd.f32 %v7386, %v7554
        %v7556 = vpop.f32.mrf.mxu0
        %v7557 = vadd.f32 %v7388, %v7556
        %7558 = vmatmul.bf16.gmra.mxu0 %v867
        %v7559 = vpop.f32.mrf.mxu0
        %v7560 = vadd.f32 %v7391, %v7559
        %v7561 = vpop.f32.mrf.mxu0
        %v7562 = vadd.f32 %v7393, %v7561
        %7563 = vmatmul.bf16.gmra.mxu0 %v875
        %v7564 = vpop.f32.mrf.mxu0
        %v7565 = vadd.f32 %v7396, %v7564
        %v7566 = vpop.f32.mrf.mxu0
        %v7567 = vadd.f32 %v7398, %v7566
        %7568 = vmatmul.bf16.gmra.mxu0 %v883
        %v7569 = vpop.f32.mrf.mxu0
        %v7570 = vadd.f32 %v7401, %v7569
        %v7571 = vpop.f32.mrf.mxu0
        %v7572 = vadd.f32 %v7403, %v7571
        %7573 = vmatmul.bf16.gmra.mxu0 %v891
        %v7574 = vpop.f32.mrf.mxu0
        %v7575 = vadd.f32 %v7406, %v7574
        %v7576 = vpop.f32.mrf.mxu0
        %v7577 = vadd.f32 %v7408, %v7576
        %7578 = vmatmul.bf16.gmra.mxu0 %v899
        %v7579 = vpop.f32.mrf.mxu0
        %v7580 = vadd.f32 %v7411, %v7579
        %v7581 = vpop.f32.mrf.mxu0
        %v7582 = vadd.f32 %v7413, %v7581
        %7583 = vmatmul.bf16.gmra.mxu0 %v907
        %v7584 = vpop.f32.mrf.mxu0
        %v7585 = vadd.f32 %v7416, %v7584
        %v7586 = vpop.f32.mrf.mxu0
        %v7587 = vadd.f32 %v7418, %v7586
        %7588 = vmatmul.bf16.gmra.mxu0 %v915
        %v7589 = vpop.f32.mrf.mxu0
        %v7590 = vadd.f32 %v7421, %v7589
        %v7591 = vpop.f32.mrf.mxu0
        %v7592 = vadd.f32 %v7423, %v7591
        %7593 = vmatmul.bf16.gmra.mxu0 %v923
        %v7594 = vpop.f32.mrf.mxu0
        %v7595 = vadd.f32 %v7426, %v7594
        %v7596 = vpop.f32.mrf.mxu0
        %v7597 = vadd.f32 %v7428, %v7596
        %7598 = vmatmul.bf16.gmra.mxu0 %v931
        %v7599 = vpop.f32.mrf.mxu0
        %v7600 = vadd.f32 %v7431, %v7599
        %v7601 = vpop.f32.mrf.mxu0
        %v7602 = vadd.f32 %v7433, %v7601
        %7603 = vmatmul.bf16.gmra.mxu0 %v939
        %v7604 = vpop.f32.mrf.mxu0
        %v7605 = vadd.f32 %v7436, %v7604
        %v7606 = vpop.f32.mrf.mxu0
        %v7607 = vadd.f32 %v7438, %v7606
        %7608 = vmatmul.bf16.gmra.mxu0 %v947
        %v7609 = vpop.f32.mrf.mxu0
        %v7610 = vadd.f32 %v7441, %v7609
        %v7611 = vpop.f32.mrf.mxu0
        %v7612 = vadd.f32 %v7443, %v7611
        %7613 = vmatmul.bf16.gmra.mxu0 %v955
        %v7614 = vpop.f32.mrf.mxu0
        %v7615 = vadd.f32 %v7446, %v7614
        %v7616 = vpop.f32.mrf.mxu0
        %v7617 = vadd.f32 %v7448, %v7616
        %7618 = vmatmul.bf16.gmra.mxu0 %v963
        %v7619 = vpop.f32.mrf.mxu0
        %v7620 = vadd.f32 %v7451, %v7619
        %v7621 = vpop.f32.mrf.mxu0
        %v7622 = vadd.f32 %v7453, %v7621
        %7623 = vmatmul.bf16.gmra.mxu0 %v971
        %v7624 = vpop.f32.mrf.mxu0
        %v7625 = vadd.f32 %v7456, %v7624
        %v7626 = vpop.f32.mrf.mxu0
        %v7627 = vadd.f32 %v7458, %v7626
        %7628 = vmatmul.bf16.gmra.mxu0 %v979
        %v7629 = vpop.f32.mrf.mxu0
        %v7630 = vadd.f32 %v7461, %v7629
        %v7631 = vpop.f32.mrf.mxu0
        %v7632 = vadd.f32 %v7463, %v7631
        %7633 = vmatmul.bf16.gmra.mxu0 %v987
        %v7634 = vpop.f32.mrf.mxu0
        %v7635 = vadd.f32 %v7466, %v7634
        %v7636 = vpop.f32.mrf.mxu0
        %v7637 = vadd.f32 %v7468, %v7636
        %7638 = vmatmul.bf16.gmra.mxu0 %v995
        %v7639 = vpop.f32.mrf.mxu0
        %v7640 = vadd.f32 %v7471, %v7639
        %v7641 = vpop.f32.mrf.mxu0
        %v7642 = vadd.f32 %v7473, %v7641
        %7643 = vmatmul.bf16.gmra.mxu0 %v1003
        %v7644 = vpop.f32.mrf.mxu0
        %v7645 = vadd.f32 %v7476, %v7644
        %v7646 = vpop.f32.mrf.mxu0
        %v7647 = vadd.f32 %v7478, %v7646
        %7648 = vmatmul.bf16.gmra.mxu0 %v1011
        %v7649 = vpop.f32.mrf.mxu0
        %v7650 = vadd.f32 %v7481, %v7649
        %v7651 = vpop.f32.mrf.mxu0
        %v7652 = vadd.f32 %v7483, %v7651
        %7653 = vmatmul.bf16.gmra.mxu0 %v1019
        %v7654 = vpop.f32.mrf.mxu0
        %v7655 = vadd.f32 %v7486, %v7654
        %v7656 = vpop.f32.mrf.mxu0
        %v7657 = vadd.f32 %v7488, %v7656
        %7658 = vmatmul.bf16.gmra.mxu0 %v1027
        %v7659 = vpop.f32.mrf.mxu0
        %v7660 = vadd.f32 %v7491, %v7659
        %v7661 = vpop.f32.mrf.mxu0
        %v7662 = vadd.f32 %v7493, %v7661
        %7663 = vmatmul.bf16.gmra.mxu0 %v1035
        %v7664 = vpop.f32.mrf.mxu0
        %v7665 = vadd.f32 %v7496, %v7664
        %v7666 = vpop.f32.mrf.mxu0
        %v7667 = vadd.f32 %v7498, %v7666
        %7668 = vmatmul.bf16.gmra.mxu0 %v1043
        %v7669 = vpop.f32.mrf.mxu0
        %v7670 = vadd.f32 %v7501, %v7669
        %v7671 = vpop.f32.mrf.mxu0
        %v7672 = vadd.f32 %v7503, %v7671
        %7673 = vmatmul.bf16.gmra.mxu0 %v1051
        %v7674 = vpop.f32.mrf.mxu0
        %v7675 = vadd.f32 %v7506, %v7674
        %v7676 = vpop.f32.mrf.mxu0
        %v7677 = vadd.f32 %v7508, %v7676
        %7678 = vmatmul.bf16.gmra.mxu0 %v1059
        %v7679 = vpop.f32.mrf.mxu0
        %v7680 = vadd.f32 %v7511, %v7679
        %v7681 = vpop.f32.mrf.mxu0
        %v7682 = vadd.f32 %v7513, %v7681
        %7683 = vmatmul.bf16.gmra.mxu0 %v1067
        %v7684 = vpop.f32.mrf.mxu0
        %v7685 = vadd.f32 %v7516, %v7684
        %v7686 = vpop.f32.mrf.mxu0
        %v7687 = vadd.f32 %v7518, %v7686
        %7688 = vmatmul.bf16.gmra.mxu0 %v1075
        %v7689 = vpop.f32.mrf.mxu0
        %v7690 = vadd.f32 %v7521, %v7689
        %v7691 = vpop.f32.mrf.mxu0
        %v7692 = vadd.f32 %v7523, %v7691
        %7693 = vdwg.mxu0
        %7694 = vmatpush.bf16.msra.mxu0 %v2335
        %7695 = vmatpush.bf16.msra.mxu0 %v2331
        %7696 = vmatpush.bf16.msra.mxu0 %v2327
        %7697 = vmatpush.bf16.msra.mxu0 %v2323
        %7698 = vmatpush.bf16.msra.mxu0 %v2319
        %7699 = vmatpush.bf16.msra.mxu0 %v2315
        %7700 = vmatpush.bf16.msra.mxu0 %v2311
        %7701 = vmatpush.bf16.msra.mxu0 %v2307
        %7702 = vmatmul.bf16.gmra.mxu0 %v828
        %v7703 = vpop.f32.mrf.mxu0
        %v7704 = vadd.f32 %v7535, %v7703
        %v7705 = vpop.f32.mrf.mxu0
        %v7706 = vadd.f32 %v7537, %v7705
        %7707 = vmatmul.bf16.gmra.mxu0 %v836
        %v7708 = vpop.f32.mrf.mxu0
        %v7709 = vadd.f32 %v7540, %v7708
        %v7710 = vpop.f32.mrf.mxu0
        %v7711 = vadd.f32 %v7542, %v7710
        %7712 = vmatmul.bf16.gmra.mxu0 %v844
        %v7713 = vpop.f32.mrf.mxu0
        %v7714 = vadd.f32 %v7545, %v7713
        %v7715 = vpop.f32.mrf.mxu0
        %v7716 = vadd.f32 %v7547, %v7715
        %7717 = vmatmul.bf16.gmra.mxu0 %v852
        %v7718 = vpop.f32.mrf.mxu0
        %v7719 = vadd.f32 %v7550, %v7718
        %v7720 = vpop.f32.mrf.mxu0
        %v7721 = vadd.f32 %v7552, %v7720
        %7722 = vmatmul.bf16.gmra.mxu0 %v860
        %v7723 = vpop.f32.mrf.mxu0
        %v7724 = vadd.f32 %v7555, %v7723
        %v7725 = vpop.f32.mrf.mxu0
        %v7726 = vadd.f32 %v7557, %v7725
        %7727 = vmatmul.bf16.gmra.mxu0 %v868
        %v7728 = vpop.f32.mrf.mxu0
        %v7729 = vadd.f32 %v7560, %v7728
        %v7730 = vpop.f32.mrf.mxu0
        %v7731 = vadd.f32 %v7562, %v7730
        %7732 = vmatmul.bf16.gmra.mxu0 %v876
        %v7733 = vpop.f32.mrf.mxu0
        %v7734 = vadd.f32 %v7565, %v7733
        %v7735 = vpop.f32.mrf.mxu0
        %v7736 = vadd.f32 %v7567, %v7735
        %7737 = vmatmul.bf16.gmra.mxu0 %v884
        %v7738 = vpop.f32.mrf.mxu0
        %v7739 = vadd.f32 %v7570, %v7738
        %v7740 = vpop.f32.mrf.mxu0
        %v7741 = vadd.f32 %v7572, %v7740
        %7742 = vmatmul.bf16.gmra.mxu0 %v892
        %v7743 = vpop.f32.mrf.mxu0
        %v7744 = vadd.f32 %v7575, %v7743
        %v7745 = vpop.f32.mrf.mxu0
        %v7746 = vadd.f32 %v7577, %v7745
        %7747 = vmatmul.bf16.gmra.mxu0 %v900
        %v7748 = vpop.f32.mrf.mxu0
        %v7749 = vadd.f32 %v7580, %v7748
        %v7750 = vpop.f32.mrf.mxu0
        %v7751 = vadd.f32 %v7582, %v7750
        %7752 = vmatmul.bf16.gmra.mxu0 %v908
        %v7753 = vpop.f32.mrf.mxu0
        %v7754 = vadd.f32 %v7585, %v7753
        %v7755 = vpop.f32.mrf.mxu0
        %v7756 = vadd.f32 %v7587, %v7755
        %7757 = vmatmul.bf16.gmra.mxu0 %v916
        %v7758 = vpop.f32.mrf.mxu0
        %v7759 = vadd.f32 %v7590, %v7758
        %v7760 = vpop.f32.mrf.mxu0
        %v7761 = vadd.f32 %v7592, %v7760
        %7762 = vmatmul.bf16.gmra.mxu0 %v924
        %v7763 = vpop.f32.mrf.mxu0
        %v7764 = vadd.f32 %v7595, %v7763
        %v7765 = vpop.f32.mrf.mxu0
        %v7766 = vadd.f32 %v7597, %v7765
        %7767 = vmatmul.bf16.gmra.mxu0 %v932
        %v7768 = vpop.f32.mrf.mxu0
        %v7769 = vadd.f32 %v7600, %v7768
        %v7770 = vpop.f32.mrf.mxu0
        %v7771 = vadd.f32 %v7602, %v7770
        %7772 = vmatmul.bf16.gmra.mxu0 %v940
        %v7773 = vpop.f32.mrf.mxu0
        %v7774 = vadd.f32 %v7605, %v7773
        %v7775 = vpop.f32.mrf.mxu0
        %v7776 = vadd.f32 %v7607, %v7775
        %7777 = vmatmul.bf16.gmra.mxu0 %v948
        %v7778 = vpop.f32.mrf.mxu0
        %v7779 = vadd.f32 %v7610, %v7778
        %v7780 = vpop.f32.mrf.mxu0
        %v7781 = vadd.f32 %v7612, %v7780
        %7782 = vmatmul.bf16.gmra.mxu0 %v956
        %v7783 = vpop.f32.mrf.mxu0
        %v7784 = vadd.f32 %v7615, %v7783
        %v7785 = vpop.f32.mrf.mxu0
        %v7786 = vadd.f32 %v7617, %v7785
        %7787 = vmatmul.bf16.gmra.mxu0 %v964
        %v7788 = vpop.f32.mrf.mxu0
        %v7789 = vadd.f32 %v7620, %v7788
        %v7790 = vpop.f32.mrf.mxu0
        %v7791 = vadd.f32 %v7622, %v7790
        %7792 = vmatmul.bf16.gmra.mxu0 %v972
        %v7793 = vpop.f32.mrf.mxu0
        %v7794 = vadd.f32 %v7625, %v7793
        %v7795 = vpop.f32.mrf.mxu0
        %v7796 = vadd.f32 %v7627, %v7795
        %7797 = vmatmul.bf16.gmra.mxu0 %v980
        %v7798 = vpop.f32.mrf.mxu0
        %v7799 = vadd.f32 %v7630, %v7798
        %v7800 = vpop.f32.mrf.mxu0
        %v7801 = vadd.f32 %v7632, %v7800
        %7802 = vmatmul.bf16.gmra.mxu0 %v988
        %v7803 = vpop.f32.mrf.mxu0
        %v7804 = vadd.f32 %v7635, %v7803
        %v7805 = vpop.f32.mrf.mxu0
        %v7806 = vadd.f32 %v7637, %v7805
        %7807 = vmatmul.bf16.gmra.mxu0 %v996
        %v7808 = vpop.f32.mrf.mxu0
        %v7809 = vadd.f32 %v7640, %v7808
        %v7810 = vpop.f32.mrf.mxu0
        %v7811 = vadd.f32 %v7642, %v7810
        %7812 = vmatmul.bf16.gmra.mxu0 %v1004
        %v7813 = vpop.f32.mrf.mxu0
        %v7814 = vadd.f32 %v7645, %v7813
        %v7815 = vpop.f32.mrf.mxu0
        %v7816 = vadd.f32 %v7647, %v7815
        %7817 = vmatmul.bf16.gmra.mxu0 %v1012
        %v7818 = vpop.f32.mrf.mxu0
        %v7819 = vadd.f32 %v7650, %v7818
        %v7820 = vpop.f32.mrf.mxu0
        %v7821 = vadd.f32 %v7652, %v7820
        %7822 = vmatmul.bf16.gmra.mxu0 %v1020
        %v7823 = vpop.f32.mrf.mxu0
        %v7824 = vadd.f32 %v7655, %v7823
        %v7825 = vpop.f32.mrf.mxu0
        %v7826 = vadd.f32 %v7657, %v7825
        %7827 = vmatmul.bf16.gmra.mxu0 %v1028
        %v7828 = vpop.f32.mrf.mxu0
        %v7829 = vadd.f32 %v7660, %v7828
        %v7830 = vpop.f32.mrf.mxu0
        %v7831 = vadd.f32 %v7662, %v7830
        %7832 = vmatmul.bf16.gmra.mxu0 %v1036
        %v7833 = vpop.f32.mrf.mxu0
        %v7834 = vadd.f32 %v7665, %v7833
        %v7835 = vpop.f32.mrf.mxu0
        %v7836 = vadd.f32 %v7667, %v7835
        %7837 = vmatmul.bf16.gmra.mxu0 %v1044
        %v7838 = vpop.f32.mrf.mxu0
        %v7839 = vadd.f32 %v7670, %v7838
        %v7840 = vpop.f32.mrf.mxu0
        %v7841 = vadd.f32 %v7672, %v7840
        %7842 = vmatmul.bf16.gmra.mxu0 %v1052
        %v7843 = vpop.f32.mrf.mxu0
        %v7844 = vadd.f32 %v7675, %v7843
        %v7845 = vpop.f32.mrf.mxu0
        %v7846 = vadd.f32 %v7677, %v7845
        %7847 = vmatmul.bf16.gmra.mxu0 %v1060
        %v7848 = vpop.f32.mrf.mxu0
        %v7849 = vadd.f32 %v7680, %v7848
        %v7850 = vpop.f32.mrf.mxu0
        %v7851 = vadd.f32 %v7682, %v7850
        %7852 = vmatmul.bf16.gmra.mxu0 %v1068
        %v7853 = vpop.f32.mrf.mxu0
        %v7854 = vadd.f32 %v7685, %v7853
        %v7855 = vpop.f32.mrf.mxu0
        %v7856 = vadd.f32 %v7687, %v7855
        %7857 = vmatmul.bf16.gmra.mxu0 %v1076
        %v7858 = vpop.f32.mrf.mxu0
        %v7859 = vadd.f32 %v7690, %v7858
        %v7860 = vpop.f32.mrf.mxu0
        %v7861 = vadd.f32 %v7692, %v7860
        %7862 = vdwg.mxu0
        %7863 = vmatpush.bf16.msra.mxu0 %v2367
        %7864 = vmatpush.bf16.msra.mxu0 %v2363
        %7865 = vmatpush.bf16.msra.mxu0 %v2359
        %7866 = vmatpush.bf16.msra.mxu0 %v2355
        %7867 = vmatpush.bf16.msra.mxu0 %v2351
        %7868 = vmatpush.bf16.msra.mxu0 %v2347
        %7869 = vmatpush.bf16.msra.mxu0 %v2343
        %7870 = vmatpush.bf16.msra.mxu0 %v2339
        %7871 = vmatmul.bf16.gmra.mxu0 %v829
        %v7872 = vpop.f32.mrf.mxu0
        %v7873 = vadd.f32 %v7704, %v7872
        %v7874 = vpop.f32.mrf.mxu0
        %v7875 = vadd.f32 %v7706, %v7874
        %7876 = vmatmul.bf16.gmra.mxu0 %v837
        %v7877 = vpop.f32.mrf.mxu0
        %v7878 = vadd.f32 %v7709, %v7877
        %v7879 = vpop.f32.mrf.mxu0
        %v7880 = vadd.f32 %v7711, %v7879
        %7881 = vmatmul.bf16.gmra.mxu0 %v845
        %v7882 = vpop.f32.mrf.mxu0
        %v7883 = vadd.f32 %v7714, %v7882
        %v7884 = vpop.f32.mrf.mxu0
        %v7885 = vadd.f32 %v7716, %v7884
        %7886 = vmatmul.bf16.gmra.mxu0 %v853
        %v7887 = vpop.f32.mrf.mxu0
        %v7888 = vadd.f32 %v7719, %v7887
        %v7889 = vpop.f32.mrf.mxu0
        %v7890 = vadd.f32 %v7721, %v7889
        %7891 = vmatmul.bf16.gmra.mxu0 %v861
        %v7892 = vpop.f32.mrf.mxu0
        %v7893 = vadd.f32 %v7724, %v7892
        %v7894 = vpop.f32.mrf.mxu0
        %v7895 = vadd.f32 %v7726, %v7894
        %7896 = vmatmul.bf16.gmra.mxu0 %v869
        %v7897 = vpop.f32.mrf.mxu0
        %v7898 = vadd.f32 %v7729, %v7897
        %v7899 = vpop.f32.mrf.mxu0
        %v7900 = vadd.f32 %v7731, %v7899
        %7901 = vmatmul.bf16.gmra.mxu0 %v877
        %v7902 = vpop.f32.mrf.mxu0
        %v7903 = vadd.f32 %v7734, %v7902
        %v7904 = vpop.f32.mrf.mxu0
        %v7905 = vadd.f32 %v7736, %v7904
        %7906 = vmatmul.bf16.gmra.mxu0 %v885
        %v7907 = vpop.f32.mrf.mxu0
        %v7908 = vadd.f32 %v7739, %v7907
        %v7909 = vpop.f32.mrf.mxu0
        %v7910 = vadd.f32 %v7741, %v7909
        %7911 = vmatmul.bf16.gmra.mxu0 %v893
        %v7912 = vpop.f32.mrf.mxu0
        %v7913 = vadd.f32 %v7744, %v7912
        %v7914 = vpop.f32.mrf.mxu0
        %v7915 = vadd.f32 %v7746, %v7914
        %7916 = vmatmul.bf16.gmra.mxu0 %v901
        %v7917 = vpop.f32.mrf.mxu0
        %v7918 = vadd.f32 %v7749, %v7917
        %v7919 = vpop.f32.mrf.mxu0
        %v7920 = vadd.f32 %v7751, %v7919
        %7921 = vmatmul.bf16.gmra.mxu0 %v909
        %v7922 = vpop.f32.mrf.mxu0
        %v7923 = vadd.f32 %v7754, %v7922
        %v7924 = vpop.f32.mrf.mxu0
        %v7925 = vadd.f32 %v7756, %v7924
        %7926 = vmatmul.bf16.gmra.mxu0 %v917
        %v7927 = vpop.f32.mrf.mxu0
        %v7928 = vadd.f32 %v7759, %v7927
        %v7929 = vpop.f32.mrf.mxu0
        %v7930 = vadd.f32 %v7761, %v7929
        %7931 = vmatmul.bf16.gmra.mxu0 %v925
        %v7932 = vpop.f32.mrf.mxu0
        %v7933 = vadd.f32 %v7764, %v7932
        %v7934 = vpop.f32.mrf.mxu0
        %v7935 = vadd.f32 %v7766, %v7934
        %7936 = vmatmul.bf16.gmra.mxu0 %v933
        %v7937 = vpop.f32.mrf.mxu0
        %v7938 = vadd.f32 %v7769, %v7937
        %v7939 = vpop.f32.mrf.mxu0
        %v7940 = vadd.f32 %v7771, %v7939
        %7941 = vmatmul.bf16.gmra.mxu0 %v941
        %v7942 = vpop.f32.mrf.mxu0
        %v7943 = vadd.f32 %v7774, %v7942
        %v7944 = vpop.f32.mrf.mxu0
        %v7945 = vadd.f32 %v7776, %v7944
        %7946 = vmatmul.bf16.gmra.mxu0 %v949
        %v7947 = vpop.f32.mrf.mxu0
        %v7948 = vadd.f32 %v7779, %v7947
        %v7949 = vpop.f32.mrf.mxu0
        %v7950 = vadd.f32 %v7781, %v7949
        %7951 = vmatmul.bf16.gmra.mxu0 %v957
        %v7952 = vpop.f32.mrf.mxu0
        %v7953 = vadd.f32 %v7784, %v7952
        %v7954 = vpop.f32.mrf.mxu0
        %v7955 = vadd.f32 %v7786, %v7954
        %7956 = vmatmul.bf16.gmra.mxu0 %v965
        %v7957 = vpop.f32.mrf.mxu0
        %v7958 = vadd.f32 %v7789, %v7957
        %v7959 = vpop.f32.mrf.mxu0
        %v7960 = vadd.f32 %v7791, %v7959
        %7961 = vmatmul.bf16.gmra.mxu0 %v973
        %v7962 = vpop.f32.mrf.mxu0
        %v7963 = vadd.f32 %v7794, %v7962
        %v7964 = vpop.f32.mrf.mxu0
        %v7965 = vadd.f32 %v7796, %v7964
        %7966 = vmatmul.bf16.gmra.mxu0 %v981
        %v7967 = vpop.f32.mrf.mxu0
        %v7968 = vadd.f32 %v7799, %v7967
        %v7969 = vpop.f32.mrf.mxu0
        %v7970 = vadd.f32 %v7801, %v7969
        %7971 = vmatmul.bf16.gmra.mxu0 %v989
        %v7972 = vpop.f32.mrf.mxu0
        %v7973 = vadd.f32 %v7804, %v7972
        %v7974 = vpop.f32.mrf.mxu0
        %v7975 = vadd.f32 %v7806, %v7974
        %7976 = vmatmul.bf16.gmra.mxu0 %v997
        %v7977 = vpop.f32.mrf.mxu0
        %v7978 = vadd.f32 %v7809, %v7977
        %v7979 = vpop.f32.mrf.mxu0
        %v7980 = vadd.f32 %v7811, %v7979
        %7981 = vmatmul.bf16.gmra.mxu0 %v1005
        %v7982 = vpop.f32.mrf.mxu0
        %v7983 = vadd.f32 %v7814, %v7982
        %v7984 = vpop.f32.mrf.mxu0
        %v7985 = vadd.f32 %v7816, %v7984
        %7986 = vmatmul.bf16.gmra.mxu0 %v1013
        %v7987 = vpop.f32.mrf.mxu0
        %v7988 = vadd.f32 %v7819, %v7987
        %v7989 = vpop.f32.mrf.mxu0
        %v7990 = vadd.f32 %v7821, %v7989
        %7991 = vmatmul.bf16.gmra.mxu0 %v1021
        %v7992 = vpop.f32.mrf.mxu0
        %v7993 = vadd.f32 %v7824, %v7992
        %v7994 = vpop.f32.mrf.mxu0
        %v7995 = vadd.f32 %v7826, %v7994
        %7996 = vmatmul.bf16.gmra.mxu0 %v1029
        %v7997 = vpop.f32.mrf.mxu0
        %v7998 = vadd.f32 %v7829, %v7997
        %v7999 = vpop.f32.mrf.mxu0
        %v8000 = vadd.f32 %v7831, %v7999
        %8001 = vmatmul.bf16.gmra.mxu0 %v1037
        %v8002 = vpop.f32.mrf.mxu0
        %v8003 = vadd.f32 %v7834, %v8002
        %v8004 = vpop.f32.mrf.mxu0
        %v8005 = vadd.f32 %v7836, %v8004
        %8006 = vmatmul.bf16.gmra.mxu0 %v1045
        %v8007 = vpop.f32.mrf.mxu0
        %v8008 = vadd.f32 %v7839, %v8007
        %v8009 = vpop.f32.mrf.mxu0
        %v8010 = vadd.f32 %v7841, %v8009
        %8011 = vmatmul.bf16.gmra.mxu0 %v1053
        %v8012 = vpop.f32.mrf.mxu0
        %v8013 = vadd.f32 %v7844, %v8012
        %v8014 = vpop.f32.mrf.mxu0
        %v8015 = vadd.f32 %v7846, %v8014
        %8016 = vmatmul.bf16.gmra.mxu0 %v1061
        %v8017 = vpop.f32.mrf.mxu0
        %v8018 = vadd.f32 %v7849, %v8017
        %v8019 = vpop.f32.mrf.mxu0
        %v8020 = vadd.f32 %v7851, %v8019
        %8021 = vmatmul.bf16.gmra.mxu0 %v1069
        %v8022 = vpop.f32.mrf.mxu0
        %v8023 = vadd.f32 %v7854, %v8022
        %v8024 = vpop.f32.mrf.mxu0
        %v8025 = vadd.f32 %v7856, %v8024
        %8026 = vmatmul.bf16.gmra.mxu0 %v1077
        %v8027 = vpop.f32.mrf.mxu0
        %v8028 = vadd.f32 %v7859, %v8027
        %v8029 = vpop.f32.mrf.mxu0
        %v8030 = vadd.f32 %v7861, %v8029
        %8031 = vdwg.mxu0
        %v8032 = vtanh.pop %v3817
        %v8033 = vtanh.pop %v5169
        %v8034 = vtanh.pop %v3819
        %v8035 = vtanh.pop %v5171
        %v8036 = vtanh.pop %v3822
        %v8037 = vtanh.pop %v5174
        %v8038 = vtanh.pop %v3824
        %v8039 = vtanh.pop %v5176
        %v8040 = vtanh.pop %v3827
        %v8041 = vtanh.pop %v5179
        %v8042 = vtanh.pop %v3829
        %v8043 = vtanh.pop %v5181
        %v8044 = vtanh.pop %v3832
        %v8045 = vtanh.pop %v5184
        %v8046 = vtanh.pop %v3834
        %v8047 = vtanh.pop %v5186
        %v8048 = vtanh.pop %v3837
        %v8049 = vtanh.pop %v5189
        %v8050 = vtanh.pop %v3839
        %v8051 = vtanh.pop %v5191
        %v8052 = vtanh.pop %v3842
        %v8053 = vtanh.pop %v5194
        %v8054 = vtanh.pop %v3844
        %v8055 = vtanh.pop %v5196
        %v8056 = vtanh.pop %v3847
        %v8057 = vtanh.pop %v5199
        %v8058 = vtanh.pop %v3849
        %v8059 = vtanh.pop %v5201
        %v8060 = vtanh.pop %v3852
        %v8061 = vtanh.pop %v5204
        %v8062 = vtanh.pop %v3854
        %v8063 = vtanh.pop %v5206
        %v8064 = vtanh.pop %v3857
        %v8065 = vtanh.pop %v5209
        %v8066 = vtanh.pop %v3859
        %v8067 = vtanh.pop %v5211
        %v8068 = vtanh.pop %v3862
        %v8069 = vtanh.pop %v5214
        %v8070 = vtanh.pop %v3864
        %v8071 = vtanh.pop %v5216
        %v8072 = vtanh.pop %v3867
        %v8073 = vtanh.pop %v5219
        %v8074 = vtanh.pop %v3869
        %v8075 = vtanh.pop %v5221
        %v8076 = vtanh.pop %v3872
        %v8077 = vtanh.pop %v5224
        %v8078 = vtanh.pop %v3874
        %v8079 = vtanh.pop %v5226
        %v8080 = vtanh.pop %v3877
        %v8081 = vtanh.pop %v5229
        %v8082 = vtanh.pop %v3879
        %v8083 = vtanh.pop %v5231
        %v8084 = vtanh.pop %v3882
        %v8085 = vtanh.pop %v5234
        %v8086 = vtanh.pop %v3884
        %v8087 = vtanh.pop %v5236
        %v8088 = vtanh.pop %v3887
        %v8089 = vtanh.pop %v5239
        %v8090 = vtanh.pop %v3889
        %v8091 = vtanh.pop %v5241
        %v8092 = vtanh.pop %v3892
        %v8093 = vtanh.pop %v5244
        %v8094 = vtanh.pop %v3894
        %v8095 = vtanh.pop %v5246
        %v8096 = vtanh.pop %v3897
        %v8097 = vtanh.pop %v5249
        %v8098 = vtanh.pop %v3899
        %v8099 = vtanh.pop %v5251
        %v8100 = vtanh.pop %v3902
        %v8101 = vtanh.pop %v5254
        %v8102 = vtanh.pop %v3904
        %v8103 = vtanh.pop %v5256
        %v8104 = vtanh.pop %v3907
        %v8105 = vtanh.pop %v5259
        %v8106 = vtanh.pop %v3909
        %v8107 = vtanh.pop %v5261
        %v8108 = vtanh.pop %v3912
        %v8109 = vtanh.pop %v5264
        %v8110 = vtanh.pop %v3914
        %v8111 = vtanh.pop %v5266
        %v8112 = vtanh.pop %v3917
        %v8113 = vtanh.pop %v5269
        %v8114 = vtanh.pop %v3919
        %v8115 = vtanh.pop %v5271
        %v8116 = vtanh.pop %v3922
        %v8117 = vtanh.pop %v5274
        %v8118 = vtanh.pop %v3924
        %v8119 = vtanh.pop %v5276
        %v8120 = vtanh.pop %v3927
        %v8121 = vtanh.pop %v5279
        %v8122 = vtanh.pop %v3929
        %v8123 = vtanh.pop %v5281
        %v8124 = vtanh.pop %v3932
        %v8125 = vtanh.pop %v5284
        %v8126 = vtanh.pop %v3934
        %v8127 = vtanh.pop %v5286
        %v8128 = vtanh.pop %v3937
        %v8129 = vtanh.pop %v5289
        %v8130 = vtanh.pop %v3939
        %v8131 = vtanh.pop %v5291
        %v8132 = vtanh.pop %v3942
        %v8133 = vtanh.pop %v5294
        %v8134 = vtanh.pop %v3944
        %v8135 = vtanh.pop %v5296
        %v8136 = vtanh.pop %v3947
        %v8137 = vtanh.pop %v5299
        %v8138 = vtanh.pop %v3949
        %v8139 = vtanh.pop %v5301
        %v8140 = vtanh.pop %v3952
        %v8141 = vtanh.pop %v5304
        %v8142 = vtanh.pop %v3954
        %v8143 = vtanh.pop %v5306
        %v8144 = vtanh.pop %v3957
        %v8145 = vtanh.pop %v5309
        %v8146 = vtanh.pop %v3959
        %v8147 = vtanh.pop %v5311
        %v8148 = vtanh.pop %v3962
        %v8149 = vtanh.pop %v5314
        %v8150 = vtanh.pop %v3964
        %v8151 = vtanh.pop %v5316
        %v8152 = vtanh.pop %v3967
        %v8153 = vtanh.pop %v5319
        %v8154 = vtanh.pop %v3969
        %v8155 = vtanh.pop %v5321
        %v8156 = vtanh.pop %v3972
        %v8157 = vtanh.pop %v5324
        %v8158 = vtanh.pop %v3974
        %v8159 = vtanh.pop %v5326
        %v8160 = vmul.f32 %v6521, 0.5
        %v8161 = vmul.f32 %v7873, 0.5
        %v8162 = vmul.f32 %v6523, 0.5
        %v8163 = vmul.f32 %v7875, 0.5
        %v8164 = vmul.f32 %v6526, 0.5
        %v8165 = vmul.f32 %v7878, 0.5
        %v8166 = vmul.f32 %v6528, 0.5
        %v8167 = vmul.f32 %v7880, 0.5
        %v8168 = vmul.f32 %v6531, 0.5
        %v8169 = vmul.f32 %v7883, 0.5
        %v8170 = vmul.f32 %v6533, 0.5
        %v8171 = vmul.f32 %v7885, 0.5
        %v8172 = vmul.f32 %v6536, 0.5
        %v8173 = vmul.f32 %v7888, 0.5
        %v8174 = vmul.f32 %v6538, 0.5
        %v8175 = vmul.f32 %v7890, 0.5
        %v8176 = vmul.f32 %v6541, 0.5
        %v8177 = vmul.f32 %v7893, 0.5
        %v8178 = vmul.f32 %v6543, 0.5
        %v8179 = vmul.f32 %v7895, 0.5
        %v8180 = vmul.f32 %v6546, 0.5
        %v8181 = vmul.f32 %v7898, 0.5
        %v8182 = vmul.f32 %v6548, 0.5
        %v8183 = vmul.f32 %v7900, 0.5
        %v8184 = vmul.f32 %v6551, 0.5
        %v8185 = vmul.f32 %v7903, 0.5
        %v8186 = vmul.f32 %v6553, 0.5
        %v8187 = vmul.f32 %v7905, 0.5
        %v8188 = vmul.f32 %v6556, 0.5
        %v8189 = vmul.f32 %v7908, 0.5
        %v8190 = vmul.f32 %v6558, 0.5
        %v8191 = vmul.f32 %v7910, 0.5
        %v8192 = vmul.f32 %v6561, 0.5
        %v8193 = vmul.f32 %v7913, 0.5
        %v8194 = vmul.f32 %v6563, 0.5
        %v8195 = vmul.f32 %v7915, 0.5
        %v8196 = vmul.f32 %v6566, 0.5
        %v8197 = vmul.f32 %v7918, 0.5
        %v8198 = vmul.f32 %v6568, 0.5
        %v8199 = vmul.f32 %v7920, 0.5
        %v8200 = vmul.f32 %v6571, 0.5
        %v8201 = vmul.f32 %v7923, 0.5
        %v8202 = vmul.f32 %v6573, 0.5
        %v8203 = vmul.f32 %v7925, 0.5
        %v8204 = vmul.f32 %v6576, 0.5
        %v8205 = vmul.f32 %v7928, 0.5
        %v8206 = vmul.f32 %v6578, 0.5
        %v8207 = vmul.f32 %v7930, 0.5
        %v8208 = vmul.f32 %v6581, 0.5
        %v8209 = vmul.f32 %v7933, 0.5
        %v8210 = vmul.f32 %v6583, 0.5
        %v8211 = vmul.f32 %v7935, 0.5
        %v8212 = vmul.f32 %v6586, 0.5
        %v8213 = vmul.f32 %v7938, 0.5
        %v8214 = vmul.f32 %v6588, 0.5
        %v8215 = vmul.f32 %v7940, 0.5
        %v8216 = vmul.f32 %v6591, 0.5
        %v8217 = vmul.f32 %v7943, 0.5
        %v8218 = vmul.f32 %v6593, 0.5
        %v8219 = vmul.f32 %v7945, 0.5
        %v8220 = vmul.f32 %v6596, 0.5
        %v8221 = vmul.f32 %v7948, 0.5
        %v8222 = vmul.f32 %v6598, 0.5
        %v8223 = vmul.f32 %v7950, 0.5
        %v8224 = vmul.f32 %v6601, 0.5
        %v8225 = vmul.f32 %v7953, 0.5
        %v8226 = vmul.f32 %v6603, 0.5
        %v8227 = vmul.f32 %v7955, 0.5
        %v8228 = vmul.f32 %v6606, 0.5
        %v8229 = vmul.f32 %v7958, 0.5
        %v8230 = vmul.f32 %v6608, 0.5
        %v8231 = vmul.f32 %v7960, 0.5
        %v8232 = vmul.f32 %v6611, 0.5
        %v8233 = vmul.f32 %v7963, 0.5
        %v8234 = vmul.f32 %v6613, 0.5
        %v8235 = vmul.f32 %v7965, 0.5
        %v8236 = vmul.f32 %v6616, 0.5
        %v8237 = vmul.f32 %v7968, 0.5
        %v8238 = vmul.f32 %v6618, 0.5
        %v8239 = vmul.f32 %v7970, 0.5
        %v8240 = vmul.f32 %v6621, 0.5
        %v8241 = vmul.f32 %v7973, 0.5
        %v8242 = vmul.f32 %v6623, 0.5
        %v8243 = vmul.f32 %v7975, 0.5
        %v8244 = vmul.f32 %v6626, 0.5
        %v8245 = vmul.f32 %v7978, 0.5
        %v8246 = vmul.f32 %v6628, 0.5
        %v8247 = vmul.f32 %v7980, 0.5
        %v8248 = vmul.f32 %v6631, 0.5
        %v8249 = vmul.f32 %v7983, 0.5
        %v8250 = vmul.f32 %v6633, 0.5
        %v8251 = vmul.f32 %v7985, 0.5
        %v8252 = vmul.f32 %v6636, 0.5
        %v8253 = vmul.f32 %v7988, 0.5
        %v8254 = vmul.f32 %v6638, 0.5
        %v8255 = vmul.f32 %v7990, 0.5
        %v8256 = vmul.f32 %v6641, 0.5
        %v8257 = vmul.f32 %v7993, 0.5
        %v8258 = vmul.f32 %v6643, 0.5
        %v8259 = vmul.f32 %v7995, 0.5
        %v8260 = vmul.f32 %v6646, 0.5
        %v8261 = vmul.f32 %v7998, 0.5
        %v8262 = vmul.f32 %v6648, 0.5
        %v8263 = vmul.f32 %v8000, 0.5
        %v8264 = vmul.f32 %v6651, 0.5
        %v8265 = vmul.f32 %v8003, 0.5
        %v8266 = vmul.f32 %v6653, 0.5
        %v8267 = vmul.f32 %v8005, 0.5
        %v8268 = vmul.f32 %v6656, 0.5
        %v8269 = vmul.f32 %v8008, 0.5
        %v8270 = vmul.f32 %v6658, 0.5
        %v8271 = vmul.f32 %v8010, 0.5
        %v8272 = vmul.f32 %v6661, 0.5
        %v8273 = vmul.f32 %v8013, 0.5
        %v8274 = vmul.f32 %v6663, 0.5
        %v8275 = vmul.f32 %v8015, 0.5
        %v8276 = vmul.f32 %v6666, 0.5
        %v8277 = vmul.f32 %v8018, 0.5
        %v8278 = vmul.f32 %v6668, 0.5
        %v8279 = vmul.f32 %v8020, 0.5
        %v8280 = vmul.f32 %v6671, 0.5
        %v8281 = vmul.f32 %v8023, 0.5
        %v8282 = vmul.f32 %v6673, 0.5
        %v8283 = vmul.f32 %v8025, 0.5
        %v8284 = vmul.f32 %v6676, 0.5
        %v8285 = vmul.f32 %v8028, 0.5
        %v8286 = vmul.f32 %v6678, 0.5
        %v8287 = vmul.f32 %v8030, 0.5
        %v8288 = vtanh.pop %v8160
        %v8289 = vtanh.pop %v8161
        %v8290 = vtanh.pop %v8162
        %v8291 = vtanh.pop %v8163
        %v8292 = vtanh.pop %v8164
        %v8293 = vtanh.pop %v8165
        %v8294 = vtanh.pop %v8166
        %v8295 = vtanh.pop %v8167
        %v8296 = vtanh.pop %v8168
        %v8297 = vtanh.pop %v8169
        %v8298 = vtanh.pop %v8170
        %v8299 = vtanh.pop %v8171
        %v8300 = vtanh.pop %v8172
        %v8301 = vtanh.pop %v8173
        %v8302 = vtanh.pop %v8174
        %v8303 = vtanh.pop %v8175
        %v8304 = vtanh.pop %v8176
        %v8305 = vtanh.pop %v8177
        %v8306 = vtanh.pop %v8178
        %v8307 = vtanh.pop %v8179
        %v8308 = vtanh.pop %v8180
        %v8309 = vtanh.pop %v8181
        %v8310 = vtanh.pop %v8182
        %v8311 = vtanh.pop %v8183
        %v8312 = vtanh.pop %v8184
        %v8313 = vtanh.pop %v8185
        %v8314 = vtanh.pop %v8186
        %v8315 = vtanh.pop %v8187
        %v8316 = vtanh.pop %v8188
        %v8317 = vtanh.pop %v8189
        %v8318 = vtanh.pop %v8190
        %v8319 = vtanh.pop %v8191
        %v8320 = vtanh.pop %v8192
        %v8321 = vtanh.pop %v8193
        %v8322 = vtanh.pop %v8194
        %v8323 = vtanh.pop %v8195
        %v8324 = vtanh.pop %v8196
        %v8325 = vtanh.pop %v8197
        %v8326 = vtanh.pop %v8198
        %v8327 = vtanh.pop %v8199
        %v8328 = vtanh.pop %v8200
        %v8329 = vtanh.pop %v8201
        %v8330 = vtanh.pop %v8202
        %v8331 = vtanh.pop %v8203
        %v8332 = vtanh.pop %v8204
        %v8333 = vtanh.pop %v8205
        %v8334 = vtanh.pop %v8206
        %v8335 = vtanh.pop %v8207
        %v8336 = vtanh.pop %v8208
        %v8337 = vtanh.pop %v8209
        %v8338 = vtanh.pop %v8210
        %v8339 = vtanh.pop %v8211
        %v8340 = vtanh.pop %v8212
        %v8341 = vtanh.pop %v8213
        %v8342 = vtanh.pop %v8214
        %v8343 = vtanh.pop %v8215
        %v8344 = vtanh.pop %v8216
        %v8345 = vtanh.pop %v8217
        %v8346 = vtanh.pop %v8218
        %v8347 = vtanh.pop %v8219
        %v8348 = vtanh.pop %v8220
        %v8349 = vtanh.pop %v8221
        %v8350 = vtanh.pop %v8222
        %v8351 = vtanh.pop %v8223
        %v8352 = vtanh.pop %v8224
        %v8353 = vtanh.pop %v8225
        %v8354 = vtanh.pop %v8226
        %v8355 = vtanh.pop %v8227
        %v8356 = vtanh.pop %v8228
        %v8357 = vtanh.pop %v8229
        %v8358 = vtanh.pop %v8230
        %v8359 = vtanh.pop %v8231
        %v8360 = vtanh.pop %v8232
        %v8361 = vtanh.pop %v8233
        %v8362 = vtanh.pop %v8234
        %v8363 = vtanh.pop %v8235
        %v8364 = vtanh.pop %v8236
        %v8365 = vtanh.pop %v8237
        %v8366 = vtanh.pop %v8238
        %v8367 = vtanh.pop %v8239
        %v8368 = vtanh.pop %v8240
        %v8369 = vtanh.pop %v8241
        %v8370 = vtanh.pop %v8242
        %v8371 = vtanh.pop %v8243
        %v8372 = vtanh.pop %v8244
        %v8373 = vtanh.pop %v8245
        %v8374 = vtanh.pop %v8246
        %v8375 = vtanh.pop %v8247
        %v8376 = vtanh.pop %v8248
        %v8377 = vtanh.pop %v8249
        %v8378 = vtanh.pop %v8250
        %v8379 = vtanh.pop %v8251
        %v8380 = vtanh.pop %v8252
        %v8381 = vtanh.pop %v8253
        %v8382 = vtanh.pop %v8254
        %v8383 = vtanh.pop %v8255
        %v8384 = vtanh.pop %v8256
        %v8385 = vtanh.pop %v8257
        %v8386 = vtanh.pop %v8258
        %v8387 = vtanh.pop %v8259
        %v8388 = vtanh.pop %v8260
        %v8389 = vtanh.pop %v8261
        %v8390 = vtanh.pop %v8262
        %v8391 = vtanh.pop %v8263
        %v8392 = vtanh.pop %v8264
        %v8393 = vtanh.pop %v8265
        %v8394 = vtanh.pop %v8266
        %v8395 = vtanh.pop %v8267
        %v8396 = vtanh.pop %v8268
        %v8397 = vtanh.pop %v8269
        %v8398 = vtanh.pop %v8270
        %v8399 = vtanh.pop %v8271
        %v8400 = vtanh.pop %v8272
        %v8401 = vtanh.pop %v8273
        %v8402 = vtanh.pop %v8274
        %v8403 = vtanh.pop %v8275
        %v8404 = vtanh.pop %v8276
        %v8405 = vtanh.pop %v8277
        %v8406 = vtanh.pop %v8278
        %v8407 = vtanh.pop %v8279
        %v8408 = vtanh.pop %v8280
        %v8409 = vtanh.pop %v8281
        %v8410 = vtanh.pop %v8282
        %v8411 = vtanh.pop %v8283
        %v8412 = vtanh.pop %v8284
        %v8413 = vtanh.pop %v8285
        %v8414 = vtanh.pop %v8286
        %v8415 = vtanh.pop %v8287
        %v8416 = vadd.f32 %v8288, 1.0
        %v8417 = vadd.f32 %v8289, 1.0
        %v8418 = vadd.f32 %v8290, 1.0
        %v8419 = vadd.f32 %v8291, 1.0
        %v8420 = vadd.f32 %v8292, 1.0
        %v8421 = vadd.f32 %v8293, 1.0
        %v8422 = vadd.f32 %v8294, 1.0
        %v8423 = vadd.f32 %v8295, 1.0
        %v8424 = vadd.f32 %v8296, 1.0
        %v8425 = vadd.f32 %v8297, 1.0
        %v8426 = vadd.f32 %v8298, 1.0
        %v8427 = vadd.f32 %v8299, 1.0
        %v8428 = vadd.f32 %v8300, 1.0
        %v8429 = vadd.f32 %v8301, 1.0
        %v8430 = vadd.f32 %v8302, 1.0
        %v8431 = vadd.f32 %v8303, 1.0
        %v8432 = vadd.f32 %v8304, 1.0
        %v8433 = vadd.f32 %v8305, 1.0
        %v8434 = vadd.f32 %v8306, 1.0
        %v8435 = vadd.f32 %v8307, 1.0
        %v8436 = vadd.f32 %v8308, 1.0
        %v8437 = vadd.f32 %v8309, 1.0
        %v8438 = vadd.f32 %v8310, 1.0
        %v8439 = vadd.f32 %v8311, 1.0
        %v8440 = vadd.f32 %v8312, 1.0
        %v8441 = vadd.f32 %v8313, 1.0
        %v8442 = vadd.f32 %v8314, 1.0
        %v8443 = vadd.f32 %v8315, 1.0
        %v8444 = vadd.f32 %v8316, 1.0
        %v8445 = vadd.f32 %v8317, 1.0
        %v8446 = vadd.f32 %v8318, 1.0
        %v8447 = vadd.f32 %v8319, 1.0
        %v8448 = vadd.f32 %v8320, 1.0
        %v8449 = vadd.f32 %v8321, 1.0
        %v8450 = vadd.f32 %v8322, 1.0
        %v8451 = vadd.f32 %v8323, 1.0
        %v8452 = vadd.f32 %v8324, 1.0
        %v8453 = vadd.f32 %v8325, 1.0
        %v8454 = vadd.f32 %v8326, 1.0
        %v8455 = vadd.f32 %v8327, 1.0
        %v8456 = vadd.f32 %v8328, 1.0
        %v8457 = vadd.f32 %v8329, 1.0
        %v8458 = vadd.f32 %v8330, 1.0
        %v8459 = vadd.f32 %v8331, 1.0
        %v8460 = vadd.f32 %v8332, 1.0
        %v8461 = vadd.f32 %v8333, 1.0
        %v8462 = vadd.f32 %v8334, 1.0
        %v8463 = vadd.f32 %v8335, 1.0
        %v8464 = vadd.f32 %v8336, 1.0
        %v8465 = vadd.f32 %v8337, 1.0
        %v8466 = vadd.f32 %v8338, 1.0
        %v8467 = vadd.f32 %v8339, 1.0
        %v8468 = vadd.f32 %v8340, 1.0
        %v8469 = vadd.f32 %v8341, 1.0
        %v8470 = vadd.f32 %v8342, 1.0
        %v8471 = vadd.f32 %v8343, 1.0
        %v8472 = vadd.f32 %v8344, 1.0
        %v8473 = vadd.f32 %v8345, 1.0
        %v8474 = vadd.f32 %v8346, 1.0
        %v8475 = vadd.f32 %v8347, 1.0
        %v8476 = vadd.f32 %v8348, 1.0
        %v8477 = vadd.f32 %v8349, 1.0
        %v8478 = vadd.f32 %v8350, 1.0
        %v8479 = vadd.f32 %v8351, 1.0
        %v8480 = vadd.f32 %v8352, 1.0
        %v8481 = vadd.f32 %v8353, 1.0
        %v8482 = vadd.f32 %v8354, 1.0
        %v8483 = vadd.f32 %v8355, 1.0
        %v8484 = vadd.f32 %v8356, 1.0
        %v8485 = vadd.f32 %v8357, 1.0
        %v8486 = vadd.f32 %v8358, 1.0
        %v8487 = vadd.f32 %v8359, 1.0
        %v8488 = vadd.f32 %v8360, 1.0
        %v8489 = vadd.f32 %v8361, 1.0
        %v8490 = vadd.f32 %v8362, 1.0
        %v8491 = vadd.f32 %v8363, 1.0
        %v8492 = vadd.f32 %v8364, 1.0
        %v8493 = vadd.f32 %v8365, 1.0
        %v8494 = vadd.f32 %v8366, 1.0
        %v8495 = vadd.f32 %v8367, 1.0
        %v8496 = vadd.f32 %v8368, 1.0
        %v8497 = vadd.f32 %v8369, 1.0
        %v8498 = vadd.f32 %v8370, 1.0
        %v8499 = vadd.f32 %v8371, 1.0
        %v8500 = vadd.f32 %v8372, 1.0
        %v8501 = vadd.f32 %v8373, 1.0
        %v8502 = vadd.f32 %v8374, 1.0
        %v8503 = vadd.f32 %v8375, 1.0
        %v8504 = vadd.f32 %v8376, 1.0
        %v8505 = vadd.f32 %v8377, 1.0
        %v8506 = vadd.f32 %v8378, 1.0
        %v8507 = vadd.f32 %v8379, 1.0
        %v8508 = vadd.f32 %v8380, 1.0
        %v8509 = vadd.f32 %v8381, 1.0
        %v8510 = vadd.f32 %v8382, 1.0
        %v8511 = vadd.f32 %v8383, 1.0
        %v8512 = vadd.f32 %v8384, 1.0
        %v8513 = vadd.f32 %v8385, 1.0
        %v8514 = vadd.f32 %v8386, 1.0
        %v8515 = vadd.f32 %v8387, 1.0
        %v8516 = vadd.f32 %v8388, 1.0
        %v8517 = vadd.f32 %v8389, 1.0
        %v8518 = vadd.f32 %v8390, 1.0
        %v8519 = vadd.f32 %v8391, 1.0
        %v8520 = vadd.f32 %v8392, 1.0
        %v8521 = vadd.f32 %v8393, 1.0
        %v8522 = vadd.f32 %v8394, 1.0
        %v8523 = vadd.f32 %v8395, 1.0
        %v8524 = vadd.f32 %v8396, 1.0
        %v8525 = vadd.f32 %v8397, 1.0
        %v8526 = vadd.f32 %v8398, 1.0
        %v8527 = vadd.f32 %v8399, 1.0
        %v8528 = vadd.f32 %v8400, 1.0
        %v8529 = vadd.f32 %v8401, 1.0
        %v8530 = vadd.f32 %v8402, 1.0
        %v8531 = vadd.f32 %v8403, 1.0
        %v8532 = vadd.f32 %v8404, 1.0
        %v8533 = vadd.f32 %v8405, 1.0
        %v8534 = vadd.f32 %v8406, 1.0
        %v8535 = vadd.f32 %v8407, 1.0
        %v8536 = vadd.f32 %v8408, 1.0
        %v8537 = vadd.f32 %v8409, 1.0
        %v8538 = vadd.f32 %v8410, 1.0
        %v8539 = vadd.f32 %v8411, 1.0
        %v8540 = vadd.f32 %v8412, 1.0
        %v8541 = vadd.f32 %v8413, 1.0
        %v8542 = vadd.f32 %v8414, 1.0
        %v8543 = vadd.f32 %v8415, 1.0
        %v8544 = vmul.f32 %v8416, 0.5
        %v8545 = vmul.f32 %v8417, 0.5
        %v8546 = vmul.f32 %v8418, 0.5
        %v8547 = vmul.f32 %v8419, 0.5
        %v8548 = vmul.f32 %v8420, 0.5
        %v8549 = vmul.f32 %v8421, 0.5
        %v8550 = vmul.f32 %v8422, 0.5
        %v8551 = vmul.f32 %v8423, 0.5
        %v8552 = vmul.f32 %v8424, 0.5
        %v8553 = vmul.f32 %v8425, 0.5
        %v8554 = vmul.f32 %v8426, 0.5
        %v8555 = vmul.f32 %v8427, 0.5
        %v8556 = vmul.f32 %v8428, 0.5
        %v8557 = vmul.f32 %v8429, 0.5
        %v8558 = vmul.f32 %v8430, 0.5
        %v8559 = vmul.f32 %v8431, 0.5
        %v8560 = vmul.f32 %v8432, 0.5
        %v8561 = vmul.f32 %v8433, 0.5
        %v8562 = vmul.f32 %v8434, 0.5
        %v8563 = vmul.f32 %v8435, 0.5
        %v8564 = vmul.f32 %v8436, 0.5
        %v8565 = vmul.f32 %v8437, 0.5
        %v8566 = vmul.f32 %v8438, 0.5
        %v8567 = vmul.f32 %v8439, 0.5
        %v8568 = vmul.f32 %v8440, 0.5
        %v8569 = vmul.f32 %v8441, 0.5
        %v8570 = vmul.f32 %v8442, 0.5
        %v8571 = vmul.f32 %v8443, 0.5
        %v8572 = vmul.f32 %v8444, 0.5
        %v8573 = vmul.f32 %v8445, 0.5
        %v8574 = vmul.f32 %v8446, 0.5
        %v8575 = vmul.f32 %v8447, 0.5
        %v8576 = vmul.f32 %v8448, 0.5
        %v8577 = vmul.f32 %v8449, 0.5
        %v8578 = vmul.f32 %v8450, 0.5
        %v8579 = vmul.f32 %v8451, 0.5
        %v8580 = vmul.f32 %v8452, 0.5
        %v8581 = vmul.f32 %v8453, 0.5
        %v8582 = vmul.f32 %v8454, 0.5
        %v8583 = vmul.f32 %v8455, 0.5
        %v8584 = vmul.f32 %v8456, 0.5
        %v8585 = vmul.f32 %v8457, 0.5
        %v8586 = vmul.f32 %v8458, 0.5
        %v8587 = vmul.f32 %v8459, 0.5
        %v8588 = vmul.f32 %v8460, 0.5
        %v8589 = vmul.f32 %v8461, 0.5
        %v8590 = vmul.f32 %v8462, 0.5
        %v8591 = vmul.f32 %v8463, 0.5
        %v8592 = vmul.f32 %v8464, 0.5
        %v8593 = vmul.f32 %v8465, 0.5
        %v8594 = vmul.f32 %v8466, 0.5
        %v8595 = vmul.f32 %v8467, 0.5
        %v8596 = vmul.f32 %v8468, 0.5
        %v8597 = vmul.f32 %v8469, 0.5
        %v8598 = vmul.f32 %v8470, 0.5
        %v8599 = vmul.f32 %v8471, 0.5
        %v8600 = vmul.f32 %v8472, 0.5
        %v8601 = vmul.f32 %v8473, 0.5
        %v8602 = vmul.f32 %v8474, 0.5
        %v8603 = vmul.f32 %v8475, 0.5
        %v8604 = vmul.f32 %v8476, 0.5
        %v8605 = vmul.f32 %v8477, 0.5
        %v8606 = vmul.f32 %v8478, 0.5
        %v8607 = vmul.f32 %v8479, 0.5
        %v8608 = vmul.f32 %v8480, 0.5
        %v8609 = vmul.f32 %v8481, 0.5
        %v8610 = vmul.f32 %v8482, 0.5
        %v8611 = vmul.f32 %v8483, 0.5
        %v8612 = vmul.f32 %v8484, 0.5
        %v8613 = vmul.f32 %v8485, 0.5
        %v8614 = vmul.f32 %v8486, 0.5
        %v8615 = vmul.f32 %v8487, 0.5
        %v8616 = vmul.f32 %v8488, 0.5
        %v8617 = vmul.f32 %v8489, 0.5
        %v8618 = vmul.f32 %v8490, 0.5
        %v8619 = vmul.f32 %v8491, 0.5
        %v8620 = vmul.f32 %v8492, 0.5
        %v8621 = vmul.f32 %v8493, 0.5
        %v8622 = vmul.f32 %v8494, 0.5
        %v8623 = vmul.f32 %v8495, 0.5
        %v8624 = vmul.f32 %v8496, 0.5
        %v8625 = vmul.f32 %v8497, 0.5
        %v8626 = vmul.f32 %v8498, 0.5
        %v8627 = vmul.f32 %v8499, 0.5
        %v8628 = vmul.f32 %v8500, 0.5
        %v8629 = vmul.f32 %v8501, 0.5
        %v8630 = vmul.f32 %v8502, 0.5
        %v8631 = vmul.f32 %v8503, 0.5
        %v8632 = vmul.f32 %v8504, 0.5
        %v8633 = vmul.f32 %v8505, 0.5
        %v8634 = vmul.f32 %v8506, 0.5
        %v8635 = vmul.f32 %v8507, 0.5
        %v8636 = vmul.f32 %v8508, 0.5
        %v8637 = vmul.f32 %v8509, 0.5
        %v8638 = vmul.f32 %v8510, 0.5
        %v8639 = vmul.f32 %v8511, 0.5
        %v8640 = vmul.f32 %v8512, 0.5
        %v8641 = vmul.f32 %v8513, 0.5
        %v8642 = vmul.f32 %v8514, 0.5
        %v8643 = vmul.f32 %v8515, 0.5
        %v8644 = vmul.f32 %v8516, 0.5
        %v8645 = vmul.f32 %v8517, 0.5
        %v8646 = vmul.f32 %v8518, 0.5
        %v8647 = vmul.f32 %v8519, 0.5
        %v8648 = vmul.f32 %v8520, 0.5
        %v8649 = vmul.f32 %v8521, 0.5
        %v8650 = vmul.f32 %v8522, 0.5
        %v8651 = vmul.f32 %v8523, 0.5
        %v8652 = vmul.f32 %v8524, 0.5
        %v8653 = vmul.f32 %v8525, 0.5
        %v8654 = vmul.f32 %v8526, 0.5
        %v8655 = vmul.f32 %v8527, 0.5
        %v8656 = vmul.f32 %v8528, 0.5
        %v8657 = vmul.f32 %v8529, 0.5
        %v8658 = vmul.f32 %v8530, 0.5
        %v8659 = vmul.f32 %v8531, 0.5
        %v8660 = vmul.f32 %v8532, 0.5
        %v8661 = vmul.f32 %v8533, 0.5
        %v8662 = vmul.f32 %v8534, 0.5
        %v8663 = vmul.f32 %v8535, 0.5
        %v8664 = vmul.f32 %v8536, 0.5
        %v8665 = vmul.f32 %v8537, 0.5
        %v8666 = vmul.f32 %v8538, 0.5
        %v8667 = vmul.f32 %v8539, 0.5
        %v8668 = vmul.f32 %v8540, 0.5
        %v8669 = vmul.f32 %v8541, 0.5
        %v8670 = vmul.f32 %v8542, 0.5
        %v8671 = vmul.f32 %v8543, 0.5
        %v8672 = vmul.f32 %v8032, %v8544
        %v8673 = vmul.f32 %v8033, %v8545
        %v8674 = vmul.f32 %v8034, %v8546
        %v8675 = vmul.f32 %v8035, %v8547
        %v8676 = vmul.f32 %v8036, %v8548
        %v8677 = vmul.f32 %v8037, %v8549
        %v8678 = vmul.f32 %v8038, %v8550
        %v8679 = vmul.f32 %v8039, %v8551
        %v8680 = vmul.f32 %v8040, %v8552
        %v8681 = vmul.f32 %v8041, %v8553
        %v8682 = vmul.f32 %v8042, %v8554
        %v8683 = vmul.f32 %v8043, %v8555
        %v8684 = vmul.f32 %v8044, %v8556
        %v8685 = vmul.f32 %v8045, %v8557
        %v8686 = vmul.f32 %v8046, %v8558
        %v8687 = vmul.f32 %v8047, %v8559
        %v8688 = vmul.f32 %v8048, %v8560
        %v8689 = vmul.f32 %v8049, %v8561
        %v8690 = vmul.f32 %v8050, %v8562
        %v8691 = vmul.f32 %v8051, %v8563
        %v8692 = vmul.f32 %v8052, %v8564
        %v8693 = vmul.f32 %v8053, %v8565
        %v8694 = vmul.f32 %v8054, %v8566
        %v8695 = vmul.f32 %v8055, %v8567
        %v8696 = vmul.f32 %v8056, %v8568
        %v8697 = vmul.f32 %v8057, %v8569
        %v8698 = vmul.f32 %v8058, %v8570
        %v8699 = vmul.f32 %v8059, %v8571
        %v8700 = vmul.f32 %v8060, %v8572
        %v8701 = vmul.f32 %v8061, %v8573
        %v8702 = vmul.f32 %v8062, %v8574
        %v8703 = vmul.f32 %v8063, %v8575
        %v8704 = vmul.f32 %v8064, %v8576
        %v8705 = vmul.f32 %v8065, %v8577
        %v8706 = vmul.f32 %v8066, %v8578
        %v8707 = vmul.f32 %v8067, %v8579
        %v8708 = vmul.f32 %v8068, %v8580
        %v8709 = vmul.f32 %v8069, %v8581
        %v8710 = vmul.f32 %v8070, %v8582
        %v8711 = vmul.f32 %v8071, %v8583
        %v8712 = vmul.f32 %v8072, %v8584
        %v8713 = vmul.f32 %v8073, %v8585
        %v8714 = vmul.f32 %v8074, %v8586
        %v8715 = vmul.f32 %v8075, %v8587
        %v8716 = vmul.f32 %v8076, %v8588
        %v8717 = vmul.f32 %v8077, %v8589
        %v8718 = vmul.f32 %v8078, %v8590
        %v8719 = vmul.f32 %v8079, %v8591
        %v8720 = vmul.f32 %v8080, %v8592
        %v8721 = vmul.f32 %v8081, %v8593
        %v8722 = vmul.f32 %v8082, %v8594
        %v8723 = vmul.f32 %v8083, %v8595
        %v8724 = vmul.f32 %v8084, %v8596
        %v8725 = vmul.f32 %v8085, %v8597
        %v8726 = vmul.f32 %v8086, %v8598
        %v8727 = vmul.f32 %v8087, %v8599
        %v8728 = vmul.f32 %v8088, %v8600
        %v8729 = vmul.f32 %v8089, %v8601
        %v8730 = vmul.f32 %v8090, %v8602
        %v8731 = vmul.f32 %v8091, %v8603
        %v8732 = vmul.f32 %v8092, %v8604
        %v8733 = vmul.f32 %v8093, %v8605
        %v8734 = vmul.f32 %v8094, %v8606
        %v8735 = vmul.f32 %v8095, %v8607
        %v8736 = vmul.f32 %v8096, %v8608
        %v8737 = vmul.f32 %v8097, %v8609
        %v8738 = vmul.f32 %v8098, %v8610
        %v8739 = vmul.f32 %v8099, %v8611
        %v8740 = vmul.f32 %v8100, %v8612
        %v8741 = vmul.f32 %v8101, %v8613
        %v8742 = vmul.f32 %v8102, %v8614
        %v8743 = vmul.f32 %v8103, %v8615
        %v8744 = vmul.f32 %v8104, %v8616
        %v8745 = vmul.f32 %v8105, %v8617
        %v8746 = vmul.f32 %v8106, %v8618
        %v8747 = vmul.f32 %v8107, %v8619
        %v8748 = vmul.f32 %v8108, %v8620
        %v8749 = vmul.f32 %v8109, %v8621
        %v8750 = vmul.f32 %v8110, %v8622
        %v8751 = vmul.f32 %v8111, %v8623
        %v8752 = vmul.f32 %v8112, %v8624
        %v8753 = vmul.f32 %v8113, %v8625
        %v8754 = vmul.f32 %v8114, %v8626
        %v8755 = vmul.f32 %v8115, %v8627
        %v8756 = vmul.f32 %v8116, %v8628
        %v8757 = vmul.f32 %v8117, %v8629
        %v8758 = vmul.f32 %v8118, %v8630
        %v8759 = vmul.f32 %v8119, %v8631
        %v8760 = vmul.f32 %v8120, %v8632
        %v8761 = vmul.f32 %v8121, %v8633
        %v8762 = vmul.f32 %v8122, %v8634
        %v8763 = vmul.f32 %v8123, %v8635
        %v8764 = vmul.f32 %v8124, %v8636
        %v8765 = vmul.f32 %v8125, %v8637
        %v8766 = vmul.f32 %v8126, %v8638
        %v8767 = vmul.f32 %v8127, %v8639
        %v8768 = vmul.f32 %v8128, %v8640
        %v8769 = vmul.f32 %v8129, %v8641
        %v8770 = vmul.f32 %v8130, %v8642
        %v8771 = vmul.f32 %v8131, %v8643
        %v8772 = vmul.f32 %v8132, %v8644
        %v8773 = vmul.f32 %v8133, %v8645
        %v8774 = vmul.f32 %v8134, %v8646
        %v8775 = vmul.f32 %v8135, %v8647
        %v8776 = vmul.f32 %v8136, %v8648
        %v8777 = vmul.f32 %v8137, %v8649
        %v8778 = vmul.f32 %v8138, %v8650
        %v8779 = vmul.f32 %v8139, %v8651
        %v8780 = vmul.f32 %v8140, %v8652
        %v8781 = vmul.f32 %v8141, %v8653
        %v8782 = vmul.f32 %v8142, %v8654
        %v8783 = vmul.f32 %v8143, %v8655
        %v8784 = vmul.f32 %v8144, %v8656
        %v8785 = vmul.f32 %v8145, %v8657
        %v8786 = vmul.f32 %v8146, %v8658
        %v8787 = vmul.f32 %v8147, %v8659
        %v8788 = vmul.f32 %v8148, %v8660
        %v8789 = vmul.f32 %v8149, %v8661
        %v8790 = vmul.f32 %v8150, %v8662
        %v8791 = vmul.f32 %v8151, %v8663
        %v8792 = vmul.f32 %v8152, %v8664
        %v8793 = vmul.f32 %v8153, %v8665
        %v8794 = vmul.f32 %v8154, %v8666
        %v8795 = vmul.f32 %v8155, %v8667
        %v8796 = vmul.f32 %v8156, %v8668
        %v8797 = vmul.f32 %v8157, %v8669
        %v8798 = vmul.f32 %v8158, %v8670
        %v8799 = vmul.f32 %v8159, %v8671
        %v8800 = vld [vmem:[#allocation8] sm:$0xff]
        %v8801 = vld [vmem:[#allocation8 + $0x8] sm:$0xff]
        %v8802 = vld [vmem:[#allocation8 + $0x10] sm:$0xff]
        %v8803 = vld [vmem:[#allocation8 + $0x18] sm:$0xff]
        %v8804 = vld [vmem:[#allocation8 + $0x20] sm:$0xff]
        %v8805 = vld [vmem:[#allocation8 + $0x28] sm:$0xff]
        %v8806 = vld [vmem:[#allocation8 + $0x30] sm:$0xff]
        %v8807 = vld [vmem:[#allocation8 + $0x38] sm:$0xff]
        %v8808 = vld [vmem:[#allocation8 + $0x40] sm:$0xff]
        %v8809 = vld [vmem:[#allocation8 + $0x48] sm:$0xff]
        %v8810 = vld [vmem:[#allocation8 + $0x50] sm:$0xff]
        %v8811 = vld [vmem:[#allocation8 + $0x58] sm:$0xff]
        %v8812 = vld [vmem:[#allocation8 + $0x60] sm:$0xff]
        %v8813 = vld [vmem:[#allocation8 + $0x68] sm:$0xff]
        %v8814 = vld [vmem:[#allocation8 + $0x70] sm:$0xff]
        %v8815 = vld [vmem:[#allocation8 + $0x78] sm:$0xff]
        %v8816 = vld [vmem:[#allocation8 + $0x80] sm:$0xff]
        %v8817 = vld [vmem:[#allocation8 + $0x88] sm:$0xff]
        %v8818 = vld [vmem:[#allocation8 + $0x90] sm:$0xff]
        %v8819 = vld [vmem:[#allocation8 + $0x98] sm:$0xff]
        %v8820 = vld [vmem:[#allocation8 + $0xa0] sm:$0xff]
        %v8821 = vld [vmem:[#allocation8 + $0xa8] sm:$0xff]
        %v8822 = vld [vmem:[#allocation8 + $0xb0] sm:$0xff]
        %v8823 = vld [vmem:[#allocation8 + $0xb8] sm:$0xff]
        %v8824 = vld [vmem:[#allocation8 + $0xc0] sm:$0xff]
        %v8825 = vld [vmem:[#allocation8 + $0xc8] sm:$0xff]
        %v8826 = vld [vmem:[#allocation8 + $0xd0] sm:$0xff]
        %v8827 = vld [vmem:[#allocation8 + $0xd8] sm:$0xff]
        %v8828 = vld [vmem:[#allocation8 + $0xe0] sm:$0xff]
        %v8829 = vld [vmem:[#allocation8 + $0xe8] sm:$0xff]
        %v8830 = vld [vmem:[#allocation8 + $0xf0] sm:$0xff]
        %v8831 = vld [vmem:[#allocation8 + $0xf8] sm:$0xff]
        %v8832 = vld [vmem:[#allocation10] sm:$0x1]
        %v8834 = vperm.slane %v8832, 0
        %8836 = vmatpush.msra.mxu0 %v8815
        %8837 = vmatpush.msra.mxu0 %v8814
        %8838 = vmatpush.msra.mxu0 %v8813
        %8839 = vmatpush.msra.mxu0 %v8812
        %8840 = vmatpush.msra.mxu0 %v8811
        %8841 = vmatpush.msra.mxu0 %v8810
        %8842 = vmatpush.msra.mxu0 %v8809
        %8843 = vmatpush.msra.mxu0 %v8808
        %8844 = vmatpush.msra.mxu0 %v8807
        %8845 = vmatpush.msra.mxu0 %v8806
        %8846 = vmatpush.msra.mxu0 %v8805
        %8847 = vmatpush.msra.mxu0 %v8804
        %8848 = vmatpush.msra.mxu0 %v8803
        %8849 = vmatpush.msra.mxu0 %v8802
        %8850 = vmatpush.msra.mxu0 %v8801
        %8851 = vmatpush.msra.mxu0 %v8800
        %8852 = vmatmul.f32.gmra.mxu0 %v8672
        %v8853 = vpop.f32.mrf.mxu0
        %v8854 = vadd.f32 %v8834, %v8853
        %8855 = vmatmul.f32.gmra.mxu0 %v8674
        %v8856 = vpop.f32.mrf.mxu0
        %v8857 = vadd.f32 %v8834, %v8856
        %8858 = vmatmul.f32.gmra.mxu0 %v8676
        %v8859 = vpop.f32.mrf.mxu0
        %v8860 = vadd.f32 %v8834, %v8859
        %8861 = vmatmul.f32.gmra.mxu0 %v8678
        %v8862 = vpop.f32.mrf.mxu0
        %v8863 = vadd.f32 %v8834, %v8862
        %8864 = vmatmul.f32.gmra.mxu0 %v8680
        %v8865 = vpop.f32.mrf.mxu0
        %v8866 = vadd.f32 %v8834, %v8865
        %8867 = vmatmul.f32.gmra.mxu0 %v8682
        %v8868 = vpop.f32.mrf.mxu0
        %v8869 = vadd.f32 %v8834, %v8868
        %8870 = vmatmul.f32.gmra.mxu0 %v8684
        %v8871 = vpop.f32.mrf.mxu0
        %v8872 = vadd.f32 %v8834, %v8871
        %8873 = vmatmul.f32.gmra.mxu0 %v8686
        %v8874 = vpop.f32.mrf.mxu0
        %v8875 = vadd.f32 %v8834, %v8874
        %8876 = vmatmul.f32.gmra.mxu0 %v8688
        %v8877 = vpop.f32.mrf.mxu0
        %v8878 = vadd.f32 %v8834, %v8877
        %8879 = vmatmul.f32.gmra.mxu0 %v8690
        %v8880 = vpop.f32.mrf.mxu0
        %v8881 = vadd.f32 %v8834, %v8880
        %8882 = vmatmul.f32.gmra.mxu0 %v8692
        %v8883 = vpop.f32.mrf.mxu0
        %v8884 = vadd.f32 %v8834, %v8883
        %8885 = vmatmul.f32.gmra.mxu0 %v8694
        %v8886 = vpop.f32.mrf.mxu0
        %v8887 = vadd.f32 %v8834, %v8886
        %8888 = vmatmul.f32.gmra.mxu0 %v8696
        %v8889 = vpop.f32.mrf.mxu0
        %v8890 = vadd.f32 %v8834, %v8889
        %8891 = vmatmul.f32.gmra.mxu0 %v8698
        %v8892 = vpop.f32.mrf.mxu0
        %v8893 = vadd.f32 %v8834, %v8892
        %8894 = vmatmul.f32.gmra.mxu0 %v8700
        %v8895 = vpop.f32.mrf.mxu0
        %v8896 = vadd.f32 %v8834, %v8895
        %8897 = vmatmul.f32.gmra.mxu0 %v8702
        %v8898 = vpop.f32.mrf.mxu0
        %v8899 = vadd.f32 %v8834, %v8898
        %8900 = vmatmul.f32.gmra.mxu0 %v8704
        %v8901 = vpop.f32.mrf.mxu0
        %v8902 = vadd.f32 %v8834, %v8901
        %8903 = vmatmul.f32.gmra.mxu0 %v8706
        %v8904 = vpop.f32.mrf.mxu0
        %v8905 = vadd.f32 %v8834, %v8904
        %8906 = vmatmul.f32.gmra.mxu0 %v8708
        %v8907 = vpop.f32.mrf.mxu0
        %v8908 = vadd.f32 %v8834, %v8907
        %8909 = vmatmul.f32.gmra.mxu0 %v8710
        %v8910 = vpop.f32.mrf.mxu0
        %v8911 = vadd.f32 %v8834, %v8910
        %8912 = vmatmul.f32.gmra.mxu0 %v8712
        %v8913 = vpop.f32.mrf.mxu0
        %v8914 = vadd.f32 %v8834, %v8913
        %8915 = vmatmul.f32.gmra.mxu0 %v8714
        %v8916 = vpop.f32.mrf.mxu0
        %v8917 = vadd.f32 %v8834, %v8916
        %8918 = vmatmul.f32.gmra.mxu0 %v8716
        %v8919 = vpop.f32.mrf.mxu0
        %v8920 = vadd.f32 %v8834, %v8919
        %8921 = vmatmul.f32.gmra.mxu0 %v8718
        %v8922 = vpop.f32.mrf.mxu0
        %v8923 = vadd.f32 %v8834, %v8922
        %8924 = vmatmul.f32.gmra.mxu0 %v8720
        %v8925 = vpop.f32.mrf.mxu0
        %v8926 = vadd.f32 %v8834, %v8925
        %8927 = vmatmul.f32.gmra.mxu0 %v8722
        %v8928 = vpop.f32.mrf.mxu0
        %v8929 = vadd.f32 %v8834, %v8928
        %8930 = vmatmul.f32.gmra.mxu0 %v8724
        %v8931 = vpop.f32.mrf.mxu0
        %v8932 = vadd.f32 %v8834, %v8931
        %8933 = vmatmul.f32.gmra.mxu0 %v8726
        %v8934 = vpop.f32.mrf.mxu0
        %v8935 = vadd.f32 %v8834, %v8934
        %8936 = vmatmul.f32.gmra.mxu0 %v8728
        %v8937 = vpop.f32.mrf.mxu0
        %v8938 = vadd.f32 %v8834, %v8937
        %8939 = vmatmul.f32.gmra.mxu0 %v8730
        %v8940 = vpop.f32.mrf.mxu0
        %v8941 = vadd.f32 %v8834, %v8940
        %8942 = vmatmul.f32.gmra.mxu0 %v8732
        %v8943 = vpop.f32.mrf.mxu0
        %v8944 = vadd.f32 %v8834, %v8943
        %8945 = vmatmul.f32.gmra.mxu0 %v8734
        %v8946 = vpop.f32.mrf.mxu0
        %v8947 = vadd.f32 %v8834, %v8946
        %8948 = vmatmul.f32.gmra.mxu0 %v8736
        %v8949 = vpop.f32.mrf.mxu0
        %v8950 = vadd.f32 %v8834, %v8949
        %8951 = vmatmul.f32.gmra.mxu0 %v8738
        %v8952 = vpop.f32.mrf.mxu0
        %v8953 = vadd.f32 %v8834, %v8952
        %8954 = vmatmul.f32.gmra.mxu0 %v8740
        %v8955 = vpop.f32.mrf.mxu0
        %v8956 = vadd.f32 %v8834, %v8955
        %8957 = vmatmul.f32.gmra.mxu0 %v8742
        %v8958 = vpop.f32.mrf.mxu0
        %v8959 = vadd.f32 %v8834, %v8958
        %8960 = vmatmul.f32.gmra.mxu0 %v8744
        %v8961 = vpop.f32.mrf.mxu0
        %v8962 = vadd.f32 %v8834, %v8961
        %8963 = vmatmul.f32.gmra.mxu0 %v8746
        %v8964 = vpop.f32.mrf.mxu0
        %v8965 = vadd.f32 %v8834, %v8964
        %8966 = vmatmul.f32.gmra.mxu0 %v8748
        %v8967 = vpop.f32.mrf.mxu0
        %v8968 = vadd.f32 %v8834, %v8967
        %8969 = vmatmul.f32.gmra.mxu0 %v8750
        %v8970 = vpop.f32.mrf.mxu0
        %v8971 = vadd.f32 %v8834, %v8970
        %8972 = vmatmul.f32.gmra.mxu0 %v8752
        %v8973 = vpop.f32.mrf.mxu0
        %v8974 = vadd.f32 %v8834, %v8973
        %8975 = vmatmul.f32.gmra.mxu0 %v8754
        %v8976 = vpop.f32.mrf.mxu0
        %v8977 = vadd.f32 %v8834, %v8976
        %8978 = vmatmul.f32.gmra.mxu0 %v8756
        %v8979 = vpop.f32.mrf.mxu0
        %v8980 = vadd.f32 %v8834, %v8979
        %8981 = vmatmul.f32.gmra.mxu0 %v8758
        %v8982 = vpop.f32.mrf.mxu0
        %v8983 = vadd.f32 %v8834, %v8982
        %8984 = vmatmul.f32.gmra.mxu0 %v8760
        %v8985 = vpop.f32.mrf.mxu0
        %v8986 = vadd.f32 %v8834, %v8985
        %8987 = vmatmul.f32.gmra.mxu0 %v8762
        %v8988 = vpop.f32.mrf.mxu0
        %v8989 = vadd.f32 %v8834, %v8988
        %8990 = vmatmul.f32.gmra.mxu0 %v8764
        %v8991 = vpop.f32.mrf.mxu0
        %v8992 = vadd.f32 %v8834, %v8991
        %8993 = vmatmul.f32.gmra.mxu0 %v8766
        %v8994 = vpop.f32.mrf.mxu0
        %v8995 = vadd.f32 %v8834, %v8994
        %8996 = vmatmul.f32.gmra.mxu0 %v8768
        %v8997 = vpop.f32.mrf.mxu0
        %v8998 = vadd.f32 %v8834, %v8997
        %8999 = vmatmul.f32.gmra.mxu0 %v8770
        %v9000 = vpop.f32.mrf.mxu0
        %v9001 = vadd.f32 %v8834, %v9000
        %9002 = vmatmul.f32.gmra.mxu0 %v8772
        %v9003 = vpop.f32.mrf.mxu0
        %v9004 = vadd.f32 %v8834, %v9003
        %9005 = vmatmul.f32.gmra.mxu0 %v8774
        %v9006 = vpop.f32.mrf.mxu0
        %v9007 = vadd.f32 %v8834, %v9006
        %9008 = vmatmul.f32.gmra.mxu0 %v8776
        %v9009 = vpop.f32.mrf.mxu0
        %v9010 = vadd.f32 %v8834, %v9009
        %9011 = vmatmul.f32.gmra.mxu0 %v8778
        %v9012 = vpop.f32.mrf.mxu0
        %v9013 = vadd.f32 %v8834, %v9012
        %9014 = vmatmul.f32.gmra.mxu0 %v8780
        %v9015 = vpop.f32.mrf.mxu0
        %v9016 = vadd.f32 %v8834, %v9015
        %9017 = vmatmul.f32.gmra.mxu0 %v8782
        %v9018 = vpop.f32.mrf.mxu0
        %v9019 = vadd.f32 %v8834, %v9018
        %9020 = vmatmul.f32.gmra.mxu0 %v8784
        %v9021 = vpop.f32.mrf.mxu0
        %v9022 = vadd.f32 %v8834, %v9021
        %9023 = vmatmul.f32.gmra.mxu0 %v8786
        %v9024 = vpop.f32.mrf.mxu0
        %v9025 = vadd.f32 %v8834, %v9024
        %9026 = vmatmul.f32.gmra.mxu0 %v8788
        %v9027 = vpop.f32.mrf.mxu0
        %v9028 = vadd.f32 %v8834, %v9027
        %9029 = vmatmul.f32.gmra.mxu0 %v8790
        %v9030 = vpop.f32.mrf.mxu0
        %v9031 = vadd.f32 %v8834, %v9030
        %9032 = vmatmul.f32.gmra.mxu0 %v8792
        %v9033 = vpop.f32.mrf.mxu0
        %v9034 = vadd.f32 %v8834, %v9033
        %9035 = vmatmul.f32.gmra.mxu0 %v8794
        %v9036 = vpop.f32.mrf.mxu0
        %v9037 = vadd.f32 %v8834, %v9036
        %9038 = vmatmul.f32.gmra.mxu0 %v8796
        %v9039 = vpop.f32.mrf.mxu0
        %v9040 = vadd.f32 %v8834, %v9039
        %9041 = vmatmul.f32.gmra.mxu0 %v8798
        %v9042 = vpop.f32.mrf.mxu0
        %v9043 = vadd.f32 %v8834, %v9042
        %9044 = vdwg.mxu0
        %9045 = vmatpush.msra.mxu0 %v8831
        %9046 = vmatpush.msra.mxu0 %v8830
        %9047 = vmatpush.msra.mxu0 %v8829
        %9048 = vmatpush.msra.mxu0 %v8828
        %9049 = vmatpush.msra.mxu0 %v8827
        %9050 = vmatpush.msra.mxu0 %v8826
        %9051 = vmatpush.msra.mxu0 %v8825
        %9052 = vmatpush.msra.mxu0 %v8824
        %9053 = vmatpush.msra.mxu0 %v8823
        %9054 = vmatpush.msra.mxu0 %v8822
        %9055 = vmatpush.msra.mxu0 %v8821
        %9056 = vmatpush.msra.mxu0 %v8820
        %9057 = vmatpush.msra.mxu0 %v8819
        %9058 = vmatpush.msra.mxu0 %v8818
        %9059 = vmatpush.msra.mxu0 %v8817
        %9060 = vmatpush.msra.mxu0 %v8816
        %9061 = vmatmul.f32.gmra.mxu0 %v8673
        %v9062 = vpop.f32.mrf.mxu0
        %v9063 = vadd.f32 %v8854, %v9062
        %9064 = vmatmul.f32.gmra.mxu0 %v8675
        %v9065 = vpop.f32.mrf.mxu0
        %v9066 = vadd.f32 %v8857, %v9065
        %9067 = vmatmul.f32.gmra.mxu0 %v8677
        %v9068 = vpop.f32.mrf.mxu0
        %v9069 = vadd.f32 %v8860, %v9068
        %9070 = vmatmul.f32.gmra.mxu0 %v8679
        %v9071 = vpop.f32.mrf.mxu0
        %v9072 = vadd.f32 %v8863, %v9071
        %9073 = vmatmul.f32.gmra.mxu0 %v8681
        %v9074 = vpop.f32.mrf.mxu0
        %v9075 = vadd.f32 %v8866, %v9074
        %9076 = vmatmul.f32.gmra.mxu0 %v8683
        %v9077 = vpop.f32.mrf.mxu0
        %v9078 = vadd.f32 %v8869, %v9077
        %9079 = vmatmul.f32.gmra.mxu0 %v8685
        %v9080 = vpop.f32.mrf.mxu0
        %v9081 = vadd.f32 %v8872, %v9080
        %9082 = vmatmul.f32.gmra.mxu0 %v8687
        %v9083 = vpop.f32.mrf.mxu0
        %v9084 = vadd.f32 %v8875, %v9083
        %9085 = vmatmul.f32.gmra.mxu0 %v8689
        %v9086 = vpop.f32.mrf.mxu0
        %v9087 = vadd.f32 %v8878, %v9086
        %9088 = vmatmul.f32.gmra.mxu0 %v8691
        %v9089 = vpop.f32.mrf.mxu0
        %v9090 = vadd.f32 %v8881, %v9089
        %9091 = vmatmul.f32.gmra.mxu0 %v8693
        %v9092 = vpop.f32.mrf.mxu0
        %v9093 = vadd.f32 %v8884, %v9092
        %9094 = vmatmul.f32.gmra.mxu0 %v8695
        %v9095 = vpop.f32.mrf.mxu0
        %v9096 = vadd.f32 %v8887, %v9095
        %9097 = vmatmul.f32.gmra.mxu0 %v8697
        %v9098 = vpop.f32.mrf.mxu0
        %v9099 = vadd.f32 %v8890, %v9098
        %9100 = vmatmul.f32.gmra.mxu0 %v8699
        %v9101 = vpop.f32.mrf.mxu0
        %v9102 = vadd.f32 %v8893, %v9101
        %9103 = vmatmul.f32.gmra.mxu0 %v8701
        %v9104 = vpop.f32.mrf.mxu0
        %v9105 = vadd.f32 %v8896, %v9104
        %9106 = vmatmul.f32.gmra.mxu0 %v8703
        %v9107 = vpop.f32.mrf.mxu0
        %v9108 = vadd.f32 %v8899, %v9107
        %9109 = vmatmul.f32.gmra.mxu0 %v8705
        %v9110 = vpop.f32.mrf.mxu0
        %v9111 = vadd.f32 %v8902, %v9110
        %9112 = vmatmul.f32.gmra.mxu0 %v8707
        %v9113 = vpop.f32.mrf.mxu0
        %v9114 = vadd.f32 %v8905, %v9113
        %9115 = vmatmul.f32.gmra.mxu0 %v8709
        %v9116 = vpop.f32.mrf.mxu0
        %v9117 = vadd.f32 %v8908, %v9116
        %9118 = vmatmul.f32.gmra.mxu0 %v8711
        %v9119 = vpop.f32.mrf.mxu0
        %v9120 = vadd.f32 %v8911, %v9119
        %9121 = vmatmul.f32.gmra.mxu0 %v8713
        %v9122 = vpop.f32.mrf.mxu0
        %v9123 = vadd.f32 %v8914, %v9122
        %9124 = vmatmul.f32.gmra.mxu0 %v8715
        %v9125 = vpop.f32.mrf.mxu0
        %v9126 = vadd.f32 %v8917, %v9125
        %9127 = vmatmul.f32.gmra.mxu0 %v8717
        %v9128 = vpop.f32.mrf.mxu0
        %v9129 = vadd.f32 %v8920, %v9128
        %9130 = vmatmul.f32.gmra.mxu0 %v8719
        %v9131 = vpop.f32.mrf.mxu0
        %v9132 = vadd.f32 %v8923, %v9131
        %9133 = vmatmul.f32.gmra.mxu0 %v8721
        %v9134 = vpop.f32.mrf.mxu0
        %v9135 = vadd.f32 %v8926, %v9134
        %9136 = vmatmul.f32.gmra.mxu0 %v8723
        %v9137 = vpop.f32.mrf.mxu0
        %v9138 = vadd.f32 %v8929, %v9137
        %9139 = vmatmul.f32.gmra.mxu0 %v8725
        %v9140 = vpop.f32.mrf.mxu0
        %v9141 = vadd.f32 %v8932, %v9140
        %9142 = vmatmul.f32.gmra.mxu0 %v8727
        %v9143 = vpop.f32.mrf.mxu0
        %v9144 = vadd.f32 %v8935, %v9143
        %9145 = vmatmul.f32.gmra.mxu0 %v8729
        %v9146 = vpop.f32.mrf.mxu0
        %v9147 = vadd.f32 %v8938, %v9146
        %9148 = vmatmul.f32.gmra.mxu0 %v8731
        %v9149 = vpop.f32.mrf.mxu0
        %v9150 = vadd.f32 %v8941, %v9149
        %9151 = vmatmul.f32.gmra.mxu0 %v8733
        %v9152 = vpop.f32.mrf.mxu0
        %v9153 = vadd.f32 %v8944, %v9152
        %9154 = vmatmul.f32.gmra.mxu0 %v8735
        %v9155 = vpop.f32.mrf.mxu0
        %v9156 = vadd.f32 %v8947, %v9155
        %9157 = vmatmul.f32.gmra.mxu0 %v8737
        %v9158 = vpop.f32.mrf.mxu0
        %v9159 = vadd.f32 %v8950, %v9158
        %9160 = vmatmul.f32.gmra.mxu0 %v8739
        %v9161 = vpop.f32.mrf.mxu0
        %v9162 = vadd.f32 %v8953, %v9161
        %9163 = vmatmul.f32.gmra.mxu0 %v8741
        %v9164 = vpop.f32.mrf.mxu0
        %v9165 = vadd.f32 %v8956, %v9164
        %9166 = vmatmul.f32.gmra.mxu0 %v8743
        %v9167 = vpop.f32.mrf.mxu0
        %v9168 = vadd.f32 %v8959, %v9167
        %9169 = vmatmul.f32.gmra.mxu0 %v8745
        %v9170 = vpop.f32.mrf.mxu0
        %v9171 = vadd.f32 %v8962, %v9170
        %9172 = vmatmul.f32.gmra.mxu0 %v8747
        %v9173 = vpop.f32.mrf.mxu0
        %v9174 = vadd.f32 %v8965, %v9173
        %9175 = vmatmul.f32.gmra.mxu0 %v8749
        %v9176 = vpop.f32.mrf.mxu0
        %v9177 = vadd.f32 %v8968, %v9176
        %9178 = vmatmul.f32.gmra.mxu0 %v8751
        %v9179 = vpop.f32.mrf.mxu0
        %v9180 = vadd.f32 %v8971, %v9179
        %9181 = vmatmul.f32.gmra.mxu0 %v8753
        %v9182 = vpop.f32.mrf.mxu0
        %v9183 = vadd.f32 %v8974, %v9182
        %9184 = vmatmul.f32.gmra.mxu0 %v8755
        %v9185 = vpop.f32.mrf.mxu0
        %v9186 = vadd.f32 %v8977, %v9185
        %9187 = vmatmul.f32.gmra.mxu0 %v8757
        %v9188 = vpop.f32.mrf.mxu0
        %v9189 = vadd.f32 %v8980, %v9188
        %9190 = vmatmul.f32.gmra.mxu0 %v8759
        %v9191 = vpop.f32.mrf.mxu0
        %v9192 = vadd.f32 %v8983, %v9191
        %9193 = vmatmul.f32.gmra.mxu0 %v8761
        %v9194 = vpop.f32.mrf.mxu0
        %v9195 = vadd.f32 %v8986, %v9194
        %9196 = vmatmul.f32.gmra.mxu0 %v8763
        %v9197 = vpop.f32.mrf.mxu0
        %v9198 = vadd.f32 %v8989, %v9197
        %9199 = vmatmul.f32.gmra.mxu0 %v8765
        %v9200 = vpop.f32.mrf.mxu0
        %v9201 = vadd.f32 %v8992, %v9200
        %9202 = vmatmul.f32.gmra.mxu0 %v8767
        %v9203 = vpop.f32.mrf.mxu0
        %v9204 = vadd.f32 %v8995, %v9203
        %9205 = vmatmul.f32.gmra.mxu0 %v8769
        %v9206 = vpop.f32.mrf.mxu0
        %v9207 = vadd.f32 %v8998, %v9206
        %9208 = vmatmul.f32.gmra.mxu0 %v8771
        %v9209 = vpop.f32.mrf.mxu0
        %v9210 = vadd.f32 %v9001, %v9209
        %9211 = vmatmul.f32.gmra.mxu0 %v8773
        %v9212 = vpop.f32.mrf.mxu0
        %v9213 = vadd.f32 %v9004, %v9212
        %9214 = vmatmul.f32.gmra.mxu0 %v8775
        %v9215 = vpop.f32.mrf.mxu0
        %v9216 = vadd.f32 %v9007, %v9215
        %9217 = vmatmul.f32.gmra.mxu0 %v8777
        %v9218 = vpop.f32.mrf.mxu0
        %v9219 = vadd.f32 %v9010, %v9218
        %9220 = vmatmul.f32.gmra.mxu0 %v8779
        %v9221 = vpop.f32.mrf.mxu0
        %v9222 = vadd.f32 %v9013, %v9221
        %9223 = vmatmul.f32.gmra.mxu0 %v8781
        %v9224 = vpop.f32.mrf.mxu0
        %v9225 = vadd.f32 %v9016, %v9224
        %9226 = vmatmul.f32.gmra.mxu0 %v8783
        %v9227 = vpop.f32.mrf.mxu0
        %v9228 = vadd.f32 %v9019, %v9227
        %9229 = vmatmul.f32.gmra.mxu0 %v8785
        %v9230 = vpop.f32.mrf.mxu0
        %v9231 = vadd.f32 %v9022, %v9230
        %9232 = vmatmul.f32.gmra.mxu0 %v8787
        %v9233 = vpop.f32.mrf.mxu0
        %v9234 = vadd.f32 %v9025, %v9233
        %9235 = vmatmul.f32.gmra.mxu0 %v8789
        %v9236 = vpop.f32.mrf.mxu0
        %v9237 = vadd.f32 %v9028, %v9236
        %9238 = vmatmul.f32.gmra.mxu0 %v8791
        %v9239 = vpop.f32.mrf.mxu0
        %v9240 = vadd.f32 %v9031, %v9239
        %9241 = vmatmul.f32.gmra.mxu0 %v8793
        %v9242 = vpop.f32.mrf.mxu0
        %v9243 = vadd.f32 %v9034, %v9242
        %9244 = vmatmul.f32.gmra.mxu0 %v8795
        %v9245 = vpop.f32.mrf.mxu0
        %v9246 = vadd.f32 %v9037, %v9245
        %9247 = vmatmul.f32.gmra.mxu0 %v8797
        %v9248 = vpop.f32.mrf.mxu0
        %v9249 = vadd.f32 %v9040, %v9248
        %9250 = vmatmul.f32.gmra.mxu0 %v8799
        %v9251 = vpop.f32.mrf.mxu0
        %v9252 = vadd.f32 %v9043, %v9251
        %9253 = vdwg.mxu0
        %9254 = vst [vmem:[%s307] sm:$0xff] %v9063
        %9255 = vst [vmem:[%s307 + $0x8] sm:$0xff] %v9066
        %9256 = vst [vmem:[%s307 + $0x10] sm:$0xff] %v9069
        %9257 = vst [vmem:[%s307 + $0x18] sm:$0xff] %v9072
        %9258 = vst [vmem:[%s307 + $0x20] sm:$0xff] %v9075
        %9259 = vst [vmem:[%s307 + $0x28] sm:$0xff] %v9078
        %9260 = vst [vmem:[%s307 + $0x30] sm:$0xff] %v9081
        %9261 = vst [vmem:[%s307 + $0x38] sm:$0xff] %v9084
        %9262 = vst [vmem:[%s307 + $0x40] sm:$0xff] %v9087
        %9263 = vst [vmem:[%s307 + $0x48] sm:$0xff] %v9090
        %9264 = vst [vmem:[%s307 + $0x50] sm:$0xff] %v9093
        %9265 = vst [vmem:[%s307 + $0x58] sm:$0xff] %v9096
        %9266 = vst [vmem:[%s307 + $0x60] sm:$0xff] %v9099
        %9267 = vst [vmem:[%s307 + $0x68] sm:$0xff] %v9102
        %9268 = vst [vmem:[%s307 + $0x70] sm:$0xff] %v9105
        %9269 = vst [vmem:[%s307 + $0x78] sm:$0xff] %v9108
        %9270 = vst [vmem:[%s307 + $0x80] sm:$0xff] %v9111
        %9271 = vst [vmem:[%s307 + $0x88] sm:$0xff] %v9114
        %9272 = vst [vmem:[%s307 + $0x90] sm:$0xff] %v9117
        %9273 = vst [vmem:[%s307 + $0x98] sm:$0xff] %v9120
        %9274 = vst [vmem:[%s307 + $0xa0] sm:$0xff] %v9123
        %9275 = vst [vmem:[%s307 + $0xa8] sm:$0xff] %v9126
        %9276 = vst [vmem:[%s307 + $0xb0] sm:$0xff] %v9129
        %9277 = vst [vmem:[%s307 + $0xb8] sm:$0xff] %v9132
        %9278 = vst [vmem:[%s307 + $0xc0] sm:$0xff] %v9135
        %9279 = vst [vmem:[%s307 + $0xc8] sm:$0xff] %v9138
        %9280 = vst [vmem:[%s307 + $0xd0] sm:$0xff] %v9141
        %9281 = vst [vmem:[%s307 + $0xd8] sm:$0xff] %v9144
        %9282 = vst [vmem:[%s307 + $0xe0] sm:$0xff] %v9147
        %9283 = vst [vmem:[%s307 + $0xe8] sm:$0xff] %v9150
        %9284 = vst [vmem:[%s307 + $0xf0] sm:$0xff] %v9153
        %9285 = vst [vmem:[%s307 + $0xf8] sm:$0xff] %v9156
        %9286 = vst [vmem:[%s307 + $0x100] sm:$0xff] %v9159
        %9287 = vst [vmem:[%s307 + $0x108] sm:$0xff] %v9162
        %9288 = vst [vmem:[%s307 + $0x110] sm:$0xff] %v9165
        %9289 = vst [vmem:[%s307 + $0x118] sm:$0xff] %v9168
        %9290 = vst [vmem:[%s307 + $0x120] sm:$0xff] %v9171
        %9291 = vst [vmem:[%s307 + $0x128] sm:$0xff] %v9174
        %9292 = vst [vmem:[%s307 + $0x130] sm:$0xff] %v9177
        %9293 = vst [vmem:[%s307 + $0x138] sm:$0xff] %v9180
        %9294 = vst [vmem:[%s307 + $0x140] sm:$0xff] %v9183
        %9295 = vst [vmem:[%s307 + $0x148] sm:$0xff] %v9186
        %9296 = vst [vmem:[%s307 + $0x150] sm:$0xff] %v9189
        %9297 = vst [vmem:[%s307 + $0x158] sm:$0xff] %v9192
        %9298 = vst [vmem:[%s307 + $0x160] sm:$0xff] %v9195
        %9299 = vst [vmem:[%s307 + $0x168] sm:$0xff] %v9198
        %9300 = vst [vmem:[%s307 + $0x170] sm:$0xff] %v9201
        %9301 = vst [vmem:[%s307 + $0x178] sm:$0xff] %v9204
        %9302 = vst [vmem:[%s307 + $0x180] sm:$0xff] %v9207
        %9303 = vst [vmem:[%s307 + $0x188] sm:$0xff] %v9210
        %9304 = vst [vmem:[%s307 + $0x190] sm:$0xff] %v9213
        %9305 = vst [vmem:[%s307 + $0x198] sm:$0xff] %v9216
        %9306 = vst [vmem:[%s307 + $0x1a0] sm:$0xff] %v9219
        %9307 = vst [vmem:[%s307 + $0x1a8] sm:$0xff] %v9222
        %9308 = vst [vmem:[%s307 + $0x1b0] sm:$0xff] %v9225
        %9309 = vst [vmem:[%s307 + $0x1b8] sm:$0xff] %v9228
        %9310 = vst [vmem:[%s307 + $0x1c0] sm:$0xff] %v9231
        %9311 = vst [vmem:[%s307 + $0x1c8] sm:$0xff] %v9234
        %9312 = vst [vmem:[%s307 + $0x1d0] sm:$0xff] %v9237
        %9313 = vst [vmem:[%s307 + $0x1d8] sm:$0xff] %v9240
        %9314 = vst [vmem:[%s307 + $0x1e0] sm:$0xff] %v9243
        %9315 = vst [vmem:[%s307 + $0x1e8] sm:$0xff] %v9246
        %9316 = vst [vmem:[%s307 + $0x1f0] sm:$0xff] %v9249
        %9317 = vst [vmem:[%s307 + $0x1f8] sm:$0xff] %v9252
        %s9318 = sand.u32 %s142, 1
        %s9319 = scalar_lea.sflag [#allocation4], %s9318
        %s9320 = sand.u32 %s142, 1
        %s9321 = smul.addr %s9320, 512
        %s9322 = scalar_lea.vmem [#allocation11], %s9321
        // Predicated region
        $region61: #{tpu_custom_call.1} parent=39 // pred_check
          %p9323 = pneg %p152
        $region62: #{tpu_custom_call.1} parent=39 // pred_check_branch
          %9325 = sbr.rel (%p9323) target = $region64
        $region63: #{tpu_custom_call.1} parent=39 // pred_region
          %s9326 = smul.u32 64, %s24
          %9328 = vsyncadd %s9319, 0
          %s9329 = smul.addr %s9326, 8
          %s9330 = scalar_lea.hbm %s5, %s9329
          %s9331 = sshll.u32 %s9322, 4
          %s9332 = int_to_ptr.vmem [resolvable:$true] %s9331
          %s9333 = sshll.u32 %s9330, 4
          %s9334 = int_to_ptr.hbm [resolvable:$true] %s9333
          %9339 = dma.vmem_to_hbm [thread:$0]  %s9332, 8192, %s9334, %s9319, 128, 128, 8
        $region64: #{tpu_custom_call.1} parent=39 // pred_fallthru
          _
      $region40: #{tpu_custom_call.1} parent=5 // pred_fallthru
        _
      %p9340 = scmp.le.s32.totalorder 2, %s19
      // Predicated region
      $region65: #{tpu_custom_call.1} parent=5 // pred_check
        %p9341 = pneg %p9340
      $region66: #{tpu_custom_call.1} parent=5 // pred_check_branch
        %9343 = sbr.rel (%p9341) target = $region68
      $region67: #{tpu_custom_call.1} parent=5 // pred_region
        %s9344 = ssub.s32 %s19, 2
        // Predicated region
        $region69: #{tpu_custom_call.1} parent=67 // pred_check
          %p9345 = pneg %p158
        $region70: #{tpu_custom_call.1} parent=67 // pred_check_branch
          %9347 = sbr.rel (%p9345) target = $region72
        $region71: #{tpu_custom_call.1} parent=67 // pred_region
          %s9348 = sand.u32 %s143, 1
          %s9349 = scalar_lea.sflag [#allocation4], %s9348
          %s9350 = sand.u32 %s143, 1
          %s9351 = smul.addr %s9350, 512
          %s9352 = scalar_lea.vmem [#allocation11], %s9351
          %9354 = dma.done %s9349, 8192
        $region72: #{tpu_custom_call.1} parent=67 // pred_fallthru
          _
      $region68: #{tpu_custom_call.1} parent=5 // pred_fallthru
        _
    $region6: #{tpu_custom_call.1} parent=1 // loop_footer
      %s23 = sadd.s32 1, %s19
    $region7: #{tpu_custom_call.1} parent=1 // loop_footer_branch
      %18 = sbr.rel target = $region3
    $region8: #{tpu_custom_call.1} parent=1 // loop_exit
      _
    %9355 = vsyncpa [#allocation3], 1
    %s9356 = scalar_lea.sflag [#allocation3], 1
    %9357 = vsyncpa %s9356, 1
    %9358 = vsyncpa [#allocation6], 1
    %9359 = vsyncpa [#allocation9], 1
    %9360 = vsyncpa [#allocation4], 1
    %s9361 = scalar_lea.sflag [#allocation4], 1
    %9362 = vsyncpa %s9361, 1

</llo_original>
